<compile_context>
chip_gen: v5e
topology: v5e:2x2
jax: 0.10.0
libtpu: 0.0.40
codegen_flags: <defaults>
</compile_context>

<pallas_src>
import functools

import jax
import jax.numpy as jnp
from jax.experimental import pallas as pl
from jax.experimental.pallas import tpu as pltpu


def _round_up(n: int, m: int) -> int:
    return ((n + m - 1) // m) * m


# Logical layer sizes from the PyTorch module.
LAYER_SIZES = [1, 100, 1200, 1300, 100, 1]

# Padded sizes (lane dim multiple of 128).
PAD_SIZES = [_round_up(s, 128) for s in LAYER_SIZES]  # [128, 128, 1280, 1408, 128, 128]


def mlp_kernel(x_ref,
               w1_ref, b1_ref,
               w2_ref, b2_ref,
               w3_ref, b3_ref,
               w4_ref, b4_ref,
               w5_ref, b5_ref,
               o_ref):
    """Fused 5-layer MLP forward pass for one batch tile.

    Hidden weights arrive as bf16 and are consumed directly by the MXU
    (bf16 x bf16 -> f32 accumulate); biases and tanh stay in f32.  Layer 1 is
    a VPU broadcast (in_features == 1) and layer 5 a lane reduction
    (out_features == 1), so neither wastes an MXU pass on zero-padded blocks.
    """
    x = x_ref[...]                                             # (bb, 1) f32

    # Layer 1: Linear(1, 100) as a broadcasted multiply (no matmul needed).
    h = jnp.tanh(x * w1_ref[...] + b1_ref[...])                # (bb, 128) f32

    # Layers 2-4: native bf16 MXU matmuls, f32 accumulate (no f32 weight copies).
    h = jnp.tanh(jnp.dot(h.astype(jnp.bfloat16), w2_ref[...],
                         preferred_element_type=jnp.float32) + b2_ref[...])
    h = jnp.tanh(jnp.dot(h.astype(jnp.bfloat16), w3_ref[...],
                         preferred_element_type=jnp.float32) + b3_ref[...])
    h = jnp.tanh(jnp.dot(h.astype(jnp.bfloat16), w4_ref[...],
                         preferred_element_type=jnp.float32) + b4_ref[...])

    # Layer 5: Linear(100, 1) as multiply + lane reduction (XLU).
    mu = jnp.sum(h * w5_ref[...], axis=-1, keepdims=True) + b5_ref[...]  # (bb, 1)
    o_ref[...] = mu


def init_params(key):
    """Deterministic PyTorch-style init: U(-1/sqrt(fan_in), 1/sqrt(fan_in)).

    Returns:
      padded:     padded kernel operands.  fc1 weight as a f32 (1, 128) row,
                  out_mu weight as a f32 (1, 128) transposed row with (1, 1)
                  bias; hidden weights as bf16 (in_pad, out_pad); all biases
                  f32.
      ref_params: unpadded (W, b) per layer; hidden W already bf16-rounded so
                  the pure-JAX reference uses the same effective weights.
    """
    padded, ref_params = [], []
    n_layers = len(LAYER_SIZES) - 1
    for i in range(n_layers):
        fan_in, fan_out = LAYER_SIZES[i], LAYER_SIZES[i + 1]
        key, kw, kb = jax.random.split(key, 3)
        bound = 1.0 / (fan_in ** 0.5)
        w = jax.random.uniform(kw, (fan_in, fan_out), jnp.float32, -bound, bound)
        b = jax.random.uniform(kb, (fan_out,), jnp.float32, -bound, bound)

        if i == 0:
            # fc1 (1 -> 100): f32 (1, out_pad) row for the VPU broadcast.
            w_pad = jnp.zeros((1, PAD_SIZES[1]), jnp.float32).at[:, :fan_out].set(w)
            b_pad = jnp.zeros((1, PAD_SIZES[1]), jnp.float32).at[0, :fan_out].set(b)
            ref_params.append((w, b))
        elif i == n_layers - 1:
            # out_mu (100 -> 1): f32 (1, in_pad) row for the lane reduction.
            w_pad = jnp.zeros((1, PAD_SIZES[-2]), jnp.float32).at[:, :fan_in].set(w.T)
            b_pad = jnp.reshape(b, (1, 1)).astype(jnp.float32)
            ref_params.append((w, b))
        else:
            # Hidden layers: stream weights as bf16 (halves the dominant DMA).
            w_bf16 = w.astype(jnp.bfloat16)
            in_p, out_p = PAD_SIZES[i], PAD_SIZES[i + 1]
            w_pad = jnp.zeros((in_p, out_p), jnp.bfloat16).at[:fan_in, :fan_out].set(w_bf16)
            b_pad = jnp.zeros((1, out_p), jnp.float32).at[0, :fan_out].set(b)
            ref_params.append((w_bf16, b))
        padded.extend([w_pad, b_pad])
    return padded, ref_params


@functools.partial(jax.jit, static_argnames=("batch",))
def net_forward(x, padded_params, *, batch):
    """x: (B, 1) float32 -> mu: (B, 1) float32.

    Single pallas_call with a 1-D batch grid.  Weights use constant index
    maps (DMA'd once, VMEM-resident across grid steps); x/out tiles pipeline
    behind compute.  Small batches run as a single grid step.
    """
    # Batch tile: whole (padded) batch when small, 256-row blocks when large.
    if batch <= 256:
        b_pad = _round_up(max(batch, 8), 8)
        block_b = b_pad
    else:
        block_b = 256
        b_pad = _round_up(batch, block_b)
    grid = (b_pad // block_b,)

    x_pad = jnp.zeros((b_pad, 1), jnp.float32).at[:batch, :].set(x)

    def _const_spec(p):
        zeros = (0,) * p.ndim
        return pl.BlockSpec(p.shape, lambda i, _z=zeros: _z)

    in_specs = [pl.BlockSpec((block_b, 1), lambda i: (i, 0))]
    in_specs += [_const_spec(p) for p in padded_params]
    out_specs = pl.BlockSpec((block_b, 1), lambda i: (i, 0))

    flops = 2 * b_pad * sum(LAYER_SIZES[i] * LAYER_SIZES[i + 1]
                            for i in range(len(LAYER_SIZES) - 1))
    transcendentals = b_pad * sum(LAYER_SIZES[1:-1])
    param_bytes = sum(int(p.size) * p.dtype.itemsize for p in padded_params)
    bytes_accessed = int(x_pad.size) * 4 + param_bytes + b_pad * 4

    # VMEM budget from actual operand sizes: double-buffered weight/bias tiles
    # + a few live f32 intermediates + lane-padded x/out tiles + margin.
    vmem_limit = _round_up(2 * param_bytes
                           + 4 * block_b * max(PAD_SIZES) * 4
                           + 4 * block_b * 128 * 4
                           + (4 << 20), 1 << 20)

    out_pad = pl.pallas_call(
        mlp_kernel,
        out_shape=jax.ShapeDtypeStruct((b_pad, 1), jnp.float32),
        grid=grid,
        in_specs=in_specs,
        out_specs=out_specs,
        compiler_params=pltpu.CompilerParams(
            dimension_semantics=("parallel",),
            vmem_limit_bytes=vmem_limit),
        cost_estimate=pl.CostEstimate(flops=flops,
                                      transcendentals=transcendentals,
                                      bytes_accessed=bytes_accessed),
    )(x_pad, *padded_params)

    return out_pad[:batch, :]


def net_forward_ref(x, ref_params):
    """Pure-JAX reference with the kernel's numerics.

    Layers 2-4 use the same bf16 weights and bf16-rounded activations fed to
    an f32-accumulating dot (exactly what the MXU does); layers 1 and 5 are
    pure f32.
    """
    (w1, b1), (w2, b2), (w3, b3), (w4, b4), (w5, b5) = ref_params
    h = jnp.tanh(jnp.dot(x, w1, precision=jax.lax.Precision.HIGHEST) + b1)
    for w, b in ((w2, b2), (w3, b3), (w4, b4)):
        h = jnp.tanh(jnp.dot(h.astype(jnp.bfloat16), w,
                             preferred_element_type=jnp.float32) + b)
    return jnp.dot(h, w5, precision=jax.lax.Precision.HIGHEST) + b5


if __name__ == "__main__":
    key = jax.random.PRNGKey(0)
    key, kparams, kx = jax.random.split(key, 3)

    padded_params, ref_params = init_params(kparams)

    batch = 8
    x = jax.random.normal(kx, (batch, 1), jnp.float32)

    mu = jax.block_until_ready(net_forward(x, padded_params, batch=batch))
    mu_ref = net_forward_ref(x, ref_params)

    assert mu.shape == (batch, 1), mu.shape
    max_err = float(jnp.max(jnp.abs(mu - mu_ref)))
    assert jnp.allclose(mu, mu_ref, atol=1e-3, rtol=1e-3), f"max abs err = {max_err}"

    print("KERNEL_OK")
</pallas_src>

<mosaic_0001>
module attributes {stable_mosaic.version = 11 : i64} {
  func.func @mlp_kernel(%arg0: i32, %arg1: memref<8x1xf32, #tpu.memory_space<vmem>>, %arg2: memref<1x128xf32, #tpu.memory_space<vmem>>, %arg3: memref<1x128xf32, #tpu.memory_space<vmem>>, %arg4: memref<128x1280xbf16, #tpu.memory_space<vmem>>, %arg5: memref<1x1280xf32, #tpu.memory_space<vmem>>, %arg6: memref<1280x1408xbf16, #tpu.memory_space<vmem>>, %arg7: memref<1x1408xf32, #tpu.memory_space<vmem>>, %arg8: memref<1408x128xbf16, #tpu.memory_space<vmem>>, %arg9: memref<1x128xf32, #tpu.memory_space<vmem>>, %arg10: memref<1x128xf32, #tpu.memory_space<vmem>>, %arg11: memref<1x1xf32, #tpu.memory_space<vmem>>, %arg12: memref<8x1xf32, #tpu.memory_space<vmem>>) attributes {dimension_semantics = [#tpu.dimension_semantics<parallel>], iteration_bounds = array<i64: 1>, scalar_prefetch = 0 : i64, scratch_operands = 0 : i64, tpu.core_type = #tpu.core_type<tc>, window_params = [{transform_indices = @transform_0, window_bounds = array<i64: 8, 1>}, {pipeline_mode = #tpu.pipeline_mode<synchronous>, transform_indices = @transform_1, window_bounds = array<i64: 1, 128>}, {pipeline_mode = #tpu.pipeline_mode<synchronous>, transform_indices = @transform_2, window_bounds = array<i64: 1, 128>}, {pipeline_mode = #tpu.pipeline_mode<synchronous>, transform_indices = @transform_3, window_bounds = array<i64: 128, 1280>}, {pipeline_mode = #tpu.pipeline_mode<synchronous>, transform_indices = @transform_4, window_bounds = array<i64: 1, 1280>}, {pipeline_mode = #tpu.pipeline_mode<synchronous>, transform_indices = @transform_5, window_bounds = array<i64: 1280, 1408>}, {pipeline_mode = #tpu.pipeline_mode<synchronous>, transform_indices = @transform_6, window_bounds = array<i64: 1, 1408>}, {pipeline_mode = #tpu.pipeline_mode<synchronous>, transform_indices = @transform_7, window_bounds = array<i64: 1408, 128>}, {pipeline_mode = #tpu.pipeline_mode<synchronous>, transform_indices = @transform_8, window_bounds = array<i64: 1, 128>}, {pipeline_mode = #tpu.pipeline_mode<synchronous>, transform_indices = @transform_9, window_bounds = array<i64: 1, 128>}, {pipeline_mode = #tpu.pipeline_mode<synchronous>, transform_indices = @transform_10, window_bounds = array<i64: 1, 1>}, {transform_indices = @transform_11, window_bounds = array<i64: 8, 1>}]} {
    %c0 = arith.constant 0 : index
    %c0_0 = arith.constant 0 : index
    %0 = vector.load %arg1[%c0, %c0_0] : memref<8x1xf32, #tpu.memory_space<vmem>>, vector<8x1xf32>
    %c0_1 = arith.constant 0 : index
    %c0_2 = arith.constant 0 : index
    %1 = vector.load %arg2[%c0_1, %c0_2] : memref<1x128xf32, #tpu.memory_space<vmem>>, vector<1x128xf32>
    %2 = vector.broadcast %0 : vector<8x1xf32> to vector<8x128xf32>
    %3 = vector.broadcast %1 : vector<1x128xf32> to vector<8x128xf32>
    %4 = arith.mulf %2, %3 : vector<8x128xf32>
    %c0_3 = arith.constant 0 : index
    %c0_4 = arith.constant 0 : index
    %5 = vector.load %arg3[%c0_3, %c0_4] : memref<1x128xf32, #tpu.memory_space<vmem>>, vector<1x128xf32>
    %6 = vector.broadcast %5 : vector<1x128xf32> to vector<8x128xf32>
    %7 = arith.addf %4, %6 : vector<8x128xf32>
    %8 = math.tanh %7 : vector<8x128xf32>
    %9 = arith.truncf %8 : vector<8x128xf32> to vector<8x128xbf16>
    %c0_5 = arith.constant 0 : index
    %c0_6 = arith.constant 0 : index
    %10 = vector.load %arg4[%c0_5, %c0_6] : memref<128x1280xbf16, #tpu.memory_space<vmem>>, vector<128x1280xbf16>
    %cst = arith.constant dense<0.000000e+00> : vector<8x1280xf32>
    %11 = tpu.matmul %9, %10, %cst {dimension_numbers = #tpu.dot_dimension_numbers<[1], [0], [0], [1], [0, 0, 1, 1], [], []>} : vector<8x128xbf16>, vector<128x1280xbf16>, vector<8x1280xf32> -> vector<8x1280xf32>
    %c0_7 = arith.constant 0 : index
    %c0_8 = arith.constant 0 : index
    %12 = vector.load %arg5[%c0_7, %c0_8] : memref<1x1280xf32, #tpu.memory_space<vmem>>, vector<1x1280xf32>
    %13 = vector.broadcast %12 : vector<1x1280xf32> to vector<8x1280xf32>
    %14 = arith.addf %11, %13 : vector<8x1280xf32>
    %15 = math.tanh %14 : vector<8x1280xf32>
    %16 = arith.truncf %15 : vector<8x1280xf32> to vector<8x1280xbf16>
    %c0_9 = arith.constant 0 : index
    %c0_10 = arith.constant 0 : index
    %17 = vector.load %arg6[%c0_9, %c0_10] : memref<1280x1408xbf16, #tpu.memory_space<vmem>>, vector<1280x1408xbf16>
    %cst_11 = arith.constant dense<0.000000e+00> : vector<8x1408xf32>
    %18 = tpu.matmul %16, %17, %cst_11 {dimension_numbers = #tpu.dot_dimension_numbers<[1], [0], [0], [1], [0, 0, 1, 1], [], []>} : vector<8x1280xbf16>, vector<1280x1408xbf16>, vector<8x1408xf32> -> vector<8x1408xf32>
    %c0_12 = arith.constant 0 : index
    %c0_13 = arith.constant 0 : index
    %19 = vector.load %arg7[%c0_12, %c0_13] : memref<1x1408xf32, #tpu.memory_space<vmem>>, vector<1x1408xf32>
    %20 = vector.broadcast %19 : vector<1x1408xf32> to vector<8x1408xf32>
    %21 = arith.addf %18, %20 : vector<8x1408xf32>
    %22 = math.tanh %21 : vector<8x1408xf32>
    %23 = arith.truncf %22 : vector<8x1408xf32> to vector<8x1408xbf16>
    %c0_14 = arith.constant 0 : index
    %c0_15 = arith.constant 0 : index
    %24 = vector.load %arg8[%c0_14, %c0_15] : memref<1408x128xbf16, #tpu.memory_space<vmem>>, vector<1408x128xbf16>
    %cst_16 = arith.constant dense<0.000000e+00> : vector<8x128xf32>
    %25 = tpu.matmul %23, %24, %cst_16 {dimension_numbers = #tpu.dot_dimension_numbers<[1], [0], [0], [1], [0, 0, 1, 1], [], []>} : vector<8x1408xbf16>, vector<1408x128xbf16>, vector<8x128xf32> -> vector<8x128xf32>
    %c0_17 = arith.constant 0 : index
    %c0_18 = arith.constant 0 : index
    %26 = vector.load %arg9[%c0_17, %c0_18] : memref<1x128xf32, #tpu.memory_space<vmem>>, vector<1x128xf32>
    %27 = vector.broadcast %26 : vector<1x128xf32> to vector<8x128xf32>
    %28 = arith.addf %25, %27 : vector<8x128xf32>
    %29 = math.tanh %28 : vector<8x128xf32>
    %c0_19 = arith.constant 0 : index
    %c0_20 = arith.constant 0 : index
    %30 = vector.load %arg10[%c0_19, %c0_20] : memref<1x128xf32, #tpu.memory_space<vmem>>, vector<1x128xf32>
    %31 = vector.broadcast %30 : vector<1x128xf32> to vector<8x128xf32>
    %32 = arith.mulf %29, %31 : vector<8x128xf32>
    %cst_21 = arith.constant dense<0.000000e+00> : vector<8xf32>
    %33 = vector.multi_reduction <add>, %32, %cst_21 [1] : vector<8x128xf32> to vector<8xf32>
    %34 = vector.shape_cast %33 : vector<8xf32> to vector<8x1xf32>
    %c0_22 = arith.constant 0 : index
    %c0_23 = arith.constant 0 : index
    %35 = vector.load %arg11[%c0_22, %c0_23] : memref<1x1xf32, #tpu.memory_space<vmem>>, vector<1x1xf32>
    %36 = vector.broadcast %35 : vector<1x1xf32> to vector<8x1xf32>
    %37 = arith.addf %34, %36 : vector<8x1xf32>
    %c0_24 = arith.constant 0 : index
    %c0_25 = arith.constant 0 : index
    %38 = vector.load %arg12[%c0_24, %c0_25] : memref<8x1xf32, #tpu.memory_space<vmem>>, vector<8x1xf32>
    tpu.vector_store %arg12[%c0_24, %c0_25], %37 {strides = array<i32>} : memref<8x1xf32, #tpu.memory_space<vmem>>, vector<8x1xf32>,
    return
  }
  func.func @transform_0(%arg0: i32) -> (i32, i32) {
    %c0_i32 = arith.constant 0 : i32
    %c0_i32_0 = arith.constant 0 : i32
    return %arg0, %c0_i32 : i32, i32
  }
  func.func @transform_1(%arg0: i32) -> (i32, i32) {
    %c0_i32 = arith.constant 0 : i32
    %c0_i32_0 = arith.constant 0 : i32
    %c0_i32_1 = arith.constant 0 : i32
    return %c0_i32, %c0_i32_0 : i32, i32
  }
  func.func @transform_2(%arg0: i32) -> (i32, i32) {
    %c0_i32 = arith.constant 0 : i32
    %c0_i32_0 = arith.constant 0 : i32
    %c0_i32_1 = arith.constant 0 : i32
    return %c0_i32, %c0_i32_0 : i32, i32
  }
  func.func @transform_3(%arg0: i32) -> (i32, i32) {
    %c0_i32 = arith.constant 0 : i32
    %c0_i32_0 = arith.constant 0 : i32
    %c0_i32_1 = arith.constant 0 : i32
    return %c0_i32, %c0_i32_0 : i32, i32
  }
  func.func @transform_4(%arg0: i32) -> (i32, i32) {
    %c0_i32 = arith.constant 0 : i32
    %c0_i32_0 = arith.constant 0 : i32
    %c0_i32_1 = arith.constant 0 : i32
    return %c0_i32, %c0_i32_0 : i32, i32
  }
  func.func @transform_5(%arg0: i32) -> (i32, i32) {
    %c0_i32 = arith.constant 0 : i32
    %c0_i32_0 = arith.constant 0 : i32
    %c0_i32_1 = arith.constant 0 : i32
    return %c0_i32, %c0_i32_0 : i32, i32
  }
  func.func @transform_6(%arg0: i32) -> (i32, i32) {
    %c0_i32 = arith.constant 0 : i32
    %c0_i32_0 = arith.constant 0 : i32
    %c0_i32_1 = arith.constant 0 : i32
    return %c0_i32, %c0_i32_0 : i32, i32
  }
  func.func @transform_7(%arg0: i32) -> (i32, i32) {
    %c0_i32 = arith.constant 0 : i32
    %c0_i32_0 = arith.constant 0 : i32
    %c0_i32_1 = arith.constant 0 : i32
    return %c0_i32, %c0_i32_0 : i32, i32
  }
  func.func @transform_8(%arg0: i32) -> (i32, i32) {
    %c0_i32 = arith.constant 0 : i32
    %c0_i32_0 = arith.constant 0 : i32
    %c0_i32_1 = arith.constant 0 : i32
    return %c0_i32, %c0_i32_0 : i32, i32
  }
  func.func @transform_9(%arg0: i32) -> (i32, i32) {
    %c0_i32 = arith.constant 0 : i32
    %c0_i32_0 = arith.constant 0 : i32
    %c0_i32_1 = arith.constant 0 : i32
    return %c0_i32, %c0_i32_0 : i32, i32
  }
  func.func @transform_10(%arg0: i32) -> (i32, i32) {
    %c0_i32 = arith.constant 0 : i32
    %c0_i32_0 = arith.constant 0 : i32
    %c0_i32_1 = arith.constant 0 : i32
    return %c0_i32, %c0_i32_0 : i32, i32
  }
  func.func @transform_11(%arg0: i32) -> (i32, i32) {
    %c0_i32 = arith.constant 0 : i32
    %c0_i32_0 = arith.constant 0 : i32
    return %arg0, %c0_i32 : i32, i32
  }
}

</mosaic_0001>

<llo_original>
// kernel: net_forward.1
$region0: #{net_forward.1}
  #allocation0 [shape = 'u32[]', space=smem, size = 0x4, offset = 0x4, fixed_abs, tag = 'smem constant byte address 0x4 - core index']
  #allocation1 [shape = 'u32[72,128]{1,0:T(1,128)}', space=vmem, size = 0x9000, scoped, tag = 'internal scratch']
  #allocation2 [shape = 'f32[1,1]{1,0:T(1,128)S(1)}', space=vmem, size = 0x200, scoped, tag = 'scoped memory for net_forward.1']
  %s0 = inlined_call_operand.vmem [shape: f32[8,1], index: 0, kind: input, shape index: {}]
  %s1 = inlined_call_operand.hbm [shape: f32[1,128], index: 1, kind: input, shape index: {}]
  %s2 = inlined_call_operand.hbm [shape: f32[1,128], index: 2, kind: input, shape index: {}]
  %s3 = inlined_call_operand.hbm [shape: bf16[128,1280], index: 3, kind: input, shape index: {}]
  %s4 = inlined_call_operand.hbm [shape: f32[1,1280], index: 4, kind: input, shape index: {}]
  %s5 = inlined_call_operand.hbm [shape: bf16[1280,1408], index: 5, kind: input, shape index: {}]
  %s6 = inlined_call_operand.hbm [shape: f32[1,1408], index: 6, kind: input, shape index: {}]
  %s7 = inlined_call_operand.hbm [shape: bf16[1408,128], index: 7, kind: input, shape index: {}]
  %s8 = inlined_call_operand.hbm [shape: f32[1,128], index: 8, kind: input, shape index: {}]
  %s9 = inlined_call_operand.hbm [shape: f32[1,128], index: 9, kind: input, shape index: {}]
  %s10 = inlined_call_operand.<no memory space> [shape: f32[1,1], index: 10, kind: input, shape index: {}]
  %s11 = inlined_call_operand.vmem [shape: f32[8,1], index: 11, kind: output, shape index: {}]
  %s12 = sld [smem:[#allocation0]]
  $region90: #{net_forward.1} parent=0
    _
  %s14 = ssub.s32 1, %s12
  %s15 = scalar_select 0, %s14, %s12
  %v16 = vstv %s10
  %17 = vst [vmem:[#allocation2] sm:$0x1] %v16
  $region1: #{net_forward.1} parent=0
    #allocation3 [shape = 'u8[512]{0}', space=vmem, size = 0x400, scoped, tag = 'input window, operand 1, single buffered']
    #allocation4 [shape = 's32[1]{0}', space=sflag, size = 0x4, scoped, tag = 'scoped memory for net_forward.1']
    #allocation5 [shape = 'u8[512]{0}', space=vmem, size = 0x400, scoped, tag = 'input window, operand 2, single buffered']
    #allocation6 [shape = 's32[1]{0}', space=sflag, size = 0x4, scoped, tag = 'scoped memory for net_forward.1']
    #allocation7 [shape = 'u8[327680]{0}', space=vmem, size = 0x50000, scoped, tag = 'input window, operand 3, single buffered']
    #allocation8 [shape = 'u8[5120]{0}', space=vmem, size = 0x1400, scoped, tag = 'input window, operand 4, single buffered']
    #allocation9 [shape = 's32[1]{0}', space=sflag, size = 0x4, scoped, tag = 'scoped memory for net_forward.1']
    #allocation10 [shape = 'u8[3604480]{0}', space=vmem, size = 0x370000, scoped, tag = 'input window, operand 5, single buffered']
    #allocation11 [shape = 'u8[5632]{0}', space=vmem, size = 0x1800, scoped, tag = 'input window, operand 6, single buffered']
    #allocation12 [shape = 's32[1]{0}', space=sflag, size = 0x4, scoped, tag = 'scoped memory for net_forward.1']
    #allocation13 [shape = 'u8[360448]{0}', space=vmem, size = 0x58000, scoped, tag = 'input window, operand 7, single buffered']
    #allocation14 [shape = 'u8[512]{0}', space=vmem, size = 0x400, scoped, tag = 'input window, operand 8, single buffered']
    #allocation15 [shape = 's32[1]{0}', space=sflag, size = 0x4, scoped, tag = 'scoped memory for net_forward.1']
    #allocation16 [shape = 'u8[512]{0}', space=vmem, size = 0x400, scoped, tag = 'input window, operand 9, single buffered']
    %18 = vsyncpa [#allocation4], 0
    %19 = vsyncpa [#allocation6], 0
    %20 = vsyncpa [#allocation9], 0
    %21 = vsyncpa [#allocation12], 0
    %22 = vsyncpa [#allocation15], 0
    // Predicated region
    $region2: #{net_forward.1} parent=1 // pred_check
      _
    $region3: #{net_forward.1} parent=1 // pred_check_branch
      %24 = sbr.rel (0) target = $region5
    $region4: #{net_forward.1} parent=1 // pred_region
      _
    $region5: #{net_forward.1} parent=1 // pred_fallthru
      _
    // Predicated region
    $region6: #{net_forward.1} parent=1 // pred_check
      _
    $region7: #{net_forward.1} parent=1 // pred_check_branch
      %26 = sbr.rel (0) target = $region9
    $region8: #{net_forward.1} parent=1 // pred_region
      %28 = vsyncadd [#allocation4], 0
      %s30 = sshll.u32 %s1, 4
      %s31 = int_to_ptr.hbm [resolvable:$true] %s30
      %s32 = sshll.u32 [#allocation3], 4
      %s33 = int_to_ptr.vmem [resolvable:$true] %s32
      %35 = dma.hbm_to_vmem [thread:$0]  %s31, 16, %s33, [#allocation4]
    $region9: #{net_forward.1} parent=1 // pred_fallthru
      _
    // Predicated region
    $region10: #{net_forward.1} parent=1 // pred_check
      _
    $region11: #{net_forward.1} parent=1 // pred_check_branch
      %37 = sbr.rel (0) target = $region13
    $region12: #{net_forward.1} parent=1 // pred_region
      %39 = vsyncadd [#allocation6], 0
      %s41 = sshll.u32 %s2, 4
      %s42 = int_to_ptr.hbm [resolvable:$true] %s41
      %s43 = sshll.u32 [#allocation5], 4
      %s44 = int_to_ptr.vmem [resolvable:$true] %s43
      %46 = dma.hbm_to_vmem [thread:$0]  %s42, 16, %s44, [#allocation6]
    $region13: #{net_forward.1} parent=1 // pred_fallthru
      _
    // Predicated region
    $region14: #{net_forward.1} parent=1 // pred_check
      _
    $region15: #{net_forward.1} parent=1 // pred_check_branch
      %48 = sbr.rel (0) target = $region17
    $region16: #{net_forward.1} parent=1 // pred_region
      %50 = vsyncadd [#allocation6], 0
      %s51 = sshll.u32 %s3, 4
      %s52 = int_to_ptr.hbm [resolvable:$true] %s51
      %s53 = sshll.u32 [#allocation7], 4
      %s54 = int_to_ptr.vmem [resolvable:$true] %s53
      %59 = dma.hbm_to_vmem [thread:$0]  %s52, 10240, %s54, [#allocation6], 640, 640, 40
    $region17: #{net_forward.1} parent=1 // pred_fallthru
      _
    // Predicated region
    $region18: #{net_forward.1} parent=1 // pred_check
      _
    $region19: #{net_forward.1} parent=1 // pred_check_branch
      %61 = sbr.rel (0) target = $region21
    $region20: #{net_forward.1} parent=1 // pred_region
      %63 = vsyncadd [#allocation9], 0
      %s65 = sshll.u32 %s4, 4
      %s66 = int_to_ptr.hbm [resolvable:$true] %s65
      %s67 = sshll.u32 [#allocation8], 4
      %s68 = int_to_ptr.vmem [resolvable:$true] %s67
      %70 = dma.hbm_to_vmem [thread:$0]  %s66, 160, %s68, [#allocation9]
    $region21: #{net_forward.1} parent=1 // pred_fallthru
      _
    // Predicated region
    $region22: #{net_forward.1} parent=1 // pred_check
      _
    $region23: #{net_forward.1} parent=1 // pred_check_branch
      %72 = sbr.rel (0) target = $region25
    $region24: #{net_forward.1} parent=1 // pred_region
      %74 = vsyncadd [#allocation9], 0
      %s75 = sshll.u32 %s5, 4
      %s76 = int_to_ptr.hbm [resolvable:$true] %s75
      %s77 = sshll.u32 [#allocation10], 4
      %s78 = int_to_ptr.vmem [resolvable:$true] %s77
      %83 = dma.hbm_to_vmem [thread:$0]  %s76, 112640, %s78, [#allocation9], 704, 704, 44
    $region25: #{net_forward.1} parent=1 // pred_fallthru
      _
    // Predicated region
    $region26: #{net_forward.1} parent=1 // pred_check
      _
    $region27: #{net_forward.1} parent=1 // pred_check_branch
      %85 = sbr.rel (0) target = $region29
    $region28: #{net_forward.1} parent=1 // pred_region
      %87 = vsyncadd [#allocation12], 0
      %s89 = sshll.u32 %s6, 4
      %s90 = int_to_ptr.hbm [resolvable:$true] %s89
      %s91 = sshll.u32 [#allocation11], 4
      %s92 = int_to_ptr.vmem [resolvable:$true] %s91
      %94 = dma.hbm_to_vmem [thread:$0]  %s90, 176, %s92, [#allocation12]
    $region29: #{net_forward.1} parent=1 // pred_fallthru
      _
    // Predicated region
    $region30: #{net_forward.1} parent=1 // pred_check
      _
    $region31: #{net_forward.1} parent=1 // pred_check_branch
      %96 = sbr.rel (0) target = $region33
    $region32: #{net_forward.1} parent=1 // pred_region
      %98 = vsyncadd [#allocation12], 0
      %s99 = sshll.u32 %s7, 4
      %s100 = int_to_ptr.hbm [resolvable:$true] %s99
      %s101 = sshll.u32 [#allocation13], 4
      %s102 = int_to_ptr.vmem [resolvable:$true] %s101
      %107 = dma.hbm_to_vmem [thread:$0]  %s100, 11264, %s102, [#allocation12], 64, 64, 4
    $region33: #{net_forward.1} parent=1 // pred_fallthru
      _
    // Predicated region
    $region34: #{net_forward.1} parent=1 // pred_check
      _
    $region35: #{net_forward.1} parent=1 // pred_check_branch
      %109 = sbr.rel (0) target = $region37
    $region36: #{net_forward.1} parent=1 // pred_region
      %111 = vsyncadd [#allocation15], 0
      %s113 = sshll.u32 %s8, 4
      %s114 = int_to_ptr.hbm [resolvable:$true] %s113
      %s115 = sshll.u32 [#allocation14], 4
      %s116 = int_to_ptr.vmem [resolvable:$true] %s115
      %118 = dma.hbm_to_vmem [thread:$0]  %s114, 16, %s116, [#allocation15]
    $region37: #{net_forward.1} parent=1 // pred_fallthru
      _
    // Predicated region
    $region38: #{net_forward.1} parent=1 // pred_check
      _
    $region39: #{net_forward.1} parent=1 // pred_check_branch
      %120 = sbr.rel (0) target = $region41
    $region40: #{net_forward.1} parent=1 // pred_region
      %122 = vsyncadd [#allocation15], 0
      %s124 = sshll.u32 %s9, 4
      %s125 = int_to_ptr.hbm [resolvable:$true] %s124
      %s126 = sshll.u32 [#allocation16], 4
      %s127 = int_to_ptr.vmem [resolvable:$true] %s126
      %129 = dma.hbm_to_vmem [thread:$0]  %s125, 16, %s127, [#allocation15]
    $region41: #{net_forward.1} parent=1 // pred_fallthru
      _
    // Predicated region
    $region42: #{net_forward.1} parent=1 // pred_check
      _
    $region43: #{net_forward.1} parent=1 // pred_check_branch
      %131 = sbr.rel (0) target = $region45
    $region44: #{net_forward.1} parent=1 // pred_region
      _
    $region45: #{net_forward.1} parent=1 // pred_fallthru
      _
    // Predicated region
    $region46: #{net_forward.1} parent=1 // pred_check
      _
    $region47: #{net_forward.1} parent=1 // pred_check_branch
      %133 = sbr.rel (0) target = $region49
    $region48: #{net_forward.1} parent=1 // pred_region
      %135 = dma.done [#allocation4], 16
    $region49: #{net_forward.1} parent=1 // pred_fallthru
      _
    // Predicated region
    $region50: #{net_forward.1} parent=1 // pred_check
      _
    $region51: #{net_forward.1} parent=1 // pred_check_branch
      %137 = sbr.rel (0) target = $region53
    $region52: #{net_forward.1} parent=1 // pred_region
      %139 = dma.done [#allocation6], 16
    $region53: #{net_forward.1} parent=1 // pred_fallthru
      _
    // Predicated region
    $region54: #{net_forward.1} parent=1 // pred_check
      _
    $region55: #{net_forward.1} parent=1 // pred_check_branch
      %141 = sbr.rel (0) target = $region57
    $region56: #{net_forward.1} parent=1 // pred_region
      %143 = dma.done [#allocation6], 10240
    $region57: #{net_forward.1} parent=1 // pred_fallthru
      _
    // Predicated region
    $region58: #{net_forward.1} parent=1 // pred_check
      _
    $region59: #{net_forward.1} parent=1 // pred_check_branch
      %145 = sbr.rel (0) target = $region61
    $region60: #{net_forward.1} parent=1 // pred_region
      %147 = dma.done [#allocation9], 160
    $region61: #{net_forward.1} parent=1 // pred_fallthru
      _
    // Predicated region
    $region62: #{net_forward.1} parent=1 // pred_check
      _
    $region63: #{net_forward.1} parent=1 // pred_check_branch
      %149 = sbr.rel (0) target = $region65
    $region64: #{net_forward.1} parent=1 // pred_region
      %151 = dma.done [#allocation9], 112640
    $region65: #{net_forward.1} parent=1 // pred_fallthru
      _
    // Predicated region
    $region66: #{net_forward.1} parent=1 // pred_check
      _
    $region67: #{net_forward.1} parent=1 // pred_check_branch
      %153 = sbr.rel (0) target = $region69
    $region68: #{net_forward.1} parent=1 // pred_region
      %155 = dma.done [#allocation12], 176
    $region69: #{net_forward.1} parent=1 // pred_fallthru
      _
    // Predicated region
    $region70: #{net_forward.1} parent=1 // pred_check
      _
    $region71: #{net_forward.1} parent=1 // pred_check_branch
      %157 = sbr.rel (0) target = $region73
    $region72: #{net_forward.1} parent=1 // pred_region
      %159 = dma.done [#allocation12], 11264
    $region73: #{net_forward.1} parent=1 // pred_fallthru
      _
    // Predicated region
    $region74: #{net_forward.1} parent=1 // pred_check
      _
    $region75: #{net_forward.1} parent=1 // pred_check_branch
      %161 = sbr.rel (0) target = $region77
    $region76: #{net_forward.1} parent=1 // pred_region
      %163 = dma.done [#allocation15], 16
    $region77: #{net_forward.1} parent=1 // pred_fallthru
      _
    // Predicated region
    $region78: #{net_forward.1} parent=1 // pred_check
      _
    $region79: #{net_forward.1} parent=1 // pred_check_branch
      %165 = sbr.rel (0) target = $region81
    $region80: #{net_forward.1} parent=1 // pred_region
      %167 = dma.done [#allocation15], 16
    $region81: #{net_forward.1} parent=1 // pred_fallthru
      _
    %v168 = vld [vmem:[%s0] sm:$0xff]
    %v169 = vld [vmem:[#allocation3] sm:$0x1]
    %171 = vset.pattern.permute.xlu0 0
    %172 = vperm.xlu0 %171, %v168
    %v173 = vpop.permute.xlu0 %172
    %v176 = vperm.slane %v169, 0
    %v178 = vmul.f32 %v173, %v176
    %v179 = vld [vmem:[#allocation5] sm:$0x1]
    %v181 = vperm.slane %v179, 0
    %v183 = vadd.f32 %v178, %v181
    %v184 = vtanh.pop %v183
    %v185 = vpack.c.bf16 %v184, %v184
    %v186 = vld [vmem:[#allocation7] sm:$0xff]
    %v187 = vld [vmem:[#allocation7 + $0x8] sm:$0xff]
    %v188 = vld [vmem:[#allocation7 + $0x10] sm:$0xff]
    %v189 = vld [vmem:[#allocation7 + $0x18] sm:$0xff]
    %v190 = vld [vmem:[#allocation7 + $0x20] sm:$0xff]
    %v191 = vld [vmem:[#allocation7 + $0x28] sm:$0xff]
    %v192 = vld [vmem:[#allocation7 + $0x30] sm:$0xff]
    %v193 = vld [vmem:[#allocation7 + $0x38] sm:$0xff]
    %v194 = vld [vmem:[#allocation7 + $0x40] sm:$0xff]
    %v195 = vld [vmem:[#allocation7 + $0x48] sm:$0xff]
    %v196 = vld [vmem:[#allocation7 + $0x50] sm:$0xff]
    %v197 = vld [vmem:[#allocation7 + $0x58] sm:$0xff]
    %v198 = vld [vmem:[#allocation7 + $0x60] sm:$0xff]
    %v199 = vld [vmem:[#allocation7 + $0x68] sm:$0xff]
    %v200 = vld [vmem:[#allocation7 + $0x70] sm:$0xff]
    %v201 = vld [vmem:[#allocation7 + $0x78] sm:$0xff]
    %v202 = vld [vmem:[#allocation7 + $0x80] sm:$0xff]
    %v203 = vld [vmem:[#allocation7 + $0x88] sm:$0xff]
    %v204 = vld [vmem:[#allocation7 + $0x90] sm:$0xff]
    %v205 = vld [vmem:[#allocation7 + $0x98] sm:$0xff]
    %v206 = vld [vmem:[#allocation7 + $0xa0] sm:$0xff]
    %v207 = vld [vmem:[#allocation7 + $0xa8] sm:$0xff]
    %v208 = vld [vmem:[#allocation7 + $0xb0] sm:$0xff]
    %v209 = vld [vmem:[#allocation7 + $0xb8] sm:$0xff]
    %v210 = vld [vmem:[#allocation7 + $0xc0] sm:$0xff]
    %v211 = vld [vmem:[#allocation7 + $0xc8] sm:$0xff]
    %v212 = vld [vmem:[#allocation7 + $0xd0] sm:$0xff]
    %v213 = vld [vmem:[#allocation7 + $0xd8] sm:$0xff]
    %v214 = vld [vmem:[#allocation7 + $0xe0] sm:$0xff]
    %v215 = vld [vmem:[#allocation7 + $0xe8] sm:$0xff]
    %v216 = vld [vmem:[#allocation7 + $0xf0] sm:$0xff]
    %v217 = vld [vmem:[#allocation7 + $0xf8] sm:$0xff]
    %v218 = vld [vmem:[#allocation7 + $0x100] sm:$0xff]
    %v219 = vld [vmem:[#allocation7 + $0x108] sm:$0xff]
    %v220 = vld [vmem:[#allocation7 + $0x110] sm:$0xff]
    %v221 = vld [vmem:[#allocation7 + $0x118] sm:$0xff]
    %v222 = vld [vmem:[#allocation7 + $0x120] sm:$0xff]
    %v223 = vld [vmem:[#allocation7 + $0x128] sm:$0xff]
    %v224 = vld [vmem:[#allocation7 + $0x130] sm:$0xff]
    %v225 = vld [vmem:[#allocation7 + $0x138] sm:$0xff]
    %v226 = vld [vmem:[#allocation7 + $0x140] sm:$0xff]
    %v227 = vld [vmem:[#allocation7 + $0x148] sm:$0xff]
    %v228 = vld [vmem:[#allocation7 + $0x150] sm:$0xff]
    %v229 = vld [vmem:[#allocation7 + $0x158] sm:$0xff]
    %v230 = vld [vmem:[#allocation7 + $0x160] sm:$0xff]
    %v231 = vld [vmem:[#allocation7 + $0x168] sm:$0xff]
    %v232 = vld [vmem:[#allocation7 + $0x170] sm:$0xff]
    %v233 = vld [vmem:[#allocation7 + $0x178] sm:$0xff]
    %v234 = vld [vmem:[#allocation7 + $0x180] sm:$0xff]
    %v235 = vld [vmem:[#allocation7 + $0x188] sm:$0xff]
    %v236 = vld [vmem:[#allocation7 + $0x190] sm:$0xff]
    %v237 = vld [vmem:[#allocation7 + $0x198] sm:$0xff]
    %v238 = vld [vmem:[#allocation7 + $0x1a0] sm:$0xff]
    %v239 = vld [vmem:[#allocation7 + $0x1a8] sm:$0xff]
    %v240 = vld [vmem:[#allocation7 + $0x1b0] sm:$0xff]
    %v241 = vld [vmem:[#allocation7 + $0x1b8] sm:$0xff]
    %v242 = vld [vmem:[#allocation7 + $0x1c0] sm:$0xff]
    %v243 = vld [vmem:[#allocation7 + $0x1c8] sm:$0xff]
    %v244 = vld [vmem:[#allocation7 + $0x1d0] sm:$0xff]
    %v245 = vld [vmem:[#allocation7 + $0x1d8] sm:$0xff]
    %v246 = vld [vmem:[#allocation7 + $0x1e0] sm:$0xff]
    %v247 = vld [vmem:[#allocation7 + $0x1e8] sm:$0xff]
    %v248 = vld [vmem:[#allocation7 + $0x1f0] sm:$0xff]
    %v249 = vld [vmem:[#allocation7 + $0x1f8] sm:$0xff]
    %v250 = vld [vmem:[#allocation7 + $0x200] sm:$0xff]
    %v251 = vld [vmem:[#allocation7 + $0x208] sm:$0xff]
    %v252 = vld [vmem:[#allocation7 + $0x210] sm:$0xff]
    %v253 = vld [vmem:[#allocation7 + $0x218] sm:$0xff]
    %v254 = vld [vmem:[#allocation7 + $0x220] sm:$0xff]
    %v255 = vld [vmem:[#allocation7 + $0x228] sm:$0xff]
    %v256 = vld [vmem:[#allocation7 + $0x230] sm:$0xff]
    %v257 = vld [vmem:[#allocation7 + $0x238] sm:$0xff]
    %v258 = vld [vmem:[#allocation7 + $0x240] sm:$0xff]
    %v259 = vld [vmem:[#allocation7 + $0x248] sm:$0xff]
    %v260 = vld [vmem:[#allocation7 + $0x250] sm:$0xff]
    %v261 = vld [vmem:[#allocation7 + $0x258] sm:$0xff]
    %v262 = vld [vmem:[#allocation7 + $0x260] sm:$0xff]
    %v263 = vld [vmem:[#allocation7 + $0x268] sm:$0xff]
    %v264 = vld [vmem:[#allocation7 + $0x270] sm:$0xff]
    %v265 = vld [vmem:[#allocation7 + $0x278] sm:$0xff]
    %v266 = vld [vmem:[#allocation8] sm:$0xff]
    %v267 = vld [vmem:[#allocation8 + $0x8] sm:$0x3]
    %v270 = vperm.slane %v266, 0
    %v271 = vperm.slane %v266, 1
    %v272 = vperm.slane %v266, 2
    %v273 = vperm.slane %v266, 3
    %v274 = vperm.slane %v266, 4
    %v275 = vperm.slane %v266, 5
    %v276 = vperm.slane %v266, 6
    %v277 = vperm.slane %v266, 7
    %v278 = vperm.slane %v267, 0
    %v279 = vperm.slane %v267, 1
    %v370 = vunpack.c.l.b16 %v186
    %v371 = vunpack.c.h.b16 %v186
    %v372 = vunpack.c.l.b16 %v187
    %v373 = vunpack.c.h.b16 %v187
    %v374 = vunpack.c.l.b16 %v188
    %v375 = vunpack.c.h.b16 %v188
    %v376 = vunpack.c.l.b16 %v189
    %v377 = vunpack.c.h.b16 %v189
    %v378 = vunpack.c.l.b16 %v190
    %v379 = vunpack.c.h.b16 %v190
    %v380 = vunpack.c.l.b16 %v191
    %v381 = vunpack.c.h.b16 %v191
    %v382 = vunpack.c.l.b16 %v192
    %v383 = vunpack.c.h.b16 %v192
    %v384 = vunpack.c.l.b16 %v193
    %v385 = vunpack.c.h.b16 %v193
    %v386 = vunpack.c.l.b16 %v194
    %v387 = vunpack.c.h.b16 %v194
    %v388 = vunpack.c.l.b16 %v195
    %v389 = vunpack.c.h.b16 %v195
    %v390 = vunpack.c.l.b16 %v196
    %v391 = vunpack.c.h.b16 %v196
    %v392 = vunpack.c.l.b16 %v197
    %v393 = vunpack.c.h.b16 %v197
    %v394 = vunpack.c.l.b16 %v198
    %v395 = vunpack.c.h.b16 %v198
    %v396 = vunpack.c.l.b16 %v199
    %v397 = vunpack.c.h.b16 %v199
    %v398 = vunpack.c.l.b16 %v200
    %v399 = vunpack.c.h.b16 %v200
    %v400 = vunpack.c.l.b16 %v201
    %v401 = vunpack.c.h.b16 %v201
    %v402 = vunpack.c.l.b16 %v202
    %v403 = vunpack.c.h.b16 %v202
    %v404 = vunpack.c.l.b16 %v203
    %v405 = vunpack.c.h.b16 %v203
    %v406 = vunpack.c.l.b16 %v204
    %v407 = vunpack.c.h.b16 %v204
    %v408 = vunpack.c.l.b16 %v205
    %v409 = vunpack.c.h.b16 %v205
    %v410 = vunpack.c.l.b16 %v206
    %v411 = vunpack.c.h.b16 %v206
    %v412 = vunpack.c.l.b16 %v207
    %v413 = vunpack.c.h.b16 %v207
    %v414 = vunpack.c.l.b16 %v208
    %v415 = vunpack.c.h.b16 %v208
    %v416 = vunpack.c.l.b16 %v209
    %v417 = vunpack.c.h.b16 %v209
    %v418 = vunpack.c.l.b16 %v210
    %v419 = vunpack.c.h.b16 %v210
    %v420 = vunpack.c.l.b16 %v211
    %v421 = vunpack.c.h.b16 %v211
    %v422 = vunpack.c.l.b16 %v212
    %v423 = vunpack.c.h.b16 %v212
    %v424 = vunpack.c.l.b16 %v213
    %v425 = vunpack.c.h.b16 %v213
    %v426 = vunpack.c.l.b16 %v214
    %v427 = vunpack.c.h.b16 %v214
    %v428 = vunpack.c.l.b16 %v215
    %v429 = vunpack.c.h.b16 %v215
    %v430 = vunpack.c.l.b16 %v216
    %v431 = vunpack.c.h.b16 %v216
    %v432 = vunpack.c.l.b16 %v217
    %v433 = vunpack.c.h.b16 %v217
    %v434 = vunpack.c.l.b16 %v218
    %v435 = vunpack.c.h.b16 %v218
    %v436 = vunpack.c.l.b16 %v219
    %v437 = vunpack.c.h.b16 %v219
    %v438 = vunpack.c.l.b16 %v220
    %v439 = vunpack.c.h.b16 %v220
    %v440 = vunpack.c.l.b16 %v221
    %v441 = vunpack.c.h.b16 %v221
    %v442 = vunpack.c.l.b16 %v222
    %v443 = vunpack.c.h.b16 %v222
    %v444 = vunpack.c.l.b16 %v223
    %v445 = vunpack.c.h.b16 %v223
    %v446 = vunpack.c.l.b16 %v224
    %v447 = vunpack.c.h.b16 %v224
    %v448 = vunpack.c.l.b16 %v225
    %v449 = vunpack.c.h.b16 %v225
    %v450 = vunpack.c.l.b16 %v226
    %v451 = vunpack.c.h.b16 %v226
    %v452 = vunpack.c.l.b16 %v227
    %v453 = vunpack.c.h.b16 %v227
    %v454 = vunpack.c.l.b16 %v228
    %v455 = vunpack.c.h.b16 %v228
    %v456 = vunpack.c.l.b16 %v229
    %v457 = vunpack.c.h.b16 %v229
    %v458 = vunpack.c.l.b16 %v230
    %v459 = vunpack.c.h.b16 %v230
    %v460 = vunpack.c.l.b16 %v231
    %v461 = vunpack.c.h.b16 %v231
    %v462 = vunpack.c.l.b16 %v232
    %v463 = vunpack.c.h.b16 %v232
    %v464 = vunpack.c.l.b16 %v233
    %v465 = vunpack.c.h.b16 %v233
    %v466 = vunpack.c.l.b16 %v234
    %v467 = vunpack.c.h.b16 %v234
    %v468 = vunpack.c.l.b16 %v235
    %v469 = vunpack.c.h.b16 %v235
    %v470 = vunpack.c.l.b16 %v236
    %v471 = vunpack.c.h.b16 %v236
    %v472 = vunpack.c.l.b16 %v237
    %v473 = vunpack.c.h.b16 %v237
    %v474 = vunpack.c.l.b16 %v238
    %v475 = vunpack.c.h.b16 %v238
    %v476 = vunpack.c.l.b16 %v239
    %v477 = vunpack.c.h.b16 %v239
    %v478 = vunpack.c.l.b16 %v240
    %v479 = vunpack.c.h.b16 %v240
    %v480 = vunpack.c.l.b16 %v241
    %v481 = vunpack.c.h.b16 %v241
    %v482 = vunpack.c.l.b16 %v242
    %v483 = vunpack.c.h.b16 %v242
    %v484 = vunpack.c.l.b16 %v243
    %v485 = vunpack.c.h.b16 %v243
    %v486 = vunpack.c.l.b16 %v244
    %v487 = vunpack.c.h.b16 %v244
    %v488 = vunpack.c.l.b16 %v245
    %v489 = vunpack.c.h.b16 %v245
    %v490 = vunpack.c.l.b16 %v246
    %v491 = vunpack.c.h.b16 %v246
    %v492 = vunpack.c.l.b16 %v247
    %v493 = vunpack.c.h.b16 %v247
    %v494 = vunpack.c.l.b16 %v248
    %v495 = vunpack.c.h.b16 %v248
    %v496 = vunpack.c.l.b16 %v249
    %v497 = vunpack.c.h.b16 %v249
    %v498 = vunpack.c.l.b16 %v250
    %v499 = vunpack.c.h.b16 %v250
    %v500 = vunpack.c.l.b16 %v251
    %v501 = vunpack.c.h.b16 %v251
    %v502 = vunpack.c.l.b16 %v252
    %v503 = vunpack.c.h.b16 %v252
    %v504 = vunpack.c.l.b16 %v253
    %v505 = vunpack.c.h.b16 %v253
    %v506 = vunpack.c.l.b16 %v254
    %v507 = vunpack.c.h.b16 %v254
    %v508 = vunpack.c.l.b16 %v255
    %v509 = vunpack.c.h.b16 %v255
    %v510 = vunpack.c.l.b16 %v256
    %v511 = vunpack.c.h.b16 %v256
    %v512 = vunpack.c.l.b16 %v257
    %v513 = vunpack.c.h.b16 %v257
    %v514 = vunpack.c.l.b16 %v258
    %v515 = vunpack.c.h.b16 %v258
    %v516 = vunpack.c.l.b16 %v259
    %v517 = vunpack.c.h.b16 %v259
    %v518 = vunpack.c.l.b16 %v260
    %v519 = vunpack.c.h.b16 %v260
    %v520 = vunpack.c.l.b16 %v261
    %v521 = vunpack.c.h.b16 %v261
    %v522 = vunpack.c.l.b16 %v262
    %v523 = vunpack.c.h.b16 %v262
    %v524 = vunpack.c.l.b16 %v263
    %v525 = vunpack.c.h.b16 %v263
    %v526 = vunpack.c.l.b16 %v264
    %v527 = vunpack.c.h.b16 %v264
    %v528 = vunpack.c.l.b16 %v265
    %v529 = vunpack.c.h.b16 %v265
    %v530 = vpack.c.b16 %v380, %v370
    %v531 = vpack.c.b16 %v381, %v371
    %v532 = vpack.c.b16 %v382, %v372
    %v533 = vpack.c.b16 %v383, %v373
    %v534 = vpack.c.b16 %v384, %v374
    %v535 = vpack.c.b16 %v385, %v375
    %v536 = vpack.c.b16 %v386, %v376
    %v537 = vpack.c.b16 %v387, %v377
    %v538 = vpack.c.b16 %v388, %v378
    %v539 = vpack.c.b16 %v389, %v379
    %v540 = vpack.c.b16 %v400, %v390
    %v541 = vpack.c.b16 %v401, %v391
    %v542 = vpack.c.b16 %v402, %v392
    %v543 = vpack.c.b16 %v403, %v393
    %v544 = vpack.c.b16 %v404, %v394
    %v545 = vpack.c.b16 %v405, %v395
    %v546 = vpack.c.b16 %v406, %v396
    %v547 = vpack.c.b16 %v407, %v397
    %v548 = vpack.c.b16 %v408, %v398
    %v549 = vpack.c.b16 %v409, %v399
    %v550 = vpack.c.b16 %v420, %v410
    %v551 = vpack.c.b16 %v421, %v411
    %v552 = vpack.c.b16 %v422, %v412
    %v553 = vpack.c.b16 %v423, %v413
    %v554 = vpack.c.b16 %v424, %v414
    %v555 = vpack.c.b16 %v425, %v415
    %v556 = vpack.c.b16 %v426, %v416
    %v557 = vpack.c.b16 %v427, %v417
    %v558 = vpack.c.b16 %v428, %v418
    %v559 = vpack.c.b16 %v429, %v419
    %v560 = vpack.c.b16 %v440, %v430
    %v561 = vpack.c.b16 %v441, %v431
    %v562 = vpack.c.b16 %v442, %v432
    %v563 = vpack.c.b16 %v443, %v433
    %v564 = vpack.c.b16 %v444, %v434
    %v565 = vpack.c.b16 %v445, %v435
    %v566 = vpack.c.b16 %v446, %v436
    %v567 = vpack.c.b16 %v447, %v437
    %v568 = vpack.c.b16 %v448, %v438
    %v569 = vpack.c.b16 %v449, %v439
    %v570 = vpack.c.b16 %v460, %v450
    %v571 = vpack.c.b16 %v461, %v451
    %v572 = vpack.c.b16 %v462, %v452
    %v573 = vpack.c.b16 %v463, %v453
    %v574 = vpack.c.b16 %v464, %v454
    %v575 = vpack.c.b16 %v465, %v455
    %v576 = vpack.c.b16 %v466, %v456
    %v577 = vpack.c.b16 %v467, %v457
    %v578 = vpack.c.b16 %v468, %v458
    %v579 = vpack.c.b16 %v469, %v459
    %v580 = vpack.c.b16 %v480, %v470
    %v581 = vpack.c.b16 %v481, %v471
    %v582 = vpack.c.b16 %v482, %v472
    %v583 = vpack.c.b16 %v483, %v473
    %v584 = vpack.c.b16 %v484, %v474
    %v585 = vpack.c.b16 %v485, %v475
    %v586 = vpack.c.b16 %v486, %v476
    %v587 = vpack.c.b16 %v487, %v477
    %v588 = vpack.c.b16 %v488, %v478
    %v589 = vpack.c.b16 %v489, %v479
    %v590 = vpack.c.b16 %v500, %v490
    %v591 = vpack.c.b16 %v501, %v491
    %v592 = vpack.c.b16 %v502, %v492
    %v593 = vpack.c.b16 %v503, %v493
    %v594 = vpack.c.b16 %v504, %v494
    %v595 = vpack.c.b16 %v505, %v495
    %v596 = vpack.c.b16 %v506, %v496
    %v597 = vpack.c.b16 %v507, %v497
    %v598 = vpack.c.b16 %v508, %v498
    %v599 = vpack.c.b16 %v509, %v499
    %v600 = vpack.c.b16 %v520, %v510
    %v601 = vpack.c.b16 %v521, %v511
    %v602 = vpack.c.b16 %v522, %v512
    %v603 = vpack.c.b16 %v523, %v513
    %v604 = vpack.c.b16 %v524, %v514
    %v605 = vpack.c.b16 %v525, %v515
    %v606 = vpack.c.b16 %v526, %v516
    %v607 = vpack.c.b16 %v527, %v517
    %v608 = vpack.c.b16 %v528, %v518
    %v609 = vpack.c.b16 %v529, %v519
    %690 = vmatpush.bf16.msra.mxu0 %v600
    %691 = vmatpush.bf16.msra.mxu0 %v590
    %692 = vmatpush.bf16.msra.mxu0 %v580
    %693 = vmatpush.bf16.msra.mxu0 %v570
    %694 = vmatpush.bf16.msra.mxu0 %v560
    %695 = vmatpush.bf16.msra.mxu0 %v550
    %696 = vmatpush.bf16.msra.mxu0 %v540
    %697 = vmatpush.bf16.msra.mxu0 %v530
    %698 = vmatmul.bf16.gmra.mxu0 %v185
    %v699 = vpop.f32.mrf.mxu0
    %v700 = vadd.f32 %v270, %v699
    %v701 = vpop.f32.mrf.mxu0
    %702 = vdwg.mxu0
    %703 = vmatpush.bf16.msra.mxu0 %v601
    %704 = vmatpush.bf16.msra.mxu0 %v591
    %705 = vmatpush.bf16.msra.mxu0 %v581
    %706 = vmatpush.bf16.msra.mxu0 %v571
    %707 = vmatpush.bf16.msra.mxu0 %v561
    %708 = vmatpush.bf16.msra.mxu0 %v551
    %709 = vmatpush.bf16.msra.mxu0 %v541
    %710 = vmatpush.bf16.msra.mxu0 %v531
    %711 = vmatmul.bf16.gmra.mxu0 %v185
    %v712 = vpop.f32.mrf.mxu0
    %v713 = vadd.f32 %v271, %v712
    %v714 = vpop.f32.mrf.mxu0
    %715 = vdwg.mxu0
    %716 = vmatpush.bf16.msra.mxu0 %v602
    %717 = vmatpush.bf16.msra.mxu0 %v592
    %718 = vmatpush.bf16.msra.mxu0 %v582
    %719 = vmatpush.bf16.msra.mxu0 %v572
    %720 = vmatpush.bf16.msra.mxu0 %v562
    %721 = vmatpush.bf16.msra.mxu0 %v552
    %722 = vmatpush.bf16.msra.mxu0 %v542
    %723 = vmatpush.bf16.msra.mxu0 %v532
    %724 = vmatmul.bf16.gmra.mxu0 %v185
    %v725 = vpop.f32.mrf.mxu0
    %v726 = vadd.f32 %v272, %v725
    %v727 = vpop.f32.mrf.mxu0
    %728 = vdwg.mxu0
    %729 = vmatpush.bf16.msra.mxu0 %v603
    %730 = vmatpush.bf16.msra.mxu0 %v593
    %731 = vmatpush.bf16.msra.mxu0 %v583
    %732 = vmatpush.bf16.msra.mxu0 %v573
    %733 = vmatpush.bf16.msra.mxu0 %v563
    %734 = vmatpush.bf16.msra.mxu0 %v553
    %735 = vmatpush.bf16.msra.mxu0 %v543
    %736 = vmatpush.bf16.msra.mxu0 %v533
    %737 = vmatmul.bf16.gmra.mxu0 %v185
    %v738 = vpop.f32.mrf.mxu0
    %v739 = vadd.f32 %v273, %v738
    %v740 = vpop.f32.mrf.mxu0
    %741 = vdwg.mxu0
    %742 = vmatpush.bf16.msra.mxu0 %v604
    %743 = vmatpush.bf16.msra.mxu0 %v594
    %744 = vmatpush.bf16.msra.mxu0 %v584
    %745 = vmatpush.bf16.msra.mxu0 %v574
    %746 = vmatpush.bf16.msra.mxu0 %v564
    %747 = vmatpush.bf16.msra.mxu0 %v554
    %748 = vmatpush.bf16.msra.mxu0 %v544
    %749 = vmatpush.bf16.msra.mxu0 %v534
    %750 = vmatmul.bf16.gmra.mxu0 %v185
    %v751 = vpop.f32.mrf.mxu0
    %v752 = vadd.f32 %v274, %v751
    %v753 = vpop.f32.mrf.mxu0
    %754 = vdwg.mxu0
    %755 = vmatpush.bf16.msra.mxu0 %v605
    %756 = vmatpush.bf16.msra.mxu0 %v595
    %757 = vmatpush.bf16.msra.mxu0 %v585
    %758 = vmatpush.bf16.msra.mxu0 %v575
    %759 = vmatpush.bf16.msra.mxu0 %v565
    %760 = vmatpush.bf16.msra.mxu0 %v555
    %761 = vmatpush.bf16.msra.mxu0 %v545
    %762 = vmatpush.bf16.msra.mxu0 %v535
    %763 = vmatmul.bf16.gmra.mxu0 %v185
    %v764 = vpop.f32.mrf.mxu0
    %v765 = vadd.f32 %v275, %v764
    %v766 = vpop.f32.mrf.mxu0
    %767 = vdwg.mxu0
    %768 = vmatpush.bf16.msra.mxu0 %v606
    %769 = vmatpush.bf16.msra.mxu0 %v596
    %770 = vmatpush.bf16.msra.mxu0 %v586
    %771 = vmatpush.bf16.msra.mxu0 %v576
    %772 = vmatpush.bf16.msra.mxu0 %v566
    %773 = vmatpush.bf16.msra.mxu0 %v556
    %774 = vmatpush.bf16.msra.mxu0 %v546
    %775 = vmatpush.bf16.msra.mxu0 %v536
    %776 = vmatmul.bf16.gmra.mxu0 %v185
    %v777 = vpop.f32.mrf.mxu0
    %v778 = vadd.f32 %v276, %v777
    %v779 = vpop.f32.mrf.mxu0
    %780 = vdwg.mxu0
    %781 = vmatpush.bf16.msra.mxu0 %v607
    %782 = vmatpush.bf16.msra.mxu0 %v597
    %783 = vmatpush.bf16.msra.mxu0 %v587
    %784 = vmatpush.bf16.msra.mxu0 %v577
    %785 = vmatpush.bf16.msra.mxu0 %v567
    %786 = vmatpush.bf16.msra.mxu0 %v557
    %787 = vmatpush.bf16.msra.mxu0 %v547
    %788 = vmatpush.bf16.msra.mxu0 %v537
    %789 = vmatmul.bf16.gmra.mxu0 %v185
    %v790 = vpop.f32.mrf.mxu0
    %v791 = vadd.f32 %v277, %v790
    %v792 = vpop.f32.mrf.mxu0
    %793 = vdwg.mxu0
    %794 = vmatpush.bf16.msra.mxu0 %v608
    %795 = vmatpush.bf16.msra.mxu0 %v598
    %796 = vmatpush.bf16.msra.mxu0 %v588
    %797 = vmatpush.bf16.msra.mxu0 %v578
    %798 = vmatpush.bf16.msra.mxu0 %v568
    %799 = vmatpush.bf16.msra.mxu0 %v558
    %800 = vmatpush.bf16.msra.mxu0 %v548
    %801 = vmatpush.bf16.msra.mxu0 %v538
    %802 = vmatmul.bf16.gmra.mxu0 %v185
    %v803 = vpop.f32.mrf.mxu0
    %v804 = vadd.f32 %v278, %v803
    %v805 = vpop.f32.mrf.mxu0
    %806 = vdwg.mxu0
    %807 = vmatpush.bf16.msra.mxu0 %v609
    %808 = vmatpush.bf16.msra.mxu0 %v599
    %809 = vmatpush.bf16.msra.mxu0 %v589
    %810 = vmatpush.bf16.msra.mxu0 %v579
    %811 = vmatpush.bf16.msra.mxu0 %v569
    %812 = vmatpush.bf16.msra.mxu0 %v559
    %813 = vmatpush.bf16.msra.mxu0 %v549
    %814 = vmatpush.bf16.msra.mxu0 %v539
    %815 = vmatmul.bf16.gmra.mxu0 %v185
    %v816 = vpop.f32.mrf.mxu0
    %v817 = vadd.f32 %v279, %v816
    %v818 = vpop.f32.mrf.mxu0
    %819 = vdwg.mxu0
    %v820 = vtanh.pop %v700
    %v821 = vtanh.pop %v713
    %v822 = vtanh.pop %v726
    %v823 = vtanh.pop %v739
    %v824 = vtanh.pop %v752
    %v825 = vtanh.pop %v765
    %v826 = vtanh.pop %v778
    %v827 = vtanh.pop %v791
    %v828 = vtanh.pop %v804
    %v829 = vtanh.pop %v817
    %v830 = vpack.c.bf16 %v820, %v820
    %v831 = vpack.c.bf16 %v821, %v821
    %v832 = vpack.c.bf16 %v822, %v822
    %v833 = vpack.c.bf16 %v823, %v823
    %v834 = vpack.c.bf16 %v824, %v824
    %v835 = vpack.c.bf16 %v825, %v825
    %v836 = vpack.c.bf16 %v826, %v826
    %v837 = vpack.c.bf16 %v827, %v827
    %v838 = vpack.c.bf16 %v828, %v828
    %v839 = vpack.c.bf16 %v829, %v829
    %v840 = vld [vmem:[#allocation10] sm:$0xff]
    %v841 = vld [vmem:[#allocation10 + $0x8] sm:$0xff]
    %v842 = vld [vmem:[#allocation10 + $0x10] sm:$0xff]
    %v843 = vld [vmem:[#allocation10 + $0x18] sm:$0xff]
    %v844 = vld [vmem:[#allocation10 + $0x20] sm:$0xff]
    %v845 = vld [vmem:[#allocation10 + $0x28] sm:$0xf]
    %v846 = vld [vmem:[#allocation10 + $0x2c] sm:$0xff]
    %v847 = vld [vmem:[#allocation10 + $0x34] sm:$0xff]
    %v848 = vld [vmem:[#allocation10 + $0x3c] sm:$0xff]
    %v849 = vld [vmem:[#allocation10 + $0x44] sm:$0xff]
    %v850 = vld [vmem:[#allocation10 + $0x4c] sm:$0xff]
    %v851 = vld [vmem:[#allocation10 + $0x54] sm:$0xf]
    %v852 = vld [vmem:[#allocation10 + $0x58] sm:$0xff]
    %v853 = vld [vmem:[#allocation10 + $0x60] sm:$0xff]
    %v854 = vld [vmem:[#allocation10 + $0x68] sm:$0xff]
    %v855 = vld [vmem:[#allocation10 + $0x70] sm:$0xff]
    %v856 = vld [vmem:[#allocation10 + $0x78] sm:$0xff]
    %v857 = vld [vmem:[#allocation10 + $0x80] sm:$0xf]
    %v858 = vld [vmem:[#allocation10 + $0x84] sm:$0xff]
    %v859 = vld [vmem:[#allocation10 + $0x8c] sm:$0xff]
    %v860 = vld [vmem:[#allocation10 + $0x94] sm:$0xff]
    %v861 = vld [vmem:[#allocation10 + $0x9c] sm:$0xff]
    %v862 = vld [vmem:[#allocation10 + $0xa4] sm:$0xff]
    %v863 = vld [vmem:[#allocation10 + $0xac] sm:$0xf]
    %v864 = vld [vmem:[#allocation10 + $0xb0] sm:$0xff]
    %v865 = vld [vmem:[#allocation10 + $0xb8] sm:$0xff]
    %v866 = vld [vmem:[#allocation10 + $0xc0] sm:$0xff]
    %v867 = vld [vmem:[#allocation10 + $0xc8] sm:$0xff]
    %v868 = vld [vmem:[#allocation10 + $0xd0] sm:$0xff]
    %v869 = vld [vmem:[#allocation10 + $0xd8] sm:$0xf]
    %v870 = vld [vmem:[#allocation10 + $0xdc] sm:$0xff]
    %v871 = vld [vmem:[#allocation10 + $0xe4] sm:$0xff]
    %v872 = vld [vmem:[#allocation10 + $0xec] sm:$0xff]
    %v873 = vld [vmem:[#allocation10 + $0xf4] sm:$0xff]
    %v874 = vld [vmem:[#allocation10 + $0xfc] sm:$0xff]
    %v875 = vld [vmem:[#allocation10 + $0x104] sm:$0xf]
    %v876 = vld [vmem:[#allocation10 + $0x108] sm:$0xff]
    %v877 = vld [vmem:[#allocation10 + $0x110] sm:$0xff]
    %v878 = vld [vmem:[#allocation10 + $0x118] sm:$0xff]
    %v879 = vld [vmem:[#allocation10 + $0x120] sm:$0xff]
    %v880 = vld [vmem:[#allocation10 + $0x128] sm:$0xff]
    %v881 = vld [vmem:[#allocation10 + $0x130] sm:$0xf]
    %v882 = vld [vmem:[#allocation10 + $0x134] sm:$0xff]
    %v883 = vld [vmem:[#allocation10 + $0x13c] sm:$0xff]
    %v884 = vld [vmem:[#allocation10 + $0x144] sm:$0xff]
    %v885 = vld [vmem:[#allocation10 + $0x14c] sm:$0xff]
    %v886 = vld [vmem:[#allocation10 + $0x154] sm:$0xff]
    %v887 = vld [vmem:[#allocation10 + $0x15c] sm:$0xf]
    %v888 = vld [vmem:[#allocation10 + $0x160] sm:$0xff]
    %v889 = vld [vmem:[#allocation10 + $0x168] sm:$0xff]
    %v890 = vld [vmem:[#allocation10 + $0x170] sm:$0xff]
    %v891 = vld [vmem:[#allocation10 + $0x178] sm:$0xff]
    %v892 = vld [vmem:[#allocation10 + $0x180] sm:$0xff]
    %v893 = vld [vmem:[#allocation10 + $0x188] sm:$0xf]
    %v894 = vld [vmem:[#allocation10 + $0x18c] sm:$0xff]
    %v895 = vld [vmem:[#allocation10 + $0x194] sm:$0xff]
    %v896 = vld [vmem:[#allocation10 + $0x19c] sm:$0xff]
    %v897 = vld [vmem:[#allocation10 + $0x1a4] sm:$0xff]
    %v898 = vld [vmem:[#allocation10 + $0x1ac] sm:$0xff]
    %v899 = vld [vmem:[#allocation10 + $0x1b4] sm:$0xf]
    %v900 = vld [vmem:[#allocation10 + $0x1b8] sm:$0xff]
    %v901 = vld [vmem:[#allocation10 + $0x1c0] sm:$0xff]
    %v902 = vld [vmem:[#allocation10 + $0x1c8] sm:$0xff]
    %v903 = vld [vmem:[#allocation10 + $0x1d0] sm:$0xff]
    %v904 = vld [vmem:[#allocation10 + $0x1d8] sm:$0xff]
    %v905 = vld [vmem:[#allocation10 + $0x1e0] sm:$0xf]
    %v906 = vld [vmem:[#allocation10 + $0x1e4] sm:$0xff]
    %v907 = vld [vmem:[#allocation10 + $0x1ec] sm:$0xff]
    %v908 = vld [vmem:[#allocation10 + $0x1f4] sm:$0xff]
    %v909 = vld [vmem:[#allocation10 + $0x1fc] sm:$0xff]
    %v910 = vld [vmem:[#allocation10 + $0x204] sm:$0xff]
    %v911 = vld [vmem:[#allocation10 + $0x20c] sm:$0xf]
    %v912 = vld [vmem:[#allocation10 + $0x210] sm:$0xff]
    %v913 = vld [vmem:[#allocation10 + $0x218] sm:$0xff]
    %v914 = vld [vmem:[#allocation10 + $0x220] sm:$0xff]
    %v915 = vld [vmem:[#allocation10 + $0x228] sm:$0xff]
    %v916 = vld [vmem:[#allocation10 + $0x230] sm:$0xff]
    %v917 = vld [vmem:[#allocation10 + $0x238] sm:$0xf]
    %v918 = vld [vmem:[#allocation10 + $0x23c] sm:$0xff]
    %v919 = vld [vmem:[#allocation10 + $0x244] sm:$0xff]
    %v920 = vld [vmem:[#allocation10 + $0x24c] sm:$0xff]
    %v921 = vld [vmem:[#allocation10 + $0x254] sm:$0xff]
    %v922 = vld [vmem:[#allocation10 + $0x25c] sm:$0xff]
    %v923 = vld [vmem:[#allocation10 + $0x264] sm:$0xf]
    %v924 = vld [vmem:[#allocation10 + $0x268] sm:$0xff]
    %v925 = vld [vmem:[#allocation10 + $0x270] sm:$0xff]
    %v926 = vld [vmem:[#allocation10 + $0x278] sm:$0xff]
    %v927 = vld [vmem:[#allocation10 + $0x280] sm:$0xff]
    %v928 = vld [vmem:[#allocation10 + $0x288] sm:$0xff]
    %v929 = vld [vmem:[#allocation10 + $0x290] sm:$0xf]
    %v930 = vld [vmem:[#allocation10 + $0x294] sm:$0xff]
    %v931 = vld [vmem:[#allocation10 + $0x29c] sm:$0xff]
    %v932 = vld [vmem:[#allocation10 + $0x2a4] sm:$0xff]
    %v933 = vld [vmem:[#allocation10 + $0x2ac] sm:$0xff]
    %v934 = vld [vmem:[#allocation10 + $0x2b4] sm:$0xff]
    %v935 = vld [vmem:[#allocation10 + $0x2bc] sm:$0xf]
    %v936 = vld [vmem:[#allocation10 + $0x2c0] sm:$0xff]
    %v937 = vld [vmem:[#allocation10 + $0x2c8] sm:$0xff]
    %v938 = vld [vmem:[#allocation10 + $0x2d0] sm:$0xff]
    %v939 = vld [vmem:[#allocation10 + $0x2d8] sm:$0xff]
    %v940 = vld [vmem:[#allocation10 + $0x2e0] sm:$0xff]
    %v941 = vld [vmem:[#allocation10 + $0x2e8] sm:$0xf]
    %v942 = vld [vmem:[#allocation10 + $0x2ec] sm:$0xff]
    %v943 = vld [vmem:[#allocation10 + $0x2f4] sm:$0xff]
    %v944 = vld [vmem:[#allocation10 + $0x2fc] sm:$0xff]
    %v945 = vld [vmem:[#allocation10 + $0x304] sm:$0xff]
    %v946 = vld [vmem:[#allocation10 + $0x30c] sm:$0xff]
    %v947 = vld [vmem:[#allocation10 + $0x314] sm:$0xf]
    %v948 = vld [vmem:[#allocation10 + $0x318] sm:$0xff]
    %v949 = vld [vmem:[#allocation10 + $0x320] sm:$0xff]
    %v950 = vld [vmem:[#allocation10 + $0x328] sm:$0xff]
    %v951 = vld [vmem:[#allocation10 + $0x330] sm:$0xff]
    %v952 = vld [vmem:[#allocation10 + $0x338] sm:$0xff]
    %v953 = vld [vmem:[#allocation10 + $0x340] sm:$0xf]
    %v954 = vld [vmem:[#allocation10 + $0x344] sm:$0xff]
    %v955 = vld [vmem:[#allocation10 + $0x34c] sm:$0xff]
    %v956 = vld [vmem:[#allocation10 + $0x354] sm:$0xff]
    %v957 = vld [vmem:[#allocation10 + $0x35c] sm:$0xff]
    %v958 = vld [vmem:[#allocation10 + $0x364] sm:$0xff]
    %v959 = vld [vmem:[#allocation10 + $0x36c] sm:$0xf]
    %v960 = vld [vmem:[#allocation10 + $0x370] sm:$0xff]
    %v961 = vld [vmem:[#allocation10 + $0x378] sm:$0xff]
    %v962 = vld [vmem:[#allocation10 + $0x380] sm:$0xff]
    %v963 = vld [vmem:[#allocation10 + $0x388] sm:$0xff]
    %v964 = vld [vmem:[#allocation10 + $0x390] sm:$0xff]
    %v965 = vld [vmem:[#allocation10 + $0x398] sm:$0xf]
    %v966 = vld [vmem:[#allocation10 + $0x39c] sm:$0xff]
    %v967 = vld [vmem:[#allocation10 + $0x3a4] sm:$0xff]
    %v968 = vld [vmem:[#allocation10 + $0x3ac] sm:$0xff]
    %v969 = vld [vmem:[#allocation10 + $0x3b4] sm:$0xff]
    %v970 = vld [vmem:[#allocation10 + $0x3bc] sm:$0xff]
    %v971 = vld [vmem:[#allocation10 + $0x3c4] sm:$0xf]
    %v972 = vld [vmem:[#allocation10 + $0x3c8] sm:$0xff]
    %v973 = vld [vmem:[#allocation10 + $0x3d0] sm:$0xff]
    %v974 = vld [vmem:[#allocation10 + $0x3d8] sm:$0xff]
    %v975 = vld [vmem:[#allocation10 + $0x3e0] sm:$0xff]
    %v976 = vld [vmem:[#allocation10 + $0x3e8] sm:$0xff]
    %v977 = vld [vmem:[#allocation10 + $0x3f0] sm:$0xf]
    %v978 = vld [vmem:[#allocation10 + $0x3f4] sm:$0xff]
    %v979 = vld [vmem:[#allocation10 + $0x3fc] sm:$0xff]
    %v980 = vld [vmem:[#allocation10 + $0x404] sm:$0xff]
    %v981 = vld [vmem:[#allocation10 + $0x40c] sm:$0xff]
    %v982 = vld [vmem:[#allocation10 + $0x414] sm:$0xff]
    %v983 = vld [vmem:[#allocation10 + $0x41c] sm:$0xf]
    %v984 = vld [vmem:[#allocation10 + $0x420] sm:$0xff]
    %v985 = vld [vmem:[#allocation10 + $0x428] sm:$0xff]
    %v986 = vld [vmem:[#allocation10 + $0x430] sm:$0xff]
    %v987 = vld [vmem:[#allocation10 + $0x438] sm:$0xff]
    %v988 = vld [vmem:[#allocation10 + $0x440] sm:$0xff]
    %v989 = vld [vmem:[#allocation10 + $0x448] sm:$0xf]
    %v990 = vld [vmem:[#allocation10 + $0x44c] sm:$0xff]
    %v991 = vld [vmem:[#allocation10 + $0x454] sm:$0xff]
    %v992 = vld [vmem:[#allocation10 + $0x45c] sm:$0xff]
    %v993 = vld [vmem:[#allocation10 + $0x464] sm:$0xff]
    %v994 = vld [vmem:[#allocation10 + $0x46c] sm:$0xff]
    %v995 = vld [vmem:[#allocation10 + $0x474] sm:$0xf]
    %v996 = vld [vmem:[#allocation10 + $0x478] sm:$0xff]
    %v997 = vld [vmem:[#allocation10 + $0x480] sm:$0xff]
    %v998 = vld [vmem:[#allocation10 + $0x488] sm:$0xff]
    %v999 = vld [vmem:[#allocation10 + $0x490] sm:$0xff]
    %v1000 = vld [vmem:[#allocation10 + $0x498] sm:$0xff]
    %v1001 = vld [vmem:[#allocation10 + $0x4a0] sm:$0xf]
    %v1002 = vld [vmem:[#allocation10 + $0x4a4] sm:$0xff]
    %v1003 = vld [vmem:[#allocation10 + $0x4ac] sm:$0xff]
    %v1004 = vld [vmem:[#allocation10 + $0x4b4] sm:$0xff]
    %v1005 = vld [vmem:[#allocation10 + $0x4bc] sm:$0xff]
    %v1006 = vld [vmem:[#allocation10 + $0x4c4] sm:$0xff]
    %v1007 = vld [vmem:[#allocation10 + $0x4cc] sm:$0xf]
    %v1008 = vld [vmem:[#allocation10 + $0x4d0] sm:$0xff]
    %v1009 = vld [vmem:[#allocation10 + $0x4d8] sm:$0xff]
    %v1010 = vld [vmem:[#allocation10 + $0x4e0] sm:$0xff]
    %v1011 = vld [vmem:[#allocation10 + $0x4e8] sm:$0xff]
    %v1012 = vld [vmem:[#allocation10 + $0x4f0] sm:$0xff]
    %v1013 = vld [vmem:[#allocation10 + $0x4f8] sm:$0xf]
    %v1014 = vld [vmem:[#allocation10 + $0x4fc] sm:$0xff]
    %v1015 = vld [vmem:[#allocation10 + $0x504] sm:$0xff]
    %v1016 = vld [vmem:[#allocation10 + $0x50c] sm:$0xff]
    %v1017 = vld [vmem:[#allocation10 + $0x514] sm:$0xff]
    %v1018 = vld [vmem:[#allocation10 + $0x51c] sm:$0xff]
    %v1019 = vld [vmem:[#allocation10 + $0x524] sm:$0xf]
    %v1020 = vld [vmem:[#allocation10 + $0x528] sm:$0xff]
    %v1021 = vld [vmem:[#allocation10 + $0x530] sm:$0xff]
    %v1022 = vld [vmem:[#allocation10 + $0x538] sm:$0xff]
    %v1023 = vld [vmem:[#allocation10 + $0x540] sm:$0xff]
    %v1024 = vld [vmem:[#allocation10 + $0x548] sm:$0xff]
    %v1025 = vld [vmem:[#allocation10 + $0x550] sm:$0xf]
    %v1026 = vld [vmem:[#allocation10 + $0x554] sm:$0xff]
    %v1027 = vld [vmem:[#allocation10 + $0x55c] sm:$0xff]
    %v1028 = vld [vmem:[#allocation10 + $0x564] sm:$0xff]
    %v1029 = vld [vmem:[#allocation10 + $0x56c] sm:$0xff]
    %v1030 = vld [vmem:[#allocation10 + $0x574] sm:$0xff]
    %v1031 = vld [vmem:[#allocation10 + $0x57c] sm:$0xf]
    %v1032 = vld [vmem:[#allocation10 + $0x580] sm:$0xff]
    %v1033 = vld [vmem:[#allocation10 + $0x588] sm:$0xff]
    %v1034 = vld [vmem:[#allocation10 + $0x590] sm:$0xff]
    %v1035 = vld [vmem:[#allocation10 + $0x598] sm:$0xff]
    %v1036 = vld [vmem:[#allocation10 + $0x5a0] sm:$0xff]
    %v1037 = vld [vmem:[#allocation10 + $0x5a8] sm:$0xf]
    %v1038 = vld [vmem:[#allocation10 + $0x5ac] sm:$0xff]
    %v1039 = vld [vmem:[#allocation10 + $0x5b4] sm:$0xff]
    %v1040 = vld [vmem:[#allocation10 + $0x5bc] sm:$0xff]
    %v1041 = vld [vmem:[#allocation10 + $0x5c4] sm:$0xff]
    %v1042 = vld [vmem:[#allocation10 + $0x5cc] sm:$0xff]
    %v1043 = vld [vmem:[#allocation10 + $0x5d4] sm:$0xf]
    %v1044 = vld [vmem:[#allocation10 + $0x5d8] sm:$0xff]
    %v1045 = vld [vmem:[#allocation10 + $0x5e0] sm:$0xff]
    %v1046 = vld [vmem:[#allocation10 + $0x5e8] sm:$0xff]
    %v1047 = vld [vmem:[#allocation10 + $0x5f0] sm:$0xff]
    %v1048 = vld [vmem:[#allocation10 + $0x5f8] sm:$0xff]
    %v1049 = vld [vmem:[#allocation10 + $0x600] sm:$0xf]
    %v1050 = vld [vmem:[#allocation10 + $0x604] sm:$0xff]
    %v1051 = vld [vmem:[#allocation10 + $0x60c] sm:$0xff]
    %v1052 = vld [vmem:[#allocation10 + $0x614] sm:$0xff]
    %v1053 = vld [vmem:[#allocation10 + $0x61c] sm:$0xff]
    %v1054 = vld [vmem:[#allocation10 + $0x624] sm:$0xff]
    %v1055 = vld [vmem:[#allocation10 + $0x62c] sm:$0xf]
    %v1056 = vld [vmem:[#allocation10 + $0x630] sm:$0xff]
    %v1057 = vld [vmem:[#allocation10 + $0x638] sm:$0xff]
    %v1058 = vld [vmem:[#allocation10 + $0x640] sm:$0xff]
    %v1059 = vld [vmem:[#allocation10 + $0x648] sm:$0xff]
    %v1060 = vld [vmem:[#allocation10 + $0x650] sm:$0xff]
    %v1061 = vld [vmem:[#allocation10 + $0x658] sm:$0xf]
    %v1062 = vld [vmem:[#allocation10 + $0x65c] sm:$0xff]
    %v1063 = vld [vmem:[#allocation10 + $0x664] sm:$0xff]
    %v1064 = vld [vmem:[#allocation10 + $0x66c] sm:$0xff]
    %v1065 = vld [vmem:[#allocation10 + $0x674] sm:$0xff]
    %v1066 = vld [vmem:[#allocation10 + $0x67c] sm:$0xff]
    %v1067 = vld [vmem:[#allocation10 + $0x684] sm:$0xf]
    %v1068 = vld [vmem:[#allocation10 + $0x688] sm:$0xff]
    %v1069 = vld [vmem:[#allocation10 + $0x690] sm:$0xff]
    %v1070 = vld [vmem:[#allocation10 + $0x698] sm:$0xff]
    %v1071 = vld [vmem:[#allocation10 + $0x6a0] sm:$0xff]
    %v1072 = vld [vmem:[#allocation10 + $0x6a8] sm:$0xff]
    %v1073 = vld [vmem:[#allocation10 + $0x6b0] sm:$0xf]
    %v1074 = vld [vmem:[#allocation10 + $0x6b4] sm:$0xff]
    %v1075 = vld [vmem:[#allocation10 + $0x6bc] sm:$0xff]
    %v1076 = vld [vmem:[#allocation10 + $0x6c4] sm:$0xff]
    %v1077 = vld [vmem:[#allocation10 + $0x6cc] sm:$0xff]
    %v1078 = vld [vmem:[#allocation10 + $0x6d4] sm:$0xff]
    %v1079 = vld [vmem:[#allocation10 + $0x6dc] sm:$0xf]
    %v1080 = vld [vmem:[#allocation10 + $0x6e0] sm:$0xff]
    %v1081 = vld [vmem:[#allocation10 + $0x6e8] sm:$0xff]
    %v1082 = vld [vmem:[#allocation10 + $0x6f0] sm:$0xff]
    %v1083 = vld [vmem:[#allocation10 + $0x6f8] sm:$0xff]
    %v1084 = vld [vmem:[#allocation10 + $0x700] sm:$0xff]
    %v1085 = vld [vmem:[#allocation10 + $0x708] sm:$0xf]
    %v1086 = vld [vmem:[#allocation10 + $0x70c] sm:$0xff]
    %v1087 = vld [vmem:[#allocation10 + $0x714] sm:$0xff]
    %v1088 = vld [vmem:[#allocation10 + $0x71c] sm:$0xff]
    %v1089 = vld [vmem:[#allocation10 + $0x724] sm:$0xff]
    %v1090 = vld [vmem:[#allocation10 + $0x72c] sm:$0xff]
    %v1091 = vld [vmem:[#allocation10 + $0x734] sm:$0xf]
    %v1092 = vld [vmem:[#allocation10 + $0x738] sm:$0xff]
    %v1093 = vld [vmem:[#allocation10 + $0x740] sm:$0xff]
    %v1094 = vld [vmem:[#allocation10 + $0x748] sm:$0xff]
    %v1095 = vld [vmem:[#allocation10 + $0x750] sm:$0xff]
    %v1096 = vld [vmem:[#allocation10 + $0x758] sm:$0xff]
    %v1097 = vld [vmem:[#allocation10 + $0x760] sm:$0xf]
    %v1098 = vld [vmem:[#allocation10 + $0x764] sm:$0xff]
    %v1099 = vld [vmem:[#allocation10 + $0x76c] sm:$0xff]
    %v1100 = vld [vmem:[#allocation10 + $0x774] sm:$0xff]
    %v1101 = vld [vmem:[#allocation10 + $0x77c] sm:$0xff]
    %v1102 = vld [vmem:[#allocation10 + $0x784] sm:$0xff]
    %v1103 = vld [vmem:[#allocation10 + $0x78c] sm:$0xf]
    %v1104 = vld [vmem:[#allocation10 + $0x790] sm:$0xff]
    %v1105 = vld [vmem:[#allocation10 + $0x798] sm:$0xff]
    %v1106 = vld [vmem:[#allocation10 + $0x7a0] sm:$0xff]
    %v1107 = vld [vmem:[#allocation10 + $0x7a8] sm:$0xff]
    %v1108 = vld [vmem:[#allocation10 + $0x7b0] sm:$0xff]
    %v1109 = vld [vmem:[#allocation10 + $0x7b8] sm:$0xf]
    %v1110 = vld [vmem:[#allocation10 + $0x7bc] sm:$0xff]
    %v1111 = vld [vmem:[#allocation10 + $0x7c4] sm:$0xff]
    %v1112 = vld [vmem:[#allocation10 + $0x7cc] sm:$0xff]
    %v1113 = vld [vmem:[#allocation10 + $0x7d4] sm:$0xff]
    %v1114 = vld [vmem:[#allocation10 + $0x7dc] sm:$0xff]
    %v1115 = vld [vmem:[#allocation10 + $0x7e4] sm:$0xf]
    %v1116 = vld [vmem:[#allocation10 + $0x7e8] sm:$0xff]
    %v1117 = vld [vmem:[#allocation10 + $0x7f0] sm:$0xff]
    %v1118 = vld [vmem:[#allocation10 + $0x7f8] sm:$0xff]
    %v1119 = vld [vmem:[#allocation10 + $0x800] sm:$0xff]
    %v1120 = vld [vmem:[#allocation10 + $0x808] sm:$0xff]
    %v1121 = vld [vmem:[#allocation10 + $0x810] sm:$0xf]
    %v1122 = vld [vmem:[#allocation10 + $0x814] sm:$0xff]
    %v1123 = vld [vmem:[#allocation10 + $0x81c] sm:$0xff]
    %v1124 = vld [vmem:[#allocation10 + $0x824] sm:$0xff]
    %v1125 = vld [vmem:[#allocation10 + $0x82c] sm:$0xff]
    %v1126 = vld [vmem:[#allocation10 + $0x834] sm:$0xff]
    %v1127 = vld [vmem:[#allocation10 + $0x83c] sm:$0xf]
    %v1128 = vld [vmem:[#allocation10 + $0x840] sm:$0xff]
    %v1129 = vld [vmem:[#allocation10 + $0x848] sm:$0xff]
    %v1130 = vld [vmem:[#allocation10 + $0x850] sm:$0xff]
    %v1131 = vld [vmem:[#allocation10 + $0x858] sm:$0xff]
    %v1132 = vld [vmem:[#allocation10 + $0x860] sm:$0xff]
    %v1133 = vld [vmem:[#allocation10 + $0x868] sm:$0xf]
    %v1134 = vld [vmem:[#allocation10 + $0x86c] sm:$0xff]
    %v1135 = vld [vmem:[#allocation10 + $0x874] sm:$0xff]
    %v1136 = vld [vmem:[#allocation10 + $0x87c] sm:$0xff]
    %v1137 = vld [vmem:[#allocation10 + $0x884] sm:$0xff]
    %v1138 = vld [vmem:[#allocation10 + $0x88c] sm:$0xff]
    %v1139 = vld [vmem:[#allocation10 + $0x894] sm:$0xf]
    %v1140 = vld [vmem:[#allocation10 + $0x898] sm:$0xff]
    %v1141 = vld [vmem:[#allocation10 + $0x8a0] sm:$0xff]
    %v1142 = vld [vmem:[#allocation10 + $0x8a8] sm:$0xff]
    %v1143 = vld [vmem:[#allocation10 + $0x8b0] sm:$0xff]
    %v1144 = vld [vmem:[#allocation10 + $0x8b8] sm:$0xff]
    %v1145 = vld [vmem:[#allocation10 + $0x8c0] sm:$0xf]
    %v1146 = vld [vmem:[#allocation10 + $0x8c4] sm:$0xff]
    %v1147 = vld [vmem:[#allocation10 + $0x8cc] sm:$0xff]
    %v1148 = vld [vmem:[#allocation10 + $0x8d4] sm:$0xff]
    %v1149 = vld [vmem:[#allocation10 + $0x8dc] sm:$0xff]
    %v1150 = vld [vmem:[#allocation10 + $0x8e4] sm:$0xff]
    %v1151 = vld [vmem:[#allocation10 + $0x8ec] sm:$0xf]
    %v1152 = vld [vmem:[#allocation10 + $0x8f0] sm:$0xff]
    %v1153 = vld [vmem:[#allocation10 + $0x8f8] sm:$0xff]
    %v1154 = vld [vmem:[#allocation10 + $0x900] sm:$0xff]
    %v1155 = vld [vmem:[#allocation10 + $0x908] sm:$0xff]
    %v1156 = vld [vmem:[#allocation10 + $0x910] sm:$0xff]
    %v1157 = vld [vmem:[#allocation10 + $0x918] sm:$0xf]
    %v1158 = vld [vmem:[#allocation10 + $0x91c] sm:$0xff]
    %v1159 = vld [vmem:[#allocation10 + $0x924] sm:$0xff]
    %v1160 = vld [vmem:[#allocation10 + $0x92c] sm:$0xff]
    %v1161 = vld [vmem:[#allocation10 + $0x934] sm:$0xff]
    %v1162 = vld [vmem:[#allocation10 + $0x93c] sm:$0xff]
    %v1163 = vld [vmem:[#allocation10 + $0x944] sm:$0xf]
    %v1164 = vld [vmem:[#allocation10 + $0x948] sm:$0xff]
    %v1165 = vld [vmem:[#allocation10 + $0x950] sm:$0xff]
    %v1166 = vld [vmem:[#allocation10 + $0x958] sm:$0xff]
    %v1167 = vld [vmem:[#allocation10 + $0x960] sm:$0xff]
    %v1168 = vld [vmem:[#allocation10 + $0x968] sm:$0xff]
    %v1169 = vld [vmem:[#allocation10 + $0x970] sm:$0xf]
    %v1170 = vld [vmem:[#allocation10 + $0x974] sm:$0xff]
    %v1171 = vld [vmem:[#allocation10 + $0x97c] sm:$0xff]
    %v1172 = vld [vmem:[#allocation10 + $0x984] sm:$0xff]
    %v1173 = vld [vmem:[#allocation10 + $0x98c] sm:$0xff]
    %v1174 = vld [vmem:[#allocation10 + $0x994] sm:$0xff]
    %v1175 = vld [vmem:[#allocation10 + $0x99c] sm:$0xf]
    %v1176 = vld [vmem:[#allocation10 + $0x9a0] sm:$0xff]
    %v1177 = vld [vmem:[#allocation10 + $0x9a8] sm:$0xff]
    %v1178 = vld [vmem:[#allocation10 + $0x9b0] sm:$0xff]
    %v1179 = vld [vmem:[#allocation10 + $0x9b8] sm:$0xff]
    %v1180 = vld [vmem:[#allocation10 + $0x9c0] sm:$0xff]
    %v1181 = vld [vmem:[#allocation10 + $0x9c8] sm:$0xf]
    %v1182 = vld [vmem:[#allocation10 + $0x9cc] sm:$0xff]
    %v1183 = vld [vmem:[#allocation10 + $0x9d4] sm:$0xff]
    %v1184 = vld [vmem:[#allocation10 + $0x9dc] sm:$0xff]
    %v1185 = vld [vmem:[#allocation10 + $0x9e4] sm:$0xff]
    %v1186 = vld [vmem:[#allocation10 + $0x9ec] sm:$0xff]
    %v1187 = vld [vmem:[#allocation10 + $0x9f4] sm:$0xf]
    %v1188 = vld [vmem:[#allocation10 + $0x9f8] sm:$0xff]
    %v1189 = vld [vmem:[#allocation10 + $0xa00] sm:$0xff]
    %v1190 = vld [vmem:[#allocation10 + $0xa08] sm:$0xff]
    %v1191 = vld [vmem:[#allocation10 + $0xa10] sm:$0xff]
    %v1192 = vld [vmem:[#allocation10 + $0xa18] sm:$0xff]
    %v1193 = vld [vmem:[#allocation10 + $0xa20] sm:$0xf]
    %v1194 = vld [vmem:[#allocation10 + $0xa24] sm:$0xff]
    %v1195 = vld [vmem:[#allocation10 + $0xa2c] sm:$0xff]
    %v1196 = vld [vmem:[#allocation10 + $0xa34] sm:$0xff]
    %v1197 = vld [vmem:[#allocation10 + $0xa3c] sm:$0xff]
    %v1198 = vld [vmem:[#allocation10 + $0xa44] sm:$0xff]
    %v1199 = vld [vmem:[#allocation10 + $0xa4c] sm:$0xf]
    %v1200 = vld [vmem:[#allocation10 + $0xa50] sm:$0xff]
    %v1201 = vld [vmem:[#allocation10 + $0xa58] sm:$0xff]
    %v1202 = vld [vmem:[#allocation10 + $0xa60] sm:$0xff]
    %v1203 = vld [vmem:[#allocation10 + $0xa68] sm:$0xff]
    %v1204 = vld [vmem:[#allocation10 + $0xa70] sm:$0xff]
    %v1205 = vld [vmem:[#allocation10 + $0xa78] sm:$0xf]
    %v1206 = vld [vmem:[#allocation10 + $0xa7c] sm:$0xff]
    %v1207 = vld [vmem:[#allocation10 + $0xa84] sm:$0xff]
    %v1208 = vld [vmem:[#allocation10 + $0xa8c] sm:$0xff]
    %v1209 = vld [vmem:[#allocation10 + $0xa94] sm:$0xff]
    %v1210 = vld [vmem:[#allocation10 + $0xa9c] sm:$0xff]
    %v1211 = vld [vmem:[#allocation10 + $0xaa4] sm:$0xf]
    %v1212 = vld [vmem:[#allocation10 + $0xaa8] sm:$0xff]
    %v1213 = vld [vmem:[#allocation10 + $0xab0] sm:$0xff]
    %v1214 = vld [vmem:[#allocation10 + $0xab8] sm:$0xff]
    %v1215 = vld [vmem:[#allocation10 + $0xac0] sm:$0xff]
    %v1216 = vld [vmem:[#allocation10 + $0xac8] sm:$0xff]
    %v1217 = vld [vmem:[#allocation10 + $0xad0] sm:$0xf]
    %v1218 = vld [vmem:[#allocation10 + $0xad4] sm:$0xff]
    %v1219 = vld [vmem:[#allocation10 + $0xadc] sm:$0xff]
    %v1220 = vld [vmem:[#allocation10 + $0xae4] sm:$0xff]
    %v1221 = vld [vmem:[#allocation10 + $0xaec] sm:$0xff]
    %v1222 = vld [vmem:[#allocation10 + $0xaf4] sm:$0xff]
    %v1223 = vld [vmem:[#allocation10 + $0xafc] sm:$0xf]
    %v1224 = vld [vmem:[#allocation10 + $0xb00] sm:$0xff]
    %v1225 = vld [vmem:[#allocation10 + $0xb08] sm:$0xff]
    %v1226 = vld [vmem:[#allocation10 + $0xb10] sm:$0xff]
    %v1227 = vld [vmem:[#allocation10 + $0xb18] sm:$0xff]
    %v1228 = vld [vmem:[#allocation10 + $0xb20] sm:$0xff]
    %v1229 = vld [vmem:[#allocation10 + $0xb28] sm:$0xf]
    %v1230 = vld [vmem:[#allocation10 + $0xb2c] sm:$0xff]
    %v1231 = vld [vmem:[#allocation10 + $0xb34] sm:$0xff]
    %v1232 = vld [vmem:[#allocation10 + $0xb3c] sm:$0xff]
    %v1233 = vld [vmem:[#allocation10 + $0xb44] sm:$0xff]
    %v1234 = vld [vmem:[#allocation10 + $0xb4c] sm:$0xff]
    %v1235 = vld [vmem:[#allocation10 + $0xb54] sm:$0xf]
    %v1236 = vld [vmem:[#allocation10 + $0xb58] sm:$0xff]
    %v1237 = vld [vmem:[#allocation10 + $0xb60] sm:$0xff]
    %v1238 = vld [vmem:[#allocation10 + $0xb68] sm:$0xff]
    %v1239 = vld [vmem:[#allocation10 + $0xb70] sm:$0xff]
    %v1240 = vld [vmem:[#allocation10 + $0xb78] sm:$0xff]
    %v1241 = vld [vmem:[#allocation10 + $0xb80] sm:$0xf]
    %v1242 = vld [vmem:[#allocation10 + $0xb84] sm:$0xff]
    %v1243 = vld [vmem:[#allocation10 + $0xb8c] sm:$0xff]
    %v1244 = vld [vmem:[#allocation10 + $0xb94] sm:$0xff]
    %v1245 = vld [vmem:[#allocation10 + $0xb9c] sm:$0xff]
    %v1246 = vld [vmem:[#allocation10 + $0xba4] sm:$0xff]
    %v1247 = vld [vmem:[#allocation10 + $0xbac] sm:$0xf]
    %v1248 = vld [vmem:[#allocation10 + $0xbb0] sm:$0xff]
    %v1249 = vld [vmem:[#allocation10 + $0xbb8] sm:$0xff]
    %v1250 = vld [vmem:[#allocation10 + $0xbc0] sm:$0xff]
    %v1251 = vld [vmem:[#allocation10 + $0xbc8] sm:$0xff]
    %v1252 = vld [vmem:[#allocation10 + $0xbd0] sm:$0xff]
    %v1253 = vld [vmem:[#allocation10 + $0xbd8] sm:$0xf]
    %v1254 = vld [vmem:[#allocation10 + $0xbdc] sm:$0xff]
    %v1255 = vld [vmem:[#allocation10 + $0xbe4] sm:$0xff]
    %v1256 = vld [vmem:[#allocation10 + $0xbec] sm:$0xff]
    %v1257 = vld [vmem:[#allocation10 + $0xbf4] sm:$0xff]
    %v1258 = vld [vmem:[#allocation10 + $0xbfc] sm:$0xff]
    %v1259 = vld [vmem:[#allocation10 + $0xc04] sm:$0xf]
    %v1260 = vld [vmem:[#allocation10 + $0xc08] sm:$0xff]
    %v1261 = vld [vmem:[#allocation10 + $0xc10] sm:$0xff]
    %v1262 = vld [vmem:[#allocation10 + $0xc18] sm:$0xff]
    %v1263 = vld [vmem:[#allocation10 + $0xc20] sm:$0xff]
    %v1264 = vld [vmem:[#allocation10 + $0xc28] sm:$0xff]
    %v1265 = vld [vmem:[#allocation10 + $0xc30] sm:$0xf]
    %v1266 = vld [vmem:[#allocation10 + $0xc34] sm:$0xff]
    %v1267 = vld [vmem:[#allocation10 + $0xc3c] sm:$0xff]
    %v1268 = vld [vmem:[#allocation10 + $0xc44] sm:$0xff]
    %v1269 = vld [vmem:[#allocation10 + $0xc4c] sm:$0xff]
    %v1270 = vld [vmem:[#allocation10 + $0xc54] sm:$0xff]
    %v1271 = vld [vmem:[#allocation10 + $0xc5c] sm:$0xf]
    %v1272 = vld [vmem:[#allocation10 + $0xc60] sm:$0xff]
    %v1273 = vld [vmem:[#allocation10 + $0xc68] sm:$0xff]
    %v1274 = vld [vmem:[#allocation10 + $0xc70] sm:$0xff]
    %v1275 = vld [vmem:[#allocation10 + $0xc78] sm:$0xff]
    %v1276 = vld [vmem:[#allocation10 + $0xc80] sm:$0xff]
    %v1277 = vld [vmem:[#allocation10 + $0xc88] sm:$0xf]
    %v1278 = vld [vmem:[#allocation10 + $0xc8c] sm:$0xff]
    %v1279 = vld [vmem:[#allocation10 + $0xc94] sm:$0xff]
    %v1280 = vld [vmem:[#allocation10 + $0xc9c] sm:$0xff]
    %v1281 = vld [vmem:[#allocation10 + $0xca4] sm:$0xff]
    %v1282 = vld [vmem:[#allocation10 + $0xcac] sm:$0xff]
    %v1283 = vld [vmem:[#allocation10 + $0xcb4] sm:$0xf]
    %v1284 = vld [vmem:[#allocation10 + $0xcb8] sm:$0xff]
    %v1285 = vld [vmem:[#allocation10 + $0xcc0] sm:$0xff]
    %v1286 = vld [vmem:[#allocation10 + $0xcc8] sm:$0xff]
    %v1287 = vld [vmem:[#allocation10 + $0xcd0] sm:$0xff]
    %v1288 = vld [vmem:[#allocation10 + $0xcd8] sm:$0xff]
    %v1289 = vld [vmem:[#allocation10 + $0xce0] sm:$0xf]
    %v1290 = vld [vmem:[#allocation10 + $0xce4] sm:$0xff]
    %v1291 = vld [vmem:[#allocation10 + $0xcec] sm:$0xff]
    %v1292 = vld [vmem:[#allocation10 + $0xcf4] sm:$0xff]
    %v1293 = vld [vmem:[#allocation10 + $0xcfc] sm:$0xff]
    %v1294 = vld [vmem:[#allocation10 + $0xd04] sm:$0xff]
    %v1295 = vld [vmem:[#allocation10 + $0xd0c] sm:$0xf]
    %v1296 = vld [vmem:[#allocation10 + $0xd10] sm:$0xff]
    %v1297 = vld [vmem:[#allocation10 + $0xd18] sm:$0xff]
    %v1298 = vld [vmem:[#allocation10 + $0xd20] sm:$0xff]
    %v1299 = vld [vmem:[#allocation10 + $0xd28] sm:$0xff]
    %v1300 = vld [vmem:[#allocation10 + $0xd30] sm:$0xff]
    %v1301 = vld [vmem:[#allocation10 + $0xd38] sm:$0xf]
    %v1302 = vld [vmem:[#allocation10 + $0xd3c] sm:$0xff]
    %v1303 = vld [vmem:[#allocation10 + $0xd44] sm:$0xff]
    %v1304 = vld [vmem:[#allocation10 + $0xd4c] sm:$0xff]
    %v1305 = vld [vmem:[#allocation10 + $0xd54] sm:$0xff]
    %v1306 = vld [vmem:[#allocation10 + $0xd5c] sm:$0xff]
    %v1307 = vld [vmem:[#allocation10 + $0xd64] sm:$0xf]
    %v1308 = vld [vmem:[#allocation10 + $0xd68] sm:$0xff]
    %v1309 = vld [vmem:[#allocation10 + $0xd70] sm:$0xff]
    %v1310 = vld [vmem:[#allocation10 + $0xd78] sm:$0xff]
    %v1311 = vld [vmem:[#allocation10 + $0xd80] sm:$0xff]
    %v1312 = vld [vmem:[#allocation10 + $0xd88] sm:$0xff]
    %v1313 = vld [vmem:[#allocation10 + $0xd90] sm:$0xf]
    %v1314 = vld [vmem:[#allocation10 + $0xd94] sm:$0xff]
    %v1315 = vld [vmem:[#allocation10 + $0xd9c] sm:$0xff]
    %v1316 = vld [vmem:[#allocation10 + $0xda4] sm:$0xff]
    %v1317 = vld [vmem:[#allocation10 + $0xdac] sm:$0xff]
    %v1318 = vld [vmem:[#allocation10 + $0xdb4] sm:$0xff]
    %v1319 = vld [vmem:[#allocation10 + $0xdbc] sm:$0xf]
    %v1320 = vld [vmem:[#allocation10 + $0xdc0] sm:$0xff]
    %v1321 = vld [vmem:[#allocation10 + $0xdc8] sm:$0xff]
    %v1322 = vld [vmem:[#allocation10 + $0xdd0] sm:$0xff]
    %v1323 = vld [vmem:[#allocation10 + $0xdd8] sm:$0xff]
    %v1324 = vld [vmem:[#allocation10 + $0xde0] sm:$0xff]
    %v1325 = vld [vmem:[#allocation10 + $0xde8] sm:$0xf]
    %v1326 = vld [vmem:[#allocation10 + $0xdec] sm:$0xff]
    %v1327 = vld [vmem:[#allocation10 + $0xdf4] sm:$0xff]
    %v1328 = vld [vmem:[#allocation10 + $0xdfc] sm:$0xff]
    %v1329 = vld [vmem:[#allocation10 + $0xe04] sm:$0xff]
    %v1330 = vld [vmem:[#allocation10 + $0xe0c] sm:$0xff]
    %v1331 = vld [vmem:[#allocation10 + $0xe14] sm:$0xf]
    %v1332 = vld [vmem:[#allocation10 + $0xe18] sm:$0xff]
    %v1333 = vld [vmem:[#allocation10 + $0xe20] sm:$0xff]
    %v1334 = vld [vmem:[#allocation10 + $0xe28] sm:$0xff]
    %v1335 = vld [vmem:[#allocation10 + $0xe30] sm:$0xff]
    %v1336 = vld [vmem:[#allocation10 + $0xe38] sm:$0xff]
    %v1337 = vld [vmem:[#allocation10 + $0xe40] sm:$0xf]
    %v1338 = vld [vmem:[#allocation10 + $0xe44] sm:$0xff]
    %v1339 = vld [vmem:[#allocation10 + $0xe4c] sm:$0xff]
    %v1340 = vld [vmem:[#allocation10 + $0xe54] sm:$0xff]
    %v1341 = vld [vmem:[#allocation10 + $0xe5c] sm:$0xff]
    %v1342 = vld [vmem:[#allocation10 + $0xe64] sm:$0xff]
    %v1343 = vld [vmem:[#allocation10 + $0xe6c] sm:$0xf]
    %v1344 = vld [vmem:[#allocation10 + $0xe70] sm:$0xff]
    %v1345 = vld [vmem:[#allocation10 + $0xe78] sm:$0xff]
    %v1346 = vld [vmem:[#allocation10 + $0xe80] sm:$0xff]
    %v1347 = vld [vmem:[#allocation10 + $0xe88] sm:$0xff]
    %v1348 = vld [vmem:[#allocation10 + $0xe90] sm:$0xff]
    %v1349 = vld [vmem:[#allocation10 + $0xe98] sm:$0xf]
    %v1350 = vld [vmem:[#allocation10 + $0xe9c] sm:$0xff]
    %v1351 = vld [vmem:[#allocation10 + $0xea4] sm:$0xff]
    %v1352 = vld [vmem:[#allocation10 + $0xeac] sm:$0xff]
    %v1353 = vld [vmem:[#allocation10 + $0xeb4] sm:$0xff]
    %v1354 = vld [vmem:[#allocation10 + $0xebc] sm:$0xff]
    %v1355 = vld [vmem:[#allocation10 + $0xec4] sm:$0xf]
    %v1356 = vld [vmem:[#allocation10 + $0xec8] sm:$0xff]
    %v1357 = vld [vmem:[#allocation10 + $0xed0] sm:$0xff]
    %v1358 = vld [vmem:[#allocation10 + $0xed8] sm:$0xff]
    %v1359 = vld [vmem:[#allocation10 + $0xee0] sm:$0xff]
    %v1360 = vld [vmem:[#allocation10 + $0xee8] sm:$0xff]
    %v1361 = vld [vmem:[#allocation10 + $0xef0] sm:$0xf]
    %v1362 = vld [vmem:[#allocation10 + $0xef4] sm:$0xff]
    %v1363 = vld [vmem:[#allocation10 + $0xefc] sm:$0xff]
    %v1364 = vld [vmem:[#allocation10 + $0xf04] sm:$0xff]
    %v1365 = vld [vmem:[#allocation10 + $0xf0c] sm:$0xff]
    %v1366 = vld [vmem:[#allocation10 + $0xf14] sm:$0xff]
    %v1367 = vld [vmem:[#allocation10 + $0xf1c] sm:$0xf]
    %v1368 = vld [vmem:[#allocation10 + $0xf20] sm:$0xff]
    %v1369 = vld [vmem:[#allocation10 + $0xf28] sm:$0xff]
    %v1370 = vld [vmem:[#allocation10 + $0xf30] sm:$0xff]
    %v1371 = vld [vmem:[#allocation10 + $0xf38] sm:$0xff]
    %v1372 = vld [vmem:[#allocation10 + $0xf40] sm:$0xff]
    %v1373 = vld [vmem:[#allocation10 + $0xf48] sm:$0xf]
    %v1374 = vld [vmem:[#allocation10 + $0xf4c] sm:$0xff]
    %v1375 = vld [vmem:[#allocation10 + $0xf54] sm:$0xff]
    %v1376 = vld [vmem:[#allocation10 + $0xf5c] sm:$0xff]
    %v1377 = vld [vmem:[#allocation10 + $0xf64] sm:$0xff]
    %v1378 = vld [vmem:[#allocation10 + $0xf6c] sm:$0xff]
    %v1379 = vld [vmem:[#allocation10 + $0xf74] sm:$0xf]
    %v1380 = vld [vmem:[#allocation10 + $0xf78] sm:$0xff]
    %v1381 = vld [vmem:[#allocation10 + $0xf80] sm:$0xff]
    %v1382 = vld [vmem:[#allocation10 + $0xf88] sm:$0xff]
    %v1383 = vld [vmem:[#allocation10 + $0xf90] sm:$0xff]
    %v1384 = vld [vmem:[#allocation10 + $0xf98] sm:$0xff]
    %v1385 = vld [vmem:[#allocation10 + $0xfa0] sm:$0xf]
    %v1386 = vld [vmem:[#allocation10 + $0xfa4] sm:$0xff]
    %v1387 = vld [vmem:[#allocation10 + $0xfac] sm:$0xff]
    %v1388 = vld [vmem:[#allocation10 + $0xfb4] sm:$0xff]
    %v1389 = vld [vmem:[#allocation10 + $0xfbc] sm:$0xff]
    %v1390 = vld [vmem:[#allocation10 + $0xfc4] sm:$0xff]
    %v1391 = vld [vmem:[#allocation10 + $0xfcc] sm:$0xf]
    %v1392 = vld [vmem:[#allocation10 + $0xfd0] sm:$0xff]
    %v1393 = vld [vmem:[#allocation10 + $0xfd8] sm:$0xff]
    %v1394 = vld [vmem:[#allocation10 + $0xfe0] sm:$0xff]
    %v1395 = vld [vmem:[#allocation10 + $0xfe8] sm:$0xff]
    %v1396 = vld [vmem:[#allocation10 + $0xff0] sm:$0xff]
    %v1397 = vld [vmem:[#allocation10 + $0xff8] sm:$0xf]
    %v1398 = vld [vmem:[#allocation10 + $0xffc] sm:$0xff]
    %v1399 = vld [vmem:[#allocation10 + $0x1004] sm:$0xff]
    %v1400 = vld [vmem:[#allocation10 + $0x100c] sm:$0xff]
    %v1401 = vld [vmem:[#allocation10 + $0x1014] sm:$0xff]
    %v1402 = vld [vmem:[#allocation10 + $0x101c] sm:$0xff]
    %v1403 = vld [vmem:[#allocation10 + $0x1024] sm:$0xf]
    %v1404 = vld [vmem:[#allocation10 + $0x1028] sm:$0xff]
    %v1405 = vld [vmem:[#allocation10 + $0x1030] sm:$0xff]
    %v1406 = vld [vmem:[#allocation10 + $0x1038] sm:$0xff]
    %v1407 = vld [vmem:[#allocation10 + $0x1040] sm:$0xff]
    %v1408 = vld [vmem:[#allocation10 + $0x1048] sm:$0xff]
    %v1409 = vld [vmem:[#allocation10 + $0x1050] sm:$0xf]
    %v1410 = vld [vmem:[#allocation10 + $0x1054] sm:$0xff]
    %v1411 = vld [vmem:[#allocation10 + $0x105c] sm:$0xff]
    %v1412 = vld [vmem:[#allocation10 + $0x1064] sm:$0xff]
    %v1413 = vld [vmem:[#allocation10 + $0x106c] sm:$0xff]
    %v1414 = vld [vmem:[#allocation10 + $0x1074] sm:$0xff]
    %v1415 = vld [vmem:[#allocation10 + $0x107c] sm:$0xf]
    %v1416 = vld [vmem:[#allocation10 + $0x1080] sm:$0xff]
    %v1417 = vld [vmem:[#allocation10 + $0x1088] sm:$0xff]
    %v1418 = vld [vmem:[#allocation10 + $0x1090] sm:$0xff]
    %v1419 = vld [vmem:[#allocation10 + $0x1098] sm:$0xff]
    %v1420 = vld [vmem:[#allocation10 + $0x10a0] sm:$0xff]
    %v1421 = vld [vmem:[#allocation10 + $0x10a8] sm:$0xf]
    %v1422 = vld [vmem:[#allocation10 + $0x10ac] sm:$0xff]
    %v1423 = vld [vmem:[#allocation10 + $0x10b4] sm:$0xff]
    %v1424 = vld [vmem:[#allocation10 + $0x10bc] sm:$0xff]
    %v1425 = vld [vmem:[#allocation10 + $0x10c4] sm:$0xff]
    %v1426 = vld [vmem:[#allocation10 + $0x10cc] sm:$0xff]
    %v1427 = vld [vmem:[#allocation10 + $0x10d4] sm:$0xf]
    %v1428 = vld [vmem:[#allocation10 + $0x10d8] sm:$0xff]
    %v1429 = vld [vmem:[#allocation10 + $0x10e0] sm:$0xff]
    %v1430 = vld [vmem:[#allocation10 + $0x10e8] sm:$0xff]
    %v1431 = vld [vmem:[#allocation10 + $0x10f0] sm:$0xff]
    %v1432 = vld [vmem:[#allocation10 + $0x10f8] sm:$0xff]
    %v1433 = vld [vmem:[#allocation10 + $0x1100] sm:$0xf]
    %v1434 = vld [vmem:[#allocation10 + $0x1104] sm:$0xff]
    %v1435 = vld [vmem:[#allocation10 + $0x110c] sm:$0xff]
    %v1436 = vld [vmem:[#allocation10 + $0x1114] sm:$0xff]
    %v1437 = vld [vmem:[#allocation10 + $0x111c] sm:$0xff]
    %v1438 = vld [vmem:[#allocation10 + $0x1124] sm:$0xff]
    %v1439 = vld [vmem:[#allocation10 + $0x112c] sm:$0xf]
    %v1440 = vld [vmem:[#allocation10 + $0x1130] sm:$0xff]
    %v1441 = vld [vmem:[#allocation10 + $0x1138] sm:$0xff]
    %v1442 = vld [vmem:[#allocation10 + $0x1140] sm:$0xff]
    %v1443 = vld [vmem:[#allocation10 + $0x1148] sm:$0xff]
    %v1444 = vld [vmem:[#allocation10 + $0x1150] sm:$0xff]
    %v1445 = vld [vmem:[#allocation10 + $0x1158] sm:$0xf]
    %v1446 = vld [vmem:[#allocation10 + $0x115c] sm:$0xff]
    %v1447 = vld [vmem:[#allocation10 + $0x1164] sm:$0xff]
    %v1448 = vld [vmem:[#allocation10 + $0x116c] sm:$0xff]
    %v1449 = vld [vmem:[#allocation10 + $0x1174] sm:$0xff]
    %v1450 = vld [vmem:[#allocation10 + $0x117c] sm:$0xff]
    %v1451 = vld [vmem:[#allocation10 + $0x1184] sm:$0xf]
    %v1452 = vld [vmem:[#allocation10 + $0x1188] sm:$0xff]
    %v1453 = vld [vmem:[#allocation10 + $0x1190] sm:$0xff]
    %v1454 = vld [vmem:[#allocation10 + $0x1198] sm:$0xff]
    %v1455 = vld [vmem:[#allocation10 + $0x11a0] sm:$0xff]
    %v1456 = vld [vmem:[#allocation10 + $0x11a8] sm:$0xff]
    %v1457 = vld [vmem:[#allocation10 + $0x11b0] sm:$0xf]
    %v1458 = vld [vmem:[#allocation10 + $0x11b4] sm:$0xff]
    %v1459 = vld [vmem:[#allocation10 + $0x11bc] sm:$0xff]
    %v1460 = vld [vmem:[#allocation10 + $0x11c4] sm:$0xff]
    %v1461 = vld [vmem:[#allocation10 + $0x11cc] sm:$0xff]
    %v1462 = vld [vmem:[#allocation10 + $0x11d4] sm:$0xff]
    %v1463 = vld [vmem:[#allocation10 + $0x11dc] sm:$0xf]
    %v1464 = vld [vmem:[#allocation10 + $0x11e0] sm:$0xff]
    %v1465 = vld [vmem:[#allocation10 + $0x11e8] sm:$0xff]
    %v1466 = vld [vmem:[#allocation10 + $0x11f0] sm:$0xff]
    %v1467 = vld [vmem:[#allocation10 + $0x11f8] sm:$0xff]
    %v1468 = vld [vmem:[#allocation10 + $0x1200] sm:$0xff]
    %v1469 = vld [vmem:[#allocation10 + $0x1208] sm:$0xf]
    %v1470 = vld [vmem:[#allocation10 + $0x120c] sm:$0xff]
    %v1471 = vld [vmem:[#allocation10 + $0x1214] sm:$0xff]
    %v1472 = vld [vmem:[#allocation10 + $0x121c] sm:$0xff]
    %v1473 = vld [vmem:[#allocation10 + $0x1224] sm:$0xff]
    %v1474 = vld [vmem:[#allocation10 + $0x122c] sm:$0xff]
    %v1475 = vld [vmem:[#allocation10 + $0x1234] sm:$0xf]
    %v1476 = vld [vmem:[#allocation10 + $0x1238] sm:$0xff]
    %v1477 = vld [vmem:[#allocation10 + $0x1240] sm:$0xff]
    %v1478 = vld [vmem:[#allocation10 + $0x1248] sm:$0xff]
    %v1479 = vld [vmem:[#allocation10 + $0x1250] sm:$0xff]
    %v1480 = vld [vmem:[#allocation10 + $0x1258] sm:$0xff]
    %v1481 = vld [vmem:[#allocation10 + $0x1260] sm:$0xf]
    %v1482 = vld [vmem:[#allocation10 + $0x1264] sm:$0xff]
    %v1483 = vld [vmem:[#allocation10 + $0x126c] sm:$0xff]
    %v1484 = vld [vmem:[#allocation10 + $0x1274] sm:$0xff]
    %v1485 = vld [vmem:[#allocation10 + $0x127c] sm:$0xff]
    %v1486 = vld [vmem:[#allocation10 + $0x1284] sm:$0xff]
    %v1487 = vld [vmem:[#allocation10 + $0x128c] sm:$0xf]
    %v1488 = vld [vmem:[#allocation10 + $0x1290] sm:$0xff]
    %v1489 = vld [vmem:[#allocation10 + $0x1298] sm:$0xff]
    %v1490 = vld [vmem:[#allocation10 + $0x12a0] sm:$0xff]
    %v1491 = vld [vmem:[#allocation10 + $0x12a8] sm:$0xff]
    %v1492 = vld [vmem:[#allocation10 + $0x12b0] sm:$0xff]
    %v1493 = vld [vmem:[#allocation10 + $0x12b8] sm:$0xf]
    %v1494 = vld [vmem:[#allocation10 + $0x12bc] sm:$0xff]
    %v1495 = vld [vmem:[#allocation10 + $0x12c4] sm:$0xff]
    %v1496 = vld [vmem:[#allocation10 + $0x12cc] sm:$0xff]
    %v1497 = vld [vmem:[#allocation10 + $0x12d4] sm:$0xff]
    %v1498 = vld [vmem:[#allocation10 + $0x12dc] sm:$0xff]
    %v1499 = vld [vmem:[#allocation10 + $0x12e4] sm:$0xf]
    %v1500 = vld [vmem:[#allocation10 + $0x12e8] sm:$0xff]
    %v1501 = vld [vmem:[#allocation10 + $0x12f0] sm:$0xff]
    %v1502 = vld [vmem:[#allocation10 + $0x12f8] sm:$0xff]
    %v1503 = vld [vmem:[#allocation10 + $0x1300] sm:$0xff]
    %v1504 = vld [vmem:[#allocation10 + $0x1308] sm:$0xff]
    %v1505 = vld [vmem:[#allocation10 + $0x1310] sm:$0xf]
    %v1506 = vld [vmem:[#allocation10 + $0x1314] sm:$0xff]
    %v1507 = vld [vmem:[#allocation10 + $0x131c] sm:$0xff]
    %v1508 = vld [vmem:[#allocation10 + $0x1324] sm:$0xff]
    %v1509 = vld [vmem:[#allocation10 + $0x132c] sm:$0xff]
    %v1510 = vld [vmem:[#allocation10 + $0x1334] sm:$0xff]
    %v1511 = vld [vmem:[#allocation10 + $0x133c] sm:$0xf]
    %v1512 = vld [vmem:[#allocation10 + $0x1340] sm:$0xff]
    %v1513 = vld [vmem:[#allocation10 + $0x1348] sm:$0xff]
    %v1514 = vld [vmem:[#allocation10 + $0x1350] sm:$0xff]
    %v1515 = vld [vmem:[#allocation10 + $0x1358] sm:$0xff]
    %v1516 = vld [vmem:[#allocation10 + $0x1360] sm:$0xff]
    %v1517 = vld [vmem:[#allocation10 + $0x1368] sm:$0xf]
    %v1518 = vld [vmem:[#allocation10 + $0x136c] sm:$0xff]
    %v1519 = vld [vmem:[#allocation10 + $0x1374] sm:$0xff]
    %v1520 = vld [vmem:[#allocation10 + $0x137c] sm:$0xff]
    %v1521 = vld [vmem:[#allocation10 + $0x1384] sm:$0xff]
    %v1522 = vld [vmem:[#allocation10 + $0x138c] sm:$0xff]
    %v1523 = vld [vmem:[#allocation10 + $0x1394] sm:$0xf]
    %v1524 = vld [vmem:[#allocation10 + $0x1398] sm:$0xff]
    %v1525 = vld [vmem:[#allocation10 + $0x13a0] sm:$0xff]
    %v1526 = vld [vmem:[#allocation10 + $0x13a8] sm:$0xff]
    %v1527 = vld [vmem:[#allocation10 + $0x13b0] sm:$0xff]
    %v1528 = vld [vmem:[#allocation10 + $0x13b8] sm:$0xff]
    %v1529 = vld [vmem:[#allocation10 + $0x13c0] sm:$0xf]
    %v1530 = vld [vmem:[#allocation10 + $0x13c4] sm:$0xff]
    %v1531 = vld [vmem:[#allocation10 + $0x13cc] sm:$0xff]
    %v1532 = vld [vmem:[#allocation10 + $0x13d4] sm:$0xff]
    %v1533 = vld [vmem:[#allocation10 + $0x13dc] sm:$0xff]
    %v1534 = vld [vmem:[#allocation10 + $0x13e4] sm:$0xff]
    %v1535 = vld [vmem:[#allocation10 + $0x13ec] sm:$0xf]
    %v1536 = vld [vmem:[#allocation10 + $0x13f0] sm:$0xff]
    %v1537 = vld [vmem:[#allocation10 + $0x13f8] sm:$0xff]
    %v1538 = vld [vmem:[#allocation10 + $0x1400] sm:$0xff]
    %v1539 = vld [vmem:[#allocation10 + $0x1408] sm:$0xff]
    %v1540 = vld [vmem:[#allocation10 + $0x1410] sm:$0xff]
    %v1541 = vld [vmem:[#allocation10 + $0x1418] sm:$0xf]
    %v1542 = vld [vmem:[#allocation10 + $0x141c] sm:$0xff]
    %v1543 = vld [vmem:[#allocation10 + $0x1424] sm:$0xff]
    %v1544 = vld [vmem:[#allocation10 + $0x142c] sm:$0xff]
    %v1545 = vld [vmem:[#allocation10 + $0x1434] sm:$0xff]
    %v1546 = vld [vmem:[#allocation10 + $0x143c] sm:$0xff]
    %v1547 = vld [vmem:[#allocation10 + $0x1444] sm:$0xf]
    %v1548 = vld [vmem:[#allocation10 + $0x1448] sm:$0xff]
    %v1549 = vld [vmem:[#allocation10 + $0x1450] sm:$0xff]
    %v1550 = vld [vmem:[#allocation10 + $0x1458] sm:$0xff]
    %v1551 = vld [vmem:[#allocation10 + $0x1460] sm:$0xff]
    %v1552 = vld [vmem:[#allocation10 + $0x1468] sm:$0xff]
    %v1553 = vld [vmem:[#allocation10 + $0x1470] sm:$0xf]
    %v1554 = vld [vmem:[#allocation10 + $0x1474] sm:$0xff]
    %v1555 = vld [vmem:[#allocation10 + $0x147c] sm:$0xff]
    %v1556 = vld [vmem:[#allocation10 + $0x1484] sm:$0xff]
    %v1557 = vld [vmem:[#allocation10 + $0x148c] sm:$0xff]
    %v1558 = vld [vmem:[#allocation10 + $0x1494] sm:$0xff]
    %v1559 = vld [vmem:[#allocation10 + $0x149c] sm:$0xf]
    %v1560 = vld [vmem:[#allocation10 + $0x14a0] sm:$0xff]
    %v1561 = vld [vmem:[#allocation10 + $0x14a8] sm:$0xff]
    %v1562 = vld [vmem:[#allocation10 + $0x14b0] sm:$0xff]
    %v1563 = vld [vmem:[#allocation10 + $0x14b8] sm:$0xff]
    %v1564 = vld [vmem:[#allocation10 + $0x14c0] sm:$0xff]
    %v1565 = vld [vmem:[#allocation10 + $0x14c8] sm:$0xf]
    %v1566 = vld [vmem:[#allocation10 + $0x14cc] sm:$0xff]
    %v1567 = vld [vmem:[#allocation10 + $0x14d4] sm:$0xff]
    %v1568 = vld [vmem:[#allocation10 + $0x14dc] sm:$0xff]
    %v1569 = vld [vmem:[#allocation10 + $0x14e4] sm:$0xff]
    %v1570 = vld [vmem:[#allocation10 + $0x14ec] sm:$0xff]
    %v1571 = vld [vmem:[#allocation10 + $0x14f4] sm:$0xf]
    %v1572 = vld [vmem:[#allocation10 + $0x14f8] sm:$0xff]
    %v1573 = vld [vmem:[#allocation10 + $0x1500] sm:$0xff]
    %v1574 = vld [vmem:[#allocation10 + $0x1508] sm:$0xff]
    %v1575 = vld [vmem:[#allocation10 + $0x1510] sm:$0xff]
    %v1576 = vld [vmem:[#allocation10 + $0x1518] sm:$0xff]
    %v1577 = vld [vmem:[#allocation10 + $0x1520] sm:$0xf]
    %v1578 = vld [vmem:[#allocation10 + $0x1524] sm:$0xff]
    %v1579 = vld [vmem:[#allocation10 + $0x152c] sm:$0xff]
    %v1580 = vld [vmem:[#allocation10 + $0x1534] sm:$0xff]
    %v1581 = vld [vmem:[#allocation10 + $0x153c] sm:$0xff]
    %v1582 = vld [vmem:[#allocation10 + $0x1544] sm:$0xff]
    %v1583 = vld [vmem:[#allocation10 + $0x154c] sm:$0xf]
    %v1584 = vld [vmem:[#allocation10 + $0x1550] sm:$0xff]
    %v1585 = vld [vmem:[#allocation10 + $0x1558] sm:$0xff]
    %v1586 = vld [vmem:[#allocation10 + $0x1560] sm:$0xff]
    %v1587 = vld [vmem:[#allocation10 + $0x1568] sm:$0xff]
    %v1588 = vld [vmem:[#allocation10 + $0x1570] sm:$0xff]
    %v1589 = vld [vmem:[#allocation10 + $0x1578] sm:$0xf]
    %v1590 = vld [vmem:[#allocation10 + $0x157c] sm:$0xff]
    %v1591 = vld [vmem:[#allocation10 + $0x1584] sm:$0xff]
    %v1592 = vld [vmem:[#allocation10 + $0x158c] sm:$0xff]
    %v1593 = vld [vmem:[#allocation10 + $0x1594] sm:$0xff]
    %v1594 = vld [vmem:[#allocation10 + $0x159c] sm:$0xff]
    %v1595 = vld [vmem:[#allocation10 + $0x15a4] sm:$0xf]
    %v1596 = vld [vmem:[#allocation10 + $0x15a8] sm:$0xff]
    %v1597 = vld [vmem:[#allocation10 + $0x15b0] sm:$0xff]
    %v1598 = vld [vmem:[#allocation10 + $0x15b8] sm:$0xff]
    %v1599 = vld [vmem:[#allocation10 + $0x15c0] sm:$0xff]
    %v1600 = vld [vmem:[#allocation10 + $0x15c8] sm:$0xff]
    %v1601 = vld [vmem:[#allocation10 + $0x15d0] sm:$0xf]
    %v1602 = vld [vmem:[#allocation10 + $0x15d4] sm:$0xff]
    %v1603 = vld [vmem:[#allocation10 + $0x15dc] sm:$0xff]
    %v1604 = vld [vmem:[#allocation10 + $0x15e4] sm:$0xff]
    %v1605 = vld [vmem:[#allocation10 + $0x15ec] sm:$0xff]
    %v1606 = vld [vmem:[#allocation10 + $0x15f4] sm:$0xff]
    %v1607 = vld [vmem:[#allocation10 + $0x15fc] sm:$0xf]
    %v1608 = vld [vmem:[#allocation10 + $0x1600] sm:$0xff]
    %v1609 = vld [vmem:[#allocation10 + $0x1608] sm:$0xff]
    %v1610 = vld [vmem:[#allocation10 + $0x1610] sm:$0xff]
    %v1611 = vld [vmem:[#allocation10 + $0x1618] sm:$0xff]
    %v1612 = vld [vmem:[#allocation10 + $0x1620] sm:$0xff]
    %v1613 = vld [vmem:[#allocation10 + $0x1628] sm:$0xf]
    %v1614 = vld [vmem:[#allocation10 + $0x162c] sm:$0xff]
    %v1615 = vld [vmem:[#allocation10 + $0x1634] sm:$0xff]
    %v1616 = vld [vmem:[#allocation10 + $0x163c] sm:$0xff]
    %v1617 = vld [vmem:[#allocation10 + $0x1644] sm:$0xff]
    %v1618 = vld [vmem:[#allocation10 + $0x164c] sm:$0xff]
    %v1619 = vld [vmem:[#allocation10 + $0x1654] sm:$0xf]
    %v1620 = vld [vmem:[#allocation10 + $0x1658] sm:$0xff]
    %v1621 = vld [vmem:[#allocation10 + $0x1660] sm:$0xff]
    %v1622 = vld [vmem:[#allocation10 + $0x1668] sm:$0xff]
    %v1623 = vld [vmem:[#allocation10 + $0x1670] sm:$0xff]
    %v1624 = vld [vmem:[#allocation10 + $0x1678] sm:$0xff]
    %v1625 = vld [vmem:[#allocation10 + $0x1680] sm:$0xf]
    %v1626 = vld [vmem:[#allocation10 + $0x1684] sm:$0xff]
    %v1627 = vld [vmem:[#allocation10 + $0x168c] sm:$0xff]
    %v1628 = vld [vmem:[#allocation10 + $0x1694] sm:$0xff]
    %v1629 = vld [vmem:[#allocation10 + $0x169c] sm:$0xff]
    %v1630 = vld [vmem:[#allocation10 + $0x16a4] sm:$0xff]
    %v1631 = vld [vmem:[#allocation10 + $0x16ac] sm:$0xf]
    %v1632 = vld [vmem:[#allocation10 + $0x16b0] sm:$0xff]
    %v1633 = vld [vmem:[#allocation10 + $0x16b8] sm:$0xff]
    %v1634 = vld [vmem:[#allocation10 + $0x16c0] sm:$0xff]
    %v1635 = vld [vmem:[#allocation10 + $0x16c8] sm:$0xff]
    %v1636 = vld [vmem:[#allocation10 + $0x16d0] sm:$0xff]
    %v1637 = vld [vmem:[#allocation10 + $0x16d8] sm:$0xf]
    %v1638 = vld [vmem:[#allocation10 + $0x16dc] sm:$0xff]
    %v1639 = vld [vmem:[#allocation10 + $0x16e4] sm:$0xff]
    %v1640 = vld [vmem:[#allocation10 + $0x16ec] sm:$0xff]
    %v1641 = vld [vmem:[#allocation10 + $0x16f4] sm:$0xff]
    %v1642 = vld [vmem:[#allocation10 + $0x16fc] sm:$0xff]
    %v1643 = vld [vmem:[#allocation10 + $0x1704] sm:$0xf]
    %v1644 = vld [vmem:[#allocation10 + $0x1708] sm:$0xff]
    %v1645 = vld [vmem:[#allocation10 + $0x1710] sm:$0xff]
    %v1646 = vld [vmem:[#allocation10 + $0x1718] sm:$0xff]
    %v1647 = vld [vmem:[#allocation10 + $0x1720] sm:$0xff]
    %v1648 = vld [vmem:[#allocation10 + $0x1728] sm:$0xff]
    %v1649 = vld [vmem:[#allocation10 + $0x1730] sm:$0xf]
    %v1650 = vld [vmem:[#allocation10 + $0x1734] sm:$0xff]
    %v1651 = vld [vmem:[#allocation10 + $0x173c] sm:$0xff]
    %v1652 = vld [vmem:[#allocation10 + $0x1744] sm:$0xff]
    %v1653 = vld [vmem:[#allocation10 + $0x174c] sm:$0xff]
    %v1654 = vld [vmem:[#allocation10 + $0x1754] sm:$0xff]
    %v1655 = vld [vmem:[#allocation10 + $0x175c] sm:$0xf]
    %v1656 = vld [vmem:[#allocation10 + $0x1760] sm:$0xff]
    %v1657 = vld [vmem:[#allocation10 + $0x1768] sm:$0xff]
    %v1658 = vld [vmem:[#allocation10 + $0x1770] sm:$0xff]
    %v1659 = vld [vmem:[#allocation10 + $0x1778] sm:$0xff]
    %v1660 = vld [vmem:[#allocation10 + $0x1780] sm:$0xff]
    %v1661 = vld [vmem:[#allocation10 + $0x1788] sm:$0xf]
    %v1662 = vld [vmem:[#allocation10 + $0x178c] sm:$0xff]
    %v1663 = vld [vmem:[#allocation10 + $0x1794] sm:$0xff]
    %v1664 = vld [vmem:[#allocation10 + $0x179c] sm:$0xff]
    %v1665 = vld [vmem:[#allocation10 + $0x17a4] sm:$0xff]
    %v1666 = vld [vmem:[#allocation10 + $0x17ac] sm:$0xff]
    %v1667 = vld [vmem:[#allocation10 + $0x17b4] sm:$0xf]
    %v1668 = vld [vmem:[#allocation10 + $0x17b8] sm:$0xff]
    %v1669 = vld [vmem:[#allocation10 + $0x17c0] sm:$0xff]
    %v1670 = vld [vmem:[#allocation10 + $0x17c8] sm:$0xff]
    %v1671 = vld [vmem:[#allocation10 + $0x17d0] sm:$0xff]
    %v1672 = vld [vmem:[#allocation10 + $0x17d8] sm:$0xff]
    %v1673 = vld [vmem:[#allocation10 + $0x17e0] sm:$0xf]
    %v1674 = vld [vmem:[#allocation10 + $0x17e4] sm:$0xff]
    %v1675 = vld [vmem:[#allocation10 + $0x17ec] sm:$0xff]
    %v1676 = vld [vmem:[#allocation10 + $0x17f4] sm:$0xff]
    %v1677 = vld [vmem:[#allocation10 + $0x17fc] sm:$0xff]
    %v1678 = vld [vmem:[#allocation10 + $0x1804] sm:$0xff]
    %v1679 = vld [vmem:[#allocation10 + $0x180c] sm:$0xf]
    %v1680 = vld [vmem:[#allocation10 + $0x1810] sm:$0xff]
    %v1681 = vld [vmem:[#allocation10 + $0x1818] sm:$0xff]
    %v1682 = vld [vmem:[#allocation10 + $0x1820] sm:$0xff]
    %v1683 = vld [vmem:[#allocation10 + $0x1828] sm:$0xff]
    %v1684 = vld [vmem:[#allocation10 + $0x1830] sm:$0xff]
    %v1685 = vld [vmem:[#allocation10 + $0x1838] sm:$0xf]
    %v1686 = vld [vmem:[#allocation10 + $0x183c] sm:$0xff]
    %v1687 = vld [vmem:[#allocation10 + $0x1844] sm:$0xff]
    %v1688 = vld [vmem:[#allocation10 + $0x184c] sm:$0xff]
    %v1689 = vld [vmem:[#allocation10 + $0x1854] sm:$0xff]
    %v1690 = vld [vmem:[#allocation10 + $0x185c] sm:$0xff]
    %v1691 = vld [vmem:[#allocation10 + $0x1864] sm:$0xf]
    %v1692 = vld [vmem:[#allocation10 + $0x1868] sm:$0xff]
    %v1693 = vld [vmem:[#allocation10 + $0x1870] sm:$0xff]
    %v1694 = vld [vmem:[#allocation10 + $0x1878] sm:$0xff]
    %v1695 = vld [vmem:[#allocation10 + $0x1880] sm:$0xff]
    %v1696 = vld [vmem:[#allocation10 + $0x1888] sm:$0xff]
    %v1697 = vld [vmem:[#allocation10 + $0x1890] sm:$0xf]
    %v1698 = vld [vmem:[#allocation10 + $0x1894] sm:$0xff]
    %v1699 = vld [vmem:[#allocation10 + $0x189c] sm:$0xff]
    %v1700 = vld [vmem:[#allocation10 + $0x18a4] sm:$0xff]
    %v1701 = vld [vmem:[#allocation10 + $0x18ac] sm:$0xff]
    %v1702 = vld [vmem:[#allocation10 + $0x18b4] sm:$0xff]
    %v1703 = vld [vmem:[#allocation10 + $0x18bc] sm:$0xf]
    %v1704 = vld [vmem:[#allocation10 + $0x18c0] sm:$0xff]
    %v1705 = vld [vmem:[#allocation10 + $0x18c8] sm:$0xff]
    %v1706 = vld [vmem:[#allocation10 + $0x18d0] sm:$0xff]
    %v1707 = vld [vmem:[#allocation10 + $0x18d8] sm:$0xff]
    %v1708 = vld [vmem:[#allocation10 + $0x18e0] sm:$0xff]
    %v1709 = vld [vmem:[#allocation10 + $0x18e8] sm:$0xf]
    %v1710 = vld [vmem:[#allocation10 + $0x18ec] sm:$0xff]
    %v1711 = vld [vmem:[#allocation10 + $0x18f4] sm:$0xff]
    %v1712 = vld [vmem:[#allocation10 + $0x18fc] sm:$0xff]
    %v1713 = vld [vmem:[#allocation10 + $0x1904] sm:$0xff]
    %v1714 = vld [vmem:[#allocation10 + $0x190c] sm:$0xff]
    %v1715 = vld [vmem:[#allocation10 + $0x1914] sm:$0xf]
    %v1716 = vld [vmem:[#allocation10 + $0x1918] sm:$0xff]
    %v1717 = vld [vmem:[#allocation10 + $0x1920] sm:$0xff]
    %v1718 = vld [vmem:[#allocation10 + $0x1928] sm:$0xff]
    %v1719 = vld [vmem:[#allocation10 + $0x1930] sm:$0xff]
    %v1720 = vld [vmem:[#allocation10 + $0x1938] sm:$0xff]
    %v1721 = vld [vmem:[#allocation10 + $0x1940] sm:$0xf]
    %v1722 = vld [vmem:[#allocation10 + $0x1944] sm:$0xff]
    %v1723 = vld [vmem:[#allocation10 + $0x194c] sm:$0xff]
    %v1724 = vld [vmem:[#allocation10 + $0x1954] sm:$0xff]
    %v1725 = vld [vmem:[#allocation10 + $0x195c] sm:$0xff]
    %v1726 = vld [vmem:[#allocation10 + $0x1964] sm:$0xff]
    %v1727 = vld [vmem:[#allocation10 + $0x196c] sm:$0xf]
    %v1728 = vld [vmem:[#allocation10 + $0x1970] sm:$0xff]
    %v1729 = vld [vmem:[#allocation10 + $0x1978] sm:$0xff]
    %v1730 = vld [vmem:[#allocation10 + $0x1980] sm:$0xff]
    %v1731 = vld [vmem:[#allocation10 + $0x1988] sm:$0xff]
    %v1732 = vld [vmem:[#allocation10 + $0x1990] sm:$0xff]
    %v1733 = vld [vmem:[#allocation10 + $0x1998] sm:$0xf]
    %v1734 = vld [vmem:[#allocation10 + $0x199c] sm:$0xff]
    %v1735 = vld [vmem:[#allocation10 + $0x19a4] sm:$0xff]
    %v1736 = vld [vmem:[#allocation10 + $0x19ac] sm:$0xff]
    %v1737 = vld [vmem:[#allocation10 + $0x19b4] sm:$0xff]
    %v1738 = vld [vmem:[#allocation10 + $0x19bc] sm:$0xff]
    %v1739 = vld [vmem:[#allocation10 + $0x19c4] sm:$0xf]
    %v1740 = vld [vmem:[#allocation10 + $0x19c8] sm:$0xff]
    %v1741 = vld [vmem:[#allocation10 + $0x19d0] sm:$0xff]
    %v1742 = vld [vmem:[#allocation10 + $0x19d8] sm:$0xff]
    %v1743 = vld [vmem:[#allocation10 + $0x19e0] sm:$0xff]
    %v1744 = vld [vmem:[#allocation10 + $0x19e8] sm:$0xff]
    %v1745 = vld [vmem:[#allocation10 + $0x19f0] sm:$0xf]
    %v1746 = vld [vmem:[#allocation10 + $0x19f4] sm:$0xff]
    %v1747 = vld [vmem:[#allocation10 + $0x19fc] sm:$0xff]
    %v1748 = vld [vmem:[#allocation10 + $0x1a04] sm:$0xff]
    %v1749 = vld [vmem:[#allocation10 + $0x1a0c] sm:$0xff]
    %v1750 = vld [vmem:[#allocation10 + $0x1a14] sm:$0xff]
    %v1751 = vld [vmem:[#allocation10 + $0x1a1c] sm:$0xf]
    %v1752 = vld [vmem:[#allocation10 + $0x1a20] sm:$0xff]
    %v1753 = vld [vmem:[#allocation10 + $0x1a28] sm:$0xff]
    %v1754 = vld [vmem:[#allocation10 + $0x1a30] sm:$0xff]
    %v1755 = vld [vmem:[#allocation10 + $0x1a38] sm:$0xff]
    %v1756 = vld [vmem:[#allocation10 + $0x1a40] sm:$0xff]
    %v1757 = vld [vmem:[#allocation10 + $0x1a48] sm:$0xf]
    %v1758 = vld [vmem:[#allocation10 + $0x1a4c] sm:$0xff]
    %v1759 = vld [vmem:[#allocation10 + $0x1a54] sm:$0xff]
    %v1760 = vld [vmem:[#allocation10 + $0x1a5c] sm:$0xff]
    %v1761 = vld [vmem:[#allocation10 + $0x1a64] sm:$0xff]
    %v1762 = vld [vmem:[#allocation10 + $0x1a6c] sm:$0xff]
    %v1763 = vld [vmem:[#allocation10 + $0x1a74] sm:$0xf]
    %v1764 = vld [vmem:[#allocation10 + $0x1a78] sm:$0xff]
    %v1765 = vld [vmem:[#allocation10 + $0x1a80] sm:$0xff]
    %v1766 = vld [vmem:[#allocation10 + $0x1a88] sm:$0xff]
    %v1767 = vld [vmem:[#allocation10 + $0x1a90] sm:$0xff]
    %v1768 = vld [vmem:[#allocation10 + $0x1a98] sm:$0xff]
    %v1769 = vld [vmem:[#allocation10 + $0x1aa0] sm:$0xf]
    %v1770 = vld [vmem:[#allocation10 + $0x1aa4] sm:$0xff]
    %v1771 = vld [vmem:[#allocation10 + $0x1aac] sm:$0xff]
    %v1772 = vld [vmem:[#allocation10 + $0x1ab4] sm:$0xff]
    %v1773 = vld [vmem:[#allocation10 + $0x1abc] sm:$0xff]
    %v1774 = vld [vmem:[#allocation10 + $0x1ac4] sm:$0xff]
    %v1775 = vld [vmem:[#allocation10 + $0x1acc] sm:$0xf]
    %v1776 = vld [vmem:[#allocation10 + $0x1ad0] sm:$0xff]
    %v1777 = vld [vmem:[#allocation10 + $0x1ad8] sm:$0xff]
    %v1778 = vld [vmem:[#allocation10 + $0x1ae0] sm:$0xff]
    %v1779 = vld [vmem:[#allocation10 + $0x1ae8] sm:$0xff]
    %v1780 = vld [vmem:[#allocation10 + $0x1af0] sm:$0xff]
    %v1781 = vld [vmem:[#allocation10 + $0x1af8] sm:$0xf]
    %v1782 = vld [vmem:[#allocation10 + $0x1afc] sm:$0xff]
    %v1783 = vld [vmem:[#allocation10 + $0x1b04] sm:$0xff]
    %v1784 = vld [vmem:[#allocation10 + $0x1b0c] sm:$0xff]
    %v1785 = vld [vmem:[#allocation10 + $0x1b14] sm:$0xff]
    %v1786 = vld [vmem:[#allocation10 + $0x1b1c] sm:$0xff]
    %v1787 = vld [vmem:[#allocation10 + $0x1b24] sm:$0xf]
    %v1788 = vld [vmem:[#allocation10 + $0x1b28] sm:$0xff]
    %v1789 = vld [vmem:[#allocation10 + $0x1b30] sm:$0xff]
    %v1790 = vld [vmem:[#allocation10 + $0x1b38] sm:$0xff]
    %v1791 = vld [vmem:[#allocation10 + $0x1b40] sm:$0xff]
    %v1792 = vld [vmem:[#allocation10 + $0x1b48] sm:$0xff]
    %v1793 = vld [vmem:[#allocation10 + $0x1b50] sm:$0xf]
    %v1794 = vld [vmem:[#allocation10 + $0x1b54] sm:$0xff]
    %v1795 = vld [vmem:[#allocation10 + $0x1b5c] sm:$0xff]
    %v1796 = vld [vmem:[#allocation10 + $0x1b64] sm:$0xff]
    %v1797 = vld [vmem:[#allocation10 + $0x1b6c] sm:$0xff]
    %v1798 = vld [vmem:[#allocation10 + $0x1b74] sm:$0xff]
    %v1799 = vld [vmem:[#allocation10 + $0x1b7c] sm:$0xf]
    %v1800 = vld [vmem:[#allocation11] sm:$0xff]
    %v1801 = vld [vmem:[#allocation11 + $0x8] sm:$0x7]
    %v1804 = vperm.slane %v1800, 0
    %v1805 = vperm.slane %v1800, 1
    %v1806 = vperm.slane %v1800, 2
    %v1807 = vperm.slane %v1800, 3
    %v1808 = vperm.slane %v1800, 4
    %v1809 = vperm.slane %v1800, 5
    %v1810 = vperm.slane %v1800, 6
    %v1811 = vperm.slane %v1800, 7
    %v1812 = vperm.slane %v1801, 0
    %v1813 = vperm.slane %v1801, 1
    %v1814 = vperm.slane %v1801, 2
    %v2786 = vunpack.c.l.b16 %v840
    %v2787 = vunpack.c.h.b16 %v840
    %v2788 = vunpack.c.l.b16 %v841
    %v2789 = vunpack.c.h.b16 %v841
    %v2790 = vunpack.c.l.b16 %v842
    %v2791 = vunpack.c.h.b16 %v842
    %v2792 = vunpack.c.l.b16 %v843
    %v2793 = vunpack.c.h.b16 %v843
    %v2794 = vunpack.c.l.b16 %v844
    %v2795 = vunpack.c.h.b16 %v844
    %v2796 = vunpack.c.l.b16 %v845
    %v2797 = vunpack.c.l.b16 %v846
    %v2798 = vunpack.c.h.b16 %v846
    %v2799 = vunpack.c.l.b16 %v847
    %v2800 = vunpack.c.h.b16 %v847
    %v2801 = vunpack.c.l.b16 %v848
    %v2802 = vunpack.c.h.b16 %v848
    %v2803 = vunpack.c.l.b16 %v849
    %v2804 = vunpack.c.h.b16 %v849
    %v2805 = vunpack.c.l.b16 %v850
    %v2806 = vunpack.c.h.b16 %v850
    %v2807 = vunpack.c.l.b16 %v851
    %v2808 = vunpack.c.l.b16 %v852
    %v2809 = vunpack.c.h.b16 %v852
    %v2810 = vunpack.c.l.b16 %v853
    %v2811 = vunpack.c.h.b16 %v853
    %v2812 = vunpack.c.l.b16 %v854
    %v2813 = vunpack.c.h.b16 %v854
    %v2814 = vunpack.c.l.b16 %v855
    %v2815 = vunpack.c.h.b16 %v855
    %v2816 = vunpack.c.l.b16 %v856
    %v2817 = vunpack.c.h.b16 %v856
    %v2818 = vunpack.c.l.b16 %v857
    %v2819 = vunpack.c.l.b16 %v858
    %v2820 = vunpack.c.h.b16 %v858
    %v2821 = vunpack.c.l.b16 %v859
    %v2822 = vunpack.c.h.b16 %v859
    %v2823 = vunpack.c.l.b16 %v860
    %v2824 = vunpack.c.h.b16 %v860
    %v2825 = vunpack.c.l.b16 %v861
    %v2826 = vunpack.c.h.b16 %v861
    %v2827 = vunpack.c.l.b16 %v862
    %v2828 = vunpack.c.h.b16 %v862
    %v2829 = vunpack.c.l.b16 %v863
    %v2830 = vunpack.c.l.b16 %v864
    %v2831 = vunpack.c.h.b16 %v864
    %v2832 = vunpack.c.l.b16 %v865
    %v2833 = vunpack.c.h.b16 %v865
    %v2834 = vunpack.c.l.b16 %v866
    %v2835 = vunpack.c.h.b16 %v866
    %v2836 = vunpack.c.l.b16 %v867
    %v2837 = vunpack.c.h.b16 %v867
    %v2838 = vunpack.c.l.b16 %v868
    %v2839 = vunpack.c.h.b16 %v868
    %v2840 = vunpack.c.l.b16 %v869
    %v2841 = vunpack.c.l.b16 %v870
    %v2842 = vunpack.c.h.b16 %v870
    %v2843 = vunpack.c.l.b16 %v871
    %v2844 = vunpack.c.h.b16 %v871
    %v2845 = vunpack.c.l.b16 %v872
    %v2846 = vunpack.c.h.b16 %v872
    %v2847 = vunpack.c.l.b16 %v873
    %v2848 = vunpack.c.h.b16 %v873
    %v2849 = vunpack.c.l.b16 %v874
    %v2850 = vunpack.c.h.b16 %v874
    %v2851 = vunpack.c.l.b16 %v875
    %v2852 = vunpack.c.l.b16 %v876
    %v2853 = vunpack.c.h.b16 %v876
    %v2854 = vunpack.c.l.b16 %v877
    %v2855 = vunpack.c.h.b16 %v877
    %v2856 = vunpack.c.l.b16 %v878
    %v2857 = vunpack.c.h.b16 %v878
    %v2858 = vunpack.c.l.b16 %v879
    %v2859 = vunpack.c.h.b16 %v879
    %v2860 = vunpack.c.l.b16 %v880
    %v2861 = vunpack.c.h.b16 %v880
    %v2862 = vunpack.c.l.b16 %v881
    %v2863 = vunpack.c.l.b16 %v882
    %v2864 = vunpack.c.h.b16 %v882
    %v2865 = vunpack.c.l.b16 %v883
    %v2866 = vunpack.c.h.b16 %v883
    %v2867 = vunpack.c.l.b16 %v884
    %v2868 = vunpack.c.h.b16 %v884
    %v2869 = vunpack.c.l.b16 %v885
    %v2870 = vunpack.c.h.b16 %v885
    %v2871 = vunpack.c.l.b16 %v886
    %v2872 = vunpack.c.h.b16 %v886
    %v2873 = vunpack.c.l.b16 %v887
    %v2874 = vunpack.c.l.b16 %v888
    %v2875 = vunpack.c.h.b16 %v888
    %v2876 = vunpack.c.l.b16 %v889
    %v2877 = vunpack.c.h.b16 %v889
    %v2878 = vunpack.c.l.b16 %v890
    %v2879 = vunpack.c.h.b16 %v890
    %v2880 = vunpack.c.l.b16 %v891
    %v2881 = vunpack.c.h.b16 %v891
    %v2882 = vunpack.c.l.b16 %v892
    %v2883 = vunpack.c.h.b16 %v892
    %v2884 = vunpack.c.l.b16 %v893
    %v2885 = vunpack.c.l.b16 %v894
    %v2886 = vunpack.c.h.b16 %v894
    %v2887 = vunpack.c.l.b16 %v895
    %v2888 = vunpack.c.h.b16 %v895
    %v2889 = vunpack.c.l.b16 %v896
    %v2890 = vunpack.c.h.b16 %v896
    %v2891 = vunpack.c.l.b16 %v897
    %v2892 = vunpack.c.h.b16 %v897
    %v2893 = vunpack.c.l.b16 %v898
    %v2894 = vunpack.c.h.b16 %v898
    %v2895 = vunpack.c.l.b16 %v899
    %v2896 = vunpack.c.l.b16 %v900
    %v2897 = vunpack.c.h.b16 %v900
    %v2898 = vunpack.c.l.b16 %v901
    %v2899 = vunpack.c.h.b16 %v901
    %v2900 = vunpack.c.l.b16 %v902
    %v2901 = vunpack.c.h.b16 %v902
    %v2902 = vunpack.c.l.b16 %v903
    %v2903 = vunpack.c.h.b16 %v903
    %v2904 = vunpack.c.l.b16 %v904
    %v2905 = vunpack.c.h.b16 %v904
    %v2906 = vunpack.c.l.b16 %v905
    %v2907 = vunpack.c.l.b16 %v906
    %v2908 = vunpack.c.h.b16 %v906
    %v2909 = vunpack.c.l.b16 %v907
    %v2910 = vunpack.c.h.b16 %v907
    %v2911 = vunpack.c.l.b16 %v908
    %v2912 = vunpack.c.h.b16 %v908
    %v2913 = vunpack.c.l.b16 %v909
    %v2914 = vunpack.c.h.b16 %v909
    %v2915 = vunpack.c.l.b16 %v910
    %v2916 = vunpack.c.h.b16 %v910
    %v2917 = vunpack.c.l.b16 %v911
    %v2918 = vunpack.c.l.b16 %v912
    %v2919 = vunpack.c.h.b16 %v912
    %v2920 = vunpack.c.l.b16 %v913
    %v2921 = vunpack.c.h.b16 %v913
    %v2922 = vunpack.c.l.b16 %v914
    %v2923 = vunpack.c.h.b16 %v914
    %v2924 = vunpack.c.l.b16 %v915
    %v2925 = vunpack.c.h.b16 %v915
    %v2926 = vunpack.c.l.b16 %v916
    %v2927 = vunpack.c.h.b16 %v916
    %v2928 = vunpack.c.l.b16 %v917
    %v2929 = vunpack.c.l.b16 %v918
    %v2930 = vunpack.c.h.b16 %v918
    %v2931 = vunpack.c.l.b16 %v919
    %v2932 = vunpack.c.h.b16 %v919
    %v2933 = vunpack.c.l.b16 %v920
    %v2934 = vunpack.c.h.b16 %v920
    %v2935 = vunpack.c.l.b16 %v921
    %v2936 = vunpack.c.h.b16 %v921
    %v2937 = vunpack.c.l.b16 %v922
    %v2938 = vunpack.c.h.b16 %v922
    %v2939 = vunpack.c.l.b16 %v923
    %v2940 = vunpack.c.l.b16 %v924
    %v2941 = vunpack.c.h.b16 %v924
    %v2942 = vunpack.c.l.b16 %v925
    %v2943 = vunpack.c.h.b16 %v925
    %v2944 = vunpack.c.l.b16 %v926
    %v2945 = vunpack.c.h.b16 %v926
    %v2946 = vunpack.c.l.b16 %v927
    %v2947 = vunpack.c.h.b16 %v927
    %v2948 = vunpack.c.l.b16 %v928
    %v2949 = vunpack.c.h.b16 %v928
    %v2950 = vunpack.c.l.b16 %v929
    %v2951 = vunpack.c.l.b16 %v930
    %v2952 = vunpack.c.h.b16 %v930
    %v2953 = vunpack.c.l.b16 %v931
    %v2954 = vunpack.c.h.b16 %v931
    %v2955 = vunpack.c.l.b16 %v932
    %v2956 = vunpack.c.h.b16 %v932
    %v2957 = vunpack.c.l.b16 %v933
    %v2958 = vunpack.c.h.b16 %v933
    %v2959 = vunpack.c.l.b16 %v934
    %v2960 = vunpack.c.h.b16 %v934
    %v2961 = vunpack.c.l.b16 %v935
    %v2962 = vunpack.c.l.b16 %v936
    %v2963 = vunpack.c.h.b16 %v936
    %v2964 = vunpack.c.l.b16 %v937
    %v2965 = vunpack.c.h.b16 %v937
    %v2966 = vunpack.c.l.b16 %v938
    %v2967 = vunpack.c.h.b16 %v938
    %v2968 = vunpack.c.l.b16 %v939
    %v2969 = vunpack.c.h.b16 %v939
    %v2970 = vunpack.c.l.b16 %v940
    %v2971 = vunpack.c.h.b16 %v940
    %v2972 = vunpack.c.l.b16 %v941
    %v2973 = vunpack.c.l.b16 %v942
    %v2974 = vunpack.c.h.b16 %v942
    %v2975 = vunpack.c.l.b16 %v943
    %v2976 = vunpack.c.h.b16 %v943
    %v2977 = vunpack.c.l.b16 %v944
    %v2978 = vunpack.c.h.b16 %v944
    %v2979 = vunpack.c.l.b16 %v945
    %v2980 = vunpack.c.h.b16 %v945
    %v2981 = vunpack.c.l.b16 %v946
    %v2982 = vunpack.c.h.b16 %v946
    %v2983 = vunpack.c.l.b16 %v947
    %v2984 = vunpack.c.l.b16 %v948
    %v2985 = vunpack.c.h.b16 %v948
    %v2986 = vunpack.c.l.b16 %v949
    %v2987 = vunpack.c.h.b16 %v949
    %v2988 = vunpack.c.l.b16 %v950
    %v2989 = vunpack.c.h.b16 %v950
    %v2990 = vunpack.c.l.b16 %v951
    %v2991 = vunpack.c.h.b16 %v951
    %v2992 = vunpack.c.l.b16 %v952
    %v2993 = vunpack.c.h.b16 %v952
    %v2994 = vunpack.c.l.b16 %v953
    %v2995 = vunpack.c.l.b16 %v954
    %v2996 = vunpack.c.h.b16 %v954
    %v2997 = vunpack.c.l.b16 %v955
    %v2998 = vunpack.c.h.b16 %v955
    %v2999 = vunpack.c.l.b16 %v956
    %v3000 = vunpack.c.h.b16 %v956
    %v3001 = vunpack.c.l.b16 %v957
    %v3002 = vunpack.c.h.b16 %v957
    %v3003 = vunpack.c.l.b16 %v958
    %v3004 = vunpack.c.h.b16 %v958
    %v3005 = vunpack.c.l.b16 %v959
    %v3006 = vunpack.c.l.b16 %v960
    %v3007 = vunpack.c.h.b16 %v960
    %v3008 = vunpack.c.l.b16 %v961
    %v3009 = vunpack.c.h.b16 %v961
    %v3010 = vunpack.c.l.b16 %v962
    %v3011 = vunpack.c.h.b16 %v962
    %v3012 = vunpack.c.l.b16 %v963
    %v3013 = vunpack.c.h.b16 %v963
    %v3014 = vunpack.c.l.b16 %v964
    %v3015 = vunpack.c.h.b16 %v964
    %v3016 = vunpack.c.l.b16 %v965
    %v3017 = vunpack.c.l.b16 %v966
    %v3018 = vunpack.c.h.b16 %v966
    %v3019 = vunpack.c.l.b16 %v967
    %v3020 = vunpack.c.h.b16 %v967
    %v3021 = vunpack.c.l.b16 %v968
    %v3022 = vunpack.c.h.b16 %v968
    %v3023 = vunpack.c.l.b16 %v969
    %v3024 = vunpack.c.h.b16 %v969
    %v3025 = vunpack.c.l.b16 %v970
    %v3026 = vunpack.c.h.b16 %v970
    %v3027 = vunpack.c.l.b16 %v971
    %v3028 = vunpack.c.l.b16 %v972
    %v3029 = vunpack.c.h.b16 %v972
    %v3030 = vunpack.c.l.b16 %v973
    %v3031 = vunpack.c.h.b16 %v973
    %v3032 = vunpack.c.l.b16 %v974
    %v3033 = vunpack.c.h.b16 %v974
    %v3034 = vunpack.c.l.b16 %v975
    %v3035 = vunpack.c.h.b16 %v975
    %v3036 = vunpack.c.l.b16 %v976
    %v3037 = vunpack.c.h.b16 %v976
    %v3038 = vunpack.c.l.b16 %v977
    %v3039 = vunpack.c.l.b16 %v978
    %v3040 = vunpack.c.h.b16 %v978
    %v3041 = vunpack.c.l.b16 %v979
    %v3042 = vunpack.c.h.b16 %v979
    %v3043 = vunpack.c.l.b16 %v980
    %v3044 = vunpack.c.h.b16 %v980
    %v3045 = vunpack.c.l.b16 %v981
    %v3046 = vunpack.c.h.b16 %v981
    %v3047 = vunpack.c.l.b16 %v982
    %v3048 = vunpack.c.h.b16 %v982
    %v3049 = vunpack.c.l.b16 %v983
    %v3050 = vunpack.c.l.b16 %v984
    %v3051 = vunpack.c.h.b16 %v984
    %v3052 = vunpack.c.l.b16 %v985
    %v3053 = vunpack.c.h.b16 %v985
    %v3054 = vunpack.c.l.b16 %v986
    %v3055 = vunpack.c.h.b16 %v986
    %v3056 = vunpack.c.l.b16 %v987
    %v3057 = vunpack.c.h.b16 %v987
    %v3058 = vunpack.c.l.b16 %v988
    %v3059 = vunpack.c.h.b16 %v988
    %v3060 = vunpack.c.l.b16 %v989
    %v3061 = vunpack.c.l.b16 %v990
    %v3062 = vunpack.c.h.b16 %v990
    %v3063 = vunpack.c.l.b16 %v991
    %v3064 = vunpack.c.h.b16 %v991
    %v3065 = vunpack.c.l.b16 %v992
    %v3066 = vunpack.c.h.b16 %v992
    %v3067 = vunpack.c.l.b16 %v993
    %v3068 = vunpack.c.h.b16 %v993
    %v3069 = vunpack.c.l.b16 %v994
    %v3070 = vunpack.c.h.b16 %v994
    %v3071 = vunpack.c.l.b16 %v995
    %v3072 = vunpack.c.l.b16 %v996
    %v3073 = vunpack.c.h.b16 %v996
    %v3074 = vunpack.c.l.b16 %v997
    %v3075 = vunpack.c.h.b16 %v997
    %v3076 = vunpack.c.l.b16 %v998
    %v3077 = vunpack.c.h.b16 %v998
    %v3078 = vunpack.c.l.b16 %v999
    %v3079 = vunpack.c.h.b16 %v999
    %v3080 = vunpack.c.l.b16 %v1000
    %v3081 = vunpack.c.h.b16 %v1000
    %v3082 = vunpack.c.l.b16 %v1001
    %v3083 = vunpack.c.l.b16 %v1002
    %v3084 = vunpack.c.h.b16 %v1002
    %v3085 = vunpack.c.l.b16 %v1003
    %v3086 = vunpack.c.h.b16 %v1003
    %v3087 = vunpack.c.l.b16 %v1004
    %v3088 = vunpack.c.h.b16 %v1004
    %v3089 = vunpack.c.l.b16 %v1005
    %v3090 = vunpack.c.h.b16 %v1005
    %v3091 = vunpack.c.l.b16 %v1006
    %v3092 = vunpack.c.h.b16 %v1006
    %v3093 = vunpack.c.l.b16 %v1007
    %v3094 = vunpack.c.l.b16 %v1008
    %v3095 = vunpack.c.h.b16 %v1008
    %v3096 = vunpack.c.l.b16 %v1009
    %v3097 = vunpack.c.h.b16 %v1009
    %v3098 = vunpack.c.l.b16 %v1010
    %v3099 = vunpack.c.h.b16 %v1010
    %v3100 = vunpack.c.l.b16 %v1011
    %v3101 = vunpack.c.h.b16 %v1011
    %v3102 = vunpack.c.l.b16 %v1012
    %v3103 = vunpack.c.h.b16 %v1012
    %v3104 = vunpack.c.l.b16 %v1013
    %v3105 = vunpack.c.l.b16 %v1014
    %v3106 = vunpack.c.h.b16 %v1014
    %v3107 = vunpack.c.l.b16 %v1015
    %v3108 = vunpack.c.h.b16 %v1015
    %v3109 = vunpack.c.l.b16 %v1016
    %v3110 = vunpack.c.h.b16 %v1016
    %v3111 = vunpack.c.l.b16 %v1017
    %v3112 = vunpack.c.h.b16 %v1017
    %v3113 = vunpack.c.l.b16 %v1018
    %v3114 = vunpack.c.h.b16 %v1018
    %v3115 = vunpack.c.l.b16 %v1019
    %v3116 = vunpack.c.l.b16 %v1020
    %v3117 = vunpack.c.h.b16 %v1020
    %v3118 = vunpack.c.l.b16 %v1021
    %v3119 = vunpack.c.h.b16 %v1021
    %v3120 = vunpack.c.l.b16 %v1022
    %v3121 = vunpack.c.h.b16 %v1022
    %v3122 = vunpack.c.l.b16 %v1023
    %v3123 = vunpack.c.h.b16 %v1023
    %v3124 = vunpack.c.l.b16 %v1024
    %v3125 = vunpack.c.h.b16 %v1024
    %v3126 = vunpack.c.l.b16 %v1025
    %v3127 = vunpack.c.l.b16 %v1026
    %v3128 = vunpack.c.h.b16 %v1026
    %v3129 = vunpack.c.l.b16 %v1027
    %v3130 = vunpack.c.h.b16 %v1027
    %v3131 = vunpack.c.l.b16 %v1028
    %v3132 = vunpack.c.h.b16 %v1028
    %v3133 = vunpack.c.l.b16 %v1029
    %v3134 = vunpack.c.h.b16 %v1029
    %v3135 = vunpack.c.l.b16 %v1030
    %v3136 = vunpack.c.h.b16 %v1030
    %v3137 = vunpack.c.l.b16 %v1031
    %v3138 = vunpack.c.l.b16 %v1032
    %v3139 = vunpack.c.h.b16 %v1032
    %v3140 = vunpack.c.l.b16 %v1033
    %v3141 = vunpack.c.h.b16 %v1033
    %v3142 = vunpack.c.l.b16 %v1034
    %v3143 = vunpack.c.h.b16 %v1034
    %v3144 = vunpack.c.l.b16 %v1035
    %v3145 = vunpack.c.h.b16 %v1035
    %v3146 = vunpack.c.l.b16 %v1036
    %v3147 = vunpack.c.h.b16 %v1036
    %v3148 = vunpack.c.l.b16 %v1037
    %v3149 = vunpack.c.l.b16 %v1038
    %v3150 = vunpack.c.h.b16 %v1038
    %v3151 = vunpack.c.l.b16 %v1039
    %v3152 = vunpack.c.h.b16 %v1039
    %v3153 = vunpack.c.l.b16 %v1040
    %v3154 = vunpack.c.h.b16 %v1040
    %v3155 = vunpack.c.l.b16 %v1041
    %v3156 = vunpack.c.h.b16 %v1041
    %v3157 = vunpack.c.l.b16 %v1042
    %v3158 = vunpack.c.h.b16 %v1042
    %v3159 = vunpack.c.l.b16 %v1043
    %v3160 = vunpack.c.l.b16 %v1044
    %v3161 = vunpack.c.h.b16 %v1044
    %v3162 = vunpack.c.l.b16 %v1045
    %v3163 = vunpack.c.h.b16 %v1045
    %v3164 = vunpack.c.l.b16 %v1046
    %v3165 = vunpack.c.h.b16 %v1046
    %v3166 = vunpack.c.l.b16 %v1047
    %v3167 = vunpack.c.h.b16 %v1047
    %v3168 = vunpack.c.l.b16 %v1048
    %v3169 = vunpack.c.h.b16 %v1048
    %v3170 = vunpack.c.l.b16 %v1049
    %v3171 = vunpack.c.l.b16 %v1050
    %v3172 = vunpack.c.h.b16 %v1050
    %v3173 = vunpack.c.l.b16 %v1051
    %v3174 = vunpack.c.h.b16 %v1051
    %v3175 = vunpack.c.l.b16 %v1052
    %v3176 = vunpack.c.h.b16 %v1052
    %v3177 = vunpack.c.l.b16 %v1053
    %v3178 = vunpack.c.h.b16 %v1053
    %v3179 = vunpack.c.l.b16 %v1054
    %v3180 = vunpack.c.h.b16 %v1054
    %v3181 = vunpack.c.l.b16 %v1055
    %v3182 = vunpack.c.l.b16 %v1056
    %v3183 = vunpack.c.h.b16 %v1056
    %v3184 = vunpack.c.l.b16 %v1057
    %v3185 = vunpack.c.h.b16 %v1057
    %v3186 = vunpack.c.l.b16 %v1058
    %v3187 = vunpack.c.h.b16 %v1058
    %v3188 = vunpack.c.l.b16 %v1059
    %v3189 = vunpack.c.h.b16 %v1059
    %v3190 = vunpack.c.l.b16 %v1060
    %v3191 = vunpack.c.h.b16 %v1060
    %v3192 = vunpack.c.l.b16 %v1061
    %v3193 = vunpack.c.l.b16 %v1062
    %v3194 = vunpack.c.h.b16 %v1062
    %v3195 = vunpack.c.l.b16 %v1063
    %v3196 = vunpack.c.h.b16 %v1063
    %v3197 = vunpack.c.l.b16 %v1064
    %v3198 = vunpack.c.h.b16 %v1064
    %v3199 = vunpack.c.l.b16 %v1065
    %v3200 = vunpack.c.h.b16 %v1065
    %v3201 = vunpack.c.l.b16 %v1066
    %v3202 = vunpack.c.h.b16 %v1066
    %v3203 = vunpack.c.l.b16 %v1067
    %v3204 = vunpack.c.l.b16 %v1068
    %v3205 = vunpack.c.h.b16 %v1068
    %v3206 = vunpack.c.l.b16 %v1069
    %v3207 = vunpack.c.h.b16 %v1069
    %v3208 = vunpack.c.l.b16 %v1070
    %v3209 = vunpack.c.h.b16 %v1070
    %v3210 = vunpack.c.l.b16 %v1071
    %v3211 = vunpack.c.h.b16 %v1071
    %v3212 = vunpack.c.l.b16 %v1072
    %v3213 = vunpack.c.h.b16 %v1072
    %v3214 = vunpack.c.l.b16 %v1073
    %v3215 = vunpack.c.l.b16 %v1074
    %v3216 = vunpack.c.h.b16 %v1074
    %v3217 = vunpack.c.l.b16 %v1075
    %v3218 = vunpack.c.h.b16 %v1075
    %v3219 = vunpack.c.l.b16 %v1076
    %v3220 = vunpack.c.h.b16 %v1076
    %v3221 = vunpack.c.l.b16 %v1077
    %v3222 = vunpack.c.h.b16 %v1077
    %v3223 = vunpack.c.l.b16 %v1078
    %v3224 = vunpack.c.h.b16 %v1078
    %v3225 = vunpack.c.l.b16 %v1079
    %v3226 = vunpack.c.l.b16 %v1080
    %v3227 = vunpack.c.h.b16 %v1080
    %v3228 = vunpack.c.l.b16 %v1081
    %v3229 = vunpack.c.h.b16 %v1081
    %v3230 = vunpack.c.l.b16 %v1082
    %v3231 = vunpack.c.h.b16 %v1082
    %v3232 = vunpack.c.l.b16 %v1083
    %v3233 = vunpack.c.h.b16 %v1083
    %v3234 = vunpack.c.l.b16 %v1084
    %v3235 = vunpack.c.h.b16 %v1084
    %v3236 = vunpack.c.l.b16 %v1085
    %v3237 = vunpack.c.l.b16 %v1086
    %v3238 = vunpack.c.h.b16 %v1086
    %v3239 = vunpack.c.l.b16 %v1087
    %v3240 = vunpack.c.h.b16 %v1087
    %v3241 = vunpack.c.l.b16 %v1088
    %v3242 = vunpack.c.h.b16 %v1088
    %v3243 = vunpack.c.l.b16 %v1089
    %v3244 = vunpack.c.h.b16 %v1089
    %v3245 = vunpack.c.l.b16 %v1090
    %v3246 = vunpack.c.h.b16 %v1090
    %v3247 = vunpack.c.l.b16 %v1091
    %v3248 = vunpack.c.l.b16 %v1092
    %v3249 = vunpack.c.h.b16 %v1092
    %v3250 = vunpack.c.l.b16 %v1093
    %v3251 = vunpack.c.h.b16 %v1093
    %v3252 = vunpack.c.l.b16 %v1094
    %v3253 = vunpack.c.h.b16 %v1094
    %v3254 = vunpack.c.l.b16 %v1095
    %v3255 = vunpack.c.h.b16 %v1095
    %v3256 = vunpack.c.l.b16 %v1096
    %v3257 = vunpack.c.h.b16 %v1096
    %v3258 = vunpack.c.l.b16 %v1097
    %v3259 = vunpack.c.l.b16 %v1098
    %v3260 = vunpack.c.h.b16 %v1098
    %v3261 = vunpack.c.l.b16 %v1099
    %v3262 = vunpack.c.h.b16 %v1099
    %v3263 = vunpack.c.l.b16 %v1100
    %v3264 = vunpack.c.h.b16 %v1100
    %v3265 = vunpack.c.l.b16 %v1101
    %v3266 = vunpack.c.h.b16 %v1101
    %v3267 = vunpack.c.l.b16 %v1102
    %v3268 = vunpack.c.h.b16 %v1102
    %v3269 = vunpack.c.l.b16 %v1103
    %v3270 = vunpack.c.l.b16 %v1104
    %v3271 = vunpack.c.h.b16 %v1104
    %v3272 = vunpack.c.l.b16 %v1105
    %v3273 = vunpack.c.h.b16 %v1105
    %v3274 = vunpack.c.l.b16 %v1106
    %v3275 = vunpack.c.h.b16 %v1106
    %v3276 = vunpack.c.l.b16 %v1107
    %v3277 = vunpack.c.h.b16 %v1107
    %v3278 = vunpack.c.l.b16 %v1108
    %v3279 = vunpack.c.h.b16 %v1108
    %v3280 = vunpack.c.l.b16 %v1109
    %v3281 = vunpack.c.l.b16 %v1110
    %v3282 = vunpack.c.h.b16 %v1110
    %v3283 = vunpack.c.l.b16 %v1111
    %v3284 = vunpack.c.h.b16 %v1111
    %v3285 = vunpack.c.l.b16 %v1112
    %v3286 = vunpack.c.h.b16 %v1112
    %v3287 = vunpack.c.l.b16 %v1113
    %v3288 = vunpack.c.h.b16 %v1113
    %v3289 = vunpack.c.l.b16 %v1114
    %v3290 = vunpack.c.h.b16 %v1114
    %v3291 = vunpack.c.l.b16 %v1115
    %v3292 = vunpack.c.l.b16 %v1116
    %v3293 = vunpack.c.h.b16 %v1116
    %v3294 = vunpack.c.l.b16 %v1117
    %v3295 = vunpack.c.h.b16 %v1117
    %v3296 = vunpack.c.l.b16 %v1118
    %v3297 = vunpack.c.h.b16 %v1118
    %v3298 = vunpack.c.l.b16 %v1119
    %v3299 = vunpack.c.h.b16 %v1119
    %v3300 = vunpack.c.l.b16 %v1120
    %v3301 = vunpack.c.h.b16 %v1120
    %v3302 = vunpack.c.l.b16 %v1121
    %v3303 = vunpack.c.l.b16 %v1122
    %v3304 = vunpack.c.h.b16 %v1122
    %v3305 = vunpack.c.l.b16 %v1123
    %v3306 = vunpack.c.h.b16 %v1123
    %v3307 = vunpack.c.l.b16 %v1124
    %v3308 = vunpack.c.h.b16 %v1124
    %v3309 = vunpack.c.l.b16 %v1125
    %v3310 = vunpack.c.h.b16 %v1125
    %v3311 = vunpack.c.l.b16 %v1126
    %v3312 = vunpack.c.h.b16 %v1126
    %v3313 = vunpack.c.l.b16 %v1127
    %v3314 = vunpack.c.l.b16 %v1128
    %v3315 = vunpack.c.h.b16 %v1128
    %v3316 = vunpack.c.l.b16 %v1129
    %v3317 = vunpack.c.h.b16 %v1129
    %v3318 = vunpack.c.l.b16 %v1130
    %v3319 = vunpack.c.h.b16 %v1130
    %v3320 = vunpack.c.l.b16 %v1131
    %v3321 = vunpack.c.h.b16 %v1131
    %v3322 = vunpack.c.l.b16 %v1132
    %v3323 = vunpack.c.h.b16 %v1132
    %v3324 = vunpack.c.l.b16 %v1133
    %v3325 = vunpack.c.l.b16 %v1134
    %v3326 = vunpack.c.h.b16 %v1134
    %v3327 = vunpack.c.l.b16 %v1135
    %v3328 = vunpack.c.h.b16 %v1135
    %v3329 = vunpack.c.l.b16 %v1136
    %v3330 = vunpack.c.h.b16 %v1136
    %v3331 = vunpack.c.l.b16 %v1137
    %v3332 = vunpack.c.h.b16 %v1137
    %v3333 = vunpack.c.l.b16 %v1138
    %v3334 = vunpack.c.h.b16 %v1138
    %v3335 = vunpack.c.l.b16 %v1139
    %v3336 = vunpack.c.l.b16 %v1140
    %v3337 = vunpack.c.h.b16 %v1140
    %v3338 = vunpack.c.l.b16 %v1141
    %v3339 = vunpack.c.h.b16 %v1141
    %v3340 = vunpack.c.l.b16 %v1142
    %v3341 = vunpack.c.h.b16 %v1142
    %v3342 = vunpack.c.l.b16 %v1143
    %v3343 = vunpack.c.h.b16 %v1143
    %v3344 = vunpack.c.l.b16 %v1144
    %v3345 = vunpack.c.h.b16 %v1144
    %v3346 = vunpack.c.l.b16 %v1145
    %v3347 = vunpack.c.l.b16 %v1146
    %v3348 = vunpack.c.h.b16 %v1146
    %v3349 = vunpack.c.l.b16 %v1147
    %v3350 = vunpack.c.h.b16 %v1147
    %v3351 = vunpack.c.l.b16 %v1148
    %v3352 = vunpack.c.h.b16 %v1148
    %v3353 = vunpack.c.l.b16 %v1149
    %v3354 = vunpack.c.h.b16 %v1149
    %v3355 = vunpack.c.l.b16 %v1150
    %v3356 = vunpack.c.h.b16 %v1150
    %v3357 = vunpack.c.l.b16 %v1151
    %v3358 = vunpack.c.l.b16 %v1152
    %v3359 = vunpack.c.h.b16 %v1152
    %v3360 = vunpack.c.l.b16 %v1153
    %v3361 = vunpack.c.h.b16 %v1153
    %v3362 = vunpack.c.l.b16 %v1154
    %v3363 = vunpack.c.h.b16 %v1154
    %v3364 = vunpack.c.l.b16 %v1155
    %v3365 = vunpack.c.h.b16 %v1155
    %v3366 = vunpack.c.l.b16 %v1156
    %v3367 = vunpack.c.h.b16 %v1156
    %v3368 = vunpack.c.l.b16 %v1157
    %v3369 = vunpack.c.l.b16 %v1158
    %v3370 = vunpack.c.h.b16 %v1158
    %v3371 = vunpack.c.l.b16 %v1159
    %v3372 = vunpack.c.h.b16 %v1159
    %v3373 = vunpack.c.l.b16 %v1160
    %v3374 = vunpack.c.h.b16 %v1160
    %v3375 = vunpack.c.l.b16 %v1161
    %v3376 = vunpack.c.h.b16 %v1161
    %v3377 = vunpack.c.l.b16 %v1162
    %v3378 = vunpack.c.h.b16 %v1162
    %v3379 = vunpack.c.l.b16 %v1163
    %v3380 = vunpack.c.l.b16 %v1164
    %v3381 = vunpack.c.h.b16 %v1164
    %v3382 = vunpack.c.l.b16 %v1165
    %v3383 = vunpack.c.h.b16 %v1165
    %v3384 = vunpack.c.l.b16 %v1166
    %v3385 = vunpack.c.h.b16 %v1166
    %v3386 = vunpack.c.l.b16 %v1167
    %v3387 = vunpack.c.h.b16 %v1167
    %v3388 = vunpack.c.l.b16 %v1168
    %v3389 = vunpack.c.h.b16 %v1168
    %v3390 = vunpack.c.l.b16 %v1169
    %v3391 = vunpack.c.l.b16 %v1170
    %v3392 = vunpack.c.h.b16 %v1170
    %v3393 = vunpack.c.l.b16 %v1171
    %v3394 = vunpack.c.h.b16 %v1171
    %v3395 = vunpack.c.l.b16 %v1172
    %v3396 = vunpack.c.h.b16 %v1172
    %v3397 = vunpack.c.l.b16 %v1173
    %v3398 = vunpack.c.h.b16 %v1173
    %v3399 = vunpack.c.l.b16 %v1174
    %v3400 = vunpack.c.h.b16 %v1174
    %v3401 = vunpack.c.l.b16 %v1175
    %v3402 = vunpack.c.l.b16 %v1176
    %v3403 = vunpack.c.h.b16 %v1176
    %v3404 = vunpack.c.l.b16 %v1177
    %v3405 = vunpack.c.h.b16 %v1177
    %v3406 = vunpack.c.l.b16 %v1178
    %v3407 = vunpack.c.h.b16 %v1178
    %v3408 = vunpack.c.l.b16 %v1179
    %v3409 = vunpack.c.h.b16 %v1179
    %v3410 = vunpack.c.l.b16 %v1180
    %v3411 = vunpack.c.h.b16 %v1180
    %v3412 = vunpack.c.l.b16 %v1181
    %v3413 = vunpack.c.l.b16 %v1182
    %v3414 = vunpack.c.h.b16 %v1182
    %v3415 = vunpack.c.l.b16 %v1183
    %v3416 = vunpack.c.h.b16 %v1183
    %v3417 = vunpack.c.l.b16 %v1184
    %v3418 = vunpack.c.h.b16 %v1184
    %v3419 = vunpack.c.l.b16 %v1185
    %v3420 = vunpack.c.h.b16 %v1185
    %v3421 = vunpack.c.l.b16 %v1186
    %v3422 = vunpack.c.h.b16 %v1186
    %v3423 = vunpack.c.l.b16 %v1187
    %v3424 = vunpack.c.l.b16 %v1188
    %v3425 = vunpack.c.h.b16 %v1188
    %v3426 = vunpack.c.l.b16 %v1189
    %v3427 = vunpack.c.h.b16 %v1189
    %v3428 = vunpack.c.l.b16 %v1190
    %v3429 = vunpack.c.h.b16 %v1190
    %v3430 = vunpack.c.l.b16 %v1191
    %v3431 = vunpack.c.h.b16 %v1191
    %v3432 = vunpack.c.l.b16 %v1192
    %v3433 = vunpack.c.h.b16 %v1192
    %v3434 = vunpack.c.l.b16 %v1193
    %v3435 = vunpack.c.l.b16 %v1194
    %v3436 = vunpack.c.h.b16 %v1194
    %v3437 = vunpack.c.l.b16 %v1195
    %v3438 = vunpack.c.h.b16 %v1195
    %v3439 = vunpack.c.l.b16 %v1196
    %v3440 = vunpack.c.h.b16 %v1196
    %v3441 = vunpack.c.l.b16 %v1197
    %v3442 = vunpack.c.h.b16 %v1197
    %v3443 = vunpack.c.l.b16 %v1198
    %v3444 = vunpack.c.h.b16 %v1198
    %v3445 = vunpack.c.l.b16 %v1199
    %v3446 = vunpack.c.l.b16 %v1200
    %v3447 = vunpack.c.h.b16 %v1200
    %v3448 = vunpack.c.l.b16 %v1201
    %v3449 = vunpack.c.h.b16 %v1201
    %v3450 = vunpack.c.l.b16 %v1202
    %v3451 = vunpack.c.h.b16 %v1202
    %v3452 = vunpack.c.l.b16 %v1203
    %v3453 = vunpack.c.h.b16 %v1203
    %v3454 = vunpack.c.l.b16 %v1204
    %v3455 = vunpack.c.h.b16 %v1204
    %v3456 = vunpack.c.l.b16 %v1205
    %v3457 = vunpack.c.l.b16 %v1206
    %v3458 = vunpack.c.h.b16 %v1206
    %v3459 = vunpack.c.l.b16 %v1207
    %v3460 = vunpack.c.h.b16 %v1207
    %v3461 = vunpack.c.l.b16 %v1208
    %v3462 = vunpack.c.h.b16 %v1208
    %v3463 = vunpack.c.l.b16 %v1209
    %v3464 = vunpack.c.h.b16 %v1209
    %v3465 = vunpack.c.l.b16 %v1210
    %v3466 = vunpack.c.h.b16 %v1210
    %v3467 = vunpack.c.l.b16 %v1211
    %v3468 = vunpack.c.l.b16 %v1212
    %v3469 = vunpack.c.h.b16 %v1212
    %v3470 = vunpack.c.l.b16 %v1213
    %v3471 = vunpack.c.h.b16 %v1213
    %v3472 = vunpack.c.l.b16 %v1214
    %v3473 = vunpack.c.h.b16 %v1214
    %v3474 = vunpack.c.l.b16 %v1215
    %v3475 = vunpack.c.h.b16 %v1215
    %v3476 = vunpack.c.l.b16 %v1216
    %v3477 = vunpack.c.h.b16 %v1216
    %v3478 = vunpack.c.l.b16 %v1217
    %v3479 = vunpack.c.l.b16 %v1218
    %v3480 = vunpack.c.h.b16 %v1218
    %v3481 = vunpack.c.l.b16 %v1219
    %v3482 = vunpack.c.h.b16 %v1219
    %v3483 = vunpack.c.l.b16 %v1220
    %v3484 = vunpack.c.h.b16 %v1220
    %v3485 = vunpack.c.l.b16 %v1221
    %v3486 = vunpack.c.h.b16 %v1221
    %v3487 = vunpack.c.l.b16 %v1222
    %v3488 = vunpack.c.h.b16 %v1222
    %v3489 = vunpack.c.l.b16 %v1223
    %v3490 = vunpack.c.l.b16 %v1224
    %v3491 = vunpack.c.h.b16 %v1224
    %v3492 = vunpack.c.l.b16 %v1225
    %v3493 = vunpack.c.h.b16 %v1225
    %v3494 = vunpack.c.l.b16 %v1226
    %v3495 = vunpack.c.h.b16 %v1226
    %v3496 = vunpack.c.l.b16 %v1227
    %v3497 = vunpack.c.h.b16 %v1227
    %v3498 = vunpack.c.l.b16 %v1228
    %v3499 = vunpack.c.h.b16 %v1228
    %v3500 = vunpack.c.l.b16 %v1229
    %v3501 = vunpack.c.l.b16 %v1230
    %v3502 = vunpack.c.h.b16 %v1230
    %v3503 = vunpack.c.l.b16 %v1231
    %v3504 = vunpack.c.h.b16 %v1231
    %v3505 = vunpack.c.l.b16 %v1232
    %v3506 = vunpack.c.h.b16 %v1232
    %v3507 = vunpack.c.l.b16 %v1233
    %v3508 = vunpack.c.h.b16 %v1233
    %v3509 = vunpack.c.l.b16 %v1234
    %v3510 = vunpack.c.h.b16 %v1234
    %v3511 = vunpack.c.l.b16 %v1235
    %v3512 = vunpack.c.l.b16 %v1236
    %v3513 = vunpack.c.h.b16 %v1236
    %v3514 = vunpack.c.l.b16 %v1237
    %v3515 = vunpack.c.h.b16 %v1237
    %v3516 = vunpack.c.l.b16 %v1238
    %v3517 = vunpack.c.h.b16 %v1238
    %v3518 = vunpack.c.l.b16 %v1239
    %v3519 = vunpack.c.h.b16 %v1239
    %v3520 = vunpack.c.l.b16 %v1240
    %v3521 = vunpack.c.h.b16 %v1240
    %v3522 = vunpack.c.l.b16 %v1241
    %v3523 = vunpack.c.l.b16 %v1242
    %v3524 = vunpack.c.h.b16 %v1242
    %v3525 = vunpack.c.l.b16 %v1243
    %v3526 = vunpack.c.h.b16 %v1243
    %v3527 = vunpack.c.l.b16 %v1244
    %v3528 = vunpack.c.h.b16 %v1244
    %v3529 = vunpack.c.l.b16 %v1245
    %v3530 = vunpack.c.h.b16 %v1245
    %v3531 = vunpack.c.l.b16 %v1246
    %v3532 = vunpack.c.h.b16 %v1246
    %v3533 = vunpack.c.l.b16 %v1247
    %v3534 = vunpack.c.l.b16 %v1248
    %v3535 = vunpack.c.h.b16 %v1248
    %v3536 = vunpack.c.l.b16 %v1249
    %v3537 = vunpack.c.h.b16 %v1249
    %v3538 = vunpack.c.l.b16 %v1250
    %v3539 = vunpack.c.h.b16 %v1250
    %v3540 = vunpack.c.l.b16 %v1251
    %v3541 = vunpack.c.h.b16 %v1251
    %v3542 = vunpack.c.l.b16 %v1252
    %v3543 = vunpack.c.h.b16 %v1252
    %v3544 = vunpack.c.l.b16 %v1253
    %v3545 = vunpack.c.l.b16 %v1254
    %v3546 = vunpack.c.h.b16 %v1254
    %v3547 = vunpack.c.l.b16 %v1255
    %v3548 = vunpack.c.h.b16 %v1255
    %v3549 = vunpack.c.l.b16 %v1256
    %v3550 = vunpack.c.h.b16 %v1256
    %v3551 = vunpack.c.l.b16 %v1257
    %v3552 = vunpack.c.h.b16 %v1257
    %v3553 = vunpack.c.l.b16 %v1258
    %v3554 = vunpack.c.h.b16 %v1258
    %v3555 = vunpack.c.l.b16 %v1259
    %v3556 = vunpack.c.l.b16 %v1260
    %v3557 = vunpack.c.h.b16 %v1260
    %v3558 = vunpack.c.l.b16 %v1261
    %v3559 = vunpack.c.h.b16 %v1261
    %v3560 = vunpack.c.l.b16 %v1262
    %v3561 = vunpack.c.h.b16 %v1262
    %v3562 = vunpack.c.l.b16 %v1263
    %v3563 = vunpack.c.h.b16 %v1263
    %v3564 = vunpack.c.l.b16 %v1264
    %v3565 = vunpack.c.h.b16 %v1264
    %v3566 = vunpack.c.l.b16 %v1265
    %v3567 = vunpack.c.l.b16 %v1266
    %v3568 = vunpack.c.h.b16 %v1266
    %v3569 = vunpack.c.l.b16 %v1267
    %v3570 = vunpack.c.h.b16 %v1267
    %v3571 = vunpack.c.l.b16 %v1268
    %v3572 = vunpack.c.h.b16 %v1268
    %v3573 = vunpack.c.l.b16 %v1269
    %v3574 = vunpack.c.h.b16 %v1269
    %v3575 = vunpack.c.l.b16 %v1270
    %v3576 = vunpack.c.h.b16 %v1270
    %v3577 = vunpack.c.l.b16 %v1271
    %v3578 = vunpack.c.l.b16 %v1272
    %v3579 = vunpack.c.h.b16 %v1272
    %v3580 = vunpack.c.l.b16 %v1273
    %v3581 = vunpack.c.h.b16 %v1273
    %v3582 = vunpack.c.l.b16 %v1274
    %v3583 = vunpack.c.h.b16 %v1274
    %v3584 = vunpack.c.l.b16 %v1275
    %v3585 = vunpack.c.h.b16 %v1275
    %v3586 = vunpack.c.l.b16 %v1276
    %v3587 = vunpack.c.h.b16 %v1276
    %v3588 = vunpack.c.l.b16 %v1277
    %v3589 = vunpack.c.l.b16 %v1278
    %v3590 = vunpack.c.h.b16 %v1278
    %v3591 = vunpack.c.l.b16 %v1279
    %v3592 = vunpack.c.h.b16 %v1279
    %v3593 = vunpack.c.l.b16 %v1280
    %v3594 = vunpack.c.h.b16 %v1280
    %v3595 = vunpack.c.l.b16 %v1281
    %v3596 = vunpack.c.h.b16 %v1281
    %v3597 = vunpack.c.l.b16 %v1282
    %v3598 = vunpack.c.h.b16 %v1282
    %v3599 = vunpack.c.l.b16 %v1283
    %v3600 = vunpack.c.l.b16 %v1284
    %v3601 = vunpack.c.h.b16 %v1284
    %v3602 = vunpack.c.l.b16 %v1285
    %v3603 = vunpack.c.h.b16 %v1285
    %v3604 = vunpack.c.l.b16 %v1286
    %v3605 = vunpack.c.h.b16 %v1286
    %v3606 = vunpack.c.l.b16 %v1287
    %v3607 = vunpack.c.h.b16 %v1287
    %v3608 = vunpack.c.l.b16 %v1288
    %v3609 = vunpack.c.h.b16 %v1288
    %v3610 = vunpack.c.l.b16 %v1289
    %v3611 = vunpack.c.l.b16 %v1290
    %v3612 = vunpack.c.h.b16 %v1290
    %v3613 = vunpack.c.l.b16 %v1291
    %v3614 = vunpack.c.h.b16 %v1291
    %v3615 = vunpack.c.l.b16 %v1292
    %v3616 = vunpack.c.h.b16 %v1292
    %v3617 = vunpack.c.l.b16 %v1293
    %v3618 = vunpack.c.h.b16 %v1293
    %v3619 = vunpack.c.l.b16 %v1294
    %v3620 = vunpack.c.h.b16 %v1294
    %v3621 = vunpack.c.l.b16 %v1295
    %v3622 = vunpack.c.l.b16 %v1296
    %v3623 = vunpack.c.h.b16 %v1296
    %v3624 = vunpack.c.l.b16 %v1297
    %v3625 = vunpack.c.h.b16 %v1297
    %v3626 = vunpack.c.l.b16 %v1298
    %v3627 = vunpack.c.h.b16 %v1298
    %v3628 = vunpack.c.l.b16 %v1299
    %v3629 = vunpack.c.h.b16 %v1299
    %v3630 = vunpack.c.l.b16 %v1300
    %v3631 = vunpack.c.h.b16 %v1300
    %v3632 = vunpack.c.l.b16 %v1301
    %v3633 = vunpack.c.l.b16 %v1302
    %v3634 = vunpack.c.h.b16 %v1302
    %v3635 = vunpack.c.l.b16 %v1303
    %v3636 = vunpack.c.h.b16 %v1303
    %v3637 = vunpack.c.l.b16 %v1304
    %v3638 = vunpack.c.h.b16 %v1304
    %v3639 = vunpack.c.l.b16 %v1305
    %v3640 = vunpack.c.h.b16 %v1305
    %v3641 = vunpack.c.l.b16 %v1306
    %v3642 = vunpack.c.h.b16 %v1306
    %v3643 = vunpack.c.l.b16 %v1307
    %v3644 = vunpack.c.l.b16 %v1308
    %v3645 = vunpack.c.h.b16 %v1308
    %v3646 = vunpack.c.l.b16 %v1309
    %v3647 = vunpack.c.h.b16 %v1309
    %v3648 = vunpack.c.l.b16 %v1310
    %v3649 = vunpack.c.h.b16 %v1310
    %v3650 = vunpack.c.l.b16 %v1311
    %v3651 = vunpack.c.h.b16 %v1311
    %v3652 = vunpack.c.l.b16 %v1312
    %v3653 = vunpack.c.h.b16 %v1312
    %v3654 = vunpack.c.l.b16 %v1313
    %v3655 = vunpack.c.l.b16 %v1314
    %v3656 = vunpack.c.h.b16 %v1314
    %v3657 = vunpack.c.l.b16 %v1315
    %v3658 = vunpack.c.h.b16 %v1315
    %v3659 = vunpack.c.l.b16 %v1316
    %v3660 = vunpack.c.h.b16 %v1316
    %v3661 = vunpack.c.l.b16 %v1317
    %v3662 = vunpack.c.h.b16 %v1317
    %v3663 = vunpack.c.l.b16 %v1318
    %v3664 = vunpack.c.h.b16 %v1318
    %v3665 = vunpack.c.l.b16 %v1319
    %v3666 = vunpack.c.l.b16 %v1320
    %v3667 = vunpack.c.h.b16 %v1320
    %v3668 = vunpack.c.l.b16 %v1321
    %v3669 = vunpack.c.h.b16 %v1321
    %v3670 = vunpack.c.l.b16 %v1322
    %v3671 = vunpack.c.h.b16 %v1322
    %v3672 = vunpack.c.l.b16 %v1323
    %v3673 = vunpack.c.h.b16 %v1323
    %v3674 = vunpack.c.l.b16 %v1324
    %v3675 = vunpack.c.h.b16 %v1324
    %v3676 = vunpack.c.l.b16 %v1325
    %v3677 = vunpack.c.l.b16 %v1326
    %v3678 = vunpack.c.h.b16 %v1326
    %v3679 = vunpack.c.l.b16 %v1327
    %v3680 = vunpack.c.h.b16 %v1327
    %v3681 = vunpack.c.l.b16 %v1328
    %v3682 = vunpack.c.h.b16 %v1328
    %v3683 = vunpack.c.l.b16 %v1329
    %v3684 = vunpack.c.h.b16 %v1329
    %v3685 = vunpack.c.l.b16 %v1330
    %v3686 = vunpack.c.h.b16 %v1330
    %v3687 = vunpack.c.l.b16 %v1331
    %v3688 = vunpack.c.l.b16 %v1332
    %v3689 = vunpack.c.h.b16 %v1332
    %v3690 = vunpack.c.l.b16 %v1333
    %v3691 = vunpack.c.h.b16 %v1333
    %v3692 = vunpack.c.l.b16 %v1334
    %v3693 = vunpack.c.h.b16 %v1334
    %v3694 = vunpack.c.l.b16 %v1335
    %v3695 = vunpack.c.h.b16 %v1335
    %v3696 = vunpack.c.l.b16 %v1336
    %v3697 = vunpack.c.h.b16 %v1336
    %v3698 = vunpack.c.l.b16 %v1337
    %v3699 = vunpack.c.l.b16 %v1338
    %v3700 = vunpack.c.h.b16 %v1338
    %v3701 = vunpack.c.l.b16 %v1339
    %v3702 = vunpack.c.h.b16 %v1339
    %v3703 = vunpack.c.l.b16 %v1340
    %v3704 = vunpack.c.h.b16 %v1340
    %v3705 = vunpack.c.l.b16 %v1341
    %v3706 = vunpack.c.h.b16 %v1341
    %v3707 = vunpack.c.l.b16 %v1342
    %v3708 = vunpack.c.h.b16 %v1342
    %v3709 = vunpack.c.l.b16 %v1343
    %v3710 = vunpack.c.l.b16 %v1344
    %v3711 = vunpack.c.h.b16 %v1344
    %v3712 = vunpack.c.l.b16 %v1345
    %v3713 = vunpack.c.h.b16 %v1345
    %v3714 = vunpack.c.l.b16 %v1346
    %v3715 = vunpack.c.h.b16 %v1346
    %v3716 = vunpack.c.l.b16 %v1347
    %v3717 = vunpack.c.h.b16 %v1347
    %v3718 = vunpack.c.l.b16 %v1348
    %v3719 = vunpack.c.h.b16 %v1348
    %v3720 = vunpack.c.l.b16 %v1349
    %v3721 = vunpack.c.l.b16 %v1350
    %v3722 = vunpack.c.h.b16 %v1350
    %v3723 = vunpack.c.l.b16 %v1351
    %v3724 = vunpack.c.h.b16 %v1351
    %v3725 = vunpack.c.l.b16 %v1352
    %v3726 = vunpack.c.h.b16 %v1352
    %v3727 = vunpack.c.l.b16 %v1353
    %v3728 = vunpack.c.h.b16 %v1353
    %v3729 = vunpack.c.l.b16 %v1354
    %v3730 = vunpack.c.h.b16 %v1354
    %v3731 = vunpack.c.l.b16 %v1355
    %v3732 = vunpack.c.l.b16 %v1356
    %v3733 = vunpack.c.h.b16 %v1356
    %v3734 = vunpack.c.l.b16 %v1357
    %v3735 = vunpack.c.h.b16 %v1357
    %v3736 = vunpack.c.l.b16 %v1358
    %v3737 = vunpack.c.h.b16 %v1358
    %v3738 = vunpack.c.l.b16 %v1359
    %v3739 = vunpack.c.h.b16 %v1359
    %v3740 = vunpack.c.l.b16 %v1360
    %v3741 = vunpack.c.h.b16 %v1360
    %v3742 = vunpack.c.l.b16 %v1361
    %v3743 = vunpack.c.l.b16 %v1362
    %v3744 = vunpack.c.h.b16 %v1362
    %v3745 = vunpack.c.l.b16 %v1363
    %v3746 = vunpack.c.h.b16 %v1363
    %v3747 = vunpack.c.l.b16 %v1364
    %v3748 = vunpack.c.h.b16 %v1364
    %v3749 = vunpack.c.l.b16 %v1365
    %v3750 = vunpack.c.h.b16 %v1365
    %v3751 = vunpack.c.l.b16 %v1366
    %v3752 = vunpack.c.h.b16 %v1366
    %v3753 = vunpack.c.l.b16 %v1367
    %v3754 = vunpack.c.l.b16 %v1368
    %v3755 = vunpack.c.h.b16 %v1368
    %v3756 = vunpack.c.l.b16 %v1369
    %v3757 = vunpack.c.h.b16 %v1369
    %v3758 = vunpack.c.l.b16 %v1370
    %v3759 = vunpack.c.h.b16 %v1370
    %v3760 = vunpack.c.l.b16 %v1371
    %v3761 = vunpack.c.h.b16 %v1371
    %v3762 = vunpack.c.l.b16 %v1372
    %v3763 = vunpack.c.h.b16 %v1372
    %v3764 = vunpack.c.l.b16 %v1373
    %v3765 = vunpack.c.l.b16 %v1374
    %v3766 = vunpack.c.h.b16 %v1374
    %v3767 = vunpack.c.l.b16 %v1375
    %v3768 = vunpack.c.h.b16 %v1375
    %v3769 = vunpack.c.l.b16 %v1376
    %v3770 = vunpack.c.h.b16 %v1376
    %v3771 = vunpack.c.l.b16 %v1377
    %v3772 = vunpack.c.h.b16 %v1377
    %v3773 = vunpack.c.l.b16 %v1378
    %v3774 = vunpack.c.h.b16 %v1378
    %v3775 = vunpack.c.l.b16 %v1379
    %v3776 = vunpack.c.l.b16 %v1380
    %v3777 = vunpack.c.h.b16 %v1380
    %v3778 = vunpack.c.l.b16 %v1381
    %v3779 = vunpack.c.h.b16 %v1381
    %v3780 = vunpack.c.l.b16 %v1382
    %v3781 = vunpack.c.h.b16 %v1382
    %v3782 = vunpack.c.l.b16 %v1383
    %v3783 = vunpack.c.h.b16 %v1383
    %v3784 = vunpack.c.l.b16 %v1384
    %v3785 = vunpack.c.h.b16 %v1384
    %v3786 = vunpack.c.l.b16 %v1385
    %v3787 = vunpack.c.l.b16 %v1386
    %v3788 = vunpack.c.h.b16 %v1386
    %v3789 = vunpack.c.l.b16 %v1387
    %v3790 = vunpack.c.h.b16 %v1387
    %v3791 = vunpack.c.l.b16 %v1388
    %v3792 = vunpack.c.h.b16 %v1388
    %v3793 = vunpack.c.l.b16 %v1389
    %v3794 = vunpack.c.h.b16 %v1389
    %v3795 = vunpack.c.l.b16 %v1390
    %v3796 = vunpack.c.h.b16 %v1390
    %v3797 = vunpack.c.l.b16 %v1391
    %v3798 = vunpack.c.l.b16 %v1392
    %v3799 = vunpack.c.h.b16 %v1392
    %v3800 = vunpack.c.l.b16 %v1393
    %v3801 = vunpack.c.h.b16 %v1393
    %v3802 = vunpack.c.l.b16 %v1394
    %v3803 = vunpack.c.h.b16 %v1394
    %v3804 = vunpack.c.l.b16 %v1395
    %v3805 = vunpack.c.h.b16 %v1395
    %v3806 = vunpack.c.l.b16 %v1396
    %v3807 = vunpack.c.h.b16 %v1396
    %v3808 = vunpack.c.l.b16 %v1397
    %v3809 = vunpack.c.l.b16 %v1398
    %v3810 = vunpack.c.h.b16 %v1398
    %v3811 = vunpack.c.l.b16 %v1399
    %v3812 = vunpack.c.h.b16 %v1399
    %v3813 = vunpack.c.l.b16 %v1400
    %v3814 = vunpack.c.h.b16 %v1400
    %v3815 = vunpack.c.l.b16 %v1401
    %v3816 = vunpack.c.h.b16 %v1401
    %v3817 = vunpack.c.l.b16 %v1402
    %v3818 = vunpack.c.h.b16 %v1402
    %v3819 = vunpack.c.l.b16 %v1403
    %v3820 = vunpack.c.l.b16 %v1404
    %v3821 = vunpack.c.h.b16 %v1404
    %v3822 = vunpack.c.l.b16 %v1405
    %v3823 = vunpack.c.h.b16 %v1405
    %v3824 = vunpack.c.l.b16 %v1406
    %v3825 = vunpack.c.h.b16 %v1406
    %v3826 = vunpack.c.l.b16 %v1407
    %v3827 = vunpack.c.h.b16 %v1407
    %v3828 = vunpack.c.l.b16 %v1408
    %v3829 = vunpack.c.h.b16 %v1408
    %v3830 = vunpack.c.l.b16 %v1409
    %v3831 = vunpack.c.l.b16 %v1410
    %v3832 = vunpack.c.h.b16 %v1410
    %v3833 = vunpack.c.l.b16 %v1411
    %v3834 = vunpack.c.h.b16 %v1411
    %v3835 = vunpack.c.l.b16 %v1412
    %v3836 = vunpack.c.h.b16 %v1412
    %v3837 = vunpack.c.l.b16 %v1413
    %v3838 = vunpack.c.h.b16 %v1413
    %v3839 = vunpack.c.l.b16 %v1414
    %v3840 = vunpack.c.h.b16 %v1414
    %v3841 = vunpack.c.l.b16 %v1415
    %v3842 = vunpack.c.l.b16 %v1416
    %v3843 = vunpack.c.h.b16 %v1416
    %v3844 = vunpack.c.l.b16 %v1417
    %v3845 = vunpack.c.h.b16 %v1417
    %v3846 = vunpack.c.l.b16 %v1418
    %v3847 = vunpack.c.h.b16 %v1418
    %v3848 = vunpack.c.l.b16 %v1419
    %v3849 = vunpack.c.h.b16 %v1419
    %v3850 = vunpack.c.l.b16 %v1420
    %v3851 = vunpack.c.h.b16 %v1420
    %v3852 = vunpack.c.l.b16 %v1421
    %v3853 = vunpack.c.l.b16 %v1422
    %v3854 = vunpack.c.h.b16 %v1422
    %v3855 = vunpack.c.l.b16 %v1423
    %v3856 = vunpack.c.h.b16 %v1423
    %v3857 = vunpack.c.l.b16 %v1424
    %v3858 = vunpack.c.h.b16 %v1424
    %v3859 = vunpack.c.l.b16 %v1425
    %v3860 = vunpack.c.h.b16 %v1425
    %v3861 = vunpack.c.l.b16 %v1426
    %v3862 = vunpack.c.h.b16 %v1426
    %v3863 = vunpack.c.l.b16 %v1427
    %v3864 = vunpack.c.l.b16 %v1428
    %v3865 = vunpack.c.h.b16 %v1428
    %v3866 = vunpack.c.l.b16 %v1429
    %v3867 = vunpack.c.h.b16 %v1429
    %v3868 = vunpack.c.l.b16 %v1430
    %v3869 = vunpack.c.h.b16 %v1430
    %v3870 = vunpack.c.l.b16 %v1431
    %v3871 = vunpack.c.h.b16 %v1431
    %v3872 = vunpack.c.l.b16 %v1432
    %v3873 = vunpack.c.h.b16 %v1432
    %v3874 = vunpack.c.l.b16 %v1433
    %v3875 = vunpack.c.l.b16 %v1434
    %v3876 = vunpack.c.h.b16 %v1434
    %v3877 = vunpack.c.l.b16 %v1435
    %v3878 = vunpack.c.h.b16 %v1435
    %v3879 = vunpack.c.l.b16 %v1436
    %v3880 = vunpack.c.h.b16 %v1436
    %v3881 = vunpack.c.l.b16 %v1437
    %v3882 = vunpack.c.h.b16 %v1437
    %v3883 = vunpack.c.l.b16 %v1438
    %v3884 = vunpack.c.h.b16 %v1438
    %v3885 = vunpack.c.l.b16 %v1439
    %v3886 = vunpack.c.l.b16 %v1440
    %v3887 = vunpack.c.h.b16 %v1440
    %v3888 = vunpack.c.l.b16 %v1441
    %v3889 = vunpack.c.h.b16 %v1441
    %v3890 = vunpack.c.l.b16 %v1442
    %v3891 = vunpack.c.h.b16 %v1442
    %v3892 = vunpack.c.l.b16 %v1443
    %v3893 = vunpack.c.h.b16 %v1443
    %v3894 = vunpack.c.l.b16 %v1444
    %v3895 = vunpack.c.h.b16 %v1444
    %v3896 = vunpack.c.l.b16 %v1445
    %v3897 = vunpack.c.l.b16 %v1446
    %v3898 = vunpack.c.h.b16 %v1446
    %v3899 = vunpack.c.l.b16 %v1447
    %v3900 = vunpack.c.h.b16 %v1447
    %v3901 = vunpack.c.l.b16 %v1448
    %v3902 = vunpack.c.h.b16 %v1448
    %v3903 = vunpack.c.l.b16 %v1449
    %v3904 = vunpack.c.h.b16 %v1449
    %v3905 = vunpack.c.l.b16 %v1450
    %v3906 = vunpack.c.h.b16 %v1450
    %v3907 = vunpack.c.l.b16 %v1451
    %v3908 = vunpack.c.l.b16 %v1452
    %v3909 = vunpack.c.h.b16 %v1452
    %v3910 = vunpack.c.l.b16 %v1453
    %v3911 = vunpack.c.h.b16 %v1453
    %v3912 = vunpack.c.l.b16 %v1454
    %v3913 = vunpack.c.h.b16 %v1454
    %v3914 = vunpack.c.l.b16 %v1455
    %v3915 = vunpack.c.h.b16 %v1455
    %v3916 = vunpack.c.l.b16 %v1456
    %v3917 = vunpack.c.h.b16 %v1456
    %v3918 = vunpack.c.l.b16 %v1457
    %v3919 = vunpack.c.l.b16 %v1458
    %v3920 = vunpack.c.h.b16 %v1458
    %v3921 = vunpack.c.l.b16 %v1459
    %v3922 = vunpack.c.h.b16 %v1459
    %v3923 = vunpack.c.l.b16 %v1460
    %v3924 = vunpack.c.h.b16 %v1460
    %v3925 = vunpack.c.l.b16 %v1461
    %v3926 = vunpack.c.h.b16 %v1461
    %v3927 = vunpack.c.l.b16 %v1462
    %v3928 = vunpack.c.h.b16 %v1462
    %v3929 = vunpack.c.l.b16 %v1463
    %v3930 = vunpack.c.l.b16 %v1464
    %v3931 = vunpack.c.h.b16 %v1464
    %v3932 = vunpack.c.l.b16 %v1465
    %v3933 = vunpack.c.h.b16 %v1465
    %v3934 = vunpack.c.l.b16 %v1466
    %v3935 = vunpack.c.h.b16 %v1466
    %v3936 = vunpack.c.l.b16 %v1467
    %v3937 = vunpack.c.h.b16 %v1467
    %v3938 = vunpack.c.l.b16 %v1468
    %v3939 = vunpack.c.h.b16 %v1468
    %v3940 = vunpack.c.l.b16 %v1469
    %v3941 = vunpack.c.l.b16 %v1470
    %v3942 = vunpack.c.h.b16 %v1470
    %v3943 = vunpack.c.l.b16 %v1471
    %v3944 = vunpack.c.h.b16 %v1471
    %v3945 = vunpack.c.l.b16 %v1472
    %v3946 = vunpack.c.h.b16 %v1472
    %v3947 = vunpack.c.l.b16 %v1473
    %v3948 = vunpack.c.h.b16 %v1473
    %v3949 = vunpack.c.l.b16 %v1474
    %v3950 = vunpack.c.h.b16 %v1474
    %v3951 = vunpack.c.l.b16 %v1475
    %v3952 = vunpack.c.l.b16 %v1476
    %v3953 = vunpack.c.h.b16 %v1476
    %v3954 = vunpack.c.l.b16 %v1477
    %v3955 = vunpack.c.h.b16 %v1477
    %v3956 = vunpack.c.l.b16 %v1478
    %v3957 = vunpack.c.h.b16 %v1478
    %v3958 = vunpack.c.l.b16 %v1479
    %v3959 = vunpack.c.h.b16 %v1479
    %v3960 = vunpack.c.l.b16 %v1480
    %v3961 = vunpack.c.h.b16 %v1480
    %v3962 = vunpack.c.l.b16 %v1481
    %v3963 = vunpack.c.l.b16 %v1482
    %v3964 = vunpack.c.h.b16 %v1482
    %v3965 = vunpack.c.l.b16 %v1483
    %v3966 = vunpack.c.h.b16 %v1483
    %v3967 = vunpack.c.l.b16 %v1484
    %v3968 = vunpack.c.h.b16 %v1484
    %v3969 = vunpack.c.l.b16 %v1485
    %v3970 = vunpack.c.h.b16 %v1485
    %v3971 = vunpack.c.l.b16 %v1486
    %v3972 = vunpack.c.h.b16 %v1486
    %v3973 = vunpack.c.l.b16 %v1487
    %v3974 = vunpack.c.l.b16 %v1488
    %v3975 = vunpack.c.h.b16 %v1488
    %v3976 = vunpack.c.l.b16 %v1489
    %v3977 = vunpack.c.h.b16 %v1489
    %v3978 = vunpack.c.l.b16 %v1490
    %v3979 = vunpack.c.h.b16 %v1490
    %v3980 = vunpack.c.l.b16 %v1491
    %v3981 = vunpack.c.h.b16 %v1491
    %v3982 = vunpack.c.l.b16 %v1492
    %v3983 = vunpack.c.h.b16 %v1492
    %v3984 = vunpack.c.l.b16 %v1493
    %v3985 = vunpack.c.l.b16 %v1494
    %v3986 = vunpack.c.h.b16 %v1494
    %v3987 = vunpack.c.l.b16 %v1495
    %v3988 = vunpack.c.h.b16 %v1495
    %v3989 = vunpack.c.l.b16 %v1496
    %v3990 = vunpack.c.h.b16 %v1496
    %v3991 = vunpack.c.l.b16 %v1497
    %v3992 = vunpack.c.h.b16 %v1497
    %v3993 = vunpack.c.l.b16 %v1498
    %v3994 = vunpack.c.h.b16 %v1498
    %v3995 = vunpack.c.l.b16 %v1499
    %v3996 = vunpack.c.l.b16 %v1500
    %v3997 = vunpack.c.h.b16 %v1500
    %v3998 = vunpack.c.l.b16 %v1501
    %v3999 = vunpack.c.h.b16 %v1501
    %v4000 = vunpack.c.l.b16 %v1502
    %v4001 = vunpack.c.h.b16 %v1502
    %v4002 = vunpack.c.l.b16 %v1503
    %v4003 = vunpack.c.h.b16 %v1503
    %v4004 = vunpack.c.l.b16 %v1504
    %v4005 = vunpack.c.h.b16 %v1504
    %v4006 = vunpack.c.l.b16 %v1505
    %v4007 = vunpack.c.l.b16 %v1506
    %v4008 = vunpack.c.h.b16 %v1506
    %v4009 = vunpack.c.l.b16 %v1507
    %v4010 = vunpack.c.h.b16 %v1507
    %v4011 = vunpack.c.l.b16 %v1508
    %v4012 = vunpack.c.h.b16 %v1508
    %v4013 = vunpack.c.l.b16 %v1509
    %v4014 = vunpack.c.h.b16 %v1509
    %v4015 = vunpack.c.l.b16 %v1510
    %v4016 = vunpack.c.h.b16 %v1510
    %v4017 = vunpack.c.l.b16 %v1511
    %v4018 = vunpack.c.l.b16 %v1512
    %v4019 = vunpack.c.h.b16 %v1512
    %v4020 = vunpack.c.l.b16 %v1513
    %v4021 = vunpack.c.h.b16 %v1513
    %v4022 = vunpack.c.l.b16 %v1514
    %v4023 = vunpack.c.h.b16 %v1514
    %v4024 = vunpack.c.l.b16 %v1515
    %v4025 = vunpack.c.h.b16 %v1515
    %v4026 = vunpack.c.l.b16 %v1516
    %v4027 = vunpack.c.h.b16 %v1516
    %v4028 = vunpack.c.l.b16 %v1517
    %v4029 = vunpack.c.l.b16 %v1518
    %v4030 = vunpack.c.h.b16 %v1518
    %v4031 = vunpack.c.l.b16 %v1519
    %v4032 = vunpack.c.h.b16 %v1519
    %v4033 = vunpack.c.l.b16 %v1520
    %v4034 = vunpack.c.h.b16 %v1520
    %v4035 = vunpack.c.l.b16 %v1521
    %v4036 = vunpack.c.h.b16 %v1521
    %v4037 = vunpack.c.l.b16 %v1522
    %v4038 = vunpack.c.h.b16 %v1522
    %v4039 = vunpack.c.l.b16 %v1523
    %v4040 = vunpack.c.l.b16 %v1524
    %v4041 = vunpack.c.h.b16 %v1524
    %v4042 = vunpack.c.l.b16 %v1525
    %v4043 = vunpack.c.h.b16 %v1525
    %v4044 = vunpack.c.l.b16 %v1526
    %v4045 = vunpack.c.h.b16 %v1526
    %v4046 = vunpack.c.l.b16 %v1527
    %v4047 = vunpack.c.h.b16 %v1527
    %v4048 = vunpack.c.l.b16 %v1528
    %v4049 = vunpack.c.h.b16 %v1528
    %v4050 = vunpack.c.l.b16 %v1529
    %v4051 = vunpack.c.l.b16 %v1530
    %v4052 = vunpack.c.h.b16 %v1530
    %v4053 = vunpack.c.l.b16 %v1531
    %v4054 = vunpack.c.h.b16 %v1531
    %v4055 = vunpack.c.l.b16 %v1532
    %v4056 = vunpack.c.h.b16 %v1532
    %v4057 = vunpack.c.l.b16 %v1533
    %v4058 = vunpack.c.h.b16 %v1533
    %v4059 = vunpack.c.l.b16 %v1534
    %v4060 = vunpack.c.h.b16 %v1534
    %v4061 = vunpack.c.l.b16 %v1535
    %v4062 = vunpack.c.l.b16 %v1536
    %v4063 = vunpack.c.h.b16 %v1536
    %v4064 = vunpack.c.l.b16 %v1537
    %v4065 = vunpack.c.h.b16 %v1537
    %v4066 = vunpack.c.l.b16 %v1538
    %v4067 = vunpack.c.h.b16 %v1538
    %v4068 = vunpack.c.l.b16 %v1539
    %v4069 = vunpack.c.h.b16 %v1539
    %v4070 = vunpack.c.l.b16 %v1540
    %v4071 = vunpack.c.h.b16 %v1540
    %v4072 = vunpack.c.l.b16 %v1541
    %v4073 = vunpack.c.l.b16 %v1542
    %v4074 = vunpack.c.h.b16 %v1542
    %v4075 = vunpack.c.l.b16 %v1543
    %v4076 = vunpack.c.h.b16 %v1543
    %v4077 = vunpack.c.l.b16 %v1544
    %v4078 = vunpack.c.h.b16 %v1544
    %v4079 = vunpack.c.l.b16 %v1545
    %v4080 = vunpack.c.h.b16 %v1545
    %v4081 = vunpack.c.l.b16 %v1546
    %v4082 = vunpack.c.h.b16 %v1546
    %v4083 = vunpack.c.l.b16 %v1547
    %v4084 = vunpack.c.l.b16 %v1548
    %v4085 = vunpack.c.h.b16 %v1548
    %v4086 = vunpack.c.l.b16 %v1549
    %v4087 = vunpack.c.h.b16 %v1549
    %v4088 = vunpack.c.l.b16 %v1550
    %v4089 = vunpack.c.h.b16 %v1550
    %v4090 = vunpack.c.l.b16 %v1551
    %v4091 = vunpack.c.h.b16 %v1551
    %v4092 = vunpack.c.l.b16 %v1552
    %v4093 = vunpack.c.h.b16 %v1552
    %v4094 = vunpack.c.l.b16 %v1553
    %v4095 = vunpack.c.l.b16 %v1554
    %v4096 = vunpack.c.h.b16 %v1554
    %v4097 = vunpack.c.l.b16 %v1555
    %v4098 = vunpack.c.h.b16 %v1555
    %v4099 = vunpack.c.l.b16 %v1556
    %v4100 = vunpack.c.h.b16 %v1556
    %v4101 = vunpack.c.l.b16 %v1557
    %v4102 = vunpack.c.h.b16 %v1557
    %v4103 = vunpack.c.l.b16 %v1558
    %v4104 = vunpack.c.h.b16 %v1558
    %v4105 = vunpack.c.l.b16 %v1559
    %v4106 = vunpack.c.l.b16 %v1560
    %v4107 = vunpack.c.h.b16 %v1560
    %v4108 = vunpack.c.l.b16 %v1561
    %v4109 = vunpack.c.h.b16 %v1561
    %v4110 = vunpack.c.l.b16 %v1562
    %v4111 = vunpack.c.h.b16 %v1562
    %v4112 = vunpack.c.l.b16 %v1563
    %v4113 = vunpack.c.h.b16 %v1563
    %v4114 = vunpack.c.l.b16 %v1564
    %v4115 = vunpack.c.h.b16 %v1564
    %v4116 = vunpack.c.l.b16 %v1565
    %v4117 = vunpack.c.l.b16 %v1566
    %v4118 = vunpack.c.h.b16 %v1566
    %v4119 = vunpack.c.l.b16 %v1567
    %v4120 = vunpack.c.h.b16 %v1567
    %v4121 = vunpack.c.l.b16 %v1568
    %v4122 = vunpack.c.h.b16 %v1568
    %v4123 = vunpack.c.l.b16 %v1569
    %v4124 = vunpack.c.h.b16 %v1569
    %v4125 = vunpack.c.l.b16 %v1570
    %v4126 = vunpack.c.h.b16 %v1570
    %v4127 = vunpack.c.l.b16 %v1571
    %v4128 = vunpack.c.l.b16 %v1572
    %v4129 = vunpack.c.h.b16 %v1572
    %v4130 = vunpack.c.l.b16 %v1573
    %v4131 = vunpack.c.h.b16 %v1573
    %v4132 = vunpack.c.l.b16 %v1574
    %v4133 = vunpack.c.h.b16 %v1574
    %v4134 = vunpack.c.l.b16 %v1575
    %v4135 = vunpack.c.h.b16 %v1575
    %v4136 = vunpack.c.l.b16 %v1576
    %v4137 = vunpack.c.h.b16 %v1576
    %v4138 = vunpack.c.l.b16 %v1577
    %v4139 = vunpack.c.l.b16 %v1578
    %v4140 = vunpack.c.h.b16 %v1578
    %v4141 = vunpack.c.l.b16 %v1579
    %v4142 = vunpack.c.h.b16 %v1579
    %v4143 = vunpack.c.l.b16 %v1580
    %v4144 = vunpack.c.h.b16 %v1580
    %v4145 = vunpack.c.l.b16 %v1581
    %v4146 = vunpack.c.h.b16 %v1581
    %v4147 = vunpack.c.l.b16 %v1582
    %v4148 = vunpack.c.h.b16 %v1582
    %v4149 = vunpack.c.l.b16 %v1583
    %v4150 = vunpack.c.l.b16 %v1584
    %v4151 = vunpack.c.h.b16 %v1584
    %v4152 = vunpack.c.l.b16 %v1585
    %v4153 = vunpack.c.h.b16 %v1585
    %v4154 = vunpack.c.l.b16 %v1586
    %v4155 = vunpack.c.h.b16 %v1586
    %v4156 = vunpack.c.l.b16 %v1587
    %v4157 = vunpack.c.h.b16 %v1587
    %v4158 = vunpack.c.l.b16 %v1588
    %v4159 = vunpack.c.h.b16 %v1588
    %v4160 = vunpack.c.l.b16 %v1589
    %v4161 = vunpack.c.l.b16 %v1590
    %v4162 = vunpack.c.h.b16 %v1590
    %v4163 = vunpack.c.l.b16 %v1591
    %v4164 = vunpack.c.h.b16 %v1591
    %v4165 = vunpack.c.l.b16 %v1592
    %v4166 = vunpack.c.h.b16 %v1592
    %v4167 = vunpack.c.l.b16 %v1593
    %v4168 = vunpack.c.h.b16 %v1593
    %v4169 = vunpack.c.l.b16 %v1594
    %v4170 = vunpack.c.h.b16 %v1594
    %v4171 = vunpack.c.l.b16 %v1595
    %v4172 = vunpack.c.l.b16 %v1596
    %v4173 = vunpack.c.h.b16 %v1596
    %v4174 = vunpack.c.l.b16 %v1597
    %v4175 = vunpack.c.h.b16 %v1597
    %v4176 = vunpack.c.l.b16 %v1598
    %v4177 = vunpack.c.h.b16 %v1598
    %v4178 = vunpack.c.l.b16 %v1599
    %v4179 = vunpack.c.h.b16 %v1599
    %v4180 = vunpack.c.l.b16 %v1600
    %v4181 = vunpack.c.h.b16 %v1600
    %v4182 = vunpack.c.l.b16 %v1601
    %v4183 = vunpack.c.l.b16 %v1602
    %v4184 = vunpack.c.h.b16 %v1602
    %v4185 = vunpack.c.l.b16 %v1603
    %v4186 = vunpack.c.h.b16 %v1603
    %v4187 = vunpack.c.l.b16 %v1604
    %v4188 = vunpack.c.h.b16 %v1604
    %v4189 = vunpack.c.l.b16 %v1605
    %v4190 = vunpack.c.h.b16 %v1605
    %v4191 = vunpack.c.l.b16 %v1606
    %v4192 = vunpack.c.h.b16 %v1606
    %v4193 = vunpack.c.l.b16 %v1607
    %v4194 = vunpack.c.l.b16 %v1608
    %v4195 = vunpack.c.h.b16 %v1608
    %v4196 = vunpack.c.l.b16 %v1609
    %v4197 = vunpack.c.h.b16 %v1609
    %v4198 = vunpack.c.l.b16 %v1610
    %v4199 = vunpack.c.h.b16 %v1610
    %v4200 = vunpack.c.l.b16 %v1611
    %v4201 = vunpack.c.h.b16 %v1611
    %v4202 = vunpack.c.l.b16 %v1612
    %v4203 = vunpack.c.h.b16 %v1612
    %v4204 = vunpack.c.l.b16 %v1613
    %v4205 = vunpack.c.l.b16 %v1614
    %v4206 = vunpack.c.h.b16 %v1614
    %v4207 = vunpack.c.l.b16 %v1615
    %v4208 = vunpack.c.h.b16 %v1615
    %v4209 = vunpack.c.l.b16 %v1616
    %v4210 = vunpack.c.h.b16 %v1616
    %v4211 = vunpack.c.l.b16 %v1617
    %v4212 = vunpack.c.h.b16 %v1617
    %v4213 = vunpack.c.l.b16 %v1618
    %v4214 = vunpack.c.h.b16 %v1618
    %v4215 = vunpack.c.l.b16 %v1619
    %v4216 = vunpack.c.l.b16 %v1620
    %v4217 = vunpack.c.h.b16 %v1620
    %v4218 = vunpack.c.l.b16 %v1621
    %v4219 = vunpack.c.h.b16 %v1621
    %v4220 = vunpack.c.l.b16 %v1622
    %v4221 = vunpack.c.h.b16 %v1622
    %v4222 = vunpack.c.l.b16 %v1623
    %v4223 = vunpack.c.h.b16 %v1623
    %v4224 = vunpack.c.l.b16 %v1624
    %v4225 = vunpack.c.h.b16 %v1624
    %v4226 = vunpack.c.l.b16 %v1625
    %v4227 = vunpack.c.l.b16 %v1626
    %v4228 = vunpack.c.h.b16 %v1626
    %v4229 = vunpack.c.l.b16 %v1627
    %v4230 = vunpack.c.h.b16 %v1627
    %v4231 = vunpack.c.l.b16 %v1628
    %v4232 = vunpack.c.h.b16 %v1628
    %v4233 = vunpack.c.l.b16 %v1629
    %v4234 = vunpack.c.h.b16 %v1629
    %v4235 = vunpack.c.l.b16 %v1630
    %v4236 = vunpack.c.h.b16 %v1630
    %v4237 = vunpack.c.l.b16 %v1631
    %v4238 = vunpack.c.l.b16 %v1632
    %v4239 = vunpack.c.h.b16 %v1632
    %v4240 = vunpack.c.l.b16 %v1633
    %v4241 = vunpack.c.h.b16 %v1633
    %v4242 = vunpack.c.l.b16 %v1634
    %v4243 = vunpack.c.h.b16 %v1634
    %v4244 = vunpack.c.l.b16 %v1635
    %v4245 = vunpack.c.h.b16 %v1635
    %v4246 = vunpack.c.l.b16 %v1636
    %v4247 = vunpack.c.h.b16 %v1636
    %v4248 = vunpack.c.l.b16 %v1637
    %v4249 = vunpack.c.l.b16 %v1638
    %v4250 = vunpack.c.h.b16 %v1638
    %v4251 = vunpack.c.l.b16 %v1639
    %v4252 = vunpack.c.h.b16 %v1639
    %v4253 = vunpack.c.l.b16 %v1640
    %v4254 = vunpack.c.h.b16 %v1640
    %v4255 = vunpack.c.l.b16 %v1641
    %v4256 = vunpack.c.h.b16 %v1641
    %v4257 = vunpack.c.l.b16 %v1642
    %v4258 = vunpack.c.h.b16 %v1642
    %v4259 = vunpack.c.l.b16 %v1643
    %v4260 = vunpack.c.l.b16 %v1644
    %v4261 = vunpack.c.h.b16 %v1644
    %v4262 = vunpack.c.l.b16 %v1645
    %v4263 = vunpack.c.h.b16 %v1645
    %v4264 = vunpack.c.l.b16 %v1646
    %v4265 = vunpack.c.h.b16 %v1646
    %v4266 = vunpack.c.l.b16 %v1647
    %v4267 = vunpack.c.h.b16 %v1647
    %v4268 = vunpack.c.l.b16 %v1648
    %v4269 = vunpack.c.h.b16 %v1648
    %v4270 = vunpack.c.l.b16 %v1649
    %v4271 = vunpack.c.l.b16 %v1650
    %v4272 = vunpack.c.h.b16 %v1650
    %v4273 = vunpack.c.l.b16 %v1651
    %v4274 = vunpack.c.h.b16 %v1651
    %v4275 = vunpack.c.l.b16 %v1652
    %v4276 = vunpack.c.h.b16 %v1652
    %v4277 = vunpack.c.l.b16 %v1653
    %v4278 = vunpack.c.h.b16 %v1653
    %v4279 = vunpack.c.l.b16 %v1654
    %v4280 = vunpack.c.h.b16 %v1654
    %v4281 = vunpack.c.l.b16 %v1655
    %v4282 = vunpack.c.l.b16 %v1656
    %v4283 = vunpack.c.h.b16 %v1656
    %v4284 = vunpack.c.l.b16 %v1657
    %v4285 = vunpack.c.h.b16 %v1657
    %v4286 = vunpack.c.l.b16 %v1658
    %v4287 = vunpack.c.h.b16 %v1658
    %v4288 = vunpack.c.l.b16 %v1659
    %v4289 = vunpack.c.h.b16 %v1659
    %v4290 = vunpack.c.l.b16 %v1660
    %v4291 = vunpack.c.h.b16 %v1660
    %v4292 = vunpack.c.l.b16 %v1661
    %v4293 = vunpack.c.l.b16 %v1662
    %v4294 = vunpack.c.h.b16 %v1662
    %v4295 = vunpack.c.l.b16 %v1663
    %v4296 = vunpack.c.h.b16 %v1663
    %v4297 = vunpack.c.l.b16 %v1664
    %v4298 = vunpack.c.h.b16 %v1664
    %v4299 = vunpack.c.l.b16 %v1665
    %v4300 = vunpack.c.h.b16 %v1665
    %v4301 = vunpack.c.l.b16 %v1666
    %v4302 = vunpack.c.h.b16 %v1666
    %v4303 = vunpack.c.l.b16 %v1667
    %v4304 = vunpack.c.l.b16 %v1668
    %v4305 = vunpack.c.h.b16 %v1668
    %v4306 = vunpack.c.l.b16 %v1669
    %v4307 = vunpack.c.h.b16 %v1669
    %v4308 = vunpack.c.l.b16 %v1670
    %v4309 = vunpack.c.h.b16 %v1670
    %v4310 = vunpack.c.l.b16 %v1671
    %v4311 = vunpack.c.h.b16 %v1671
    %v4312 = vunpack.c.l.b16 %v1672
    %v4313 = vunpack.c.h.b16 %v1672
    %v4314 = vunpack.c.l.b16 %v1673
    %v4315 = vunpack.c.l.b16 %v1674
    %v4316 = vunpack.c.h.b16 %v1674
    %v4317 = vunpack.c.l.b16 %v1675
    %v4318 = vunpack.c.h.b16 %v1675
    %v4319 = vunpack.c.l.b16 %v1676
    %v4320 = vunpack.c.h.b16 %v1676
    %v4321 = vunpack.c.l.b16 %v1677
    %v4322 = vunpack.c.h.b16 %v1677
    %v4323 = vunpack.c.l.b16 %v1678
    %v4324 = vunpack.c.h.b16 %v1678
    %v4325 = vunpack.c.l.b16 %v1679
    %v4326 = vunpack.c.l.b16 %v1680
    %v4327 = vunpack.c.h.b16 %v1680
    %v4328 = vunpack.c.l.b16 %v1681
    %v4329 = vunpack.c.h.b16 %v1681
    %v4330 = vunpack.c.l.b16 %v1682
    %v4331 = vunpack.c.h.b16 %v1682
    %v4332 = vunpack.c.l.b16 %v1683
    %v4333 = vunpack.c.h.b16 %v1683
    %v4334 = vunpack.c.l.b16 %v1684
    %v4335 = vunpack.c.h.b16 %v1684
    %v4336 = vunpack.c.l.b16 %v1685
    %v4337 = vunpack.c.l.b16 %v1686
    %v4338 = vunpack.c.h.b16 %v1686
    %v4339 = vunpack.c.l.b16 %v1687
    %v4340 = vunpack.c.h.b16 %v1687
    %v4341 = vunpack.c.l.b16 %v1688
    %v4342 = vunpack.c.h.b16 %v1688
    %v4343 = vunpack.c.l.b16 %v1689
    %v4344 = vunpack.c.h.b16 %v1689
    %v4345 = vunpack.c.l.b16 %v1690
    %v4346 = vunpack.c.h.b16 %v1690
    %v4347 = vunpack.c.l.b16 %v1691
    %v4348 = vunpack.c.l.b16 %v1692
    %v4349 = vunpack.c.h.b16 %v1692
    %v4350 = vunpack.c.l.b16 %v1693
    %v4351 = vunpack.c.h.b16 %v1693
    %v4352 = vunpack.c.l.b16 %v1694
    %v4353 = vunpack.c.h.b16 %v1694
    %v4354 = vunpack.c.l.b16 %v1695
    %v4355 = vunpack.c.h.b16 %v1695
    %v4356 = vunpack.c.l.b16 %v1696
    %v4357 = vunpack.c.h.b16 %v1696
    %v4358 = vunpack.c.l.b16 %v1697
    %v4359 = vunpack.c.l.b16 %v1698
    %v4360 = vunpack.c.h.b16 %v1698
    %v4361 = vunpack.c.l.b16 %v1699
    %v4362 = vunpack.c.h.b16 %v1699
    %v4363 = vunpack.c.l.b16 %v1700
    %v4364 = vunpack.c.h.b16 %v1700
    %v4365 = vunpack.c.l.b16 %v1701
    %v4366 = vunpack.c.h.b16 %v1701
    %v4367 = vunpack.c.l.b16 %v1702
    %v4368 = vunpack.c.h.b16 %v1702
    %v4369 = vunpack.c.l.b16 %v1703
    %v4370 = vunpack.c.l.b16 %v1704
    %v4371 = vunpack.c.h.b16 %v1704
    %v4372 = vunpack.c.l.b16 %v1705
    %v4373 = vunpack.c.h.b16 %v1705
    %v4374 = vunpack.c.l.b16 %v1706
    %v4375 = vunpack.c.h.b16 %v1706
    %v4376 = vunpack.c.l.b16 %v1707
    %v4377 = vunpack.c.h.b16 %v1707
    %v4378 = vunpack.c.l.b16 %v1708
    %v4379 = vunpack.c.h.b16 %v1708
    %v4380 = vunpack.c.l.b16 %v1709
    %v4381 = vunpack.c.l.b16 %v1710
    %v4382 = vunpack.c.h.b16 %v1710
    %v4383 = vunpack.c.l.b16 %v1711
    %v4384 = vunpack.c.h.b16 %v1711
    %v4385 = vunpack.c.l.b16 %v1712
    %v4386 = vunpack.c.h.b16 %v1712
    %v4387 = vunpack.c.l.b16 %v1713
    %v4388 = vunpack.c.h.b16 %v1713
    %v4389 = vunpack.c.l.b16 %v1714
    %v4390 = vunpack.c.h.b16 %v1714
    %v4391 = vunpack.c.l.b16 %v1715
    %v4392 = vunpack.c.l.b16 %v1716
    %v4393 = vunpack.c.h.b16 %v1716
    %v4394 = vunpack.c.l.b16 %v1717
    %v4395 = vunpack.c.h.b16 %v1717
    %v4396 = vunpack.c.l.b16 %v1718
    %v4397 = vunpack.c.h.b16 %v1718
    %v4398 = vunpack.c.l.b16 %v1719
    %v4399 = vunpack.c.h.b16 %v1719
    %v4400 = vunpack.c.l.b16 %v1720
    %v4401 = vunpack.c.h.b16 %v1720
    %v4402 = vunpack.c.l.b16 %v1721
    %v4403 = vunpack.c.l.b16 %v1722
    %v4404 = vunpack.c.h.b16 %v1722
    %v4405 = vunpack.c.l.b16 %v1723
    %v4406 = vunpack.c.h.b16 %v1723
    %v4407 = vunpack.c.l.b16 %v1724
    %v4408 = vunpack.c.h.b16 %v1724
    %v4409 = vunpack.c.l.b16 %v1725
    %v4410 = vunpack.c.h.b16 %v1725
    %v4411 = vunpack.c.l.b16 %v1726
    %v4412 = vunpack.c.h.b16 %v1726
    %v4413 = vunpack.c.l.b16 %v1727
    %v4414 = vunpack.c.l.b16 %v1728
    %v4415 = vunpack.c.h.b16 %v1728
    %v4416 = vunpack.c.l.b16 %v1729
    %v4417 = vunpack.c.h.b16 %v1729
    %v4418 = vunpack.c.l.b16 %v1730
    %v4419 = vunpack.c.h.b16 %v1730
    %v4420 = vunpack.c.l.b16 %v1731
    %v4421 = vunpack.c.h.b16 %v1731
    %v4422 = vunpack.c.l.b16 %v1732
    %v4423 = vunpack.c.h.b16 %v1732
    %v4424 = vunpack.c.l.b16 %v1733
    %v4425 = vunpack.c.l.b16 %v1734
    %v4426 = vunpack.c.h.b16 %v1734
    %v4427 = vunpack.c.l.b16 %v1735
    %v4428 = vunpack.c.h.b16 %v1735
    %v4429 = vunpack.c.l.b16 %v1736
    %v4430 = vunpack.c.h.b16 %v1736
    %v4431 = vunpack.c.l.b16 %v1737
    %v4432 = vunpack.c.h.b16 %v1737
    %v4433 = vunpack.c.l.b16 %v1738
    %v4434 = vunpack.c.h.b16 %v1738
    %v4435 = vunpack.c.l.b16 %v1739
    %v4436 = vunpack.c.l.b16 %v1740
    %v4437 = vunpack.c.h.b16 %v1740
    %v4438 = vunpack.c.l.b16 %v1741
    %v4439 = vunpack.c.h.b16 %v1741
    %v4440 = vunpack.c.l.b16 %v1742
    %v4441 = vunpack.c.h.b16 %v1742
    %v4442 = vunpack.c.l.b16 %v1743
    %v4443 = vunpack.c.h.b16 %v1743
    %v4444 = vunpack.c.l.b16 %v1744
    %v4445 = vunpack.c.h.b16 %v1744
    %v4446 = vunpack.c.l.b16 %v1745
    %v4447 = vunpack.c.l.b16 %v1746
    %v4448 = vunpack.c.h.b16 %v1746
    %v4449 = vunpack.c.l.b16 %v1747
    %v4450 = vunpack.c.h.b16 %v1747
    %v4451 = vunpack.c.l.b16 %v1748
    %v4452 = vunpack.c.h.b16 %v1748
    %v4453 = vunpack.c.l.b16 %v1749
    %v4454 = vunpack.c.h.b16 %v1749
    %v4455 = vunpack.c.l.b16 %v1750
    %v4456 = vunpack.c.h.b16 %v1750
    %v4457 = vunpack.c.l.b16 %v1751
    %v4458 = vunpack.c.l.b16 %v1752
    %v4459 = vunpack.c.h.b16 %v1752
    %v4460 = vunpack.c.l.b16 %v1753
    %v4461 = vunpack.c.h.b16 %v1753
    %v4462 = vunpack.c.l.b16 %v1754
    %v4463 = vunpack.c.h.b16 %v1754
    %v4464 = vunpack.c.l.b16 %v1755
    %v4465 = vunpack.c.h.b16 %v1755
    %v4466 = vunpack.c.l.b16 %v1756
    %v4467 = vunpack.c.h.b16 %v1756
    %v4468 = vunpack.c.l.b16 %v1757
    %v4469 = vunpack.c.l.b16 %v1758
    %v4470 = vunpack.c.h.b16 %v1758
    %v4471 = vunpack.c.l.b16 %v1759
    %v4472 = vunpack.c.h.b16 %v1759
    %v4473 = vunpack.c.l.b16 %v1760
    %v4474 = vunpack.c.h.b16 %v1760
    %v4475 = vunpack.c.l.b16 %v1761
    %v4476 = vunpack.c.h.b16 %v1761
    %v4477 = vunpack.c.l.b16 %v1762
    %v4478 = vunpack.c.h.b16 %v1762
    %v4479 = vunpack.c.l.b16 %v1763
    %v4480 = vunpack.c.l.b16 %v1764
    %v4481 = vunpack.c.h.b16 %v1764
    %v4482 = vunpack.c.l.b16 %v1765
    %v4483 = vunpack.c.h.b16 %v1765
    %v4484 = vunpack.c.l.b16 %v1766
    %v4485 = vunpack.c.h.b16 %v1766
    %v4486 = vunpack.c.l.b16 %v1767
    %v4487 = vunpack.c.h.b16 %v1767
    %v4488 = vunpack.c.l.b16 %v1768
    %v4489 = vunpack.c.h.b16 %v1768
    %v4490 = vunpack.c.l.b16 %v1769
    %v4491 = vunpack.c.l.b16 %v1770
    %v4492 = vunpack.c.h.b16 %v1770
    %v4493 = vunpack.c.l.b16 %v1771
    %v4494 = vunpack.c.h.b16 %v1771
    %v4495 = vunpack.c.l.b16 %v1772
    %v4496 = vunpack.c.h.b16 %v1772
    %v4497 = vunpack.c.l.b16 %v1773
    %v4498 = vunpack.c.h.b16 %v1773
    %v4499 = vunpack.c.l.b16 %v1774
    %v4500 = vunpack.c.h.b16 %v1774
    %v4501 = vunpack.c.l.b16 %v1775
    %v4502 = vunpack.c.l.b16 %v1776
    %v4503 = vunpack.c.h.b16 %v1776
    %v4504 = vunpack.c.l.b16 %v1777
    %v4505 = vunpack.c.h.b16 %v1777
    %v4506 = vunpack.c.l.b16 %v1778
    %v4507 = vunpack.c.h.b16 %v1778
    %v4508 = vunpack.c.l.b16 %v1779
    %v4509 = vunpack.c.h.b16 %v1779
    %v4510 = vunpack.c.l.b16 %v1780
    %v4511 = vunpack.c.h.b16 %v1780
    %v4512 = vunpack.c.l.b16 %v1781
    %v4513 = vunpack.c.l.b16 %v1782
    %v4514 = vunpack.c.h.b16 %v1782
    %v4515 = vunpack.c.l.b16 %v1783
    %v4516 = vunpack.c.h.b16 %v1783
    %v4517 = vunpack.c.l.b16 %v1784
    %v4518 = vunpack.c.h.b16 %v1784
    %v4519 = vunpack.c.l.b16 %v1785
    %v4520 = vunpack.c.h.b16 %v1785
    %v4521 = vunpack.c.l.b16 %v1786
    %v4522 = vunpack.c.h.b16 %v1786
    %v4523 = vunpack.c.l.b16 %v1787
    %v4524 = vunpack.c.l.b16 %v1788
    %v4525 = vunpack.c.h.b16 %v1788
    %v4526 = vunpack.c.l.b16 %v1789
    %v4527 = vunpack.c.h.b16 %v1789
    %v4528 = vunpack.c.l.b16 %v1790
    %v4529 = vunpack.c.h.b16 %v1790
    %v4530 = vunpack.c.l.b16 %v1791
    %v4531 = vunpack.c.h.b16 %v1791
    %v4532 = vunpack.c.l.b16 %v1792
    %v4533 = vunpack.c.h.b16 %v1792
    %v4534 = vunpack.c.l.b16 %v1793
    %v4535 = vunpack.c.l.b16 %v1794
    %v4536 = vunpack.c.h.b16 %v1794
    %v4537 = vunpack.c.l.b16 %v1795
    %v4538 = vunpack.c.h.b16 %v1795
    %v4539 = vunpack.c.l.b16 %v1796
    %v4540 = vunpack.c.h.b16 %v1796
    %v4541 = vunpack.c.l.b16 %v1797
    %v4542 = vunpack.c.h.b16 %v1797
    %v4543 = vunpack.c.l.b16 %v1798
    %v4544 = vunpack.c.h.b16 %v1798
    %v4545 = vunpack.c.l.b16 %v1799
    %v4546 = vpack.c.b16 %v2797, %v2786
    %v4547 = vpack.c.b16 %v2798, %v2787
    %v4548 = vpack.c.b16 %v2799, %v2788
    %v4549 = vpack.c.b16 %v2800, %v2789
    %v4550 = vpack.c.b16 %v2801, %v2790
    %v4551 = vpack.c.b16 %v2802, %v2791
    %v4552 = vpack.c.b16 %v2803, %v2792
    %v4553 = vpack.c.b16 %v2804, %v2793
    %v4554 = vpack.c.b16 %v2805, %v2794
    %v4555 = vpack.c.b16 %v2806, %v2795
    %v4556 = vpack.c.b16 %v2807, %v2796
    %v4557 = vpack.c.b16 %v2819, %v2808
    %v4558 = vpack.c.b16 %v2820, %v2809
    %v4559 = vpack.c.b16 %v2821, %v2810
    %v4560 = vpack.c.b16 %v2822, %v2811
    %v4561 = vpack.c.b16 %v2823, %v2812
    %v4562 = vpack.c.b16 %v2824, %v2813
    %v4563 = vpack.c.b16 %v2825, %v2814
    %v4564 = vpack.c.b16 %v2826, %v2815
    %v4565 = vpack.c.b16 %v2827, %v2816
    %v4566 = vpack.c.b16 %v2828, %v2817
    %v4567 = vpack.c.b16 %v2829, %v2818
    %v4568 = vpack.c.b16 %v2841, %v2830
    %v4569 = vpack.c.b16 %v2842, %v2831
    %v4570 = vpack.c.b16 %v2843, %v2832
    %v4571 = vpack.c.b16 %v2844, %v2833
    %v4572 = vpack.c.b16 %v2845, %v2834
    %v4573 = vpack.c.b16 %v2846, %v2835
    %v4574 = vpack.c.b16 %v2847, %v2836
    %v4575 = vpack.c.b16 %v2848, %v2837
    %v4576 = vpack.c.b16 %v2849, %v2838
    %v4577 = vpack.c.b16 %v2850, %v2839
    %v4578 = vpack.c.b16 %v2851, %v2840
    %v4579 = vpack.c.b16 %v2863, %v2852
    %v4580 = vpack.c.b16 %v2864, %v2853
    %v4581 = vpack.c.b16 %v2865, %v2854
    %v4582 = vpack.c.b16 %v2866, %v2855
    %v4583 = vpack.c.b16 %v2867, %v2856
    %v4584 = vpack.c.b16 %v2868, %v2857
    %v4585 = vpack.c.b16 %v2869, %v2858
    %v4586 = vpack.c.b16 %v2870, %v2859
    %v4587 = vpack.c.b16 %v2871, %v2860
    %v4588 = vpack.c.b16 %v2872, %v2861
    %v4589 = vpack.c.b16 %v2873, %v2862
    %v4590 = vpack.c.b16 %v2885, %v2874
    %v4591 = vpack.c.b16 %v2886, %v2875
    %v4592 = vpack.c.b16 %v2887, %v2876
    %v4593 = vpack.c.b16 %v2888, %v2877
    %v4594 = vpack.c.b16 %v2889, %v2878
    %v4595 = vpack.c.b16 %v2890, %v2879
    %v4596 = vpack.c.b16 %v2891, %v2880
    %v4597 = vpack.c.b16 %v2892, %v2881
    %v4598 = vpack.c.b16 %v2893, %v2882
    %v4599 = vpack.c.b16 %v2894, %v2883
    %v4600 = vpack.c.b16 %v2895, %v2884
    %v4601 = vpack.c.b16 %v2907, %v2896
    %v4602 = vpack.c.b16 %v2908, %v2897
    %v4603 = vpack.c.b16 %v2909, %v2898
    %v4604 = vpack.c.b16 %v2910, %v2899
    %v4605 = vpack.c.b16 %v2911, %v2900
    %v4606 = vpack.c.b16 %v2912, %v2901
    %v4607 = vpack.c.b16 %v2913, %v2902
    %v4608 = vpack.c.b16 %v2914, %v2903
    %v4609 = vpack.c.b16 %v2915, %v2904
    %v4610 = vpack.c.b16 %v2916, %v2905
    %v4611 = vpack.c.b16 %v2917, %v2906
    %v4612 = vpack.c.b16 %v2929, %v2918
    %v4613 = vpack.c.b16 %v2930, %v2919
    %v4614 = vpack.c.b16 %v2931, %v2920
    %v4615 = vpack.c.b16 %v2932, %v2921
    %v4616 = vpack.c.b16 %v2933, %v2922
    %v4617 = vpack.c.b16 %v2934, %v2923
    %v4618 = vpack.c.b16 %v2935, %v2924
    %v4619 = vpack.c.b16 %v2936, %v2925
    %v4620 = vpack.c.b16 %v2937, %v2926
    %v4621 = vpack.c.b16 %v2938, %v2927
    %v4622 = vpack.c.b16 %v2939, %v2928
    %v4623 = vpack.c.b16 %v2951, %v2940
    %v4624 = vpack.c.b16 %v2952, %v2941
    %v4625 = vpack.c.b16 %v2953, %v2942
    %v4626 = vpack.c.b16 %v2954, %v2943
    %v4627 = vpack.c.b16 %v2955, %v2944
    %v4628 = vpack.c.b16 %v2956, %v2945
    %v4629 = vpack.c.b16 %v2957, %v2946
    %v4630 = vpack.c.b16 %v2958, %v2947
    %v4631 = vpack.c.b16 %v2959, %v2948
    %v4632 = vpack.c.b16 %v2960, %v2949
    %v4633 = vpack.c.b16 %v2961, %v2950
    %v4634 = vpack.c.b16 %v2973, %v2962
    %v4635 = vpack.c.b16 %v2974, %v2963
    %v4636 = vpack.c.b16 %v2975, %v2964
    %v4637 = vpack.c.b16 %v2976, %v2965
    %v4638 = vpack.c.b16 %v2977, %v2966
    %v4639 = vpack.c.b16 %v2978, %v2967
    %v4640 = vpack.c.b16 %v2979, %v2968
    %v4641 = vpack.c.b16 %v2980, %v2969
    %v4642 = vpack.c.b16 %v2981, %v2970
    %v4643 = vpack.c.b16 %v2982, %v2971
    %v4644 = vpack.c.b16 %v2983, %v2972
    %v4645 = vpack.c.b16 %v2995, %v2984
    %v4646 = vpack.c.b16 %v2996, %v2985
    %v4647 = vpack.c.b16 %v2997, %v2986
    %v4648 = vpack.c.b16 %v2998, %v2987
    %v4649 = vpack.c.b16 %v2999, %v2988
    %v4650 = vpack.c.b16 %v3000, %v2989
    %v4651 = vpack.c.b16 %v3001, %v2990
    %v4652 = vpack.c.b16 %v3002, %v2991
    %v4653 = vpack.c.b16 %v3003, %v2992
    %v4654 = vpack.c.b16 %v3004, %v2993
    %v4655 = vpack.c.b16 %v3005, %v2994
    %v4656 = vpack.c.b16 %v3017, %v3006
    %v4657 = vpack.c.b16 %v3018, %v3007
    %v4658 = vpack.c.b16 %v3019, %v3008
    %v4659 = vpack.c.b16 %v3020, %v3009
    %v4660 = vpack.c.b16 %v3021, %v3010
    %v4661 = vpack.c.b16 %v3022, %v3011
    %v4662 = vpack.c.b16 %v3023, %v3012
    %v4663 = vpack.c.b16 %v3024, %v3013
    %v4664 = vpack.c.b16 %v3025, %v3014
    %v4665 = vpack.c.b16 %v3026, %v3015
    %v4666 = vpack.c.b16 %v3027, %v3016
    %v4667 = vpack.c.b16 %v3039, %v3028
    %v4668 = vpack.c.b16 %v3040, %v3029
    %v4669 = vpack.c.b16 %v3041, %v3030
    %v4670 = vpack.c.b16 %v3042, %v3031
    %v4671 = vpack.c.b16 %v3043, %v3032
    %v4672 = vpack.c.b16 %v3044, %v3033
    %v4673 = vpack.c.b16 %v3045, %v3034
    %v4674 = vpack.c.b16 %v3046, %v3035
    %v4675 = vpack.c.b16 %v3047, %v3036
    %v4676 = vpack.c.b16 %v3048, %v3037
    %v4677 = vpack.c.b16 %v3049, %v3038
    %v4678 = vpack.c.b16 %v3061, %v3050
    %v4679 = vpack.c.b16 %v3062, %v3051
    %v4680 = vpack.c.b16 %v3063, %v3052
    %v4681 = vpack.c.b16 %v3064, %v3053
    %v4682 = vpack.c.b16 %v3065, %v3054
    %v4683 = vpack.c.b16 %v3066, %v3055
    %v4684 = vpack.c.b16 %v3067, %v3056
    %v4685 = vpack.c.b16 %v3068, %v3057
    %v4686 = vpack.c.b16 %v3069, %v3058
    %v4687 = vpack.c.b16 %v3070, %v3059
    %v4688 = vpack.c.b16 %v3071, %v3060
    %v4689 = vpack.c.b16 %v3083, %v3072
    %v4690 = vpack.c.b16 %v3084, %v3073
    %v4691 = vpack.c.b16 %v3085, %v3074
    %v4692 = vpack.c.b16 %v3086, %v3075
    %v4693 = vpack.c.b16 %v3087, %v3076
    %v4694 = vpack.c.b16 %v3088, %v3077
    %v4695 = vpack.c.b16 %v3089, %v3078
    %v4696 = vpack.c.b16 %v3090, %v3079
    %v4697 = vpack.c.b16 %v3091, %v3080
    %v4698 = vpack.c.b16 %v3092, %v3081
    %v4699 = vpack.c.b16 %v3093, %v3082
    %v4700 = vpack.c.b16 %v3105, %v3094
    %v4701 = vpack.c.b16 %v3106, %v3095
    %v4702 = vpack.c.b16 %v3107, %v3096
    %v4703 = vpack.c.b16 %v3108, %v3097
    %v4704 = vpack.c.b16 %v3109, %v3098
    %v4705 = vpack.c.b16 %v3110, %v3099
    %v4706 = vpack.c.b16 %v3111, %v3100
    %v4707 = vpack.c.b16 %v3112, %v3101
    %v4708 = vpack.c.b16 %v3113, %v3102
    %v4709 = vpack.c.b16 %v3114, %v3103
    %v4710 = vpack.c.b16 %v3115, %v3104
    %v4711 = vpack.c.b16 %v3127, %v3116
    %v4712 = vpack.c.b16 %v3128, %v3117
    %v4713 = vpack.c.b16 %v3129, %v3118
    %v4714 = vpack.c.b16 %v3130, %v3119
    %v4715 = vpack.c.b16 %v3131, %v3120
    %v4716 = vpack.c.b16 %v3132, %v3121
    %v4717 = vpack.c.b16 %v3133, %v3122
    %v4718 = vpack.c.b16 %v3134, %v3123
    %v4719 = vpack.c.b16 %v3135, %v3124
    %v4720 = vpack.c.b16 %v3136, %v3125
    %v4721 = vpack.c.b16 %v3137, %v3126
    %v4722 = vpack.c.b16 %v3149, %v3138
    %v4723 = vpack.c.b16 %v3150, %v3139
    %v4724 = vpack.c.b16 %v3151, %v3140
    %v4725 = vpack.c.b16 %v3152, %v3141
    %v4726 = vpack.c.b16 %v3153, %v3142
    %v4727 = vpack.c.b16 %v3154, %v3143
    %v4728 = vpack.c.b16 %v3155, %v3144
    %v4729 = vpack.c.b16 %v3156, %v3145
    %v4730 = vpack.c.b16 %v3157, %v3146
    %v4731 = vpack.c.b16 %v3158, %v3147
    %v4732 = vpack.c.b16 %v3159, %v3148
    %v4733 = vpack.c.b16 %v3171, %v3160
    %v4734 = vpack.c.b16 %v3172, %v3161
    %v4735 = vpack.c.b16 %v3173, %v3162
    %v4736 = vpack.c.b16 %v3174, %v3163
    %v4737 = vpack.c.b16 %v3175, %v3164
    %v4738 = vpack.c.b16 %v3176, %v3165
    %v4739 = vpack.c.b16 %v3177, %v3166
    %v4740 = vpack.c.b16 %v3178, %v3167
    %v4741 = vpack.c.b16 %v3179, %v3168
    %v4742 = vpack.c.b16 %v3180, %v3169
    %v4743 = vpack.c.b16 %v3181, %v3170
    %v4744 = vpack.c.b16 %v3193, %v3182
    %v4745 = vpack.c.b16 %v3194, %v3183
    %v4746 = vpack.c.b16 %v3195, %v3184
    %v4747 = vpack.c.b16 %v3196, %v3185
    %v4748 = vpack.c.b16 %v3197, %v3186
    %v4749 = vpack.c.b16 %v3198, %v3187
    %v4750 = vpack.c.b16 %v3199, %v3188
    %v4751 = vpack.c.b16 %v3200, %v3189
    %v4752 = vpack.c.b16 %v3201, %v3190
    %v4753 = vpack.c.b16 %v3202, %v3191
    %v4754 = vpack.c.b16 %v3203, %v3192
    %v4755 = vpack.c.b16 %v3215, %v3204
    %v4756 = vpack.c.b16 %v3216, %v3205
    %v4757 = vpack.c.b16 %v3217, %v3206
    %v4758 = vpack.c.b16 %v3218, %v3207
    %v4759 = vpack.c.b16 %v3219, %v3208
    %v4760 = vpack.c.b16 %v3220, %v3209
    %v4761 = vpack.c.b16 %v3221, %v3210
    %v4762 = vpack.c.b16 %v3222, %v3211
    %v4763 = vpack.c.b16 %v3223, %v3212
    %v4764 = vpack.c.b16 %v3224, %v3213
    %v4765 = vpack.c.b16 %v3225, %v3214
    %v4766 = vpack.c.b16 %v3237, %v3226
    %v4767 = vpack.c.b16 %v3238, %v3227
    %v4768 = vpack.c.b16 %v3239, %v3228
    %v4769 = vpack.c.b16 %v3240, %v3229
    %v4770 = vpack.c.b16 %v3241, %v3230
    %v4771 = vpack.c.b16 %v3242, %v3231
    %v4772 = vpack.c.b16 %v3243, %v3232
    %v4773 = vpack.c.b16 %v3244, %v3233
    %v4774 = vpack.c.b16 %v3245, %v3234
    %v4775 = vpack.c.b16 %v3246, %v3235
    %v4776 = vpack.c.b16 %v3247, %v3236
    %v4777 = vpack.c.b16 %v3259, %v3248
    %v4778 = vpack.c.b16 %v3260, %v3249
    %v4779 = vpack.c.b16 %v3261, %v3250
    %v4780 = vpack.c.b16 %v3262, %v3251
    %v4781 = vpack.c.b16 %v3263, %v3252
    %v4782 = vpack.c.b16 %v3264, %v3253
    %v4783 = vpack.c.b16 %v3265, %v3254
    %v4784 = vpack.c.b16 %v3266, %v3255
    %v4785 = vpack.c.b16 %v3267, %v3256
    %v4786 = vpack.c.b16 %v3268, %v3257
    %v4787 = vpack.c.b16 %v3269, %v3258
    %v4788 = vpack.c.b16 %v3281, %v3270
    %v4789 = vpack.c.b16 %v3282, %v3271
    %v4790 = vpack.c.b16 %v3283, %v3272
    %v4791 = vpack.c.b16 %v3284, %v3273
    %v4792 = vpack.c.b16 %v3285, %v3274
    %v4793 = vpack.c.b16 %v3286, %v3275
    %v4794 = vpack.c.b16 %v3287, %v3276
    %v4795 = vpack.c.b16 %v3288, %v3277
    %v4796 = vpack.c.b16 %v3289, %v3278
    %v4797 = vpack.c.b16 %v3290, %v3279
    %v4798 = vpack.c.b16 %v3291, %v3280
    %v4799 = vpack.c.b16 %v3303, %v3292
    %v4800 = vpack.c.b16 %v3304, %v3293
    %v4801 = vpack.c.b16 %v3305, %v3294
    %v4802 = vpack.c.b16 %v3306, %v3295
    %v4803 = vpack.c.b16 %v3307, %v3296
    %v4804 = vpack.c.b16 %v3308, %v3297
    %v4805 = vpack.c.b16 %v3309, %v3298
    %v4806 = vpack.c.b16 %v3310, %v3299
    %v4807 = vpack.c.b16 %v3311, %v3300
    %v4808 = vpack.c.b16 %v3312, %v3301
    %v4809 = vpack.c.b16 %v3313, %v3302
    %v4810 = vpack.c.b16 %v3325, %v3314
    %v4811 = vpack.c.b16 %v3326, %v3315
    %v4812 = vpack.c.b16 %v3327, %v3316
    %v4813 = vpack.c.b16 %v3328, %v3317
    %v4814 = vpack.c.b16 %v3329, %v3318
    %v4815 = vpack.c.b16 %v3330, %v3319
    %v4816 = vpack.c.b16 %v3331, %v3320
    %v4817 = vpack.c.b16 %v3332, %v3321
    %v4818 = vpack.c.b16 %v3333, %v3322
    %v4819 = vpack.c.b16 %v3334, %v3323
    %v4820 = vpack.c.b16 %v3335, %v3324
    %v4821 = vpack.c.b16 %v3347, %v3336
    %v4822 = vpack.c.b16 %v3348, %v3337
    %v4823 = vpack.c.b16 %v3349, %v3338
    %v4824 = vpack.c.b16 %v3350, %v3339
    %v4825 = vpack.c.b16 %v3351, %v3340
    %v4826 = vpack.c.b16 %v3352, %v3341
    %v4827 = vpack.c.b16 %v3353, %v3342
    %v4828 = vpack.c.b16 %v3354, %v3343
    %v4829 = vpack.c.b16 %v3355, %v3344
    %v4830 = vpack.c.b16 %v3356, %v3345
    %v4831 = vpack.c.b16 %v3357, %v3346
    %v4832 = vpack.c.b16 %v3369, %v3358
    %v4833 = vpack.c.b16 %v3370, %v3359
    %v4834 = vpack.c.b16 %v3371, %v3360
    %v4835 = vpack.c.b16 %v3372, %v3361
    %v4836 = vpack.c.b16 %v3373, %v3362
    %v4837 = vpack.c.b16 %v3374, %v3363
    %v4838 = vpack.c.b16 %v3375, %v3364
    %v4839 = vpack.c.b16 %v3376, %v3365
    %v4840 = vpack.c.b16 %v3377, %v3366
    %v4841 = vpack.c.b16 %v3378, %v3367
    %v4842 = vpack.c.b16 %v3379, %v3368
    %v4843 = vpack.c.b16 %v3391, %v3380
    %v4844 = vpack.c.b16 %v3392, %v3381
    %v4845 = vpack.c.b16 %v3393, %v3382
    %v4846 = vpack.c.b16 %v3394, %v3383
    %v4847 = vpack.c.b16 %v3395, %v3384
    %v4848 = vpack.c.b16 %v3396, %v3385
    %v4849 = vpack.c.b16 %v3397, %v3386
    %v4850 = vpack.c.b16 %v3398, %v3387
    %v4851 = vpack.c.b16 %v3399, %v3388
    %v4852 = vpack.c.b16 %v3400, %v3389
    %v4853 = vpack.c.b16 %v3401, %v3390
    %v4854 = vpack.c.b16 %v3413, %v3402
    %v4855 = vpack.c.b16 %v3414, %v3403
    %v4856 = vpack.c.b16 %v3415, %v3404
    %v4857 = vpack.c.b16 %v3416, %v3405
    %v4858 = vpack.c.b16 %v3417, %v3406
    %v4859 = vpack.c.b16 %v3418, %v3407
    %v4860 = vpack.c.b16 %v3419, %v3408
    %v4861 = vpack.c.b16 %v3420, %v3409
    %v4862 = vpack.c.b16 %v3421, %v3410
    %v4863 = vpack.c.b16 %v3422, %v3411
    %v4864 = vpack.c.b16 %v3423, %v3412
    %v4865 = vpack.c.b16 %v3435, %v3424
    %v4866 = vpack.c.b16 %v3436, %v3425
    %v4867 = vpack.c.b16 %v3437, %v3426
    %v4868 = vpack.c.b16 %v3438, %v3427
    %v4869 = vpack.c.b16 %v3439, %v3428
    %v4870 = vpack.c.b16 %v3440, %v3429
    %v4871 = vpack.c.b16 %v3441, %v3430
    %v4872 = vpack.c.b16 %v3442, %v3431
    %v4873 = vpack.c.b16 %v3443, %v3432
    %v4874 = vpack.c.b16 %v3444, %v3433
    %v4875 = vpack.c.b16 %v3445, %v3434
    %v4876 = vpack.c.b16 %v3457, %v3446
    %v4877 = vpack.c.b16 %v3458, %v3447
    %v4878 = vpack.c.b16 %v3459, %v3448
    %v4879 = vpack.c.b16 %v3460, %v3449
    %v4880 = vpack.c.b16 %v3461, %v3450
    %v4881 = vpack.c.b16 %v3462, %v3451
    %v4882 = vpack.c.b16 %v3463, %v3452
    %v4883 = vpack.c.b16 %v3464, %v3453
    %v4884 = vpack.c.b16 %v3465, %v3454
    %v4885 = vpack.c.b16 %v3466, %v3455
    %v4886 = vpack.c.b16 %v3467, %v3456
    %v4887 = vpack.c.b16 %v3479, %v3468
    %v4888 = vpack.c.b16 %v3480, %v3469
    %v4889 = vpack.c.b16 %v3481, %v3470
    %v4890 = vpack.c.b16 %v3482, %v3471
    %v4891 = vpack.c.b16 %v3483, %v3472
    %v4892 = vpack.c.b16 %v3484, %v3473
    %v4893 = vpack.c.b16 %v3485, %v3474
    %v4894 = vpack.c.b16 %v3486, %v3475
    %v4895 = vpack.c.b16 %v3487, %v3476
    %v4896 = vpack.c.b16 %v3488, %v3477
    %v4897 = vpack.c.b16 %v3489, %v3478
    %v4898 = vpack.c.b16 %v3501, %v3490
    %v4899 = vpack.c.b16 %v3502, %v3491
    %v4900 = vpack.c.b16 %v3503, %v3492
    %v4901 = vpack.c.b16 %v3504, %v3493
    %v4902 = vpack.c.b16 %v3505, %v3494
    %v4903 = vpack.c.b16 %v3506, %v3495
    %v4904 = vpack.c.b16 %v3507, %v3496
    %v4905 = vpack.c.b16 %v3508, %v3497
    %v4906 = vpack.c.b16 %v3509, %v3498
    %v4907 = vpack.c.b16 %v3510, %v3499
    %v4908 = vpack.c.b16 %v3511, %v3500
    %v4909 = vpack.c.b16 %v3523, %v3512
    %v4910 = vpack.c.b16 %v3524, %v3513
    %v4911 = vpack.c.b16 %v3525, %v3514
    %v4912 = vpack.c.b16 %v3526, %v3515
    %v4913 = vpack.c.b16 %v3527, %v3516
    %v4914 = vpack.c.b16 %v3528, %v3517
    %v4915 = vpack.c.b16 %v3529, %v3518
    %v4916 = vpack.c.b16 %v3530, %v3519
    %v4917 = vpack.c.b16 %v3531, %v3520
    %v4918 = vpack.c.b16 %v3532, %v3521
    %v4919 = vpack.c.b16 %v3533, %v3522
    %v4920 = vpack.c.b16 %v3545, %v3534
    %v4921 = vpack.c.b16 %v3546, %v3535
    %v4922 = vpack.c.b16 %v3547, %v3536
    %v4923 = vpack.c.b16 %v3548, %v3537
    %v4924 = vpack.c.b16 %v3549, %v3538
    %v4925 = vpack.c.b16 %v3550, %v3539
    %v4926 = vpack.c.b16 %v3551, %v3540
    %v4927 = vpack.c.b16 %v3552, %v3541
    %v4928 = vpack.c.b16 %v3553, %v3542
    %v4929 = vpack.c.b16 %v3554, %v3543
    %v4930 = vpack.c.b16 %v3555, %v3544
    %v4931 = vpack.c.b16 %v3567, %v3556
    %v4932 = vpack.c.b16 %v3568, %v3557
    %v4933 = vpack.c.b16 %v3569, %v3558
    %v4934 = vpack.c.b16 %v3570, %v3559
    %v4935 = vpack.c.b16 %v3571, %v3560
    %v4936 = vpack.c.b16 %v3572, %v3561
    %v4937 = vpack.c.b16 %v3573, %v3562
    %v4938 = vpack.c.b16 %v3574, %v3563
    %v4939 = vpack.c.b16 %v3575, %v3564
    %v4940 = vpack.c.b16 %v3576, %v3565
    %v4941 = vpack.c.b16 %v3577, %v3566
    %v4942 = vpack.c.b16 %v3589, %v3578
    %v4943 = vpack.c.b16 %v3590, %v3579
    %v4944 = vpack.c.b16 %v3591, %v3580
    %v4945 = vpack.c.b16 %v3592, %v3581
    %v4946 = vpack.c.b16 %v3593, %v3582
    %v4947 = vpack.c.b16 %v3594, %v3583
    %v4948 = vpack.c.b16 %v3595, %v3584
    %v4949 = vpack.c.b16 %v3596, %v3585
    %v4950 = vpack.c.b16 %v3597, %v3586
    %v4951 = vpack.c.b16 %v3598, %v3587
    %v4952 = vpack.c.b16 %v3599, %v3588
    %v4953 = vpack.c.b16 %v3611, %v3600
    %v4954 = vpack.c.b16 %v3612, %v3601
    %v4955 = vpack.c.b16 %v3613, %v3602
    %v4956 = vpack.c.b16 %v3614, %v3603
    %v4957 = vpack.c.b16 %v3615, %v3604
    %v4958 = vpack.c.b16 %v3616, %v3605
    %v4959 = vpack.c.b16 %v3617, %v3606
    %v4960 = vpack.c.b16 %v3618, %v3607
    %v4961 = vpack.c.b16 %v3619, %v3608
    %v4962 = vpack.c.b16 %v3620, %v3609
    %v4963 = vpack.c.b16 %v3621, %v3610
    %v4964 = vpack.c.b16 %v3633, %v3622
    %v4965 = vpack.c.b16 %v3634, %v3623
    %v4966 = vpack.c.b16 %v3635, %v3624
    %v4967 = vpack.c.b16 %v3636, %v3625
    %v4968 = vpack.c.b16 %v3637, %v3626
    %v4969 = vpack.c.b16 %v3638, %v3627
    %v4970 = vpack.c.b16 %v3639, %v3628
    %v4971 = vpack.c.b16 %v3640, %v3629
    %v4972 = vpack.c.b16 %v3641, %v3630
    %v4973 = vpack.c.b16 %v3642, %v3631
    %v4974 = vpack.c.b16 %v3643, %v3632
    %v4975 = vpack.c.b16 %v3655, %v3644
    %v4976 = vpack.c.b16 %v3656, %v3645
    %v4977 = vpack.c.b16 %v3657, %v3646
    %v4978 = vpack.c.b16 %v3658, %v3647
    %v4979 = vpack.c.b16 %v3659, %v3648
    %v4980 = vpack.c.b16 %v3660, %v3649
    %v4981 = vpack.c.b16 %v3661, %v3650
    %v4982 = vpack.c.b16 %v3662, %v3651
    %v4983 = vpack.c.b16 %v3663, %v3652
    %v4984 = vpack.c.b16 %v3664, %v3653
    %v4985 = vpack.c.b16 %v3665, %v3654
    %v4986 = vpack.c.b16 %v3677, %v3666
    %v4987 = vpack.c.b16 %v3678, %v3667
    %v4988 = vpack.c.b16 %v3679, %v3668
    %v4989 = vpack.c.b16 %v3680, %v3669
    %v4990 = vpack.c.b16 %v3681, %v3670
    %v4991 = vpack.c.b16 %v3682, %v3671
    %v4992 = vpack.c.b16 %v3683, %v3672
    %v4993 = vpack.c.b16 %v3684, %v3673
    %v4994 = vpack.c.b16 %v3685, %v3674
    %v4995 = vpack.c.b16 %v3686, %v3675
    %v4996 = vpack.c.b16 %v3687, %v3676
    %v4997 = vpack.c.b16 %v3699, %v3688
    %v4998 = vpack.c.b16 %v3700, %v3689
    %v4999 = vpack.c.b16 %v3701, %v3690
    %v5000 = vpack.c.b16 %v3702, %v3691
    %v5001 = vpack.c.b16 %v3703, %v3692
    %v5002 = vpack.c.b16 %v3704, %v3693
    %v5003 = vpack.c.b16 %v3705, %v3694
    %v5004 = vpack.c.b16 %v3706, %v3695
    %v5005 = vpack.c.b16 %v3707, %v3696
    %v5006 = vpack.c.b16 %v3708, %v3697
    %v5007 = vpack.c.b16 %v3709, %v3698
    %v5008 = vpack.c.b16 %v3721, %v3710
    %v5009 = vpack.c.b16 %v3722, %v3711
    %v5010 = vpack.c.b16 %v3723, %v3712
    %v5011 = vpack.c.b16 %v3724, %v3713
    %v5012 = vpack.c.b16 %v3725, %v3714
    %v5013 = vpack.c.b16 %v3726, %v3715
    %v5014 = vpack.c.b16 %v3727, %v3716
    %v5015 = vpack.c.b16 %v3728, %v3717
    %v5016 = vpack.c.b16 %v3729, %v3718
    %v5017 = vpack.c.b16 %v3730, %v3719
    %v5018 = vpack.c.b16 %v3731, %v3720
    %v5019 = vpack.c.b16 %v3743, %v3732
    %v5020 = vpack.c.b16 %v3744, %v3733
    %v5021 = vpack.c.b16 %v3745, %v3734
    %v5022 = vpack.c.b16 %v3746, %v3735
    %v5023 = vpack.c.b16 %v3747, %v3736
    %v5024 = vpack.c.b16 %v3748, %v3737
    %v5025 = vpack.c.b16 %v3749, %v3738
    %v5026 = vpack.c.b16 %v3750, %v3739
    %v5027 = vpack.c.b16 %v3751, %v3740
    %v5028 = vpack.c.b16 %v3752, %v3741
    %v5029 = vpack.c.b16 %v3753, %v3742
    %v5030 = vpack.c.b16 %v3765, %v3754
    %v5031 = vpack.c.b16 %v3766, %v3755
    %v5032 = vpack.c.b16 %v3767, %v3756
    %v5033 = vpack.c.b16 %v3768, %v3757
    %v5034 = vpack.c.b16 %v3769, %v3758
    %v5035 = vpack.c.b16 %v3770, %v3759
    %v5036 = vpack.c.b16 %v3771, %v3760
    %v5037 = vpack.c.b16 %v3772, %v3761
    %v5038 = vpack.c.b16 %v3773, %v3762
    %v5039 = vpack.c.b16 %v3774, %v3763
    %v5040 = vpack.c.b16 %v3775, %v3764
    %v5041 = vpack.c.b16 %v3787, %v3776
    %v5042 = vpack.c.b16 %v3788, %v3777
    %v5043 = vpack.c.b16 %v3789, %v3778
    %v5044 = vpack.c.b16 %v3790, %v3779
    %v5045 = vpack.c.b16 %v3791, %v3780
    %v5046 = vpack.c.b16 %v3792, %v3781
    %v5047 = vpack.c.b16 %v3793, %v3782
    %v5048 = vpack.c.b16 %v3794, %v3783
    %v5049 = vpack.c.b16 %v3795, %v3784
    %v5050 = vpack.c.b16 %v3796, %v3785
    %v5051 = vpack.c.b16 %v3797, %v3786
    %v5052 = vpack.c.b16 %v3809, %v3798
    %v5053 = vpack.c.b16 %v3810, %v3799
    %v5054 = vpack.c.b16 %v3811, %v3800
    %v5055 = vpack.c.b16 %v3812, %v3801
    %v5056 = vpack.c.b16 %v3813, %v3802
    %v5057 = vpack.c.b16 %v3814, %v3803
    %v5058 = vpack.c.b16 %v3815, %v3804
    %v5059 = vpack.c.b16 %v3816, %v3805
    %v5060 = vpack.c.b16 %v3817, %v3806
    %v5061 = vpack.c.b16 %v3818, %v3807
    %v5062 = vpack.c.b16 %v3819, %v3808
    %v5063 = vpack.c.b16 %v3831, %v3820
    %v5064 = vpack.c.b16 %v3832, %v3821
    %v5065 = vpack.c.b16 %v3833, %v3822
    %v5066 = vpack.c.b16 %v3834, %v3823
    %v5067 = vpack.c.b16 %v3835, %v3824
    %v5068 = vpack.c.b16 %v3836, %v3825
    %v5069 = vpack.c.b16 %v3837, %v3826
    %v5070 = vpack.c.b16 %v3838, %v3827
    %v5071 = vpack.c.b16 %v3839, %v3828
    %v5072 = vpack.c.b16 %v3840, %v3829
    %v5073 = vpack.c.b16 %v3841, %v3830
    %v5074 = vpack.c.b16 %v3853, %v3842
    %v5075 = vpack.c.b16 %v3854, %v3843
    %v5076 = vpack.c.b16 %v3855, %v3844
    %v5077 = vpack.c.b16 %v3856, %v3845
    %v5078 = vpack.c.b16 %v3857, %v3846
    %v5079 = vpack.c.b16 %v3858, %v3847
    %v5080 = vpack.c.b16 %v3859, %v3848
    %v5081 = vpack.c.b16 %v3860, %v3849
    %v5082 = vpack.c.b16 %v3861, %v3850
    %v5083 = vpack.c.b16 %v3862, %v3851
    %v5084 = vpack.c.b16 %v3863, %v3852
    %v5085 = vpack.c.b16 %v3875, %v3864
    %v5086 = vpack.c.b16 %v3876, %v3865
    %v5087 = vpack.c.b16 %v3877, %v3866
    %v5088 = vpack.c.b16 %v3878, %v3867
    %v5089 = vpack.c.b16 %v3879, %v3868
    %v5090 = vpack.c.b16 %v3880, %v3869
    %v5091 = vpack.c.b16 %v3881, %v3870
    %v5092 = vpack.c.b16 %v3882, %v3871
    %v5093 = vpack.c.b16 %v3883, %v3872
    %v5094 = vpack.c.b16 %v3884, %v3873
    %v5095 = vpack.c.b16 %v3885, %v3874
    %v5096 = vpack.c.b16 %v3897, %v3886
    %v5097 = vpack.c.b16 %v3898, %v3887
    %v5098 = vpack.c.b16 %v3899, %v3888
    %v5099 = vpack.c.b16 %v3900, %v3889
    %v5100 = vpack.c.b16 %v3901, %v3890
    %v5101 = vpack.c.b16 %v3902, %v3891
    %v5102 = vpack.c.b16 %v3903, %v3892
    %v5103 = vpack.c.b16 %v3904, %v3893
    %v5104 = vpack.c.b16 %v3905, %v3894
    %v5105 = vpack.c.b16 %v3906, %v3895
    %v5106 = vpack.c.b16 %v3907, %v3896
    %v5107 = vpack.c.b16 %v3919, %v3908
    %v5108 = vpack.c.b16 %v3920, %v3909
    %v5109 = vpack.c.b16 %v3921, %v3910
    %v5110 = vpack.c.b16 %v3922, %v3911
    %v5111 = vpack.c.b16 %v3923, %v3912
    %v5112 = vpack.c.b16 %v3924, %v3913
    %v5113 = vpack.c.b16 %v3925, %v3914
    %v5114 = vpack.c.b16 %v3926, %v3915
    %v5115 = vpack.c.b16 %v3927, %v3916
    %v5116 = vpack.c.b16 %v3928, %v3917
    %v5117 = vpack.c.b16 %v3929, %v3918
    %v5118 = vpack.c.b16 %v3941, %v3930
    %v5119 = vpack.c.b16 %v3942, %v3931
    %v5120 = vpack.c.b16 %v3943, %v3932
    %v5121 = vpack.c.b16 %v3944, %v3933
    %v5122 = vpack.c.b16 %v3945, %v3934
    %v5123 = vpack.c.b16 %v3946, %v3935
    %v5124 = vpack.c.b16 %v3947, %v3936
    %v5125 = vpack.c.b16 %v3948, %v3937
    %v5126 = vpack.c.b16 %v3949, %v3938
    %v5127 = vpack.c.b16 %v3950, %v3939
    %v5128 = vpack.c.b16 %v3951, %v3940
    %v5129 = vpack.c.b16 %v3963, %v3952
    %v5130 = vpack.c.b16 %v3964, %v3953
    %v5131 = vpack.c.b16 %v3965, %v3954
    %v5132 = vpack.c.b16 %v3966, %v3955
    %v5133 = vpack.c.b16 %v3967, %v3956
    %v5134 = vpack.c.b16 %v3968, %v3957
    %v5135 = vpack.c.b16 %v3969, %v3958
    %v5136 = vpack.c.b16 %v3970, %v3959
    %v5137 = vpack.c.b16 %v3971, %v3960
    %v5138 = vpack.c.b16 %v3972, %v3961
    %v5139 = vpack.c.b16 %v3973, %v3962
    %v5140 = vpack.c.b16 %v3985, %v3974
    %v5141 = vpack.c.b16 %v3986, %v3975
    %v5142 = vpack.c.b16 %v3987, %v3976
    %v5143 = vpack.c.b16 %v3988, %v3977
    %v5144 = vpack.c.b16 %v3989, %v3978
    %v5145 = vpack.c.b16 %v3990, %v3979
    %v5146 = vpack.c.b16 %v3991, %v3980
    %v5147 = vpack.c.b16 %v3992, %v3981
    %v5148 = vpack.c.b16 %v3993, %v3982
    %v5149 = vpack.c.b16 %v3994, %v3983
    %v5150 = vpack.c.b16 %v3995, %v3984
    %v5151 = vpack.c.b16 %v4007, %v3996
    %v5152 = vpack.c.b16 %v4008, %v3997
    %v5153 = vpack.c.b16 %v4009, %v3998
    %v5154 = vpack.c.b16 %v4010, %v3999
    %v5155 = vpack.c.b16 %v4011, %v4000
    %v5156 = vpack.c.b16 %v4012, %v4001
    %v5157 = vpack.c.b16 %v4013, %v4002
    %v5158 = vpack.c.b16 %v4014, %v4003
    %v5159 = vpack.c.b16 %v4015, %v4004
    %v5160 = vpack.c.b16 %v4016, %v4005
    %v5161 = vpack.c.b16 %v4017, %v4006
    %v5162 = vpack.c.b16 %v4029, %v4018
    %v5163 = vpack.c.b16 %v4030, %v4019
    %v5164 = vpack.c.b16 %v4031, %v4020
    %v5165 = vpack.c.b16 %v4032, %v4021
    %v5166 = vpack.c.b16 %v4033, %v4022
    %v5167 = vpack.c.b16 %v4034, %v4023
    %v5168 = vpack.c.b16 %v4035, %v4024
    %v5169 = vpack.c.b16 %v4036, %v4025
    %v5170 = vpack.c.b16 %v4037, %v4026
    %v5171 = vpack.c.b16 %v4038, %v4027
    %v5172 = vpack.c.b16 %v4039, %v4028
    %v5173 = vpack.c.b16 %v4051, %v4040
    %v5174 = vpack.c.b16 %v4052, %v4041
    %v5175 = vpack.c.b16 %v4053, %v4042
    %v5176 = vpack.c.b16 %v4054, %v4043
    %v5177 = vpack.c.b16 %v4055, %v4044
    %v5178 = vpack.c.b16 %v4056, %v4045
    %v5179 = vpack.c.b16 %v4057, %v4046
    %v5180 = vpack.c.b16 %v4058, %v4047
    %v5181 = vpack.c.b16 %v4059, %v4048
    %v5182 = vpack.c.b16 %v4060, %v4049
    %v5183 = vpack.c.b16 %v4061, %v4050
    %v5184 = vpack.c.b16 %v4073, %v4062
    %v5185 = vpack.c.b16 %v4074, %v4063
    %v5186 = vpack.c.b16 %v4075, %v4064
    %v5187 = vpack.c.b16 %v4076, %v4065
    %v5188 = vpack.c.b16 %v4077, %v4066
    %v5189 = vpack.c.b16 %v4078, %v4067
    %v5190 = vpack.c.b16 %v4079, %v4068
    %v5191 = vpack.c.b16 %v4080, %v4069
    %v5192 = vpack.c.b16 %v4081, %v4070
    %v5193 = vpack.c.b16 %v4082, %v4071
    %v5194 = vpack.c.b16 %v4083, %v4072
    %v5195 = vpack.c.b16 %v4095, %v4084
    %v5196 = vpack.c.b16 %v4096, %v4085
    %v5197 = vpack.c.b16 %v4097, %v4086
    %v5198 = vpack.c.b16 %v4098, %v4087
    %v5199 = vpack.c.b16 %v4099, %v4088
    %v5200 = vpack.c.b16 %v4100, %v4089
    %v5201 = vpack.c.b16 %v4101, %v4090
    %v5202 = vpack.c.b16 %v4102, %v4091
    %v5203 = vpack.c.b16 %v4103, %v4092
    %v5204 = vpack.c.b16 %v4104, %v4093
    %v5205 = vpack.c.b16 %v4105, %v4094
    %v5206 = vpack.c.b16 %v4117, %v4106
    %v5207 = vpack.c.b16 %v4118, %v4107
    %v5208 = vpack.c.b16 %v4119, %v4108
    %v5209 = vpack.c.b16 %v4120, %v4109
    %v5210 = vpack.c.b16 %v4121, %v4110
    %v5211 = vpack.c.b16 %v4122, %v4111
    %v5212 = vpack.c.b16 %v4123, %v4112
    %v5213 = vpack.c.b16 %v4124, %v4113
    %v5214 = vpack.c.b16 %v4125, %v4114
    %v5215 = vpack.c.b16 %v4126, %v4115
    %v5216 = vpack.c.b16 %v4127, %v4116
    %v5217 = vpack.c.b16 %v4139, %v4128
    %v5218 = vpack.c.b16 %v4140, %v4129
    %v5219 = vpack.c.b16 %v4141, %v4130
    %v5220 = vpack.c.b16 %v4142, %v4131
    %v5221 = vpack.c.b16 %v4143, %v4132
    %v5222 = vpack.c.b16 %v4144, %v4133
    %v5223 = vpack.c.b16 %v4145, %v4134
    %v5224 = vpack.c.b16 %v4146, %v4135
    %v5225 = vpack.c.b16 %v4147, %v4136
    %v5226 = vpack.c.b16 %v4148, %v4137
    %v5227 = vpack.c.b16 %v4149, %v4138
    %v5228 = vpack.c.b16 %v4161, %v4150
    %v5229 = vpack.c.b16 %v4162, %v4151
    %v5230 = vpack.c.b16 %v4163, %v4152
    %v5231 = vpack.c.b16 %v4164, %v4153
    %v5232 = vpack.c.b16 %v4165, %v4154
    %v5233 = vpack.c.b16 %v4166, %v4155
    %v5234 = vpack.c.b16 %v4167, %v4156
    %v5235 = vpack.c.b16 %v4168, %v4157
    %v5236 = vpack.c.b16 %v4169, %v4158
    %v5237 = vpack.c.b16 %v4170, %v4159
    %v5238 = vpack.c.b16 %v4171, %v4160
    %v5239 = vpack.c.b16 %v4183, %v4172
    %v5240 = vpack.c.b16 %v4184, %v4173
    %v5241 = vpack.c.b16 %v4185, %v4174
    %v5242 = vpack.c.b16 %v4186, %v4175
    %v5243 = vpack.c.b16 %v4187, %v4176
    %v5244 = vpack.c.b16 %v4188, %v4177
    %v5245 = vpack.c.b16 %v4189, %v4178
    %v5246 = vpack.c.b16 %v4190, %v4179
    %v5247 = vpack.c.b16 %v4191, %v4180
    %v5248 = vpack.c.b16 %v4192, %v4181
    %v5249 = vpack.c.b16 %v4193, %v4182
    %v5250 = vpack.c.b16 %v4205, %v4194
    %v5251 = vpack.c.b16 %v4206, %v4195
    %v5252 = vpack.c.b16 %v4207, %v4196
    %v5253 = vpack.c.b16 %v4208, %v4197
    %v5254 = vpack.c.b16 %v4209, %v4198
    %v5255 = vpack.c.b16 %v4210, %v4199
    %v5256 = vpack.c.b16 %v4211, %v4200
    %v5257 = vpack.c.b16 %v4212, %v4201
    %v5258 = vpack.c.b16 %v4213, %v4202
    %v5259 = vpack.c.b16 %v4214, %v4203
    %v5260 = vpack.c.b16 %v4215, %v4204
    %v5261 = vpack.c.b16 %v4227, %v4216
    %v5262 = vpack.c.b16 %v4228, %v4217
    %v5263 = vpack.c.b16 %v4229, %v4218
    %v5264 = vpack.c.b16 %v4230, %v4219
    %v5265 = vpack.c.b16 %v4231, %v4220
    %v5266 = vpack.c.b16 %v4232, %v4221
    %v5267 = vpack.c.b16 %v4233, %v4222
    %v5268 = vpack.c.b16 %v4234, %v4223
    %v5269 = vpack.c.b16 %v4235, %v4224
    %v5270 = vpack.c.b16 %v4236, %v4225
    %v5271 = vpack.c.b16 %v4237, %v4226
    %v5272 = vpack.c.b16 %v4249, %v4238
    %v5273 = vpack.c.b16 %v4250, %v4239
    %v5274 = vpack.c.b16 %v4251, %v4240
    %v5275 = vpack.c.b16 %v4252, %v4241
    %v5276 = vpack.c.b16 %v4253, %v4242
    %v5277 = vpack.c.b16 %v4254, %v4243
    %v5278 = vpack.c.b16 %v4255, %v4244
    %v5279 = vpack.c.b16 %v4256, %v4245
    %v5280 = vpack.c.b16 %v4257, %v4246
    %v5281 = vpack.c.b16 %v4258, %v4247
    %v5282 = vpack.c.b16 %v4259, %v4248
    %v5283 = vpack.c.b16 %v4271, %v4260
    %v5284 = vpack.c.b16 %v4272, %v4261
    %v5285 = vpack.c.b16 %v4273, %v4262
    %v5286 = vpack.c.b16 %v4274, %v4263
    %v5287 = vpack.c.b16 %v4275, %v4264
    %v5288 = vpack.c.b16 %v4276, %v4265
    %v5289 = vpack.c.b16 %v4277, %v4266
    %v5290 = vpack.c.b16 %v4278, %v4267
    %v5291 = vpack.c.b16 %v4279, %v4268
    %v5292 = vpack.c.b16 %v4280, %v4269
    %v5293 = vpack.c.b16 %v4281, %v4270
    %v5294 = vpack.c.b16 %v4293, %v4282
    %v5295 = vpack.c.b16 %v4294, %v4283
    %v5296 = vpack.c.b16 %v4295, %v4284
    %v5297 = vpack.c.b16 %v4296, %v4285
    %v5298 = vpack.c.b16 %v4297, %v4286
    %v5299 = vpack.c.b16 %v4298, %v4287
    %v5300 = vpack.c.b16 %v4299, %v4288
    %v5301 = vpack.c.b16 %v4300, %v4289
    %v5302 = vpack.c.b16 %v4301, %v4290
    %v5303 = vpack.c.b16 %v4302, %v4291
    %v5304 = vpack.c.b16 %v4303, %v4292
    %v5305 = vpack.c.b16 %v4315, %v4304
    %v5306 = vpack.c.b16 %v4316, %v4305
    %v5307 = vpack.c.b16 %v4317, %v4306
    %v5308 = vpack.c.b16 %v4318, %v4307
    %v5309 = vpack.c.b16 %v4319, %v4308
    %v5310 = vpack.c.b16 %v4320, %v4309
    %v5311 = vpack.c.b16 %v4321, %v4310
    %v5312 = vpack.c.b16 %v4322, %v4311
    %v5313 = vpack.c.b16 %v4323, %v4312
    %v5314 = vpack.c.b16 %v4324, %v4313
    %v5315 = vpack.c.b16 %v4325, %v4314
    %v5316 = vpack.c.b16 %v4337, %v4326
    %v5317 = vpack.c.b16 %v4338, %v4327
    %v5318 = vpack.c.b16 %v4339, %v4328
    %v5319 = vpack.c.b16 %v4340, %v4329
    %v5320 = vpack.c.b16 %v4341, %v4330
    %v5321 = vpack.c.b16 %v4342, %v4331
    %v5322 = vpack.c.b16 %v4343, %v4332
    %v5323 = vpack.c.b16 %v4344, %v4333
    %v5324 = vpack.c.b16 %v4345, %v4334
    %v5325 = vpack.c.b16 %v4346, %v4335
    %v5326 = vpack.c.b16 %v4347, %v4336
    %v5327 = vpack.c.b16 %v4359, %v4348
    %v5328 = vpack.c.b16 %v4360, %v4349
    %v5329 = vpack.c.b16 %v4361, %v4350
    %v5330 = vpack.c.b16 %v4362, %v4351
    %v5331 = vpack.c.b16 %v4363, %v4352
    %v5332 = vpack.c.b16 %v4364, %v4353
    %v5333 = vpack.c.b16 %v4365, %v4354
    %v5334 = vpack.c.b16 %v4366, %v4355
    %v5335 = vpack.c.b16 %v4367, %v4356
    %v5336 = vpack.c.b16 %v4368, %v4357
    %v5337 = vpack.c.b16 %v4369, %v4358
    %v5338 = vpack.c.b16 %v4381, %v4370
    %v5339 = vpack.c.b16 %v4382, %v4371
    %v5340 = vpack.c.b16 %v4383, %v4372
    %v5341 = vpack.c.b16 %v4384, %v4373
    %v5342 = vpack.c.b16 %v4385, %v4374
    %v5343 = vpack.c.b16 %v4386, %v4375
    %v5344 = vpack.c.b16 %v4387, %v4376
    %v5345 = vpack.c.b16 %v4388, %v4377
    %v5346 = vpack.c.b16 %v4389, %v4378
    %v5347 = vpack.c.b16 %v4390, %v4379
    %v5348 = vpack.c.b16 %v4391, %v4380
    %v5349 = vpack.c.b16 %v4403, %v4392
    %v5350 = vpack.c.b16 %v4404, %v4393
    %v5351 = vpack.c.b16 %v4405, %v4394
    %v5352 = vpack.c.b16 %v4406, %v4395
    %v5353 = vpack.c.b16 %v4407, %v4396
    %v5354 = vpack.c.b16 %v4408, %v4397
    %v5355 = vpack.c.b16 %v4409, %v4398
    %v5356 = vpack.c.b16 %v4410, %v4399
    %v5357 = vpack.c.b16 %v4411, %v4400
    %v5358 = vpack.c.b16 %v4412, %v4401
    %v5359 = vpack.c.b16 %v4413, %v4402
    %v5360 = vpack.c.b16 %v4425, %v4414
    %v5361 = vpack.c.b16 %v4426, %v4415
    %v5362 = vpack.c.b16 %v4427, %v4416
    %v5363 = vpack.c.b16 %v4428, %v4417
    %v5364 = vpack.c.b16 %v4429, %v4418
    %v5365 = vpack.c.b16 %v4430, %v4419
    %v5366 = vpack.c.b16 %v4431, %v4420
    %v5367 = vpack.c.b16 %v4432, %v4421
    %v5368 = vpack.c.b16 %v4433, %v4422
    %v5369 = vpack.c.b16 %v4434, %v4423
    %v5370 = vpack.c.b16 %v4435, %v4424
    %v5371 = vpack.c.b16 %v4447, %v4436
    %v5372 = vpack.c.b16 %v4448, %v4437
    %v5373 = vpack.c.b16 %v4449, %v4438
    %v5374 = vpack.c.b16 %v4450, %v4439
    %v5375 = vpack.c.b16 %v4451, %v4440
    %v5376 = vpack.c.b16 %v4452, %v4441
    %v5377 = vpack.c.b16 %v4453, %v4442
    %v5378 = vpack.c.b16 %v4454, %v4443
    %v5379 = vpack.c.b16 %v4455, %v4444
    %v5380 = vpack.c.b16 %v4456, %v4445
    %v5381 = vpack.c.b16 %v4457, %v4446
    %v5382 = vpack.c.b16 %v4469, %v4458
    %v5383 = vpack.c.b16 %v4470, %v4459
    %v5384 = vpack.c.b16 %v4471, %v4460
    %v5385 = vpack.c.b16 %v4472, %v4461
    %v5386 = vpack.c.b16 %v4473, %v4462
    %v5387 = vpack.c.b16 %v4474, %v4463
    %v5388 = vpack.c.b16 %v4475, %v4464
    %v5389 = vpack.c.b16 %v4476, %v4465
    %v5390 = vpack.c.b16 %v4477, %v4466
    %v5391 = vpack.c.b16 %v4478, %v4467
    %v5392 = vpack.c.b16 %v4479, %v4468
    %v5393 = vpack.c.b16 %v4491, %v4480
    %v5394 = vpack.c.b16 %v4492, %v4481
    %v5395 = vpack.c.b16 %v4493, %v4482
    %v5396 = vpack.c.b16 %v4494, %v4483
    %v5397 = vpack.c.b16 %v4495, %v4484
    %v5398 = vpack.c.b16 %v4496, %v4485
    %v5399 = vpack.c.b16 %v4497, %v4486
    %v5400 = vpack.c.b16 %v4498, %v4487
    %v5401 = vpack.c.b16 %v4499, %v4488
    %v5402 = vpack.c.b16 %v4500, %v4489
    %v5403 = vpack.c.b16 %v4501, %v4490
    %v5404 = vpack.c.b16 %v4513, %v4502
    %v5405 = vpack.c.b16 %v4514, %v4503
    %v5406 = vpack.c.b16 %v4515, %v4504
    %v5407 = vpack.c.b16 %v4516, %v4505
    %v5408 = vpack.c.b16 %v4517, %v4506
    %v5409 = vpack.c.b16 %v4518, %v4507
    %v5410 = vpack.c.b16 %v4519, %v4508
    %v5411 = vpack.c.b16 %v4520, %v4509
    %v5412 = vpack.c.b16 %v4521, %v4510
    %v5413 = vpack.c.b16 %v4522, %v4511
    %v5414 = vpack.c.b16 %v4523, %v4512
    %v5415 = vpack.c.b16 %v4535, %v4524
    %v5416 = vpack.c.b16 %v4536, %v4525
    %v5417 = vpack.c.b16 %v4537, %v4526
    %v5418 = vpack.c.b16 %v4538, %v4527
    %v5419 = vpack.c.b16 %v4539, %v4528
    %v5420 = vpack.c.b16 %v4540, %v4529
    %v5421 = vpack.c.b16 %v4541, %v4530
    %v5422 = vpack.c.b16 %v4542, %v4531
    %v5423 = vpack.c.b16 %v4543, %v4532
    %v5424 = vpack.c.b16 %v4544, %v4533
    %v5425 = vpack.c.b16 %v4545, %v4534
    %6306 = vmatpush.bf16.msra.mxu0 %v4623
    %6307 = vmatpush.bf16.msra.mxu0 %v4612
    %6308 = vmatpush.bf16.msra.mxu0 %v4601
    %6309 = vmatpush.bf16.msra.mxu0 %v4590
    %6310 = vmatpush.bf16.msra.mxu0 %v4579
    %6311 = vmatpush.bf16.msra.mxu0 %v4568
    %6312 = vmatpush.bf16.msra.mxu0 %v4557
    %6313 = vmatpush.bf16.msra.mxu0 %v4546
    %6314 = vmatmul.bf16.gmra.mxu0 %v830
    %v6315 = vpop.f32.mrf.mxu0
    %v6316 = vadd.f32 %v1804, %v6315
    %v6317 = vpop.f32.mrf.mxu0
    %6318 = vdwg.mxu0
    %6319 = vmatpush.bf16.msra.mxu0 %v4711
    %6320 = vmatpush.bf16.msra.mxu0 %v4700
    %6321 = vmatpush.bf16.msra.mxu0 %v4689
    %6322 = vmatpush.bf16.msra.mxu0 %v4678
    %6323 = vmatpush.bf16.msra.mxu0 %v4667
    %6324 = vmatpush.bf16.msra.mxu0 %v4656
    %6325 = vmatpush.bf16.msra.mxu0 %v4645
    %6326 = vmatpush.bf16.msra.mxu0 %v4634
    %6327 = vmatmul.bf16.gmra.mxu0 %v831
    %v6328 = vpop.f32.mrf.mxu0
    %v6329 = vadd.f32 %v6316, %v6328
    %v6330 = vpop.f32.mrf.mxu0
    %6331 = vdwg.mxu0
    %6332 = vmatpush.bf16.msra.mxu0 %v4799
    %6333 = vmatpush.bf16.msra.mxu0 %v4788
    %6334 = vmatpush.bf16.msra.mxu0 %v4777
    %6335 = vmatpush.bf16.msra.mxu0 %v4766
    %6336 = vmatpush.bf16.msra.mxu0 %v4755
    %6337 = vmatpush.bf16.msra.mxu0 %v4744
    %6338 = vmatpush.bf16.msra.mxu0 %v4733
    %6339 = vmatpush.bf16.msra.mxu0 %v4722
    %6340 = vmatmul.bf16.gmra.mxu0 %v832
    %v6341 = vpop.f32.mrf.mxu0
    %v6342 = vadd.f32 %v6329, %v6341
    %v6343 = vpop.f32.mrf.mxu0
    %6344 = vdwg.mxu0
    %6345 = vmatpush.bf16.msra.mxu0 %v4887
    %6346 = vmatpush.bf16.msra.mxu0 %v4876
    %6347 = vmatpush.bf16.msra.mxu0 %v4865
    %6348 = vmatpush.bf16.msra.mxu0 %v4854
    %6349 = vmatpush.bf16.msra.mxu0 %v4843
    %6350 = vmatpush.bf16.msra.mxu0 %v4832
    %6351 = vmatpush.bf16.msra.mxu0 %v4821
    %6352 = vmatpush.bf16.msra.mxu0 %v4810
    %6353 = vmatmul.bf16.gmra.mxu0 %v833
    %v6354 = vpop.f32.mrf.mxu0
    %v6355 = vadd.f32 %v6342, %v6354
    %v6356 = vpop.f32.mrf.mxu0
    %6357 = vdwg.mxu0
    %6358 = vmatpush.bf16.msra.mxu0 %v4975
    %6359 = vmatpush.bf16.msra.mxu0 %v4964
    %6360 = vmatpush.bf16.msra.mxu0 %v4953
    %6361 = vmatpush.bf16.msra.mxu0 %v4942
    %6362 = vmatpush.bf16.msra.mxu0 %v4931
    %6363 = vmatpush.bf16.msra.mxu0 %v4920
    %6364 = vmatpush.bf16.msra.mxu0 %v4909
    %6365 = vmatpush.bf16.msra.mxu0 %v4898
    %6366 = vmatmul.bf16.gmra.mxu0 %v834
    %v6367 = vpop.f32.mrf.mxu0
    %v6368 = vadd.f32 %v6355, %v6367
    %v6369 = vpop.f32.mrf.mxu0
    %6370 = vdwg.mxu0
    %6371 = vmatpush.bf16.msra.mxu0 %v5063
    %6372 = vmatpush.bf16.msra.mxu0 %v5052
    %6373 = vmatpush.bf16.msra.mxu0 %v5041
    %6374 = vmatpush.bf16.msra.mxu0 %v5030
    %6375 = vmatpush.bf16.msra.mxu0 %v5019
    %6376 = vmatpush.bf16.msra.mxu0 %v5008
    %6377 = vmatpush.bf16.msra.mxu0 %v4997
    %6378 = vmatpush.bf16.msra.mxu0 %v4986
    %6379 = vmatmul.bf16.gmra.mxu0 %v835
    %v6380 = vpop.f32.mrf.mxu0
    %v6381 = vadd.f32 %v6368, %v6380
    %v6382 = vpop.f32.mrf.mxu0
    %6383 = vdwg.mxu0
    %6384 = vmatpush.bf16.msra.mxu0 %v5151
    %6385 = vmatpush.bf16.msra.mxu0 %v5140
    %6386 = vmatpush.bf16.msra.mxu0 %v5129
    %6387 = vmatpush.bf16.msra.mxu0 %v5118
    %6388 = vmatpush.bf16.msra.mxu0 %v5107
    %6389 = vmatpush.bf16.msra.mxu0 %v5096
    %6390 = vmatpush.bf16.msra.mxu0 %v5085
    %6391 = vmatpush.bf16.msra.mxu0 %v5074
    %6392 = vmatmul.bf16.gmra.mxu0 %v836
    %v6393 = vpop.f32.mrf.mxu0
    %v6394 = vadd.f32 %v6381, %v6393
    %v6395 = vpop.f32.mrf.mxu0
    %6396 = vdwg.mxu0
    %6397 = vmatpush.bf16.msra.mxu0 %v5239
    %6398 = vmatpush.bf16.msra.mxu0 %v5228
    %6399 = vmatpush.bf16.msra.mxu0 %v5217
    %6400 = vmatpush.bf16.msra.mxu0 %v5206
    %6401 = vmatpush.bf16.msra.mxu0 %v5195
    %6402 = vmatpush.bf16.msra.mxu0 %v5184
    %6403 = vmatpush.bf16.msra.mxu0 %v5173
    %6404 = vmatpush.bf16.msra.mxu0 %v5162
    %6405 = vmatmul.bf16.gmra.mxu0 %v837
    %v6406 = vpop.f32.mrf.mxu0
    %v6407 = vadd.f32 %v6394, %v6406
    %v6408 = vpop.f32.mrf.mxu0
    %6409 = vdwg.mxu0
    %6410 = vmatpush.bf16.msra.mxu0 %v5327
    %6411 = vmatpush.bf16.msra.mxu0 %v5316
    %6412 = vmatpush.bf16.msra.mxu0 %v5305
    %6413 = vmatpush.bf16.msra.mxu0 %v5294
    %6414 = vmatpush.bf16.msra.mxu0 %v5283
    %6415 = vmatpush.bf16.msra.mxu0 %v5272
    %6416 = vmatpush.bf16.msra.mxu0 %v5261
    %6417 = vmatpush.bf16.msra.mxu0 %v5250
    %6418 = vmatmul.bf16.gmra.mxu0 %v838
    %v6419 = vpop.f32.mrf.mxu0
    %v6420 = vadd.f32 %v6407, %v6419
    %v6421 = vpop.f32.mrf.mxu0
    %6422 = vdwg.mxu0
    %6423 = vmatpush.bf16.msra.mxu0 %v5415
    %6424 = vmatpush.bf16.msra.mxu0 %v5404
    %6425 = vmatpush.bf16.msra.mxu0 %v5393
    %6426 = vmatpush.bf16.msra.mxu0 %v5382
    %6427 = vmatpush.bf16.msra.mxu0 %v5371
    %6428 = vmatpush.bf16.msra.mxu0 %v5360
    %6429 = vmatpush.bf16.msra.mxu0 %v5349
    %6430 = vmatpush.bf16.msra.mxu0 %v5338
    %6431 = vmatmul.bf16.gmra.mxu0 %v839
    %v6432 = vpop.f32.mrf.mxu0
    %v6433 = vadd.f32 %v6420, %v6432
    %v6434 = vpop.f32.mrf.mxu0
    %6435 = vdwg.mxu0
    %6436 = vmatpush.bf16.msra.mxu0 %v4624
    %6437 = vmatpush.bf16.msra.mxu0 %v4613
    %6438 = vmatpush.bf16.msra.mxu0 %v4602
    %6439 = vmatpush.bf16.msra.mxu0 %v4591
    %6440 = vmatpush.bf16.msra.mxu0 %v4580
    %6441 = vmatpush.bf16.msra.mxu0 %v4569
    %6442 = vmatpush.bf16.msra.mxu0 %v4558
    %6443 = vmatpush.bf16.msra.mxu0 %v4547
    %6444 = vmatmul.bf16.gmra.mxu0 %v830
    %v6445 = vpop.f32.mrf.mxu0
    %v6446 = vadd.f32 %v1805, %v6445
    %v6447 = vpop.f32.mrf.mxu0
    %6448 = vdwg.mxu0
    %6449 = vmatpush.bf16.msra.mxu0 %v4712
    %6450 = vmatpush.bf16.msra.mxu0 %v4701
    %6451 = vmatpush.bf16.msra.mxu0 %v4690
    %6452 = vmatpush.bf16.msra.mxu0 %v4679
    %6453 = vmatpush.bf16.msra.mxu0 %v4668
    %6454 = vmatpush.bf16.msra.mxu0 %v4657
    %6455 = vmatpush.bf16.msra.mxu0 %v4646
    %6456 = vmatpush.bf16.msra.mxu0 %v4635
    %6457 = vmatmul.bf16.gmra.mxu0 %v831
    %v6458 = vpop.f32.mrf.mxu0
    %v6459 = vadd.f32 %v6446, %v6458
    %v6460 = vpop.f32.mrf.mxu0
    %6461 = vdwg.mxu0
    %6462 = vmatpush.bf16.msra.mxu0 %v4800
    %6463 = vmatpush.bf16.msra.mxu0 %v4789
    %6464 = vmatpush.bf16.msra.mxu0 %v4778
    %6465 = vmatpush.bf16.msra.mxu0 %v4767
    %6466 = vmatpush.bf16.msra.mxu0 %v4756
    %6467 = vmatpush.bf16.msra.mxu0 %v4745
    %6468 = vmatpush.bf16.msra.mxu0 %v4734
    %6469 = vmatpush.bf16.msra.mxu0 %v4723
    %6470 = vmatmul.bf16.gmra.mxu0 %v832
    %v6471 = vpop.f32.mrf.mxu0
    %v6472 = vadd.f32 %v6459, %v6471
    %v6473 = vpop.f32.mrf.mxu0
    %6474 = vdwg.mxu0
    %6475 = vmatpush.bf16.msra.mxu0 %v4888
    %6476 = vmatpush.bf16.msra.mxu0 %v4877
    %6477 = vmatpush.bf16.msra.mxu0 %v4866
    %6478 = vmatpush.bf16.msra.mxu0 %v4855
    %6479 = vmatpush.bf16.msra.mxu0 %v4844
    %6480 = vmatpush.bf16.msra.mxu0 %v4833
    %6481 = vmatpush.bf16.msra.mxu0 %v4822
    %6482 = vmatpush.bf16.msra.mxu0 %v4811
    %6483 = vmatmul.bf16.gmra.mxu0 %v833
    %v6484 = vpop.f32.mrf.mxu0
    %v6485 = vadd.f32 %v6472, %v6484
    %v6486 = vpop.f32.mrf.mxu0
    %6487 = vdwg.mxu0
    %6488 = vmatpush.bf16.msra.mxu0 %v4976
    %6489 = vmatpush.bf16.msra.mxu0 %v4965
    %6490 = vmatpush.bf16.msra.mxu0 %v4954
    %6491 = vmatpush.bf16.msra.mxu0 %v4943
    %6492 = vmatpush.bf16.msra.mxu0 %v4932
    %6493 = vmatpush.bf16.msra.mxu0 %v4921
    %6494 = vmatpush.bf16.msra.mxu0 %v4910
    %6495 = vmatpush.bf16.msra.mxu0 %v4899
    %6496 = vmatmul.bf16.gmra.mxu0 %v834
    %v6497 = vpop.f32.mrf.mxu0
    %v6498 = vadd.f32 %v6485, %v6497
    %v6499 = vpop.f32.mrf.mxu0
    %6500 = vdwg.mxu0
    %6501 = vmatpush.bf16.msra.mxu0 %v5064
    %6502 = vmatpush.bf16.msra.mxu0 %v5053
    %6503 = vmatpush.bf16.msra.mxu0 %v5042
    %6504 = vmatpush.bf16.msra.mxu0 %v5031
    %6505 = vmatpush.bf16.msra.mxu0 %v5020
    %6506 = vmatpush.bf16.msra.mxu0 %v5009
    %6507 = vmatpush.bf16.msra.mxu0 %v4998
    %6508 = vmatpush.bf16.msra.mxu0 %v4987
    %6509 = vmatmul.bf16.gmra.mxu0 %v835
    %v6510 = vpop.f32.mrf.mxu0
    %v6511 = vadd.f32 %v6498, %v6510
    %v6512 = vpop.f32.mrf.mxu0
    %6513 = vdwg.mxu0
    %6514 = vmatpush.bf16.msra.mxu0 %v5152
    %6515 = vmatpush.bf16.msra.mxu0 %v5141
    %6516 = vmatpush.bf16.msra.mxu0 %v5130
    %6517 = vmatpush.bf16.msra.mxu0 %v5119
    %6518 = vmatpush.bf16.msra.mxu0 %v5108
    %6519 = vmatpush.bf16.msra.mxu0 %v5097
    %6520 = vmatpush.bf16.msra.mxu0 %v5086
    %6521 = vmatpush.bf16.msra.mxu0 %v5075
    %6522 = vmatmul.bf16.gmra.mxu0 %v836
    %v6523 = vpop.f32.mrf.mxu0
    %v6524 = vadd.f32 %v6511, %v6523
    %v6525 = vpop.f32.mrf.mxu0
    %6526 = vdwg.mxu0
    %6527 = vmatpush.bf16.msra.mxu0 %v5240
    %6528 = vmatpush.bf16.msra.mxu0 %v5229
    %6529 = vmatpush.bf16.msra.mxu0 %v5218
    %6530 = vmatpush.bf16.msra.mxu0 %v5207
    %6531 = vmatpush.bf16.msra.mxu0 %v5196
    %6532 = vmatpush.bf16.msra.mxu0 %v5185
    %6533 = vmatpush.bf16.msra.mxu0 %v5174
    %6534 = vmatpush.bf16.msra.mxu0 %v5163
    %6535 = vmatmul.bf16.gmra.mxu0 %v837
    %v6536 = vpop.f32.mrf.mxu0
    %v6537 = vadd.f32 %v6524, %v6536
    %v6538 = vpop.f32.mrf.mxu0
    %6539 = vdwg.mxu0
    %6540 = vmatpush.bf16.msra.mxu0 %v5328
    %6541 = vmatpush.bf16.msra.mxu0 %v5317
    %6542 = vmatpush.bf16.msra.mxu0 %v5306
    %6543 = vmatpush.bf16.msra.mxu0 %v5295
    %6544 = vmatpush.bf16.msra.mxu0 %v5284
    %6545 = vmatpush.bf16.msra.mxu0 %v5273
    %6546 = vmatpush.bf16.msra.mxu0 %v5262
    %6547 = vmatpush.bf16.msra.mxu0 %v5251
    %6548 = vmatmul.bf16.gmra.mxu0 %v838
    %v6549 = vpop.f32.mrf.mxu0
    %v6550 = vadd.f32 %v6537, %v6549
    %v6551 = vpop.f32.mrf.mxu0
    %6552 = vdwg.mxu0
    %6553 = vmatpush.bf16.msra.mxu0 %v5416
    %6554 = vmatpush.bf16.msra.mxu0 %v5405
    %6555 = vmatpush.bf16.msra.mxu0 %v5394
    %6556 = vmatpush.bf16.msra.mxu0 %v5383
    %6557 = vmatpush.bf16.msra.mxu0 %v5372
    %6558 = vmatpush.bf16.msra.mxu0 %v5361
    %6559 = vmatpush.bf16.msra.mxu0 %v5350
    %6560 = vmatpush.bf16.msra.mxu0 %v5339
    %6561 = vmatmul.bf16.gmra.mxu0 %v839
    %v6562 = vpop.f32.mrf.mxu0
    %v6563 = vadd.f32 %v6550, %v6562
    %v6564 = vpop.f32.mrf.mxu0
    %6565 = vdwg.mxu0
    %6566 = vmatpush.bf16.msra.mxu0 %v4625
    %6567 = vmatpush.bf16.msra.mxu0 %v4614
    %6568 = vmatpush.bf16.msra.mxu0 %v4603
    %6569 = vmatpush.bf16.msra.mxu0 %v4592
    %6570 = vmatpush.bf16.msra.mxu0 %v4581
    %6571 = vmatpush.bf16.msra.mxu0 %v4570
    %6572 = vmatpush.bf16.msra.mxu0 %v4559
    %6573 = vmatpush.bf16.msra.mxu0 %v4548
    %6574 = vmatmul.bf16.gmra.mxu0 %v830
    %v6575 = vpop.f32.mrf.mxu0
    %v6576 = vadd.f32 %v1806, %v6575
    %v6577 = vpop.f32.mrf.mxu0
    %6578 = vdwg.mxu0
    %6579 = vmatpush.bf16.msra.mxu0 %v4713
    %6580 = vmatpush.bf16.msra.mxu0 %v4702
    %6581 = vmatpush.bf16.msra.mxu0 %v4691
    %6582 = vmatpush.bf16.msra.mxu0 %v4680
    %6583 = vmatpush.bf16.msra.mxu0 %v4669
    %6584 = vmatpush.bf16.msra.mxu0 %v4658
    %6585 = vmatpush.bf16.msra.mxu0 %v4647
    %6586 = vmatpush.bf16.msra.mxu0 %v4636
    %6587 = vmatmul.bf16.gmra.mxu0 %v831
    %v6588 = vpop.f32.mrf.mxu0
    %v6589 = vadd.f32 %v6576, %v6588
    %v6590 = vpop.f32.mrf.mxu0
    %6591 = vdwg.mxu0
    %6592 = vmatpush.bf16.msra.mxu0 %v4801
    %6593 = vmatpush.bf16.msra.mxu0 %v4790
    %6594 = vmatpush.bf16.msra.mxu0 %v4779
    %6595 = vmatpush.bf16.msra.mxu0 %v4768
    %6596 = vmatpush.bf16.msra.mxu0 %v4757
    %6597 = vmatpush.bf16.msra.mxu0 %v4746
    %6598 = vmatpush.bf16.msra.mxu0 %v4735
    %6599 = vmatpush.bf16.msra.mxu0 %v4724
    %6600 = vmatmul.bf16.gmra.mxu0 %v832
    %v6601 = vpop.f32.mrf.mxu0
    %v6602 = vadd.f32 %v6589, %v6601
    %v6603 = vpop.f32.mrf.mxu0
    %6604 = vdwg.mxu0
    %6605 = vmatpush.bf16.msra.mxu0 %v4889
    %6606 = vmatpush.bf16.msra.mxu0 %v4878
    %6607 = vmatpush.bf16.msra.mxu0 %v4867
    %6608 = vmatpush.bf16.msra.mxu0 %v4856
    %6609 = vmatpush.bf16.msra.mxu0 %v4845
    %6610 = vmatpush.bf16.msra.mxu0 %v4834
    %6611 = vmatpush.bf16.msra.mxu0 %v4823
    %6612 = vmatpush.bf16.msra.mxu0 %v4812
    %6613 = vmatmul.bf16.gmra.mxu0 %v833
    %v6614 = vpop.f32.mrf.mxu0
    %v6615 = vadd.f32 %v6602, %v6614
    %v6616 = vpop.f32.mrf.mxu0
    %6617 = vdwg.mxu0
    %6618 = vmatpush.bf16.msra.mxu0 %v4977
    %6619 = vmatpush.bf16.msra.mxu0 %v4966
    %6620 = vmatpush.bf16.msra.mxu0 %v4955
    %6621 = vmatpush.bf16.msra.mxu0 %v4944
    %6622 = vmatpush.bf16.msra.mxu0 %v4933
    %6623 = vmatpush.bf16.msra.mxu0 %v4922
    %6624 = vmatpush.bf16.msra.mxu0 %v4911
    %6625 = vmatpush.bf16.msra.mxu0 %v4900
    %6626 = vmatmul.bf16.gmra.mxu0 %v834
    %v6627 = vpop.f32.mrf.mxu0
    %v6628 = vadd.f32 %v6615, %v6627
    %v6629 = vpop.f32.mrf.mxu0
    %6630 = vdwg.mxu0
    %6631 = vmatpush.bf16.msra.mxu0 %v5065
    %6632 = vmatpush.bf16.msra.mxu0 %v5054
    %6633 = vmatpush.bf16.msra.mxu0 %v5043
    %6634 = vmatpush.bf16.msra.mxu0 %v5032
    %6635 = vmatpush.bf16.msra.mxu0 %v5021
    %6636 = vmatpush.bf16.msra.mxu0 %v5010
    %6637 = vmatpush.bf16.msra.mxu0 %v4999
    %6638 = vmatpush.bf16.msra.mxu0 %v4988
    %6639 = vmatmul.bf16.gmra.mxu0 %v835
    %v6640 = vpop.f32.mrf.mxu0
    %v6641 = vadd.f32 %v6628, %v6640
    %v6642 = vpop.f32.mrf.mxu0
    %6643 = vdwg.mxu0
    %6644 = vmatpush.bf16.msra.mxu0 %v5153
    %6645 = vmatpush.bf16.msra.mxu0 %v5142
    %6646 = vmatpush.bf16.msra.mxu0 %v5131
    %6647 = vmatpush.bf16.msra.mxu0 %v5120
    %6648 = vmatpush.bf16.msra.mxu0 %v5109
    %6649 = vmatpush.bf16.msra.mxu0 %v5098
    %6650 = vmatpush.bf16.msra.mxu0 %v5087
    %6651 = vmatpush.bf16.msra.mxu0 %v5076
    %6652 = vmatmul.bf16.gmra.mxu0 %v836
    %v6653 = vpop.f32.mrf.mxu0
    %v6654 = vadd.f32 %v6641, %v6653
    %v6655 = vpop.f32.mrf.mxu0
    %6656 = vdwg.mxu0
    %6657 = vmatpush.bf16.msra.mxu0 %v5241
    %6658 = vmatpush.bf16.msra.mxu0 %v5230
    %6659 = vmatpush.bf16.msra.mxu0 %v5219
    %6660 = vmatpush.bf16.msra.mxu0 %v5208
    %6661 = vmatpush.bf16.msra.mxu0 %v5197
    %6662 = vmatpush.bf16.msra.mxu0 %v5186
    %6663 = vmatpush.bf16.msra.mxu0 %v5175
    %6664 = vmatpush.bf16.msra.mxu0 %v5164
    %6665 = vmatmul.bf16.gmra.mxu0 %v837
    %v6666 = vpop.f32.mrf.mxu0
    %v6667 = vadd.f32 %v6654, %v6666
    %v6668 = vpop.f32.mrf.mxu0
    %6669 = vdwg.mxu0
    %6670 = vmatpush.bf16.msra.mxu0 %v5329
    %6671 = vmatpush.bf16.msra.mxu0 %v5318
    %6672 = vmatpush.bf16.msra.mxu0 %v5307
    %6673 = vmatpush.bf16.msra.mxu0 %v5296
    %6674 = vmatpush.bf16.msra.mxu0 %v5285
    %6675 = vmatpush.bf16.msra.mxu0 %v5274
    %6676 = vmatpush.bf16.msra.mxu0 %v5263
    %6677 = vmatpush.bf16.msra.mxu0 %v5252
    %6678 = vmatmul.bf16.gmra.mxu0 %v838
    %v6679 = vpop.f32.mrf.mxu0
    %v6680 = vadd.f32 %v6667, %v6679
    %v6681 = vpop.f32.mrf.mxu0
    %6682 = vdwg.mxu0
    %6683 = vmatpush.bf16.msra.mxu0 %v5417
    %6684 = vmatpush.bf16.msra.mxu0 %v5406
    %6685 = vmatpush.bf16.msra.mxu0 %v5395
    %6686 = vmatpush.bf16.msra.mxu0 %v5384
    %6687 = vmatpush.bf16.msra.mxu0 %v5373
    %6688 = vmatpush.bf16.msra.mxu0 %v5362
    %6689 = vmatpush.bf16.msra.mxu0 %v5351
    %6690 = vmatpush.bf16.msra.mxu0 %v5340
    %6691 = vmatmul.bf16.gmra.mxu0 %v839
    %v6692 = vpop.f32.mrf.mxu0
    %v6693 = vadd.f32 %v6680, %v6692
    %v6694 = vpop.f32.mrf.mxu0
    %6695 = vdwg.mxu0
    %6696 = vmatpush.bf16.msra.mxu0 %v4626
    %6697 = vmatpush.bf16.msra.mxu0 %v4615
    %6698 = vmatpush.bf16.msra.mxu0 %v4604
    %6699 = vmatpush.bf16.msra.mxu0 %v4593
    %6700 = vmatpush.bf16.msra.mxu0 %v4582
    %6701 = vmatpush.bf16.msra.mxu0 %v4571
    %6702 = vmatpush.bf16.msra.mxu0 %v4560
    %6703 = vmatpush.bf16.msra.mxu0 %v4549
    %6704 = vmatmul.bf16.gmra.mxu0 %v830
    %v6705 = vpop.f32.mrf.mxu0
    %v6706 = vadd.f32 %v1807, %v6705
    %v6707 = vpop.f32.mrf.mxu0
    %6708 = vdwg.mxu0
    %6709 = vmatpush.bf16.msra.mxu0 %v4714
    %6710 = vmatpush.bf16.msra.mxu0 %v4703
    %6711 = vmatpush.bf16.msra.mxu0 %v4692
    %6712 = vmatpush.bf16.msra.mxu0 %v4681
    %6713 = vmatpush.bf16.msra.mxu0 %v4670
    %6714 = vmatpush.bf16.msra.mxu0 %v4659
    %6715 = vmatpush.bf16.msra.mxu0 %v4648
    %6716 = vmatpush.bf16.msra.mxu0 %v4637
    %6717 = vmatmul.bf16.gmra.mxu0 %v831
    %v6718 = vpop.f32.mrf.mxu0
    %v6719 = vadd.f32 %v6706, %v6718
    %v6720 = vpop.f32.mrf.mxu0
    %6721 = vdwg.mxu0
    %6722 = vmatpush.bf16.msra.mxu0 %v4802
    %6723 = vmatpush.bf16.msra.mxu0 %v4791
    %6724 = vmatpush.bf16.msra.mxu0 %v4780
    %6725 = vmatpush.bf16.msra.mxu0 %v4769
    %6726 = vmatpush.bf16.msra.mxu0 %v4758
    %6727 = vmatpush.bf16.msra.mxu0 %v4747
    %6728 = vmatpush.bf16.msra.mxu0 %v4736
    %6729 = vmatpush.bf16.msra.mxu0 %v4725
    %6730 = vmatmul.bf16.gmra.mxu0 %v832
    %v6731 = vpop.f32.mrf.mxu0
    %v6732 = vadd.f32 %v6719, %v6731
    %v6733 = vpop.f32.mrf.mxu0
    %6734 = vdwg.mxu0
    %6735 = vmatpush.bf16.msra.mxu0 %v4890
    %6736 = vmatpush.bf16.msra.mxu0 %v4879
    %6737 = vmatpush.bf16.msra.mxu0 %v4868
    %6738 = vmatpush.bf16.msra.mxu0 %v4857
    %6739 = vmatpush.bf16.msra.mxu0 %v4846
    %6740 = vmatpush.bf16.msra.mxu0 %v4835
    %6741 = vmatpush.bf16.msra.mxu0 %v4824
    %6742 = vmatpush.bf16.msra.mxu0 %v4813
    %6743 = vmatmul.bf16.gmra.mxu0 %v833
    %v6744 = vpop.f32.mrf.mxu0
    %v6745 = vadd.f32 %v6732, %v6744
    %v6746 = vpop.f32.mrf.mxu0
    %6747 = vdwg.mxu0
    %6748 = vmatpush.bf16.msra.mxu0 %v4978
    %6749 = vmatpush.bf16.msra.mxu0 %v4967
    %6750 = vmatpush.bf16.msra.mxu0 %v4956
    %6751 = vmatpush.bf16.msra.mxu0 %v4945
    %6752 = vmatpush.bf16.msra.mxu0 %v4934
    %6753 = vmatpush.bf16.msra.mxu0 %v4923
    %6754 = vmatpush.bf16.msra.mxu0 %v4912
    %6755 = vmatpush.bf16.msra.mxu0 %v4901
    %6756 = vmatmul.bf16.gmra.mxu0 %v834
    %v6757 = vpop.f32.mrf.mxu0
    %v6758 = vadd.f32 %v6745, %v6757
    %v6759 = vpop.f32.mrf.mxu0
    %6760 = vdwg.mxu0
    %6761 = vmatpush.bf16.msra.mxu0 %v5066
    %6762 = vmatpush.bf16.msra.mxu0 %v5055
    %6763 = vmatpush.bf16.msra.mxu0 %v5044
    %6764 = vmatpush.bf16.msra.mxu0 %v5033
    %6765 = vmatpush.bf16.msra.mxu0 %v5022
    %6766 = vmatpush.bf16.msra.mxu0 %v5011
    %6767 = vmatpush.bf16.msra.mxu0 %v5000
    %6768 = vmatpush.bf16.msra.mxu0 %v4989
    %6769 = vmatmul.bf16.gmra.mxu0 %v835
    %v6770 = vpop.f32.mrf.mxu0
    %v6771 = vadd.f32 %v6758, %v6770
    %v6772 = vpop.f32.mrf.mxu0
    %6773 = vdwg.mxu0
    %6774 = vmatpush.bf16.msra.mxu0 %v5154
    %6775 = vmatpush.bf16.msra.mxu0 %v5143
    %6776 = vmatpush.bf16.msra.mxu0 %v5132
    %6777 = vmatpush.bf16.msra.mxu0 %v5121
    %6778 = vmatpush.bf16.msra.mxu0 %v5110
    %6779 = vmatpush.bf16.msra.mxu0 %v5099
    %6780 = vmatpush.bf16.msra.mxu0 %v5088
    %6781 = vmatpush.bf16.msra.mxu0 %v5077
    %6782 = vmatmul.bf16.gmra.mxu0 %v836
    %v6783 = vpop.f32.mrf.mxu0
    %v6784 = vadd.f32 %v6771, %v6783
    %v6785 = vpop.f32.mrf.mxu0
    %6786 = vdwg.mxu0
    %6787 = vmatpush.bf16.msra.mxu0 %v5242
    %6788 = vmatpush.bf16.msra.mxu0 %v5231
    %6789 = vmatpush.bf16.msra.mxu0 %v5220
    %6790 = vmatpush.bf16.msra.mxu0 %v5209
    %6791 = vmatpush.bf16.msra.mxu0 %v5198
    %6792 = vmatpush.bf16.msra.mxu0 %v5187
    %6793 = vmatpush.bf16.msra.mxu0 %v5176
    %6794 = vmatpush.bf16.msra.mxu0 %v5165
    %6795 = vmatmul.bf16.gmra.mxu0 %v837
    %v6796 = vpop.f32.mrf.mxu0
    %v6797 = vadd.f32 %v6784, %v6796
    %v6798 = vpop.f32.mrf.mxu0
    %6799 = vdwg.mxu0
    %6800 = vmatpush.bf16.msra.mxu0 %v5330
    %6801 = vmatpush.bf16.msra.mxu0 %v5319
    %6802 = vmatpush.bf16.msra.mxu0 %v5308
    %6803 = vmatpush.bf16.msra.mxu0 %v5297
    %6804 = vmatpush.bf16.msra.mxu0 %v5286
    %6805 = vmatpush.bf16.msra.mxu0 %v5275
    %6806 = vmatpush.bf16.msra.mxu0 %v5264
    %6807 = vmatpush.bf16.msra.mxu0 %v5253
    %6808 = vmatmul.bf16.gmra.mxu0 %v838
    %v6809 = vpop.f32.mrf.mxu0
    %v6810 = vadd.f32 %v6797, %v6809
    %v6811 = vpop.f32.mrf.mxu0
    %6812 = vdwg.mxu0
    %6813 = vmatpush.bf16.msra.mxu0 %v5418
    %6814 = vmatpush.bf16.msra.mxu0 %v5407
    %6815 = vmatpush.bf16.msra.mxu0 %v5396
    %6816 = vmatpush.bf16.msra.mxu0 %v5385
    %6817 = vmatpush.bf16.msra.mxu0 %v5374
    %6818 = vmatpush.bf16.msra.mxu0 %v5363
    %6819 = vmatpush.bf16.msra.mxu0 %v5352
    %6820 = vmatpush.bf16.msra.mxu0 %v5341
    %6821 = vmatmul.bf16.gmra.mxu0 %v839
    %v6822 = vpop.f32.mrf.mxu0
    %v6823 = vadd.f32 %v6810, %v6822
    %v6824 = vpop.f32.mrf.mxu0
    %6825 = vdwg.mxu0
    %6826 = vmatpush.bf16.msra.mxu0 %v4627
    %6827 = vmatpush.bf16.msra.mxu0 %v4616
    %6828 = vmatpush.bf16.msra.mxu0 %v4605
    %6829 = vmatpush.bf16.msra.mxu0 %v4594
    %6830 = vmatpush.bf16.msra.mxu0 %v4583
    %6831 = vmatpush.bf16.msra.mxu0 %v4572
    %6832 = vmatpush.bf16.msra.mxu0 %v4561
    %6833 = vmatpush.bf16.msra.mxu0 %v4550
    %6834 = vmatmul.bf16.gmra.mxu0 %v830
    %v6835 = vpop.f32.mrf.mxu0
    %v6836 = vadd.f32 %v1808, %v6835
    %v6837 = vpop.f32.mrf.mxu0
    %6838 = vdwg.mxu0
    %6839 = vmatpush.bf16.msra.mxu0 %v4715
    %6840 = vmatpush.bf16.msra.mxu0 %v4704
    %6841 = vmatpush.bf16.msra.mxu0 %v4693
    %6842 = vmatpush.bf16.msra.mxu0 %v4682
    %6843 = vmatpush.bf16.msra.mxu0 %v4671
    %6844 = vmatpush.bf16.msra.mxu0 %v4660
    %6845 = vmatpush.bf16.msra.mxu0 %v4649
    %6846 = vmatpush.bf16.msra.mxu0 %v4638
    %6847 = vmatmul.bf16.gmra.mxu0 %v831
    %v6848 = vpop.f32.mrf.mxu0
    %v6849 = vadd.f32 %v6836, %v6848
    %v6850 = vpop.f32.mrf.mxu0
    %6851 = vdwg.mxu0
    %6852 = vmatpush.bf16.msra.mxu0 %v4803
    %6853 = vmatpush.bf16.msra.mxu0 %v4792
    %6854 = vmatpush.bf16.msra.mxu0 %v4781
    %6855 = vmatpush.bf16.msra.mxu0 %v4770
    %6856 = vmatpush.bf16.msra.mxu0 %v4759
    %6857 = vmatpush.bf16.msra.mxu0 %v4748
    %6858 = vmatpush.bf16.msra.mxu0 %v4737
    %6859 = vmatpush.bf16.msra.mxu0 %v4726
    %6860 = vmatmul.bf16.gmra.mxu0 %v832
    %v6861 = vpop.f32.mrf.mxu0
    %v6862 = vadd.f32 %v6849, %v6861
    %v6863 = vpop.f32.mrf.mxu0
    %6864 = vdwg.mxu0
    %6865 = vmatpush.bf16.msra.mxu0 %v4891
    %6866 = vmatpush.bf16.msra.mxu0 %v4880
    %6867 = vmatpush.bf16.msra.mxu0 %v4869
    %6868 = vmatpush.bf16.msra.mxu0 %v4858
    %6869 = vmatpush.bf16.msra.mxu0 %v4847
    %6870 = vmatpush.bf16.msra.mxu0 %v4836
    %6871 = vmatpush.bf16.msra.mxu0 %v4825
    %6872 = vmatpush.bf16.msra.mxu0 %v4814
    %6873 = vmatmul.bf16.gmra.mxu0 %v833
    %v6874 = vpop.f32.mrf.mxu0
    %v6875 = vadd.f32 %v6862, %v6874
    %v6876 = vpop.f32.mrf.mxu0
    %6877 = vdwg.mxu0
    %6878 = vmatpush.bf16.msra.mxu0 %v4979
    %6879 = vmatpush.bf16.msra.mxu0 %v4968
    %6880 = vmatpush.bf16.msra.mxu0 %v4957
    %6881 = vmatpush.bf16.msra.mxu0 %v4946
    %6882 = vmatpush.bf16.msra.mxu0 %v4935
    %6883 = vmatpush.bf16.msra.mxu0 %v4924
    %6884 = vmatpush.bf16.msra.mxu0 %v4913
    %6885 = vmatpush.bf16.msra.mxu0 %v4902
    %6886 = vmatmul.bf16.gmra.mxu0 %v834
    %v6887 = vpop.f32.mrf.mxu0
    %v6888 = vadd.f32 %v6875, %v6887
    %v6889 = vpop.f32.mrf.mxu0
    %6890 = vdwg.mxu0
    %6891 = vmatpush.bf16.msra.mxu0 %v5067
    %6892 = vmatpush.bf16.msra.mxu0 %v5056
    %6893 = vmatpush.bf16.msra.mxu0 %v5045
    %6894 = vmatpush.bf16.msra.mxu0 %v5034
    %6895 = vmatpush.bf16.msra.mxu0 %v5023
    %6896 = vmatpush.bf16.msra.mxu0 %v5012
    %6897 = vmatpush.bf16.msra.mxu0 %v5001
    %6898 = vmatpush.bf16.msra.mxu0 %v4990
    %6899 = vmatmul.bf16.gmra.mxu0 %v835
    %v6900 = vpop.f32.mrf.mxu0
    %v6901 = vadd.f32 %v6888, %v6900
    %v6902 = vpop.f32.mrf.mxu0
    %6903 = vdwg.mxu0
    %6904 = vmatpush.bf16.msra.mxu0 %v5155
    %6905 = vmatpush.bf16.msra.mxu0 %v5144
    %6906 = vmatpush.bf16.msra.mxu0 %v5133
    %6907 = vmatpush.bf16.msra.mxu0 %v5122
    %6908 = vmatpush.bf16.msra.mxu0 %v5111
    %6909 = vmatpush.bf16.msra.mxu0 %v5100
    %6910 = vmatpush.bf16.msra.mxu0 %v5089
    %6911 = vmatpush.bf16.msra.mxu0 %v5078
    %6912 = vmatmul.bf16.gmra.mxu0 %v836
    %v6913 = vpop.f32.mrf.mxu0
    %v6914 = vadd.f32 %v6901, %v6913
    %v6915 = vpop.f32.mrf.mxu0
    %6916 = vdwg.mxu0
    %6917 = vmatpush.bf16.msra.mxu0 %v5243
    %6918 = vmatpush.bf16.msra.mxu0 %v5232
    %6919 = vmatpush.bf16.msra.mxu0 %v5221
    %6920 = vmatpush.bf16.msra.mxu0 %v5210
    %6921 = vmatpush.bf16.msra.mxu0 %v5199
    %6922 = vmatpush.bf16.msra.mxu0 %v5188
    %6923 = vmatpush.bf16.msra.mxu0 %v5177
    %6924 = vmatpush.bf16.msra.mxu0 %v5166
    %6925 = vmatmul.bf16.gmra.mxu0 %v837
    %v6926 = vpop.f32.mrf.mxu0
    %v6927 = vadd.f32 %v6914, %v6926
    %v6928 = vpop.f32.mrf.mxu0
    %6929 = vdwg.mxu0
    %6930 = vmatpush.bf16.msra.mxu0 %v5331
    %6931 = vmatpush.bf16.msra.mxu0 %v5320
    %6932 = vmatpush.bf16.msra.mxu0 %v5309
    %6933 = vmatpush.bf16.msra.mxu0 %v5298
    %6934 = vmatpush.bf16.msra.mxu0 %v5287
    %6935 = vmatpush.bf16.msra.mxu0 %v5276
    %6936 = vmatpush.bf16.msra.mxu0 %v5265
    %6937 = vmatpush.bf16.msra.mxu0 %v5254
    %6938 = vmatmul.bf16.gmra.mxu0 %v838
    %v6939 = vpop.f32.mrf.mxu0
    %v6940 = vadd.f32 %v6927, %v6939
    %v6941 = vpop.f32.mrf.mxu0
    %6942 = vdwg.mxu0
    %6943 = vmatpush.bf16.msra.mxu0 %v5419
    %6944 = vmatpush.bf16.msra.mxu0 %v5408
    %6945 = vmatpush.bf16.msra.mxu0 %v5397
    %6946 = vmatpush.bf16.msra.mxu0 %v5386
    %6947 = vmatpush.bf16.msra.mxu0 %v5375
    %6948 = vmatpush.bf16.msra.mxu0 %v5364
    %6949 = vmatpush.bf16.msra.mxu0 %v5353
    %6950 = vmatpush.bf16.msra.mxu0 %v5342
    %6951 = vmatmul.bf16.gmra.mxu0 %v839
    %v6952 = vpop.f32.mrf.mxu0
    %v6953 = vadd.f32 %v6940, %v6952
    %v6954 = vpop.f32.mrf.mxu0
    %6955 = vdwg.mxu0
    %6956 = vmatpush.bf16.msra.mxu0 %v4628
    %6957 = vmatpush.bf16.msra.mxu0 %v4617
    %6958 = vmatpush.bf16.msra.mxu0 %v4606
    %6959 = vmatpush.bf16.msra.mxu0 %v4595
    %6960 = vmatpush.bf16.msra.mxu0 %v4584
    %6961 = vmatpush.bf16.msra.mxu0 %v4573
    %6962 = vmatpush.bf16.msra.mxu0 %v4562
    %6963 = vmatpush.bf16.msra.mxu0 %v4551
    %6964 = vmatmul.bf16.gmra.mxu0 %v830
    %v6965 = vpop.f32.mrf.mxu0
    %v6966 = vadd.f32 %v1809, %v6965
    %v6967 = vpop.f32.mrf.mxu0
    %6968 = vdwg.mxu0
    %6969 = vmatpush.bf16.msra.mxu0 %v4716
    %6970 = vmatpush.bf16.msra.mxu0 %v4705
    %6971 = vmatpush.bf16.msra.mxu0 %v4694
    %6972 = vmatpush.bf16.msra.mxu0 %v4683
    %6973 = vmatpush.bf16.msra.mxu0 %v4672
    %6974 = vmatpush.bf16.msra.mxu0 %v4661
    %6975 = vmatpush.bf16.msra.mxu0 %v4650
    %6976 = vmatpush.bf16.msra.mxu0 %v4639
    %6977 = vmatmul.bf16.gmra.mxu0 %v831
    %v6978 = vpop.f32.mrf.mxu0
    %v6979 = vadd.f32 %v6966, %v6978
    %v6980 = vpop.f32.mrf.mxu0
    %6981 = vdwg.mxu0
    %6982 = vmatpush.bf16.msra.mxu0 %v4804
    %6983 = vmatpush.bf16.msra.mxu0 %v4793
    %6984 = vmatpush.bf16.msra.mxu0 %v4782
    %6985 = vmatpush.bf16.msra.mxu0 %v4771
    %6986 = vmatpush.bf16.msra.mxu0 %v4760
    %6987 = vmatpush.bf16.msra.mxu0 %v4749
    %6988 = vmatpush.bf16.msra.mxu0 %v4738
    %6989 = vmatpush.bf16.msra.mxu0 %v4727
    %6990 = vmatmul.bf16.gmra.mxu0 %v832
    %v6991 = vpop.f32.mrf.mxu0
    %v6992 = vadd.f32 %v6979, %v6991
    %v6993 = vpop.f32.mrf.mxu0
    %6994 = vdwg.mxu0
    %6995 = vmatpush.bf16.msra.mxu0 %v4892
    %6996 = vmatpush.bf16.msra.mxu0 %v4881
    %6997 = vmatpush.bf16.msra.mxu0 %v4870
    %6998 = vmatpush.bf16.msra.mxu0 %v4859
    %6999 = vmatpush.bf16.msra.mxu0 %v4848
    %7000 = vmatpush.bf16.msra.mxu0 %v4837
    %7001 = vmatpush.bf16.msra.mxu0 %v4826
    %7002 = vmatpush.bf16.msra.mxu0 %v4815
    %7003 = vmatmul.bf16.gmra.mxu0 %v833
    %v7004 = vpop.f32.mrf.mxu0
    %v7005 = vadd.f32 %v6992, %v7004
    %v7006 = vpop.f32.mrf.mxu0
    %7007 = vdwg.mxu0
    %7008 = vmatpush.bf16.msra.mxu0 %v4980
    %7009 = vmatpush.bf16.msra.mxu0 %v4969
    %7010 = vmatpush.bf16.msra.mxu0 %v4958
    %7011 = vmatpush.bf16.msra.mxu0 %v4947
    %7012 = vmatpush.bf16.msra.mxu0 %v4936
    %7013 = vmatpush.bf16.msra.mxu0 %v4925
    %7014 = vmatpush.bf16.msra.mxu0 %v4914
    %7015 = vmatpush.bf16.msra.mxu0 %v4903
    %7016 = vmatmul.bf16.gmra.mxu0 %v834
    %v7017 = vpop.f32.mrf.mxu0
    %v7018 = vadd.f32 %v7005, %v7017
    %v7019 = vpop.f32.mrf.mxu0
    %7020 = vdwg.mxu0
    %7021 = vmatpush.bf16.msra.mxu0 %v5068
    %7022 = vmatpush.bf16.msra.mxu0 %v5057
    %7023 = vmatpush.bf16.msra.mxu0 %v5046
    %7024 = vmatpush.bf16.msra.mxu0 %v5035
    %7025 = vmatpush.bf16.msra.mxu0 %v5024
    %7026 = vmatpush.bf16.msra.mxu0 %v5013
    %7027 = vmatpush.bf16.msra.mxu0 %v5002
    %7028 = vmatpush.bf16.msra.mxu0 %v4991
    %7029 = vmatmul.bf16.gmra.mxu0 %v835
    %v7030 = vpop.f32.mrf.mxu0
    %v7031 = vadd.f32 %v7018, %v7030
    %v7032 = vpop.f32.mrf.mxu0
    %7033 = vdwg.mxu0
    %7034 = vmatpush.bf16.msra.mxu0 %v5156
    %7035 = vmatpush.bf16.msra.mxu0 %v5145
    %7036 = vmatpush.bf16.msra.mxu0 %v5134
    %7037 = vmatpush.bf16.msra.mxu0 %v5123
    %7038 = vmatpush.bf16.msra.mxu0 %v5112
    %7039 = vmatpush.bf16.msra.mxu0 %v5101
    %7040 = vmatpush.bf16.msra.mxu0 %v5090
    %7041 = vmatpush.bf16.msra.mxu0 %v5079
    %7042 = vmatmul.bf16.gmra.mxu0 %v836
    %v7043 = vpop.f32.mrf.mxu0
    %v7044 = vadd.f32 %v7031, %v7043
    %v7045 = vpop.f32.mrf.mxu0
    %7046 = vdwg.mxu0
    %7047 = vmatpush.bf16.msra.mxu0 %v5244
    %7048 = vmatpush.bf16.msra.mxu0 %v5233
    %7049 = vmatpush.bf16.msra.mxu0 %v5222
    %7050 = vmatpush.bf16.msra.mxu0 %v5211
    %7051 = vmatpush.bf16.msra.mxu0 %v5200
    %7052 = vmatpush.bf16.msra.mxu0 %v5189
    %7053 = vmatpush.bf16.msra.mxu0 %v5178
    %7054 = vmatpush.bf16.msra.mxu0 %v5167
    %7055 = vmatmul.bf16.gmra.mxu0 %v837
    %v7056 = vpop.f32.mrf.mxu0
    %v7057 = vadd.f32 %v7044, %v7056
    %v7058 = vpop.f32.mrf.mxu0
    %7059 = vdwg.mxu0
    %7060 = vmatpush.bf16.msra.mxu0 %v5332
    %7061 = vmatpush.bf16.msra.mxu0 %v5321
    %7062 = vmatpush.bf16.msra.mxu0 %v5310
    %7063 = vmatpush.bf16.msra.mxu0 %v5299
    %7064 = vmatpush.bf16.msra.mxu0 %v5288
    %7065 = vmatpush.bf16.msra.mxu0 %v5277
    %7066 = vmatpush.bf16.msra.mxu0 %v5266
    %7067 = vmatpush.bf16.msra.mxu0 %v5255
    %7068 = vmatmul.bf16.gmra.mxu0 %v838
    %v7069 = vpop.f32.mrf.mxu0
    %v7070 = vadd.f32 %v7057, %v7069
    %v7071 = vpop.f32.mrf.mxu0
    %7072 = vdwg.mxu0
    %7073 = vmatpush.bf16.msra.mxu0 %v5420
    %7074 = vmatpush.bf16.msra.mxu0 %v5409
    %7075 = vmatpush.bf16.msra.mxu0 %v5398
    %7076 = vmatpush.bf16.msra.mxu0 %v5387
    %7077 = vmatpush.bf16.msra.mxu0 %v5376
    %7078 = vmatpush.bf16.msra.mxu0 %v5365
    %7079 = vmatpush.bf16.msra.mxu0 %v5354
    %7080 = vmatpush.bf16.msra.mxu0 %v5343
    %7081 = vmatmul.bf16.gmra.mxu0 %v839
    %v7082 = vpop.f32.mrf.mxu0
    %v7083 = vadd.f32 %v7070, %v7082
    %v7084 = vpop.f32.mrf.mxu0
    %7085 = vdwg.mxu0
    %7086 = vmatpush.bf16.msra.mxu0 %v4629
    %7087 = vmatpush.bf16.msra.mxu0 %v4618
    %7088 = vmatpush.bf16.msra.mxu0 %v4607
    %7089 = vmatpush.bf16.msra.mxu0 %v4596
    %7090 = vmatpush.bf16.msra.mxu0 %v4585
    %7091 = vmatpush.bf16.msra.mxu0 %v4574
    %7092 = vmatpush.bf16.msra.mxu0 %v4563
    %7093 = vmatpush.bf16.msra.mxu0 %v4552
    %7094 = vmatmul.bf16.gmra.mxu0 %v830
    %v7095 = vpop.f32.mrf.mxu0
    %v7096 = vadd.f32 %v1810, %v7095
    %v7097 = vpop.f32.mrf.mxu0
    %7098 = vdwg.mxu0
    %7099 = vmatpush.bf16.msra.mxu0 %v4717
    %7100 = vmatpush.bf16.msra.mxu0 %v4706
    %7101 = vmatpush.bf16.msra.mxu0 %v4695
    %7102 = vmatpush.bf16.msra.mxu0 %v4684
    %7103 = vmatpush.bf16.msra.mxu0 %v4673
    %7104 = vmatpush.bf16.msra.mxu0 %v4662
    %7105 = vmatpush.bf16.msra.mxu0 %v4651
    %7106 = vmatpush.bf16.msra.mxu0 %v4640
    %7107 = vmatmul.bf16.gmra.mxu0 %v831
    %v7108 = vpop.f32.mrf.mxu0
    %v7109 = vadd.f32 %v7096, %v7108
    %v7110 = vpop.f32.mrf.mxu0
    %7111 = vdwg.mxu0
    %7112 = vmatpush.bf16.msra.mxu0 %v4805
    %7113 = vmatpush.bf16.msra.mxu0 %v4794
    %7114 = vmatpush.bf16.msra.mxu0 %v4783
    %7115 = vmatpush.bf16.msra.mxu0 %v4772
    %7116 = vmatpush.bf16.msra.mxu0 %v4761
    %7117 = vmatpush.bf16.msra.mxu0 %v4750
    %7118 = vmatpush.bf16.msra.mxu0 %v4739
    %7119 = vmatpush.bf16.msra.mxu0 %v4728
    %7120 = vmatmul.bf16.gmra.mxu0 %v832
    %v7121 = vpop.f32.mrf.mxu0
    %v7122 = vadd.f32 %v7109, %v7121
    %v7123 = vpop.f32.mrf.mxu0
    %7124 = vdwg.mxu0
    %7125 = vmatpush.bf16.msra.mxu0 %v4893
    %7126 = vmatpush.bf16.msra.mxu0 %v4882
    %7127 = vmatpush.bf16.msra.mxu0 %v4871
    %7128 = vmatpush.bf16.msra.mxu0 %v4860
    %7129 = vmatpush.bf16.msra.mxu0 %v4849
    %7130 = vmatpush.bf16.msra.mxu0 %v4838
    %7131 = vmatpush.bf16.msra.mxu0 %v4827
    %7132 = vmatpush.bf16.msra.mxu0 %v4816
    %7133 = vmatmul.bf16.gmra.mxu0 %v833
    %v7134 = vpop.f32.mrf.mxu0
    %v7135 = vadd.f32 %v7122, %v7134
    %v7136 = vpop.f32.mrf.mxu0
    %7137 = vdwg.mxu0
    %7138 = vmatpush.bf16.msra.mxu0 %v4981
    %7139 = vmatpush.bf16.msra.mxu0 %v4970
    %7140 = vmatpush.bf16.msra.mxu0 %v4959
    %7141 = vmatpush.bf16.msra.mxu0 %v4948
    %7142 = vmatpush.bf16.msra.mxu0 %v4937
    %7143 = vmatpush.bf16.msra.mxu0 %v4926
    %7144 = vmatpush.bf16.msra.mxu0 %v4915
    %7145 = vmatpush.bf16.msra.mxu0 %v4904
    %7146 = vmatmul.bf16.gmra.mxu0 %v834
    %v7147 = vpop.f32.mrf.mxu0
    %v7148 = vadd.f32 %v7135, %v7147
    %v7149 = vpop.f32.mrf.mxu0
    %7150 = vdwg.mxu0
    %7151 = vmatpush.bf16.msra.mxu0 %v5069
    %7152 = vmatpush.bf16.msra.mxu0 %v5058
    %7153 = vmatpush.bf16.msra.mxu0 %v5047
    %7154 = vmatpush.bf16.msra.mxu0 %v5036
    %7155 = vmatpush.bf16.msra.mxu0 %v5025
    %7156 = vmatpush.bf16.msra.mxu0 %v5014
    %7157 = vmatpush.bf16.msra.mxu0 %v5003
    %7158 = vmatpush.bf16.msra.mxu0 %v4992
    %7159 = vmatmul.bf16.gmra.mxu0 %v835
    %v7160 = vpop.f32.mrf.mxu0
    %v7161 = vadd.f32 %v7148, %v7160
    %v7162 = vpop.f32.mrf.mxu0
    %7163 = vdwg.mxu0
    %7164 = vmatpush.bf16.msra.mxu0 %v5157
    %7165 = vmatpush.bf16.msra.mxu0 %v5146
    %7166 = vmatpush.bf16.msra.mxu0 %v5135
    %7167 = vmatpush.bf16.msra.mxu0 %v5124
    %7168 = vmatpush.bf16.msra.mxu0 %v5113
    %7169 = vmatpush.bf16.msra.mxu0 %v5102
    %7170 = vmatpush.bf16.msra.mxu0 %v5091
    %7171 = vmatpush.bf16.msra.mxu0 %v5080
    %7172 = vmatmul.bf16.gmra.mxu0 %v836
    %v7173 = vpop.f32.mrf.mxu0
    %v7174 = vadd.f32 %v7161, %v7173
    %v7175 = vpop.f32.mrf.mxu0
    %7176 = vdwg.mxu0
    %7177 = vmatpush.bf16.msra.mxu0 %v5245
    %7178 = vmatpush.bf16.msra.mxu0 %v5234
    %7179 = vmatpush.bf16.msra.mxu0 %v5223
    %7180 = vmatpush.bf16.msra.mxu0 %v5212
    %7181 = vmatpush.bf16.msra.mxu0 %v5201
    %7182 = vmatpush.bf16.msra.mxu0 %v5190
    %7183 = vmatpush.bf16.msra.mxu0 %v5179
    %7184 = vmatpush.bf16.msra.mxu0 %v5168
    %7185 = vmatmul.bf16.gmra.mxu0 %v837
    %v7186 = vpop.f32.mrf.mxu0
    %v7187 = vadd.f32 %v7174, %v7186
    %v7188 = vpop.f32.mrf.mxu0
    %7189 = vdwg.mxu0
    %7190 = vmatpush.bf16.msra.mxu0 %v5333
    %7191 = vmatpush.bf16.msra.mxu0 %v5322
    %7192 = vmatpush.bf16.msra.mxu0 %v5311
    %7193 = vmatpush.bf16.msra.mxu0 %v5300
    %7194 = vmatpush.bf16.msra.mxu0 %v5289
    %7195 = vmatpush.bf16.msra.mxu0 %v5278
    %7196 = vmatpush.bf16.msra.mxu0 %v5267
    %7197 = vmatpush.bf16.msra.mxu0 %v5256
    %7198 = vmatmul.bf16.gmra.mxu0 %v838
    %v7199 = vpop.f32.mrf.mxu0
    %v7200 = vadd.f32 %v7187, %v7199
    %v7201 = vpop.f32.mrf.mxu0
    %7202 = vdwg.mxu0
    %7203 = vmatpush.bf16.msra.mxu0 %v5421
    %7204 = vmatpush.bf16.msra.mxu0 %v5410
    %7205 = vmatpush.bf16.msra.mxu0 %v5399
    %7206 = vmatpush.bf16.msra.mxu0 %v5388
    %7207 = vmatpush.bf16.msra.mxu0 %v5377
    %7208 = vmatpush.bf16.msra.mxu0 %v5366
    %7209 = vmatpush.bf16.msra.mxu0 %v5355
    %7210 = vmatpush.bf16.msra.mxu0 %v5344
    %7211 = vmatmul.bf16.gmra.mxu0 %v839
    %v7212 = vpop.f32.mrf.mxu0
    %v7213 = vadd.f32 %v7200, %v7212
    %v7214 = vpop.f32.mrf.mxu0
    %7215 = vdwg.mxu0
    %7216 = vmatpush.bf16.msra.mxu0 %v4630
    %7217 = vmatpush.bf16.msra.mxu0 %v4619
    %7218 = vmatpush.bf16.msra.mxu0 %v4608
    %7219 = vmatpush.bf16.msra.mxu0 %v4597
    %7220 = vmatpush.bf16.msra.mxu0 %v4586
    %7221 = vmatpush.bf16.msra.mxu0 %v4575
    %7222 = vmatpush.bf16.msra.mxu0 %v4564
    %7223 = vmatpush.bf16.msra.mxu0 %v4553
    %7224 = vmatmul.bf16.gmra.mxu0 %v830
    %v7225 = vpop.f32.mrf.mxu0
    %v7226 = vadd.f32 %v1811, %v7225
    %v7227 = vpop.f32.mrf.mxu0
    %7228 = vdwg.mxu0
    %7229 = vmatpush.bf16.msra.mxu0 %v4718
    %7230 = vmatpush.bf16.msra.mxu0 %v4707
    %7231 = vmatpush.bf16.msra.mxu0 %v4696
    %7232 = vmatpush.bf16.msra.mxu0 %v4685
    %7233 = vmatpush.bf16.msra.mxu0 %v4674
    %7234 = vmatpush.bf16.msra.mxu0 %v4663
    %7235 = vmatpush.bf16.msra.mxu0 %v4652
    %7236 = vmatpush.bf16.msra.mxu0 %v4641
    %7237 = vmatmul.bf16.gmra.mxu0 %v831
    %v7238 = vpop.f32.mrf.mxu0
    %v7239 = vadd.f32 %v7226, %v7238
    %v7240 = vpop.f32.mrf.mxu0
    %7241 = vdwg.mxu0
    %7242 = vmatpush.bf16.msra.mxu0 %v4806
    %7243 = vmatpush.bf16.msra.mxu0 %v4795
    %7244 = vmatpush.bf16.msra.mxu0 %v4784
    %7245 = vmatpush.bf16.msra.mxu0 %v4773
    %7246 = vmatpush.bf16.msra.mxu0 %v4762
    %7247 = vmatpush.bf16.msra.mxu0 %v4751
    %7248 = vmatpush.bf16.msra.mxu0 %v4740
    %7249 = vmatpush.bf16.msra.mxu0 %v4729
    %7250 = vmatmul.bf16.gmra.mxu0 %v832
    %v7251 = vpop.f32.mrf.mxu0
    %v7252 = vadd.f32 %v7239, %v7251
    %v7253 = vpop.f32.mrf.mxu0
    %7254 = vdwg.mxu0
    %7255 = vmatpush.bf16.msra.mxu0 %v4894
    %7256 = vmatpush.bf16.msra.mxu0 %v4883
    %7257 = vmatpush.bf16.msra.mxu0 %v4872
    %7258 = vmatpush.bf16.msra.mxu0 %v4861
    %7259 = vmatpush.bf16.msra.mxu0 %v4850
    %7260 = vmatpush.bf16.msra.mxu0 %v4839
    %7261 = vmatpush.bf16.msra.mxu0 %v4828
    %7262 = vmatpush.bf16.msra.mxu0 %v4817
    %7263 = vmatmul.bf16.gmra.mxu0 %v833
    %v7264 = vpop.f32.mrf.mxu0
    %v7265 = vadd.f32 %v7252, %v7264
    %v7266 = vpop.f32.mrf.mxu0
    %7267 = vdwg.mxu0
    %7268 = vmatpush.bf16.msra.mxu0 %v4982
    %7269 = vmatpush.bf16.msra.mxu0 %v4971
    %7270 = vmatpush.bf16.msra.mxu0 %v4960
    %7271 = vmatpush.bf16.msra.mxu0 %v4949
    %7272 = vmatpush.bf16.msra.mxu0 %v4938
    %7273 = vmatpush.bf16.msra.mxu0 %v4927
    %7274 = vmatpush.bf16.msra.mxu0 %v4916
    %7275 = vmatpush.bf16.msra.mxu0 %v4905
    %7276 = vmatmul.bf16.gmra.mxu0 %v834
    %v7277 = vpop.f32.mrf.mxu0
    %v7278 = vadd.f32 %v7265, %v7277
    %v7279 = vpop.f32.mrf.mxu0
    %7280 = vdwg.mxu0
    %7281 = vmatpush.bf16.msra.mxu0 %v5070
    %7282 = vmatpush.bf16.msra.mxu0 %v5059
    %7283 = vmatpush.bf16.msra.mxu0 %v5048
    %7284 = vmatpush.bf16.msra.mxu0 %v5037
    %7285 = vmatpush.bf16.msra.mxu0 %v5026
    %7286 = vmatpush.bf16.msra.mxu0 %v5015
    %7287 = vmatpush.bf16.msra.mxu0 %v5004
    %7288 = vmatpush.bf16.msra.mxu0 %v4993
    %7289 = vmatmul.bf16.gmra.mxu0 %v835
    %v7290 = vpop.f32.mrf.mxu0
    %v7291 = vadd.f32 %v7278, %v7290
    %v7292 = vpop.f32.mrf.mxu0
    %7293 = vdwg.mxu0
    %7294 = vmatpush.bf16.msra.mxu0 %v5158
    %7295 = vmatpush.bf16.msra.mxu0 %v5147
    %7296 = vmatpush.bf16.msra.mxu0 %v5136
    %7297 = vmatpush.bf16.msra.mxu0 %v5125
    %7298 = vmatpush.bf16.msra.mxu0 %v5114
    %7299 = vmatpush.bf16.msra.mxu0 %v5103
    %7300 = vmatpush.bf16.msra.mxu0 %v5092
    %7301 = vmatpush.bf16.msra.mxu0 %v5081
    %7302 = vmatmul.bf16.gmra.mxu0 %v836
    %v7303 = vpop.f32.mrf.mxu0
    %v7304 = vadd.f32 %v7291, %v7303
    %v7305 = vpop.f32.mrf.mxu0
    %7306 = vdwg.mxu0
    %7307 = vmatpush.bf16.msra.mxu0 %v5246
    %7308 = vmatpush.bf16.msra.mxu0 %v5235
    %7309 = vmatpush.bf16.msra.mxu0 %v5224
    %7310 = vmatpush.bf16.msra.mxu0 %v5213
    %7311 = vmatpush.bf16.msra.mxu0 %v5202
    %7312 = vmatpush.bf16.msra.mxu0 %v5191
    %7313 = vmatpush.bf16.msra.mxu0 %v5180
    %7314 = vmatpush.bf16.msra.mxu0 %v5169
    %7315 = vmatmul.bf16.gmra.mxu0 %v837
    %v7316 = vpop.f32.mrf.mxu0
    %v7317 = vadd.f32 %v7304, %v7316
    %v7318 = vpop.f32.mrf.mxu0
    %7319 = vdwg.mxu0
    %7320 = vmatpush.bf16.msra.mxu0 %v5334
    %7321 = vmatpush.bf16.msra.mxu0 %v5323
    %7322 = vmatpush.bf16.msra.mxu0 %v5312
    %7323 = vmatpush.bf16.msra.mxu0 %v5301
    %7324 = vmatpush.bf16.msra.mxu0 %v5290
    %7325 = vmatpush.bf16.msra.mxu0 %v5279
    %7326 = vmatpush.bf16.msra.mxu0 %v5268
    %7327 = vmatpush.bf16.msra.mxu0 %v5257
    %7328 = vmatmul.bf16.gmra.mxu0 %v838
    %v7329 = vpop.f32.mrf.mxu0
    %v7330 = vadd.f32 %v7317, %v7329
    %v7331 = vpop.f32.mrf.mxu0
    %7332 = vdwg.mxu0
    %7333 = vmatpush.bf16.msra.mxu0 %v5422
    %7334 = vmatpush.bf16.msra.mxu0 %v5411
    %7335 = vmatpush.bf16.msra.mxu0 %v5400
    %7336 = vmatpush.bf16.msra.mxu0 %v5389
    %7337 = vmatpush.bf16.msra.mxu0 %v5378
    %7338 = vmatpush.bf16.msra.mxu0 %v5367
    %7339 = vmatpush.bf16.msra.mxu0 %v5356
    %7340 = vmatpush.bf16.msra.mxu0 %v5345
    %7341 = vmatmul.bf16.gmra.mxu0 %v839
    %v7342 = vpop.f32.mrf.mxu0
    %v7343 = vadd.f32 %v7330, %v7342
    %v7344 = vpop.f32.mrf.mxu0
    %7345 = vdwg.mxu0
    %7346 = vmatpush.bf16.msra.mxu0 %v4631
    %7347 = vmatpush.bf16.msra.mxu0 %v4620
    %7348 = vmatpush.bf16.msra.mxu0 %v4609
    %7349 = vmatpush.bf16.msra.mxu0 %v4598
    %7350 = vmatpush.bf16.msra.mxu0 %v4587
    %7351 = vmatpush.bf16.msra.mxu0 %v4576
    %7352 = vmatpush.bf16.msra.mxu0 %v4565
    %7353 = vmatpush.bf16.msra.mxu0 %v4554
    %7354 = vmatmul.bf16.gmra.mxu0 %v830
    %v7355 = vpop.f32.mrf.mxu0
    %v7356 = vadd.f32 %v1812, %v7355
    %v7357 = vpop.f32.mrf.mxu0
    %7358 = vdwg.mxu0
    %7359 = vmatpush.bf16.msra.mxu0 %v4719
    %7360 = vmatpush.bf16.msra.mxu0 %v4708
    %7361 = vmatpush.bf16.msra.mxu0 %v4697
    %7362 = vmatpush.bf16.msra.mxu0 %v4686
    %7363 = vmatpush.bf16.msra.mxu0 %v4675
    %7364 = vmatpush.bf16.msra.mxu0 %v4664
    %7365 = vmatpush.bf16.msra.mxu0 %v4653
    %7366 = vmatpush.bf16.msra.mxu0 %v4642
    %7367 = vmatmul.bf16.gmra.mxu0 %v831
    %v7368 = vpop.f32.mrf.mxu0
    %v7369 = vadd.f32 %v7356, %v7368
    %v7370 = vpop.f32.mrf.mxu0
    %7371 = vdwg.mxu0
    %7372 = vmatpush.bf16.msra.mxu0 %v4807
    %7373 = vmatpush.bf16.msra.mxu0 %v4796
    %7374 = vmatpush.bf16.msra.mxu0 %v4785
    %7375 = vmatpush.bf16.msra.mxu0 %v4774
    %7376 = vmatpush.bf16.msra.mxu0 %v4763
    %7377 = vmatpush.bf16.msra.mxu0 %v4752
    %7378 = vmatpush.bf16.msra.mxu0 %v4741
    %7379 = vmatpush.bf16.msra.mxu0 %v4730
    %7380 = vmatmul.bf16.gmra.mxu0 %v832
    %v7381 = vpop.f32.mrf.mxu0
    %v7382 = vadd.f32 %v7369, %v7381
    %v7383 = vpop.f32.mrf.mxu0
    %7384 = vdwg.mxu0
    %7385 = vmatpush.bf16.msra.mxu0 %v4895
    %7386 = vmatpush.bf16.msra.mxu0 %v4884
    %7387 = vmatpush.bf16.msra.mxu0 %v4873
    %7388 = vmatpush.bf16.msra.mxu0 %v4862
    %7389 = vmatpush.bf16.msra.mxu0 %v4851
    %7390 = vmatpush.bf16.msra.mxu0 %v4840
    %7391 = vmatpush.bf16.msra.mxu0 %v4829
    %7392 = vmatpush.bf16.msra.mxu0 %v4818
    %7393 = vmatmul.bf16.gmra.mxu0 %v833
    %v7394 = vpop.f32.mrf.mxu0
    %v7395 = vadd.f32 %v7382, %v7394
    %v7396 = vpop.f32.mrf.mxu0
    %7397 = vdwg.mxu0
    %7398 = vmatpush.bf16.msra.mxu0 %v4983
    %7399 = vmatpush.bf16.msra.mxu0 %v4972
    %7400 = vmatpush.bf16.msra.mxu0 %v4961
    %7401 = vmatpush.bf16.msra.mxu0 %v4950
    %7402 = vmatpush.bf16.msra.mxu0 %v4939
    %7403 = vmatpush.bf16.msra.mxu0 %v4928
    %7404 = vmatpush.bf16.msra.mxu0 %v4917
    %7405 = vmatpush.bf16.msra.mxu0 %v4906
    %7406 = vmatmul.bf16.gmra.mxu0 %v834
    %v7407 = vpop.f32.mrf.mxu0
    %v7408 = vadd.f32 %v7395, %v7407
    %v7409 = vpop.f32.mrf.mxu0
    %7410 = vdwg.mxu0
    %7411 = vmatpush.bf16.msra.mxu0 %v5071
    %7412 = vmatpush.bf16.msra.mxu0 %v5060
    %7413 = vmatpush.bf16.msra.mxu0 %v5049
    %7414 = vmatpush.bf16.msra.mxu0 %v5038
    %7415 = vmatpush.bf16.msra.mxu0 %v5027
    %7416 = vmatpush.bf16.msra.mxu0 %v5016
    %7417 = vmatpush.bf16.msra.mxu0 %v5005
    %7418 = vmatpush.bf16.msra.mxu0 %v4994
    %7419 = vmatmul.bf16.gmra.mxu0 %v835
    %v7420 = vpop.f32.mrf.mxu0
    %v7421 = vadd.f32 %v7408, %v7420
    %v7422 = vpop.f32.mrf.mxu0
    %7423 = vdwg.mxu0
    %7424 = vmatpush.bf16.msra.mxu0 %v5159
    %7425 = vmatpush.bf16.msra.mxu0 %v5148
    %7426 = vmatpush.bf16.msra.mxu0 %v5137
    %7427 = vmatpush.bf16.msra.mxu0 %v5126
    %7428 = vmatpush.bf16.msra.mxu0 %v5115
    %7429 = vmatpush.bf16.msra.mxu0 %v5104
    %7430 = vmatpush.bf16.msra.mxu0 %v5093
    %7431 = vmatpush.bf16.msra.mxu0 %v5082
    %7432 = vmatmul.bf16.gmra.mxu0 %v836
    %v7433 = vpop.f32.mrf.mxu0
    %v7434 = vadd.f32 %v7421, %v7433
    %v7435 = vpop.f32.mrf.mxu0
    %7436 = vdwg.mxu0
    %7437 = vmatpush.bf16.msra.mxu0 %v5247
    %7438 = vmatpush.bf16.msra.mxu0 %v5236
    %7439 = vmatpush.bf16.msra.mxu0 %v5225
    %7440 = vmatpush.bf16.msra.mxu0 %v5214
    %7441 = vmatpush.bf16.msra.mxu0 %v5203
    %7442 = vmatpush.bf16.msra.mxu0 %v5192
    %7443 = vmatpush.bf16.msra.mxu0 %v5181
    %7444 = vmatpush.bf16.msra.mxu0 %v5170
    %7445 = vmatmul.bf16.gmra.mxu0 %v837
    %v7446 = vpop.f32.mrf.mxu0
    %v7447 = vadd.f32 %v7434, %v7446
    %v7448 = vpop.f32.mrf.mxu0
    %7449 = vdwg.mxu0
    %7450 = vmatpush.bf16.msra.mxu0 %v5335
    %7451 = vmatpush.bf16.msra.mxu0 %v5324
    %7452 = vmatpush.bf16.msra.mxu0 %v5313
    %7453 = vmatpush.bf16.msra.mxu0 %v5302
    %7454 = vmatpush.bf16.msra.mxu0 %v5291
    %7455 = vmatpush.bf16.msra.mxu0 %v5280
    %7456 = vmatpush.bf16.msra.mxu0 %v5269
    %7457 = vmatpush.bf16.msra.mxu0 %v5258
    %7458 = vmatmul.bf16.gmra.mxu0 %v838
    %v7459 = vpop.f32.mrf.mxu0
    %v7460 = vadd.f32 %v7447, %v7459
    %v7461 = vpop.f32.mrf.mxu0
    %7462 = vdwg.mxu0
    %7463 = vmatpush.bf16.msra.mxu0 %v5423
    %7464 = vmatpush.bf16.msra.mxu0 %v5412
    %7465 = vmatpush.bf16.msra.mxu0 %v5401
    %7466 = vmatpush.bf16.msra.mxu0 %v5390
    %7467 = vmatpush.bf16.msra.mxu0 %v5379
    %7468 = vmatpush.bf16.msra.mxu0 %v5368
    %7469 = vmatpush.bf16.msra.mxu0 %v5357
    %7470 = vmatpush.bf16.msra.mxu0 %v5346
    %7471 = vmatmul.bf16.gmra.mxu0 %v839
    %v7472 = vpop.f32.mrf.mxu0
    %v7473 = vadd.f32 %v7460, %v7472
    %v7474 = vpop.f32.mrf.mxu0
    %7475 = vdwg.mxu0
    %7476 = vmatpush.bf16.msra.mxu0 %v4632
    %7477 = vmatpush.bf16.msra.mxu0 %v4621
    %7478 = vmatpush.bf16.msra.mxu0 %v4610
    %7479 = vmatpush.bf16.msra.mxu0 %v4599
    %7480 = vmatpush.bf16.msra.mxu0 %v4588
    %7481 = vmatpush.bf16.msra.mxu0 %v4577
    %7482 = vmatpush.bf16.msra.mxu0 %v4566
    %7483 = vmatpush.bf16.msra.mxu0 %v4555
    %7484 = vmatmul.bf16.gmra.mxu0 %v830
    %v7485 = vpop.f32.mrf.mxu0
    %v7486 = vadd.f32 %v1813, %v7485
    %v7487 = vpop.f32.mrf.mxu0
    %7488 = vdwg.mxu0
    %7489 = vmatpush.bf16.msra.mxu0 %v4720
    %7490 = vmatpush.bf16.msra.mxu0 %v4709
    %7491 = vmatpush.bf16.msra.mxu0 %v4698
    %7492 = vmatpush.bf16.msra.mxu0 %v4687
    %7493 = vmatpush.bf16.msra.mxu0 %v4676
    %7494 = vmatpush.bf16.msra.mxu0 %v4665
    %7495 = vmatpush.bf16.msra.mxu0 %v4654
    %7496 = vmatpush.bf16.msra.mxu0 %v4643
    %7497 = vmatmul.bf16.gmra.mxu0 %v831
    %v7498 = vpop.f32.mrf.mxu0
    %v7499 = vadd.f32 %v7486, %v7498
    %v7500 = vpop.f32.mrf.mxu0
    %7501 = vdwg.mxu0
    %7502 = vmatpush.bf16.msra.mxu0 %v4808
    %7503 = vmatpush.bf16.msra.mxu0 %v4797
    %7504 = vmatpush.bf16.msra.mxu0 %v4786
    %7505 = vmatpush.bf16.msra.mxu0 %v4775
    %7506 = vmatpush.bf16.msra.mxu0 %v4764
    %7507 = vmatpush.bf16.msra.mxu0 %v4753
    %7508 = vmatpush.bf16.msra.mxu0 %v4742
    %7509 = vmatpush.bf16.msra.mxu0 %v4731
    %7510 = vmatmul.bf16.gmra.mxu0 %v832
    %v7511 = vpop.f32.mrf.mxu0
    %v7512 = vadd.f32 %v7499, %v7511
    %v7513 = vpop.f32.mrf.mxu0
    %7514 = vdwg.mxu0
    %7515 = vmatpush.bf16.msra.mxu0 %v4896
    %7516 = vmatpush.bf16.msra.mxu0 %v4885
    %7517 = vmatpush.bf16.msra.mxu0 %v4874
    %7518 = vmatpush.bf16.msra.mxu0 %v4863
    %7519 = vmatpush.bf16.msra.mxu0 %v4852
    %7520 = vmatpush.bf16.msra.mxu0 %v4841
    %7521 = vmatpush.bf16.msra.mxu0 %v4830
    %7522 = vmatpush.bf16.msra.mxu0 %v4819
    %7523 = vmatmul.bf16.gmra.mxu0 %v833
    %v7524 = vpop.f32.mrf.mxu0
    %v7525 = vadd.f32 %v7512, %v7524
    %v7526 = vpop.f32.mrf.mxu0
    %7527 = vdwg.mxu0
    %7528 = vmatpush.bf16.msra.mxu0 %v4984
    %7529 = vmatpush.bf16.msra.mxu0 %v4973
    %7530 = vmatpush.bf16.msra.mxu0 %v4962
    %7531 = vmatpush.bf16.msra.mxu0 %v4951
    %7532 = vmatpush.bf16.msra.mxu0 %v4940
    %7533 = vmatpush.bf16.msra.mxu0 %v4929
    %7534 = vmatpush.bf16.msra.mxu0 %v4918
    %7535 = vmatpush.bf16.msra.mxu0 %v4907
    %7536 = vmatmul.bf16.gmra.mxu0 %v834
    %v7537 = vpop.f32.mrf.mxu0
    %v7538 = vadd.f32 %v7525, %v7537
    %v7539 = vpop.f32.mrf.mxu0
    %7540 = vdwg.mxu0
    %7541 = vmatpush.bf16.msra.mxu0 %v5072
    %7542 = vmatpush.bf16.msra.mxu0 %v5061
    %7543 = vmatpush.bf16.msra.mxu0 %v5050
    %7544 = vmatpush.bf16.msra.mxu0 %v5039
    %7545 = vmatpush.bf16.msra.mxu0 %v5028
    %7546 = vmatpush.bf16.msra.mxu0 %v5017
    %7547 = vmatpush.bf16.msra.mxu0 %v5006
    %7548 = vmatpush.bf16.msra.mxu0 %v4995
    %7549 = vmatmul.bf16.gmra.mxu0 %v835
    %v7550 = vpop.f32.mrf.mxu0
    %v7551 = vadd.f32 %v7538, %v7550
    %v7552 = vpop.f32.mrf.mxu0
    %7553 = vdwg.mxu0
    %7554 = vmatpush.bf16.msra.mxu0 %v5160
    %7555 = vmatpush.bf16.msra.mxu0 %v5149
    %7556 = vmatpush.bf16.msra.mxu0 %v5138
    %7557 = vmatpush.bf16.msra.mxu0 %v5127
    %7558 = vmatpush.bf16.msra.mxu0 %v5116
    %7559 = vmatpush.bf16.msra.mxu0 %v5105
    %7560 = vmatpush.bf16.msra.mxu0 %v5094
    %7561 = vmatpush.bf16.msra.mxu0 %v5083
    %7562 = vmatmul.bf16.gmra.mxu0 %v836
    %v7563 = vpop.f32.mrf.mxu0
    %v7564 = vadd.f32 %v7551, %v7563
    %v7565 = vpop.f32.mrf.mxu0
    %7566 = vdwg.mxu0
    %7567 = vmatpush.bf16.msra.mxu0 %v5248
    %7568 = vmatpush.bf16.msra.mxu0 %v5237
    %7569 = vmatpush.bf16.msra.mxu0 %v5226
    %7570 = vmatpush.bf16.msra.mxu0 %v5215
    %7571 = vmatpush.bf16.msra.mxu0 %v5204
    %7572 = vmatpush.bf16.msra.mxu0 %v5193
    %7573 = vmatpush.bf16.msra.mxu0 %v5182
    %7574 = vmatpush.bf16.msra.mxu0 %v5171
    %7575 = vmatmul.bf16.gmra.mxu0 %v837
    %v7576 = vpop.f32.mrf.mxu0
    %v7577 = vadd.f32 %v7564, %v7576
    %v7578 = vpop.f32.mrf.mxu0
    %7579 = vdwg.mxu0
    %7580 = vmatpush.bf16.msra.mxu0 %v5336
    %7581 = vmatpush.bf16.msra.mxu0 %v5325
    %7582 = vmatpush.bf16.msra.mxu0 %v5314
    %7583 = vmatpush.bf16.msra.mxu0 %v5303
    %7584 = vmatpush.bf16.msra.mxu0 %v5292
    %7585 = vmatpush.bf16.msra.mxu0 %v5281
    %7586 = vmatpush.bf16.msra.mxu0 %v5270
    %7587 = vmatpush.bf16.msra.mxu0 %v5259
    %7588 = vmatmul.bf16.gmra.mxu0 %v838
    %v7589 = vpop.f32.mrf.mxu0
    %v7590 = vadd.f32 %v7577, %v7589
    %v7591 = vpop.f32.mrf.mxu0
    %7592 = vdwg.mxu0
    %7593 = vmatpush.bf16.msra.mxu0 %v5424
    %7594 = vmatpush.bf16.msra.mxu0 %v5413
    %7595 = vmatpush.bf16.msra.mxu0 %v5402
    %7596 = vmatpush.bf16.msra.mxu0 %v5391
    %7597 = vmatpush.bf16.msra.mxu0 %v5380
    %7598 = vmatpush.bf16.msra.mxu0 %v5369
    %7599 = vmatpush.bf16.msra.mxu0 %v5358
    %7600 = vmatpush.bf16.msra.mxu0 %v5347
    %7601 = vmatmul.bf16.gmra.mxu0 %v839
    %v7602 = vpop.f32.mrf.mxu0
    %v7603 = vadd.f32 %v7590, %v7602
    %v7604 = vpop.f32.mrf.mxu0
    %7605 = vdwg.mxu0
    %7606 = vmatpush.bf16.msra.mxu0 %v4633
    %7607 = vmatpush.bf16.msra.mxu0 %v4622
    %7608 = vmatpush.bf16.msra.mxu0 %v4611
    %7609 = vmatpush.bf16.msra.mxu0 %v4600
    %7610 = vmatpush.bf16.msra.mxu0 %v4589
    %7611 = vmatpush.bf16.msra.mxu0 %v4578
    %7612 = vmatpush.bf16.msra.mxu0 %v4567
    %7613 = vmatpush.bf16.msra.mxu0 %v4556
    %7614 = vmatmul.bf16.gmra.mxu0 %v830
    %v7615 = vpop.f32.mrf.mxu0
    %v7616 = vadd.f32 %v1814, %v7615
    %v7617 = vpop.f32.mrf.mxu0
    %7618 = vdwg.mxu0
    %7619 = vmatpush.bf16.msra.mxu0 %v4721
    %7620 = vmatpush.bf16.msra.mxu0 %v4710
    %7621 = vmatpush.bf16.msra.mxu0 %v4699
    %7622 = vmatpush.bf16.msra.mxu0 %v4688
    %7623 = vmatpush.bf16.msra.mxu0 %v4677
    %7624 = vmatpush.bf16.msra.mxu0 %v4666
    %7625 = vmatpush.bf16.msra.mxu0 %v4655
    %7626 = vmatpush.bf16.msra.mxu0 %v4644
    %7627 = vmatmul.bf16.gmra.mxu0 %v831
    %v7628 = vpop.f32.mrf.mxu0
    %v7629 = vadd.f32 %v7616, %v7628
    %v7630 = vpop.f32.mrf.mxu0
    %7631 = vdwg.mxu0
    %7632 = vmatpush.bf16.msra.mxu0 %v4809
    %7633 = vmatpush.bf16.msra.mxu0 %v4798
    %7634 = vmatpush.bf16.msra.mxu0 %v4787
    %7635 = vmatpush.bf16.msra.mxu0 %v4776
    %7636 = vmatpush.bf16.msra.mxu0 %v4765
    %7637 = vmatpush.bf16.msra.mxu0 %v4754
    %7638 = vmatpush.bf16.msra.mxu0 %v4743
    %7639 = vmatpush.bf16.msra.mxu0 %v4732
    %7640 = vmatmul.bf16.gmra.mxu0 %v832
    %v7641 = vpop.f32.mrf.mxu0
    %v7642 = vadd.f32 %v7629, %v7641
    %v7643 = vpop.f32.mrf.mxu0
    %7644 = vdwg.mxu0
    %7645 = vmatpush.bf16.msra.mxu0 %v4897
    %7646 = vmatpush.bf16.msra.mxu0 %v4886
    %7647 = vmatpush.bf16.msra.mxu0 %v4875
    %7648 = vmatpush.bf16.msra.mxu0 %v4864
    %7649 = vmatpush.bf16.msra.mxu0 %v4853
    %7650 = vmatpush.bf16.msra.mxu0 %v4842
    %7651 = vmatpush.bf16.msra.mxu0 %v4831
    %7652 = vmatpush.bf16.msra.mxu0 %v4820
    %7653 = vmatmul.bf16.gmra.mxu0 %v833
    %v7654 = vpop.f32.mrf.mxu0
    %v7655 = vadd.f32 %v7642, %v7654
    %v7656 = vpop.f32.mrf.mxu0
    %7657 = vdwg.mxu0
    %7658 = vmatpush.bf16.msra.mxu0 %v4985
    %7659 = vmatpush.bf16.msra.mxu0 %v4974
    %7660 = vmatpush.bf16.msra.mxu0 %v4963
    %7661 = vmatpush.bf16.msra.mxu0 %v4952
    %7662 = vmatpush.bf16.msra.mxu0 %v4941
    %7663 = vmatpush.bf16.msra.mxu0 %v4930
    %7664 = vmatpush.bf16.msra.mxu0 %v4919
    %7665 = vmatpush.bf16.msra.mxu0 %v4908
    %7666 = vmatmul.bf16.gmra.mxu0 %v834
    %v7667 = vpop.f32.mrf.mxu0
    %v7668 = vadd.f32 %v7655, %v7667
    %v7669 = vpop.f32.mrf.mxu0
    %7670 = vdwg.mxu0
    %7671 = vmatpush.bf16.msra.mxu0 %v5073
    %7672 = vmatpush.bf16.msra.mxu0 %v5062
    %7673 = vmatpush.bf16.msra.mxu0 %v5051
    %7674 = vmatpush.bf16.msra.mxu0 %v5040
    %7675 = vmatpush.bf16.msra.mxu0 %v5029
    %7676 = vmatpush.bf16.msra.mxu0 %v5018
    %7677 = vmatpush.bf16.msra.mxu0 %v5007
    %7678 = vmatpush.bf16.msra.mxu0 %v4996
    %7679 = vmatmul.bf16.gmra.mxu0 %v835
    %v7680 = vpop.f32.mrf.mxu0
    %v7681 = vadd.f32 %v7668, %v7680
    %v7682 = vpop.f32.mrf.mxu0
    %7683 = vdwg.mxu0
    %7684 = vmatpush.bf16.msra.mxu0 %v5161
    %7685 = vmatpush.bf16.msra.mxu0 %v5150
    %7686 = vmatpush.bf16.msra.mxu0 %v5139
    %7687 = vmatpush.bf16.msra.mxu0 %v5128
    %7688 = vmatpush.bf16.msra.mxu0 %v5117
    %7689 = vmatpush.bf16.msra.mxu0 %v5106
    %7690 = vmatpush.bf16.msra.mxu0 %v5095
    %7691 = vmatpush.bf16.msra.mxu0 %v5084
    %7692 = vmatmul.bf16.gmra.mxu0 %v836
    %v7693 = vpop.f32.mrf.mxu0
    %v7694 = vadd.f32 %v7681, %v7693
    %v7695 = vpop.f32.mrf.mxu0
    %7696 = vdwg.mxu0
    %7697 = vmatpush.bf16.msra.mxu0 %v5249
    %7698 = vmatpush.bf16.msra.mxu0 %v5238
    %7699 = vmatpush.bf16.msra.mxu0 %v5227
    %7700 = vmatpush.bf16.msra.mxu0 %v5216
    %7701 = vmatpush.bf16.msra.mxu0 %v5205
    %7702 = vmatpush.bf16.msra.mxu0 %v5194
    %7703 = vmatpush.bf16.msra.mxu0 %v5183
    %7704 = vmatpush.bf16.msra.mxu0 %v5172
    %7705 = vmatmul.bf16.gmra.mxu0 %v837
    %v7706 = vpop.f32.mrf.mxu0
    %v7707 = vadd.f32 %v7694, %v7706
    %v7708 = vpop.f32.mrf.mxu0
    %7709 = vdwg.mxu0
    %7710 = vmatpush.bf16.msra.mxu0 %v5337
    %7711 = vmatpush.bf16.msra.mxu0 %v5326
    %7712 = vmatpush.bf16.msra.mxu0 %v5315
    %7713 = vmatpush.bf16.msra.mxu0 %v5304
    %7714 = vmatpush.bf16.msra.mxu0 %v5293
    %7715 = vmatpush.bf16.msra.mxu0 %v5282
    %7716 = vmatpush.bf16.msra.mxu0 %v5271
    %7717 = vmatpush.bf16.msra.mxu0 %v5260
    %7718 = vmatmul.bf16.gmra.mxu0 %v838
    %v7719 = vpop.f32.mrf.mxu0
    %v7720 = vadd.f32 %v7707, %v7719
    %v7721 = vpop.f32.mrf.mxu0
    %7722 = vdwg.mxu0
    %7723 = vmatpush.bf16.msra.mxu0 %v5425
    %7724 = vmatpush.bf16.msra.mxu0 %v5414
    %7725 = vmatpush.bf16.msra.mxu0 %v5403
    %7726 = vmatpush.bf16.msra.mxu0 %v5392
    %7727 = vmatpush.bf16.msra.mxu0 %v5381
    %7728 = vmatpush.bf16.msra.mxu0 %v5370
    %7729 = vmatpush.bf16.msra.mxu0 %v5359
    %7730 = vmatpush.bf16.msra.mxu0 %v5348
    %7731 = vmatmul.bf16.gmra.mxu0 %v839
    %v7732 = vpop.f32.mrf.mxu0
    %v7733 = vadd.f32 %v7720, %v7732
    %v7734 = vpop.f32.mrf.mxu0
    %7735 = vdwg.mxu0
    %v7736 = vtanh.pop %v6433
    %v7737 = vtanh.pop %v6563
    %v7738 = vtanh.pop %v6693
    %v7739 = vtanh.pop %v6823
    %v7740 = vtanh.pop %v6953
    %v7741 = vtanh.pop %v7083
    %v7742 = vtanh.pop %v7213
    %v7743 = vtanh.pop %v7343
    %v7744 = vtanh.pop %v7473
    %v7745 = vtanh.pop %v7603
    %v7746 = vtanh.pop %v7733
    %v7747 = vpack.c.bf16 %v7736, %v7736
    %v7748 = vpack.c.bf16 %v7737, %v7737
    %v7749 = vpack.c.bf16 %v7738, %v7738
    %v7750 = vpack.c.bf16 %v7739, %v7739
    %v7751 = vpack.c.bf16 %v7740, %v7740
    %v7752 = vpack.c.bf16 %v7741, %v7741
    %v7753 = vpack.c.bf16 %v7742, %v7742
    %v7754 = vpack.c.bf16 %v7743, %v7743
    %v7755 = vpack.c.bf16 %v7744, %v7744
    %v7756 = vpack.c.bf16 %v7745, %v7745
    %v7757 = vpack.c.bf16 %v7746, %v7746
    %v7758 = vld [vmem:[#allocation13] sm:$0xf]
    %v7759 = vld [vmem:[#allocation13 + $0x4] sm:$0xf]
    %v7760 = vld [vmem:[#allocation13 + $0x8] sm:$0xf]
    %v7761 = vld [vmem:[#allocation13 + $0xc] sm:$0xf]
    %v7762 = vld [vmem:[#allocation13 + $0x10] sm:$0xf]
    %v7763 = vld [vmem:[#allocation13 + $0x14] sm:$0xf]
    %v7764 = vld [vmem:[#allocation13 + $0x18] sm:$0xf]
    %v7765 = vld [vmem:[#allocation13 + $0x1c] sm:$0xf]
    %v7766 = vld [vmem:[#allocation13 + $0x20] sm:$0xf]
    %v7767 = vld [vmem:[#allocation13 + $0x24] sm:$0xf]
    %v7768 = vld [vmem:[#allocation13 + $0x28] sm:$0xf]
    %v7769 = vld [vmem:[#allocation13 + $0x2c] sm:$0xf]
    %v7770 = vld [vmem:[#allocation13 + $0x30] sm:$0xf]
    %v7771 = vld [vmem:[#allocation13 + $0x34] sm:$0xf]
    %v7772 = vld [vmem:[#allocation13 + $0x38] sm:$0xf]
    %v7773 = vld [vmem:[#allocation13 + $0x3c] sm:$0xf]
    %v7774 = vld [vmem:[#allocation13 + $0x40] sm:$0xf]
    %v7775 = vld [vmem:[#allocation13 + $0x44] sm:$0xf]
    %v7776 = vld [vmem:[#allocation13 + $0x48] sm:$0xf]
    %v7777 = vld [vmem:[#allocation13 + $0x4c] sm:$0xf]
    %v7778 = vld [vmem:[#allocation13 + $0x50] sm:$0xf]
    %v7779 = vld [vmem:[#allocation13 + $0x54] sm:$0xf]
    %v7780 = vld [vmem:[#allocation13 + $0x58] sm:$0xf]
    %v7781 = vld [vmem:[#allocation13 + $0x5c] sm:$0xf]
    %v7782 = vld [vmem:[#allocation13 + $0x60] sm:$0xf]
    %v7783 = vld [vmem:[#allocation13 + $0x64] sm:$0xf]
    %v7784 = vld [vmem:[#allocation13 + $0x68] sm:$0xf]
    %v7785 = vld [vmem:[#allocation13 + $0x6c] sm:$0xf]
    %v7786 = vld [vmem:[#allocation13 + $0x70] sm:$0xf]
    %v7787 = vld [vmem:[#allocation13 + $0x74] sm:$0xf]
    %v7788 = vld [vmem:[#allocation13 + $0x78] sm:$0xf]
    %v7789 = vld [vmem:[#allocation13 + $0x7c] sm:$0xf]
    %v7790 = vld [vmem:[#allocation13 + $0x80] sm:$0xf]
    %v7791 = vld [vmem:[#allocation13 + $0x84] sm:$0xf]
    %v7792 = vld [vmem:[#allocation13 + $0x88] sm:$0xf]
    %v7793 = vld [vmem:[#allocation13 + $0x8c] sm:$0xf]
    %v7794 = vld [vmem:[#allocation13 + $0x90] sm:$0xf]
    %v7795 = vld [vmem:[#allocation13 + $0x94] sm:$0xf]
    %v7796 = vld [vmem:[#allocation13 + $0x98] sm:$0xf]
    %v7797 = vld [vmem:[#allocation13 + $0x9c] sm:$0xf]
    %v7798 = vld [vmem:[#allocation13 + $0xa0] sm:$0xf]
    %v7799 = vld [vmem:[#allocation13 + $0xa4] sm:$0xf]
    %v7800 = vld [vmem:[#allocation13 + $0xa8] sm:$0xf]
    %v7801 = vld [vmem:[#allocation13 + $0xac] sm:$0xf]
    %v7802 = vld [vmem:[#allocation13 + $0xb0] sm:$0xf]
    %v7803 = vld [vmem:[#allocation13 + $0xb4] sm:$0xf]
    %v7804 = vld [vmem:[#allocation13 + $0xb8] sm:$0xf]
    %v7805 = vld [vmem:[#allocation13 + $0xbc] sm:$0xf]
    %v7806 = vld [vmem:[#allocation13 + $0xc0] sm:$0xf]
    %v7807 = vld [vmem:[#allocation13 + $0xc4] sm:$0xf]
    %v7808 = vld [vmem:[#allocation13 + $0xc8] sm:$0xf]
    %v7809 = vld [vmem:[#allocation13 + $0xcc] sm:$0xf]
    %v7810 = vld [vmem:[#allocation13 + $0xd0] sm:$0xf]
    %v7811 = vld [vmem:[#allocation13 + $0xd4] sm:$0xf]
    %v7812 = vld [vmem:[#allocation13 + $0xd8] sm:$0xf]
    %v7813 = vld [vmem:[#allocation13 + $0xdc] sm:$0xf]
    %v7814 = vld [vmem:[#allocation13 + $0xe0] sm:$0xf]
    %v7815 = vld [vmem:[#allocation13 + $0xe4] sm:$0xf]
    %v7816 = vld [vmem:[#allocation13 + $0xe8] sm:$0xf]
    %v7817 = vld [vmem:[#allocation13 + $0xec] sm:$0xf]
    %v7818 = vld [vmem:[#allocation13 + $0xf0] sm:$0xf]
    %v7819 = vld [vmem:[#allocation13 + $0xf4] sm:$0xf]
    %v7820 = vld [vmem:[#allocation13 + $0xf8] sm:$0xf]
    %v7821 = vld [vmem:[#allocation13 + $0xfc] sm:$0xf]
    %v7822 = vld [vmem:[#allocation13 + $0x100] sm:$0xf]
    %v7823 = vld [vmem:[#allocation13 + $0x104] sm:$0xf]
    %v7824 = vld [vmem:[#allocation13 + $0x108] sm:$0xf]
    %v7825 = vld [vmem:[#allocation13 + $0x10c] sm:$0xf]
    %v7826 = vld [vmem:[#allocation13 + $0x110] sm:$0xf]
    %v7827 = vld [vmem:[#allocation13 + $0x114] sm:$0xf]
    %v7828 = vld [vmem:[#allocation13 + $0x118] sm:$0xf]
    %v7829 = vld [vmem:[#allocation13 + $0x11c] sm:$0xf]
    %v7830 = vld [vmem:[#allocation13 + $0x120] sm:$0xf]
    %v7831 = vld [vmem:[#allocation13 + $0x124] sm:$0xf]
    %v7832 = vld [vmem:[#allocation13 + $0x128] sm:$0xf]
    %v7833 = vld [vmem:[#allocation13 + $0x12c] sm:$0xf]
    %v7834 = vld [vmem:[#allocation13 + $0x130] sm:$0xf]
    %v7835 = vld [vmem:[#allocation13 + $0x134] sm:$0xf]
    %v7836 = vld [vmem:[#allocation13 + $0x138] sm:$0xf]
    %v7837 = vld [vmem:[#allocation13 + $0x13c] sm:$0xf]
    %v7838 = vld [vmem:[#allocation13 + $0x140] sm:$0xf]
    %v7839 = vld [vmem:[#allocation13 + $0x144] sm:$0xf]
    %v7840 = vld [vmem:[#allocation13 + $0x148] sm:$0xf]
    %v7841 = vld [vmem:[#allocation13 + $0x14c] sm:$0xf]
    %v7842 = vld [vmem:[#allocation13 + $0x150] sm:$0xf]
    %v7843 = vld [vmem:[#allocation13 + $0x154] sm:$0xf]
    %v7844 = vld [vmem:[#allocation13 + $0x158] sm:$0xf]
    %v7845 = vld [vmem:[#allocation13 + $0x15c] sm:$0xf]
    %v7846 = vld [vmem:[#allocation13 + $0x160] sm:$0xf]
    %v7847 = vld [vmem:[#allocation13 + $0x164] sm:$0xf]
    %v7848 = vld [vmem:[#allocation13 + $0x168] sm:$0xf]
    %v7849 = vld [vmem:[#allocation13 + $0x16c] sm:$0xf]
    %v7850 = vld [vmem:[#allocation13 + $0x170] sm:$0xf]
    %v7851 = vld [vmem:[#allocation13 + $0x174] sm:$0xf]
    %v7852 = vld [vmem:[#allocation13 + $0x178] sm:$0xf]
    %v7853 = vld [vmem:[#allocation13 + $0x17c] sm:$0xf]
    %v7854 = vld [vmem:[#allocation13 + $0x180] sm:$0xf]
    %v7855 = vld [vmem:[#allocation13 + $0x184] sm:$0xf]
    %v7856 = vld [vmem:[#allocation13 + $0x188] sm:$0xf]
    %v7857 = vld [vmem:[#allocation13 + $0x18c] sm:$0xf]
    %v7858 = vld [vmem:[#allocation13 + $0x190] sm:$0xf]
    %v7859 = vld [vmem:[#allocation13 + $0x194] sm:$0xf]
    %v7860 = vld [vmem:[#allocation13 + $0x198] sm:$0xf]
    %v7861 = vld [vmem:[#allocation13 + $0x19c] sm:$0xf]
    %v7862 = vld [vmem:[#allocation13 + $0x1a0] sm:$0xf]
    %v7863 = vld [vmem:[#allocation13 + $0x1a4] sm:$0xf]
    %v7864 = vld [vmem:[#allocation13 + $0x1a8] sm:$0xf]
    %v7865 = vld [vmem:[#allocation13 + $0x1ac] sm:$0xf]
    %v7866 = vld [vmem:[#allocation13 + $0x1b0] sm:$0xf]
    %v7867 = vld [vmem:[#allocation13 + $0x1b4] sm:$0xf]
    %v7868 = vld [vmem:[#allocation13 + $0x1b8] sm:$0xf]
    %v7869 = vld [vmem:[#allocation13 + $0x1bc] sm:$0xf]
    %v7870 = vld [vmem:[#allocation13 + $0x1c0] sm:$0xf]
    %v7871 = vld [vmem:[#allocation13 + $0x1c4] sm:$0xf]
    %v7872 = vld [vmem:[#allocation13 + $0x1c8] sm:$0xf]
    %v7873 = vld [vmem:[#allocation13 + $0x1cc] sm:$0xf]
    %v7874 = vld [vmem:[#allocation13 + $0x1d0] sm:$0xf]
    %v7875 = vld [vmem:[#allocation13 + $0x1d4] sm:$0xf]
    %v7876 = vld [vmem:[#allocation13 + $0x1d8] sm:$0xf]
    %v7877 = vld [vmem:[#allocation13 + $0x1dc] sm:$0xf]
    %v7878 = vld [vmem:[#allocation13 + $0x1e0] sm:$0xf]
    %v7879 = vld [vmem:[#allocation13 + $0x1e4] sm:$0xf]
    %v7880 = vld [vmem:[#allocation13 + $0x1e8] sm:$0xf]
    %v7881 = vld [vmem:[#allocation13 + $0x1ec] sm:$0xf]
    %v7882 = vld [vmem:[#allocation13 + $0x1f0] sm:$0xf]
    %v7883 = vld [vmem:[#allocation13 + $0x1f4] sm:$0xf]
    %v7884 = vld [vmem:[#allocation13 + $0x1f8] sm:$0xf]
    %v7885 = vld [vmem:[#allocation13 + $0x1fc] sm:$0xf]
    %v7886 = vld [vmem:[#allocation13 + $0x200] sm:$0xf]
    %v7887 = vld [vmem:[#allocation13 + $0x204] sm:$0xf]
    %v7888 = vld [vmem:[#allocation13 + $0x208] sm:$0xf]
    %v7889 = vld [vmem:[#allocation13 + $0x20c] sm:$0xf]
    %v7890 = vld [vmem:[#allocation13 + $0x210] sm:$0xf]
    %v7891 = vld [vmem:[#allocation13 + $0x214] sm:$0xf]
    %v7892 = vld [vmem:[#allocation13 + $0x218] sm:$0xf]
    %v7893 = vld [vmem:[#allocation13 + $0x21c] sm:$0xf]
    %v7894 = vld [vmem:[#allocation13 + $0x220] sm:$0xf]
    %v7895 = vld [vmem:[#allocation13 + $0x224] sm:$0xf]
    %v7896 = vld [vmem:[#allocation13 + $0x228] sm:$0xf]
    %v7897 = vld [vmem:[#allocation13 + $0x22c] sm:$0xf]
    %v7898 = vld [vmem:[#allocation13 + $0x230] sm:$0xf]
    %v7899 = vld [vmem:[#allocation13 + $0x234] sm:$0xf]
    %v7900 = vld [vmem:[#allocation13 + $0x238] sm:$0xf]
    %v7901 = vld [vmem:[#allocation13 + $0x23c] sm:$0xf]
    %v7902 = vld [vmem:[#allocation13 + $0x240] sm:$0xf]
    %v7903 = vld [vmem:[#allocation13 + $0x244] sm:$0xf]
    %v7904 = vld [vmem:[#allocation13 + $0x248] sm:$0xf]
    %v7905 = vld [vmem:[#allocation13 + $0x24c] sm:$0xf]
    %v7906 = vld [vmem:[#allocation13 + $0x250] sm:$0xf]
    %v7907 = vld [vmem:[#allocation13 + $0x254] sm:$0xf]
    %v7908 = vld [vmem:[#allocation13 + $0x258] sm:$0xf]
    %v7909 = vld [vmem:[#allocation13 + $0x25c] sm:$0xf]
    %v7910 = vld [vmem:[#allocation13 + $0x260] sm:$0xf]
    %v7911 = vld [vmem:[#allocation13 + $0x264] sm:$0xf]
    %v7912 = vld [vmem:[#allocation13 + $0x268] sm:$0xf]
    %v7913 = vld [vmem:[#allocation13 + $0x26c] sm:$0xf]
    %v7914 = vld [vmem:[#allocation13 + $0x270] sm:$0xf]
    %v7915 = vld [vmem:[#allocation13 + $0x274] sm:$0xf]
    %v7916 = vld [vmem:[#allocation13 + $0x278] sm:$0xf]
    %v7917 = vld [vmem:[#allocation13 + $0x27c] sm:$0xf]
    %v7918 = vld [vmem:[#allocation13 + $0x280] sm:$0xf]
    %v7919 = vld [vmem:[#allocation13 + $0x284] sm:$0xf]
    %v7920 = vld [vmem:[#allocation13 + $0x288] sm:$0xf]
    %v7921 = vld [vmem:[#allocation13 + $0x28c] sm:$0xf]
    %v7922 = vld [vmem:[#allocation13 + $0x290] sm:$0xf]
    %v7923 = vld [vmem:[#allocation13 + $0x294] sm:$0xf]
    %v7924 = vld [vmem:[#allocation13 + $0x298] sm:$0xf]
    %v7925 = vld [vmem:[#allocation13 + $0x29c] sm:$0xf]
    %v7926 = vld [vmem:[#allocation13 + $0x2a0] sm:$0xf]
    %v7927 = vld [vmem:[#allocation13 + $0x2a4] sm:$0xf]
    %v7928 = vld [vmem:[#allocation13 + $0x2a8] sm:$0xf]
    %v7929 = vld [vmem:[#allocation13 + $0x2ac] sm:$0xf]
    %v7930 = vld [vmem:[#allocation13 + $0x2b0] sm:$0xf]
    %v7931 = vld [vmem:[#allocation13 + $0x2b4] sm:$0xf]
    %v7932 = vld [vmem:[#allocation13 + $0x2b8] sm:$0xf]
    %v7933 = vld [vmem:[#allocation13 + $0x2bc] sm:$0xf]
    %v7934 = vld [vmem:[#allocation14] sm:$0x1]
    %v7936 = vperm.slane %v7934, 0
    %v8114 = vunpack.c.l.b16 %v7758
    %v8115 = vunpack.c.l.b16 %v7759
    %v8116 = vunpack.c.l.b16 %v7760
    %v8117 = vunpack.c.l.b16 %v7761
    %v8118 = vunpack.c.l.b16 %v7762
    %v8119 = vunpack.c.l.b16 %v7763
    %v8120 = vunpack.c.l.b16 %v7764
    %v8121 = vunpack.c.l.b16 %v7765
    %v8122 = vunpack.c.l.b16 %v7766
    %v8123 = vunpack.c.l.b16 %v7767
    %v8124 = vunpack.c.l.b16 %v7768
    %v8125 = vunpack.c.l.b16 %v7769
    %v8126 = vunpack.c.l.b16 %v7770
    %v8127 = vunpack.c.l.b16 %v7771
    %v8128 = vunpack.c.l.b16 %v7772
    %v8129 = vunpack.c.l.b16 %v7773
    %v8130 = vunpack.c.l.b16 %v7774
    %v8131 = vunpack.c.l.b16 %v7775
    %v8132 = vunpack.c.l.b16 %v7776
    %v8133 = vunpack.c.l.b16 %v7777
    %v8134 = vunpack.c.l.b16 %v7778
    %v8135 = vunpack.c.l.b16 %v7779
    %v8136 = vunpack.c.l.b16 %v7780
    %v8137 = vunpack.c.l.b16 %v7781
    %v8138 = vunpack.c.l.b16 %v7782
    %v8139 = vunpack.c.l.b16 %v7783
    %v8140 = vunpack.c.l.b16 %v7784
    %v8141 = vunpack.c.l.b16 %v7785
    %v8142 = vunpack.c.l.b16 %v7786
    %v8143 = vunpack.c.l.b16 %v7787
    %v8144 = vunpack.c.l.b16 %v7788
    %v8145 = vunpack.c.l.b16 %v7789
    %v8146 = vunpack.c.l.b16 %v7790
    %v8147 = vunpack.c.l.b16 %v7791
    %v8148 = vunpack.c.l.b16 %v7792
    %v8149 = vunpack.c.l.b16 %v7793
    %v8150 = vunpack.c.l.b16 %v7794
    %v8151 = vunpack.c.l.b16 %v7795
    %v8152 = vunpack.c.l.b16 %v7796
    %v8153 = vunpack.c.l.b16 %v7797
    %v8154 = vunpack.c.l.b16 %v7798
    %v8155 = vunpack.c.l.b16 %v7799
    %v8156 = vunpack.c.l.b16 %v7800
    %v8157 = vunpack.c.l.b16 %v7801
    %v8158 = vunpack.c.l.b16 %v7802
    %v8159 = vunpack.c.l.b16 %v7803
    %v8160 = vunpack.c.l.b16 %v7804
    %v8161 = vunpack.c.l.b16 %v7805
    %v8162 = vunpack.c.l.b16 %v7806
    %v8163 = vunpack.c.l.b16 %v7807
    %v8164 = vunpack.c.l.b16 %v7808
    %v8165 = vunpack.c.l.b16 %v7809
    %v8166 = vunpack.c.l.b16 %v7810
    %v8167 = vunpack.c.l.b16 %v7811
    %v8168 = vunpack.c.l.b16 %v7812
    %v8169 = vunpack.c.l.b16 %v7813
    %v8170 = vunpack.c.l.b16 %v7814
    %v8171 = vunpack.c.l.b16 %v7815
    %v8172 = vunpack.c.l.b16 %v7816
    %v8173 = vunpack.c.l.b16 %v7817
    %v8174 = vunpack.c.l.b16 %v7818
    %v8175 = vunpack.c.l.b16 %v7819
    %v8176 = vunpack.c.l.b16 %v7820
    %v8177 = vunpack.c.l.b16 %v7821
    %v8178 = vunpack.c.l.b16 %v7822
    %v8179 = vunpack.c.l.b16 %v7823
    %v8180 = vunpack.c.l.b16 %v7824
    %v8181 = vunpack.c.l.b16 %v7825
    %v8182 = vunpack.c.l.b16 %v7826
    %v8183 = vunpack.c.l.b16 %v7827
    %v8184 = vunpack.c.l.b16 %v7828
    %v8185 = vunpack.c.l.b16 %v7829
    %v8186 = vunpack.c.l.b16 %v7830
    %v8187 = vunpack.c.l.b16 %v7831
    %v8188 = vunpack.c.l.b16 %v7832
    %v8189 = vunpack.c.l.b16 %v7833
    %v8190 = vunpack.c.l.b16 %v7834
    %v8191 = vunpack.c.l.b16 %v7835
    %v8192 = vunpack.c.l.b16 %v7836
    %v8193 = vunpack.c.l.b16 %v7837
    %v8194 = vunpack.c.l.b16 %v7838
    %v8195 = vunpack.c.l.b16 %v7839
    %v8196 = vunpack.c.l.b16 %v7840
    %v8197 = vunpack.c.l.b16 %v7841
    %v8198 = vunpack.c.l.b16 %v7842
    %v8199 = vunpack.c.l.b16 %v7843
    %v8200 = vunpack.c.l.b16 %v7844
    %v8201 = vunpack.c.l.b16 %v7845
    %v8202 = vunpack.c.l.b16 %v7846
    %v8203 = vunpack.c.l.b16 %v7847
    %v8204 = vunpack.c.l.b16 %v7848
    %v8205 = vunpack.c.l.b16 %v7849
    %v8206 = vunpack.c.l.b16 %v7850
    %v8207 = vunpack.c.l.b16 %v7851
    %v8208 = vunpack.c.l.b16 %v7852
    %v8209 = vunpack.c.l.b16 %v7853
    %v8210 = vunpack.c.l.b16 %v7854
    %v8211 = vunpack.c.l.b16 %v7855
    %v8212 = vunpack.c.l.b16 %v7856
    %v8213 = vunpack.c.l.b16 %v7857
    %v8214 = vunpack.c.l.b16 %v7858
    %v8215 = vunpack.c.l.b16 %v7859
    %v8216 = vunpack.c.l.b16 %v7860
    %v8217 = vunpack.c.l.b16 %v7861
    %v8218 = vunpack.c.l.b16 %v7862
    %v8219 = vunpack.c.l.b16 %v7863
    %v8220 = vunpack.c.l.b16 %v7864
    %v8221 = vunpack.c.l.b16 %v7865
    %v8222 = vunpack.c.l.b16 %v7866
    %v8223 = vunpack.c.l.b16 %v7867
    %v8224 = vunpack.c.l.b16 %v7868
    %v8225 = vunpack.c.l.b16 %v7869
    %v8226 = vunpack.c.l.b16 %v7870
    %v8227 = vunpack.c.l.b16 %v7871
    %v8228 = vunpack.c.l.b16 %v7872
    %v8229 = vunpack.c.l.b16 %v7873
    %v8230 = vunpack.c.l.b16 %v7874
    %v8231 = vunpack.c.l.b16 %v7875
    %v8232 = vunpack.c.l.b16 %v7876
    %v8233 = vunpack.c.l.b16 %v7877
    %v8234 = vunpack.c.l.b16 %v7878
    %v8235 = vunpack.c.l.b16 %v7879
    %v8236 = vunpack.c.l.b16 %v7880
    %v8237 = vunpack.c.l.b16 %v7881
    %v8238 = vunpack.c.l.b16 %v7882
    %v8239 = vunpack.c.l.b16 %v7883
    %v8240 = vunpack.c.l.b16 %v7884
    %v8241 = vunpack.c.l.b16 %v7885
    %v8242 = vunpack.c.l.b16 %v7886
    %v8243 = vunpack.c.l.b16 %v7887
    %v8244 = vunpack.c.l.b16 %v7888
    %v8245 = vunpack.c.l.b16 %v7889
    %v8246 = vunpack.c.l.b16 %v7890
    %v8247 = vunpack.c.l.b16 %v7891
    %v8248 = vunpack.c.l.b16 %v7892
    %v8249 = vunpack.c.l.b16 %v7893
    %v8250 = vunpack.c.l.b16 %v7894
    %v8251 = vunpack.c.l.b16 %v7895
    %v8252 = vunpack.c.l.b16 %v7896
    %v8253 = vunpack.c.l.b16 %v7897
    %v8254 = vunpack.c.l.b16 %v7898
    %v8255 = vunpack.c.l.b16 %v7899
    %v8256 = vunpack.c.l.b16 %v7900
    %v8257 = vunpack.c.l.b16 %v7901
    %v8258 = vunpack.c.l.b16 %v7902
    %v8259 = vunpack.c.l.b16 %v7903
    %v8260 = vunpack.c.l.b16 %v7904
    %v8261 = vunpack.c.l.b16 %v7905
    %v8262 = vunpack.c.l.b16 %v7906
    %v8263 = vunpack.c.l.b16 %v7907
    %v8264 = vunpack.c.l.b16 %v7908
    %v8265 = vunpack.c.l.b16 %v7909
    %v8266 = vunpack.c.l.b16 %v7910
    %v8267 = vunpack.c.l.b16 %v7911
    %v8268 = vunpack.c.l.b16 %v7912
    %v8269 = vunpack.c.l.b16 %v7913
    %v8270 = vunpack.c.l.b16 %v7914
    %v8271 = vunpack.c.l.b16 %v7915
    %v8272 = vunpack.c.l.b16 %v7916
    %v8273 = vunpack.c.l.b16 %v7917
    %v8274 = vunpack.c.l.b16 %v7918
    %v8275 = vunpack.c.l.b16 %v7919
    %v8276 = vunpack.c.l.b16 %v7920
    %v8277 = vunpack.c.l.b16 %v7921
    %v8278 = vunpack.c.l.b16 %v7922
    %v8279 = vunpack.c.l.b16 %v7923
    %v8280 = vunpack.c.l.b16 %v7924
    %v8281 = vunpack.c.l.b16 %v7925
    %v8282 = vunpack.c.l.b16 %v7926
    %v8283 = vunpack.c.l.b16 %v7927
    %v8284 = vunpack.c.l.b16 %v7928
    %v8285 = vunpack.c.l.b16 %v7929
    %v8286 = vunpack.c.l.b16 %v7930
    %v8287 = vunpack.c.l.b16 %v7931
    %v8288 = vunpack.c.l.b16 %v7932
    %v8289 = vunpack.c.l.b16 %v7933
    %v8290 = vpack.c.b16 %v8115, %v8114
    %v8291 = vpack.c.b16 %v8117, %v8116
    %v8292 = vpack.c.b16 %v8119, %v8118
    %v8293 = vpack.c.b16 %v8121, %v8120
    %v8294 = vpack.c.b16 %v8123, %v8122
    %v8295 = vpack.c.b16 %v8125, %v8124
    %v8296 = vpack.c.b16 %v8127, %v8126
    %v8297 = vpack.c.b16 %v8129, %v8128
    %v8298 = vpack.c.b16 %v8131, %v8130
    %v8299 = vpack.c.b16 %v8133, %v8132
    %v8300 = vpack.c.b16 %v8135, %v8134
    %v8301 = vpack.c.b16 %v8137, %v8136
    %v8302 = vpack.c.b16 %v8139, %v8138
    %v8303 = vpack.c.b16 %v8141, %v8140
    %v8304 = vpack.c.b16 %v8143, %v8142
    %v8305 = vpack.c.b16 %v8145, %v8144
    %v8306 = vpack.c.b16 %v8147, %v8146
    %v8307 = vpack.c.b16 %v8149, %v8148
    %v8308 = vpack.c.b16 %v8151, %v8150
    %v8309 = vpack.c.b16 %v8153, %v8152
    %v8310 = vpack.c.b16 %v8155, %v8154
    %v8311 = vpack.c.b16 %v8157, %v8156
    %v8312 = vpack.c.b16 %v8159, %v8158
    %v8313 = vpack.c.b16 %v8161, %v8160
    %v8314 = vpack.c.b16 %v8163, %v8162
    %v8315 = vpack.c.b16 %v8165, %v8164
    %v8316 = vpack.c.b16 %v8167, %v8166
    %v8317 = vpack.c.b16 %v8169, %v8168
    %v8318 = vpack.c.b16 %v8171, %v8170
    %v8319 = vpack.c.b16 %v8173, %v8172
    %v8320 = vpack.c.b16 %v8175, %v8174
    %v8321 = vpack.c.b16 %v8177, %v8176
    %v8322 = vpack.c.b16 %v8179, %v8178
    %v8323 = vpack.c.b16 %v8181, %v8180
    %v8324 = vpack.c.b16 %v8183, %v8182
    %v8325 = vpack.c.b16 %v8185, %v8184
    %v8326 = vpack.c.b16 %v8187, %v8186
    %v8327 = vpack.c.b16 %v8189, %v8188
    %v8328 = vpack.c.b16 %v8191, %v8190
    %v8329 = vpack.c.b16 %v8193, %v8192
    %v8330 = vpack.c.b16 %v8195, %v8194
    %v8331 = vpack.c.b16 %v8197, %v8196
    %v8332 = vpack.c.b16 %v8199, %v8198
    %v8333 = vpack.c.b16 %v8201, %v8200
    %v8334 = vpack.c.b16 %v8203, %v8202
    %v8335 = vpack.c.b16 %v8205, %v8204
    %v8336 = vpack.c.b16 %v8207, %v8206
    %v8337 = vpack.c.b16 %v8209, %v8208
    %v8338 = vpack.c.b16 %v8211, %v8210
    %v8339 = vpack.c.b16 %v8213, %v8212
    %v8340 = vpack.c.b16 %v8215, %v8214
    %v8341 = vpack.c.b16 %v8217, %v8216
    %v8342 = vpack.c.b16 %v8219, %v8218
    %v8343 = vpack.c.b16 %v8221, %v8220
    %v8344 = vpack.c.b16 %v8223, %v8222
    %v8345 = vpack.c.b16 %v8225, %v8224
    %v8346 = vpack.c.b16 %v8227, %v8226
    %v8347 = vpack.c.b16 %v8229, %v8228
    %v8348 = vpack.c.b16 %v8231, %v8230
    %v8349 = vpack.c.b16 %v8233, %v8232
    %v8350 = vpack.c.b16 %v8235, %v8234
    %v8351 = vpack.c.b16 %v8237, %v8236
    %v8352 = vpack.c.b16 %v8239, %v8238
    %v8353 = vpack.c.b16 %v8241, %v8240
    %v8354 = vpack.c.b16 %v8243, %v8242
    %v8355 = vpack.c.b16 %v8245, %v8244
    %v8356 = vpack.c.b16 %v8247, %v8246
    %v8357 = vpack.c.b16 %v8249, %v8248
    %v8358 = vpack.c.b16 %v8251, %v8250
    %v8359 = vpack.c.b16 %v8253, %v8252
    %v8360 = vpack.c.b16 %v8255, %v8254
    %v8361 = vpack.c.b16 %v8257, %v8256
    %v8362 = vpack.c.b16 %v8259, %v8258
    %v8363 = vpack.c.b16 %v8261, %v8260
    %v8364 = vpack.c.b16 %v8263, %v8262
    %v8365 = vpack.c.b16 %v8265, %v8264
    %v8366 = vpack.c.b16 %v8267, %v8266
    %v8367 = vpack.c.b16 %v8269, %v8268
    %v8368 = vpack.c.b16 %v8271, %v8270
    %v8369 = vpack.c.b16 %v8273, %v8272
    %v8370 = vpack.c.b16 %v8275, %v8274
    %v8371 = vpack.c.b16 %v8277, %v8276
    %v8372 = vpack.c.b16 %v8279, %v8278
    %v8373 = vpack.c.b16 %v8281, %v8280
    %v8374 = vpack.c.b16 %v8283, %v8282
    %v8375 = vpack.c.b16 %v8285, %v8284
    %v8376 = vpack.c.b16 %v8287, %v8286
    %v8377 = vpack.c.b16 %v8289, %v8288
    %8466 = vmatpush.bf16.msra.mxu0 %v8297
    %8467 = vmatpush.bf16.msra.mxu0 %v8296
    %8468 = vmatpush.bf16.msra.mxu0 %v8295
    %8469 = vmatpush.bf16.msra.mxu0 %v8294
    %8470 = vmatpush.bf16.msra.mxu0 %v8293
    %8471 = vmatpush.bf16.msra.mxu0 %v8292
    %8472 = vmatpush.bf16.msra.mxu0 %v8291
    %8473 = vmatpush.bf16.msra.mxu0 %v8290
    %8474 = vmatmul.bf16.gmra.mxu0 %v7747
    %v8475 = vpop.f32.mrf.mxu0
    %v8476 = vadd.f32 %v7936, %v8475
    %v8477 = vpop.f32.mrf.mxu0
    %8478 = vdwg.mxu0
    %8479 = vmatpush.bf16.msra.mxu0 %v8305
    %8480 = vmatpush.bf16.msra.mxu0 %v8304
    %8481 = vmatpush.bf16.msra.mxu0 %v8303
    %8482 = vmatpush.bf16.msra.mxu0 %v8302
    %8483 = vmatpush.bf16.msra.mxu0 %v8301
    %8484 = vmatpush.bf16.msra.mxu0 %v8300
    %8485 = vmatpush.bf16.msra.mxu0 %v8299
    %8486 = vmatpush.bf16.msra.mxu0 %v8298
    %8487 = vmatmul.bf16.gmra.mxu0 %v7748
    %v8488 = vpop.f32.mrf.mxu0
    %v8489 = vadd.f32 %v8476, %v8488
    %v8490 = vpop.f32.mrf.mxu0
    %8491 = vdwg.mxu0
    %8492 = vmatpush.bf16.msra.mxu0 %v8313
    %8493 = vmatpush.bf16.msra.mxu0 %v8312
    %8494 = vmatpush.bf16.msra.mxu0 %v8311
    %8495 = vmatpush.bf16.msra.mxu0 %v8310
    %8496 = vmatpush.bf16.msra.mxu0 %v8309
    %8497 = vmatpush.bf16.msra.mxu0 %v8308
    %8498 = vmatpush.bf16.msra.mxu0 %v8307
    %8499 = vmatpush.bf16.msra.mxu0 %v8306
    %8500 = vmatmul.bf16.gmra.mxu0 %v7749
    %v8501 = vpop.f32.mrf.mxu0
    %v8502 = vadd.f32 %v8489, %v8501
    %v8503 = vpop.f32.mrf.mxu0
    %8504 = vdwg.mxu0
    %8505 = vmatpush.bf16.msra.mxu0 %v8321
    %8506 = vmatpush.bf16.msra.mxu0 %v8320
    %8507 = vmatpush.bf16.msra.mxu0 %v8319
    %8508 = vmatpush.bf16.msra.mxu0 %v8318
    %8509 = vmatpush.bf16.msra.mxu0 %v8317
    %8510 = vmatpush.bf16.msra.mxu0 %v8316
    %8511 = vmatpush.bf16.msra.mxu0 %v8315
    %8512 = vmatpush.bf16.msra.mxu0 %v8314
    %8513 = vmatmul.bf16.gmra.mxu0 %v7750
    %v8514 = vpop.f32.mrf.mxu0
    %v8515 = vadd.f32 %v8502, %v8514
    %v8516 = vpop.f32.mrf.mxu0
    %8517 = vdwg.mxu0
    %8518 = vmatpush.bf16.msra.mxu0 %v8329
    %8519 = vmatpush.bf16.msra.mxu0 %v8328
    %8520 = vmatpush.bf16.msra.mxu0 %v8327
    %8521 = vmatpush.bf16.msra.mxu0 %v8326
    %8522 = vmatpush.bf16.msra.mxu0 %v8325
    %8523 = vmatpush.bf16.msra.mxu0 %v8324
    %8524 = vmatpush.bf16.msra.mxu0 %v8323
    %8525 = vmatpush.bf16.msra.mxu0 %v8322
    %8526 = vmatmul.bf16.gmra.mxu0 %v7751
    %v8527 = vpop.f32.mrf.mxu0
    %v8528 = vadd.f32 %v8515, %v8527
    %v8529 = vpop.f32.mrf.mxu0
    %8530 = vdwg.mxu0
    %8531 = vmatpush.bf16.msra.mxu0 %v8337
    %8532 = vmatpush.bf16.msra.mxu0 %v8336
    %8533 = vmatpush.bf16.msra.mxu0 %v8335
    %8534 = vmatpush.bf16.msra.mxu0 %v8334
    %8535 = vmatpush.bf16.msra.mxu0 %v8333
    %8536 = vmatpush.bf16.msra.mxu0 %v8332
    %8537 = vmatpush.bf16.msra.mxu0 %v8331
    %8538 = vmatpush.bf16.msra.mxu0 %v8330
    %8539 = vmatmul.bf16.gmra.mxu0 %v7752
    %v8540 = vpop.f32.mrf.mxu0
    %v8541 = vadd.f32 %v8528, %v8540
    %v8542 = vpop.f32.mrf.mxu0
    %8543 = vdwg.mxu0
    %8544 = vmatpush.bf16.msra.mxu0 %v8345
    %8545 = vmatpush.bf16.msra.mxu0 %v8344
    %8546 = vmatpush.bf16.msra.mxu0 %v8343
    %8547 = vmatpush.bf16.msra.mxu0 %v8342
    %8548 = vmatpush.bf16.msra.mxu0 %v8341
    %8549 = vmatpush.bf16.msra.mxu0 %v8340
    %8550 = vmatpush.bf16.msra.mxu0 %v8339
    %8551 = vmatpush.bf16.msra.mxu0 %v8338
    %8552 = vmatmul.bf16.gmra.mxu0 %v7753
    %v8553 = vpop.f32.mrf.mxu0
    %v8554 = vadd.f32 %v8541, %v8553
    %v8555 = vpop.f32.mrf.mxu0
    %8556 = vdwg.mxu0
    %8557 = vmatpush.bf16.msra.mxu0 %v8353
    %8558 = vmatpush.bf16.msra.mxu0 %v8352
    %8559 = vmatpush.bf16.msra.mxu0 %v8351
    %8560 = vmatpush.bf16.msra.mxu0 %v8350
    %8561 = vmatpush.bf16.msra.mxu0 %v8349
    %8562 = vmatpush.bf16.msra.mxu0 %v8348
    %8563 = vmatpush.bf16.msra.mxu0 %v8347
    %8564 = vmatpush.bf16.msra.mxu0 %v8346
    %8565 = vmatmul.bf16.gmra.mxu0 %v7754
    %v8566 = vpop.f32.mrf.mxu0
    %v8567 = vadd.f32 %v8554, %v8566
    %v8568 = vpop.f32.mrf.mxu0
    %8569 = vdwg.mxu0
    %8570 = vmatpush.bf16.msra.mxu0 %v8361
    %8571 = vmatpush.bf16.msra.mxu0 %v8360
    %8572 = vmatpush.bf16.msra.mxu0 %v8359
    %8573 = vmatpush.bf16.msra.mxu0 %v8358
    %8574 = vmatpush.bf16.msra.mxu0 %v8357
    %8575 = vmatpush.bf16.msra.mxu0 %v8356
    %8576 = vmatpush.bf16.msra.mxu0 %v8355
    %8577 = vmatpush.bf16.msra.mxu0 %v8354
    %8578 = vmatmul.bf16.gmra.mxu0 %v7755
    %v8579 = vpop.f32.mrf.mxu0
    %v8580 = vadd.f32 %v8567, %v8579
    %v8581 = vpop.f32.mrf.mxu0
    %8582 = vdwg.mxu0
    %8583 = vmatpush.bf16.msra.mxu0 %v8369
    %8584 = vmatpush.bf16.msra.mxu0 %v8368
    %8585 = vmatpush.bf16.msra.mxu0 %v8367
    %8586 = vmatpush.bf16.msra.mxu0 %v8366
    %8587 = vmatpush.bf16.msra.mxu0 %v8365
    %8588 = vmatpush.bf16.msra.mxu0 %v8364
    %8589 = vmatpush.bf16.msra.mxu0 %v8363
    %8590 = vmatpush.bf16.msra.mxu0 %v8362
    %8591 = vmatmul.bf16.gmra.mxu0 %v7756
    %v8592 = vpop.f32.mrf.mxu0
    %v8593 = vadd.f32 %v8580, %v8592
    %v8594 = vpop.f32.mrf.mxu0
    %8595 = vdwg.mxu0
    %8596 = vmatpush.bf16.msra.mxu0 %v8377
    %8597 = vmatpush.bf16.msra.mxu0 %v8376
    %8598 = vmatpush.bf16.msra.mxu0 %v8375
    %8599 = vmatpush.bf16.msra.mxu0 %v8374
    %8600 = vmatpush.bf16.msra.mxu0 %v8373
    %8601 = vmatpush.bf16.msra.mxu0 %v8372
    %8602 = vmatpush.bf16.msra.mxu0 %v8371
    %8603 = vmatpush.bf16.msra.mxu0 %v8370
    %8604 = vmatmul.bf16.gmra.mxu0 %v7757
    %v8605 = vpop.f32.mrf.mxu0
    %v8606 = vadd.f32 %v8593, %v8605
    %v8607 = vpop.f32.mrf.mxu0
    %8608 = vdwg.mxu0
    %v8609 = vtanh.pop %v8606
    %v8610 = vld [vmem:[#allocation16] sm:$0x1]
    %v8612 = vperm.slane %v8610, 0
    %v8614 = vmul.f32 %v8609, %v8612
    %8615 = vadd.xlane.f32.xlu0 %v8614
    %v8616 = vpop.xlane.xlu0 %8615
    %v8617 = vld [vmem:[#allocation2] sm:$0x1]
    %v8619 = vperm.slane %v8617, 0
    %v8621 = vadd.f32 %v8616, %v8619
    %vm8622 = vcmask 7168
    %8623 = vst.msk [vmem:[%s11] sm:$0xff] %vm8622, %v8621
    // Predicated region
    $region82: #{net_forward.1} parent=1 // pred_check
      _
    $region83: #{net_forward.1} parent=1 // pred_check_branch
      %8625 = sbr.rel (0) target = $region85
    $region84: #{net_forward.1} parent=1 // pred_region
      _
    $region85: #{net_forward.1} parent=1 // pred_fallthru
      _
    // Predicated region
    $region86: #{net_forward.1} parent=1 // pred_check
      _
    $region87: #{net_forward.1} parent=1 // pred_check_branch
      %8627 = sbr.rel (0) target = $region89
    $region88: #{net_forward.1} parent=1 // pred_region
      _
    $region89: #{net_forward.1} parent=1 // pred_fallthru
      _
    %8628 = vsyncpa [#allocation4], 1
    %8629 = vsyncpa [#allocation6], 1
    %8630 = vsyncpa [#allocation9], 1
    %8631 = vsyncpa [#allocation12], 1
    %8632 = vsyncpa [#allocation15], 1

</llo_original>
